<compile_context>
chip_gen: v5e
topology: v5e:2x2
jax: 0.10.0
libtpu: 0.0.40
codegen_flags: <defaults>
</compile_context>

<pallas_src>
import math
from functools import partial

import jax
import jax.numpy as jnp
from jax.experimental import pallas as pl
from jax.experimental.pallas import tpu as pltpu

K_MAX = 64      # max_num_neighbors in radius()
TS_MAX = 128    # max query-tile size for the PointNetConv kernel grid
OUT_PAD = 128   # lane-dense output width for kernel stores
QC_MAX = 16     # queries per in-kernel chunk (16 * 64 = 1024 edge rows)
GRAPHS_PER_STEP = 8  # graphs per grid step in the fused global head


def _round_up(x, m):
    return ((x + m - 1) // m) * m


# ---------------------------------------------------------------------------
# Pallas kernels (hot paths)
# ---------------------------------------------------------------------------
def pointconv_kernel(feats_ref, maskb_ref, w1, b1, w2, b2, w3, b3, out_ref, *, qc):
    """PointNetConv: per-edge MLP then masked max over K neighbors, chunked.

    feats_ref : (TS*K, Fin)  bf16   gathered [x_j, pos_j - pos_i]
    maskb_ref : (TS, K)      f32    additive bias: 0.0 real edge, -3e38 padding
    w3/b3 are zero-padded to OUT_PAD columns so the store is lane-dense.

    The kernel loops over chunks of `qc` queries (qc*K edge rows) so live f32
    intermediates are bounded by the chunk size instead of the whole tile.
    """
    ts, k = maskb_ref.shape
    n_chunks = ts // qc
    rows = qc * k

    # weights are tiny; load once outside the chunk loop
    w1v, b1v = w1[...], b1[...]
    w2v, b2v = w2[...], b2[...]
    w3v, b3v = w3[...], b3[...]
    no_edge_thresh = jnp.float32(-1.0e38)

    @pl.loop(0, n_chunks)
    def _(c):
        e0 = pl.multiple_of(c * rows, rows)      # edge-row start of this chunk
        q0 = pl.multiple_of(c * qc, qc)          # query-row start of this chunk
        f = feats_ref[pl.ds(e0, rows), :]        # (qc*K, Fin) bf16
        h = jnp.dot(f, w1v, preferred_element_type=jnp.float32) + b1v
        h = jnp.maximum(h, 0.0)
        h = jnp.dot(h.astype(jnp.bfloat16), w2v,
                    preferred_element_type=jnp.float32) + b2v
        h = jnp.maximum(h, 0.0)
        h = jnp.dot(h.astype(jnp.bfloat16), w3v,
                    preferred_element_type=jnp.float32) + b3v   # (qc*K, 128) f32
        fpad = h.shape[-1]
        mb = maskb_ref[pl.ds(q0, qc), :]                        # (qc, K) f32
        # additive mask bias (single add) instead of compare + select
        h3 = h.reshape(qc, k, fpad) + mb[:, :, None]
        pooled = jnp.max(h3, axis=1)                            # (qc, 128)
        # queries with no incoming edge (only padded rows here) -> 0,
        # matching PyG scatter-max-into-zeros semantics.
        out_ref[pl.ds(q0, qc), :] = jnp.where(pooled > no_edge_thresh, pooled, 0.0)


def global_head_kernel(x_ref, w1, b1, w2, b2, w3, b3,
                       hw1, hb1, hw2, hb2, hw3, hb3, out_ref, *, n_classes):
    """Fused GlobalSAModule (MLP[67,64,128,256] + per-graph max pool) and
    classifier MLP([256,128,64,2], norm=None) + log_softmax.

    G graphs per grid step -> the classifier matmuls run with M=G instead of
    M=1.  hw3/hb3 are zero-padded to OUT_PAD columns (lane-dense store);
    log_softmax is computed over the first n_classes lanes only."""
    # TODO(synk): dropout(p=0.5) is identity in eval/inference mode and is omitted.
    x = x_ref[...]                                       # (G, P, 67) bf16
    g, p, fin = x.shape
    h = x.reshape(g * p, fin)
    h = jnp.maximum(jnp.dot(h, w1[...], preferred_element_type=jnp.float32) + b1[...], 0.0)
    h = jnp.maximum(jnp.dot(h.astype(jnp.bfloat16), w2[...],
                            preferred_element_type=jnp.float32) + b2[...], 0.0)
    h = jnp.dot(h.astype(jnp.bfloat16), w3[...],
                preferred_element_type=jnp.float32) + b3[...]   # (G*P, 256)
    pooled = jnp.max(h.reshape(g, p, -1), axis=1)        # (G, 256) per-graph max pool
    gact = jnp.maximum(jnp.dot(pooled.astype(jnp.bfloat16), hw1[...],
                               preferred_element_type=jnp.float32) + hb1[...], 0.0)
    gact = jnp.maximum(jnp.dot(gact.astype(jnp.bfloat16), hw2[...],
                               preferred_element_type=jnp.float32) + hb2[...], 0.0)
    logits = jnp.dot(gact.astype(jnp.bfloat16), hw3[...],
                     preferred_element_type=jnp.float32) + hb3[...]   # (G, 128)
    lane = jax.lax.broadcasted_iota(jnp.int32, logits.shape, 1)
    valid = lane < n_classes
    neg = jnp.float32(-3.0e38)
    lm = jnp.where(valid, logits, neg)
    m = jnp.max(lm, axis=-1, keepdims=True)
    lse = jnp.log(jnp.sum(jnp.where(valid, jnp.exp(lm - m), 0.0),
                          axis=-1, keepdims=True)) + m
    out_ref[...] = jnp.where(valid, logits - lse, 0.0)   # (G, 128)


# ---------------------------------------------------------------------------
# Pallas wrappers
# ---------------------------------------------------------------------------
def pointnet_conv(feats, mask, mlp):
    """feats: (S, K, Fin) f32, mask: (S, K) bool -> (S, Fout) f32."""
    (w1, b1), (w2, b2), (w3, b3) = mlp
    s, k, fin = feats.shape
    fout = w3.shape[1]

    # lane-dense output: pad last-layer weights to 128 columns, slice later
    w3p = jnp.pad(w3, ((0, 0), (0, OUT_PAD - fout)))
    b3p = jnp.pad(b3, ((0, 0), (0, OUT_PAD - fout)))

    # large query tile; the chunked kernel keeps the per-step working set small
    ts = min(TS_MAX, _round_up(s, 8))
    s_pad = _round_up(s, ts)
    if s_pad != s:
        feats = jnp.pad(feats, ((0, s_pad - s), (0, 0), (0, 0)))
        mask = jnp.pad(mask, ((0, s_pad - s), (0, 0)))

    # 8-16 queries (512-1024 edge rows) per in-kernel chunk
    qc = QC_MAX if ts % QC_MAX == 0 else 8

    feats2d = feats.reshape(s_pad * k, fin).astype(jnp.bfloat16)
    # additive mask bias: 0.0 for real edges, -3e38 for padded edges
    mask_bias = (mask.astype(jnp.float32) - 1.0) * jnp.float32(3.0e38)
    w1b, w2b, w3b = (w.astype(jnp.bfloat16) for w in (w1, w2, w3p))

    num_steps = s_pad // ts
    if num_steps >= 3:
        # deeper buffering on the only large per-step transfer (v7x/v6e latency hiding)
        feats_spec = pl.BlockSpec((ts * k, fin), lambda i: (i, 0),
                                  pipeline_mode=pl.Buffered(3))
    else:
        feats_spec = pl.BlockSpec((ts * k, fin), lambda i: (i, 0))

    out = pl.pallas_call(
        partial(pointconv_kernel, qc=qc),
        out_shape=jax.ShapeDtypeStruct((s_pad, OUT_PAD), jnp.float32),
        grid=(num_steps,),
        in_specs=[
            feats_spec,
            pl.BlockSpec((ts, k), lambda i: (i, 0)),
            pl.BlockSpec(w1b.shape, lambda i: (0, 0)),
            pl.BlockSpec(b1.shape, lambda i: (0, 0)),
            pl.BlockSpec(w2b.shape, lambda i: (0, 0)),
            pl.BlockSpec(b2.shape, lambda i: (0, 0)),
            pl.BlockSpec(w3b.shape, lambda i: (0, 0)),
            pl.BlockSpec(b3p.shape, lambda i: (0, 0)),
        ],
        out_specs=pl.BlockSpec((ts, OUT_PAD), lambda i: (i, 0)),
        compiler_params=pltpu.CompilerParams(dimension_semantics=("parallel",)),
    )(feats2d, mask_bias, w1b, b1, w2b, b2, w3b, b3p)
    return out[:s, :fout]


def global_head(x_bpf, sa3_mlp, head_mlp, n_classes):
    """x_bpf: (B, P, 67) f32 -> (B, n_classes) log-probs.  Fused pool + head,
    G graphs per grid step."""
    (w1, b1), (w2, b2), (w3, b3) = sa3_mlp
    (hw1, hb1), (hw2, hb2), (hw3, hb3) = head_mlp
    b, p, fin = x_bpf.shape

    hw3p = jnp.pad(hw3, ((0, 0), (0, OUT_PAD - hw3.shape[1])))
    hb3p = jnp.pad(hb3, ((0, 0), (0, OUT_PAD - hb3.shape[1])))

    g = min(GRAPHS_PER_STEP, b)
    b_pad = _round_up(b, g)
    if b_pad != b:
        x_bpf = jnp.pad(x_bpf, ((0, b_pad - b), (0, 0), (0, 0)))

    xb = x_bpf.astype(jnp.bfloat16)
    w1b, w2b, w3b, hw1b, hw2b, hw3b = (
        w.astype(jnp.bfloat16) for w in (w1, w2, w3, hw1, hw2, hw3p))

    kern = partial(global_head_kernel, n_classes=n_classes)
    out = pl.pallas_call(
        kern,
        out_shape=jax.ShapeDtypeStruct((b_pad, OUT_PAD), jnp.float32),
        grid=(b_pad // g,),
        in_specs=[
            pl.BlockSpec((g, p, fin), lambda i: (i, 0, 0)),
            pl.BlockSpec(w1b.shape, lambda i: (0, 0)),
            pl.BlockSpec(b1.shape, lambda i: (0, 0)),
            pl.BlockSpec(w2b.shape, lambda i: (0, 0)),
            pl.BlockSpec(b2.shape, lambda i: (0, 0)),
            pl.BlockSpec(w3b.shape, lambda i: (0, 0)),
            pl.BlockSpec(b3.shape, lambda i: (0, 0)),
            pl.BlockSpec(hw1b.shape, lambda i: (0, 0)),
            pl.BlockSpec(hb1.shape, lambda i: (0, 0)),
            pl.BlockSpec(hw2b.shape, lambda i: (0, 0)),
            pl.BlockSpec(hb2.shape, lambda i: (0, 0)),
            pl.BlockSpec(hw3b.shape, lambda i: (0, 0)),
            pl.BlockSpec(hb3p.shape, lambda i: (0, 0)),
        ],
        out_specs=pl.BlockSpec((g, OUT_PAD), lambda i: (i, 0)),
        compiler_params=pltpu.CompilerParams(dimension_semantics=("parallel",)),
    )(xb, w1b, b1, w2b, b2, w3b, b3, hw1b, hb1, hw2b, hb2, hw3b, hb3p)
    return out[:b, :n_classes]


# ---------------------------------------------------------------------------
# JAX glue: FPS, radius search, module wiring
# ---------------------------------------------------------------------------
def fps_single(pos_b, n_sample):
    # TODO(synk): PyG fps uses random_start=True; we fix the start point at index 0.
    p = pos_b.shape[0]
    sel0 = jnp.zeros((n_sample,), dtype=jnp.int32)
    d0 = jnp.full((p,), jnp.inf, dtype=jnp.float32)

    def body(i, carry):
        sel, d = carry
        last = pos_b[sel[i - 1]]
        dist = jnp.sum((pos_b - last) ** 2, axis=-1)
        d = jnp.minimum(d, dist)
        nxt = jnp.argmax(d).astype(jnp.int32)
        return sel.at[i].set(nxt), d

    sel, _ = jax.lax.fori_loop(1, n_sample, body, (sel0, d0))
    return sel


def radius_neighbors(pos, idx, r, points_per_graph):
    # TODO(synk): torch_cluster.radius is a data-dependent search; implemented as dense
    # masked JAX glue (first K_MAX in-radius candidates by index, as torch_cluster returns).
    p = points_per_graph
    qb = idx // p                                        # graph id of each query
    cand_local = jnp.arange(p, dtype=jnp.int32)
    cand = qb[:, None] * p + cand_local[None, :]         # (S, P) same-graph candidates
    diff = pos[idx][:, None, :] - pos[cand]
    d2 = jnp.sum(diff * diff, axis=-1)
    valid = d2 <= r * r
    key = jnp.where(valid, cand_local[None, :], p)
    order = jnp.argsort(key, axis=1)[:, :K_MAX]
    sel_key = jnp.take_along_axis(key, order, axis=1)    # (S, K)
    mask = sel_key < p
    nb_local = jnp.where(mask, sel_key, 0)
    nb_global = qb[:, None] * p + nb_local
    return nb_global, mask


def sa_module(x, pos, ratio, r, mlp, num_graphs, points_per_graph):
    n = pos.shape[0]
    p = points_per_graph
    n_sample = math.ceil(p * ratio)
    pos_b = pos.reshape(num_graphs, p, 3)
    sel = jax.vmap(lambda pb: fps_single(pb, n_sample))(pos_b)        # (B, n_sample) local
    idx = (sel + (jnp.arange(num_graphs, dtype=jnp.int32) * p)[:, None]).reshape(-1)
    s = idx.shape[0]
    nb_idx, nb_mask = radius_neighbors(pos, idx, r, p)                # (S, K)
    # NOTE: the reference SAModule feeds the *full* x/pos into PointNetConv with
    # edge targets equal to the query ordinal q, so the message center is pos[q]
    # (not pos[idx[q]]), the aggregated result lands at output row q (rows >= S
    # stay 0), and pos/batch are returned un-downsampled — mirrored here exactly.
    centers = pos[:s]                                                 # (S, 3)
    rel = pos[nb_idx] - centers[:, None, :]                           # (S, K, 3)
    feats = rel if x is None else jnp.concatenate([x[nb_idx], rel], axis=-1)
    out_q = pointnet_conv(feats, nb_mask, mlp)                        # (S, Fout)
    fout = out_q.shape[-1]
    x_out = jnp.zeros((n, fout), jnp.float32).at[:s].set(out_q)
    return x_out, pos


def init_mlp(key, dims, batch_norm):
    """Deterministic params; eval-mode BatchNorm1d (gamma=1, beta=0, stats 0/1) folded in."""
    eps = 1e-5
    layers = []
    keys = jax.random.split(key, len(dims) - 1)
    for i in range(len(dims) - 1):
        kw, kb = jax.random.split(keys[i])
        w = jax.random.normal(kw, (dims[i], dims[i + 1]), jnp.float32) / jnp.sqrt(dims[i])
        b = 0.01 * jax.random.normal(kb, (1, dims[i + 1]), jnp.float32)
        last = i == len(dims) - 2
        if batch_norm and not last:                   # PyG MLP: plain_last=True
            scale = 1.0 / jnp.sqrt(1.0 + eps)
            w = w * scale
            b = b * scale
        layers.append((w, b))
    return layers


def net_forward(pos, params, num_graphs, points_per_graph):
    # sa0_out = (data.x=None, data.pos, data.batch)
    x1, pos1 = sa_module(None, pos, 0.5, 0.2, params["sa1"], num_graphs, points_per_graph)
    x2, pos2 = sa_module(x1, pos1, 0.25, 0.4, params["sa2"], num_graphs, points_per_graph)
    feats = jnp.concatenate([x2, pos2], axis=1)                        # (N, 64+3)
    feats = feats.reshape(num_graphs, points_per_graph, -1)            # contiguous batches
    n_classes = params["head"][-1][0].shape[1]
    # fused GlobalSAModule MLP + global_max_pool + classifier MLP + log_softmax
    return global_head(feats, params["sa3"], params["head"], n_classes)   # (B, 2)


if __name__ == "__main__":
    B, P = 2, 64      # 2 graphs, 64 points each  -> N = 128, data.x = None
    key = jax.random.PRNGKey(0)
    k_pos, k1, k2, k3, k4 = jax.random.split(key, 5)
    pos = jax.random.uniform(k_pos, (B * P, 3), dtype=jnp.float32)

    params = {
        "sa1": init_mlp(k1, [3, 16, 16, 32], batch_norm=True),
        "sa2": init_mlp(k2, [32 + 3, 32, 32, 64], batch_norm=True),
        "sa3": init_mlp(k3, [64 + 3, 64, 128, 256], batch_norm=True),
        "head": init_mlp(k4, [256, 128, 64, 2], batch_norm=False),
    }

    fwd = jax.jit(partial(net_forward, num_graphs=B, points_per_graph=P))
    out = fwd(pos, params)
    jax.block_until_ready(out)
    assert out.shape == (B, 2)
    assert bool(jnp.all(jnp.isfinite(out)))
    print("KERNEL_OK")
</pallas_src>

<mosaic_0001>
module attributes {stable_mosaic.version = 11 : i64} {
  func.func @pointconv_kernel(%arg0: i32, %arg1: memref<4096x3xbf16, #tpu.memory_space<vmem>>, %arg2: memref<64x64xf32, #tpu.memory_space<vmem>>, %arg3: memref<3x16xbf16, #tpu.memory_space<vmem>>, %arg4: memref<1x16xf32, #tpu.memory_space<vmem>>, %arg5: memref<16x16xbf16, #tpu.memory_space<vmem>>, %arg6: memref<1x16xf32, #tpu.memory_space<vmem>>, %arg7: memref<16x128xbf16, #tpu.memory_space<vmem>>, %arg8: memref<1x128xf32, #tpu.memory_space<vmem>>, %arg9: memref<64x128xf32, #tpu.memory_space<vmem>>) attributes {dimension_semantics = [#tpu.dimension_semantics<parallel>], iteration_bounds = array<i64: 1>, scalar_prefetch = 0 : i64, scratch_operands = 0 : i64, tpu.core_type = #tpu.core_type<tc>, window_params = [{transform_indices = @transform_0, window_bounds = array<i64: 4096, 3>}, {transform_indices = @transform_1, window_bounds = array<i64: 64, 64>}, {pipeline_mode = #tpu.pipeline_mode<synchronous>, transform_indices = @transform_2, window_bounds = array<i64: 3, 16>}, {pipeline_mode = #tpu.pipeline_mode<synchronous>, transform_indices = @transform_3, window_bounds = array<i64: 1, 16>}, {pipeline_mode = #tpu.pipeline_mode<synchronous>, transform_indices = @transform_4, window_bounds = array<i64: 16, 16>}, {pipeline_mode = #tpu.pipeline_mode<synchronous>, transform_indices = @transform_5, window_bounds = array<i64: 1, 16>}, {pipeline_mode = #tpu.pipeline_mode<synchronous>, transform_indices = @transform_6, window_bounds = array<i64: 16, 128>}, {pipeline_mode = #tpu.pipeline_mode<synchronous>, transform_indices = @transform_7, window_bounds = array<i64: 1, 128>}, {transform_indices = @transform_8, window_bounds = array<i64: 64, 128>}]} {
    %c0 = arith.constant 0 : index
    %c0_0 = arith.constant 0 : index
    %0 = vector.load %arg3[%c0, %c0_0] : memref<3x16xbf16, #tpu.memory_space<vmem>>, vector<3x16xbf16>
    %c0_1 = arith.constant 0 : index
    %c0_2 = arith.constant 0 : index
    %1 = vector.load %arg4[%c0_1, %c0_2] : memref<1x16xf32, #tpu.memory_space<vmem>>, vector<1x16xf32>
    %c0_3 = arith.constant 0 : index
    %c0_4 = arith.constant 0 : index
    %2 = vector.load %arg5[%c0_3, %c0_4] : memref<16x16xbf16, #tpu.memory_space<vmem>>, vector<16x16xbf16>
    %c0_5 = arith.constant 0 : index
    %c0_6 = arith.constant 0 : index
    %3 = vector.load %arg6[%c0_5, %c0_6] : memref<1x16xf32, #tpu.memory_space<vmem>>, vector<1x16xf32>
    %c0_7 = arith.constant 0 : index
    %c0_8 = arith.constant 0 : index
    %4 = vector.load %arg7[%c0_7, %c0_8] : memref<16x128xbf16, #tpu.memory_space<vmem>>, vector<16x128xbf16>
    %c0_9 = arith.constant 0 : index
    %c0_10 = arith.constant 0 : index
    %5 = vector.load %arg8[%c0_9, %c0_10] : memref<1x128xf32, #tpu.memory_space<vmem>>, vector<1x128xf32>
    %cst = arith.constant -9.99999968E+37 : f32
    %c0_i32 = arith.constant 0 : i32
    %c4_i32 = arith.constant 4 : i32
    %6 = arith.addi %c0_i32, %c4_i32 : i32
    %c1_i32 = arith.constant 1 : i32
    scf.for %arg10 = %c0_i32 to %6 step %c1_i32  : i32 {
      %c1_i32_12 = arith.constant 1 : i32
      %7 = arith.muli %arg10, %c1_i32_12 : i32
      %c0_i32_13 = arith.constant 0 : i32
      %8 = arith.addi %c0_i32_13, %7 : i32
      %c1024_i32 = arith.constant 1024 : i32
      %9 = arith.muli %8, %c1024_i32 : i32
      %10 = tpu.assume_multiple %9, 1024 : i32
      %c16_i32 = arith.constant 16 : i32
      %11 = arith.muli %8, %c16_i32 : i32
      %12 = tpu.assume_multiple %11, 16 : i32
      %13 = arith.index_cast %10 : i32 to index
      %c0_14 = arith.constant 0 : index
      %14 = vector.load %arg1[%13, %c0_14] : memref<4096x3xbf16, #tpu.memory_space<vmem>>, vector<1024x3xbf16>
      %cst_15 = arith.constant dense<0.000000e+00> : vector<1024x16xf32>
      %15 = tpu.matmul %14, %0, %cst_15 {dimension_numbers = #tpu.dot_dimension_numbers<[1], [0], [0], [1], [0, 0, 1, 1], [], []>} : vector<1024x3xbf16>, vector<3x16xbf16>, vector<1024x16xf32> -> vector<1024x16xf32>
      %16 = vector.broadcast %1 : vector<1x16xf32> to vector<1024x16xf32>
      %17 = arith.addf %15, %16 : vector<1024x16xf32>
      %cst_16 = arith.constant 0.000000e+00 : f32
      %18 = vector.broadcast %cst_16 : f32 to vector<1024x16xf32>
      %19 = arith.maximumf %17, %18 : vector<1024x16xf32>
      %20 = arith.truncf %19 : vector<1024x16xf32> to vector<1024x16xbf16>
      %cst_17 = arith.constant dense<0.000000e+00> : vector<1024x16xf32>
      %21 = tpu.matmul %20, %2, %cst_17 {dimension_numbers = #tpu.dot_dimension_numbers<[1], [0], [0], [1], [0, 0, 1, 1], [], []>} : vector<1024x16xbf16>, vector<16x16xbf16>, vector<1024x16xf32> -> vector<1024x16xf32>
      %22 = vector.broadcast %3 : vector<1x16xf32> to vector<1024x16xf32>
      %23 = arith.addf %21, %22 : vector<1024x16xf32>
      %cst_18 = arith.constant 0.000000e+00 : f32
      %24 = vector.broadcast %cst_18 : f32 to vector<1024x16xf32>
      %25 = arith.maximumf %23, %24 : vector<1024x16xf32>
      %26 = arith.truncf %25 : vector<1024x16xf32> to vector<1024x16xbf16>
      %cst_19 = arith.constant dense<0.000000e+00> : vector<1024x128xf32>
      %27 = tpu.matmul %26, %4, %cst_19 {dimension_numbers = #tpu.dot_dimension_numbers<[1], [0], [0], [1], [0, 0, 1, 1], [], []>} : vector<1024x16xbf16>, vector<16x128xbf16>, vector<1024x128xf32> -> vector<1024x128xf32>
      %28 = vector.broadcast %5 : vector<1x128xf32> to vector<1024x128xf32>
      %29 = arith.addf %27, %28 : vector<1024x128xf32>
      %30 = arith.index_cast %12 : i32 to index
      %c0_20 = arith.constant 0 : index
      %31 = vector.load %arg2[%30, %c0_20] : memref<64x64xf32, #tpu.memory_space<vmem>>, vector<16x64xf32>
      %32 = vector.shape_cast %29 : vector<1024x128xf32> to vector<16x64x128xf32>
      %33 = vector.shape_cast %31 : vector<16x64xf32> to vector<16x64x1xf32>
      %34 = vector.broadcast %33 : vector<16x64x1xf32> to vector<16x64x128xf32>
      %35 = arith.addf %32, %34 : vector<16x64x128xf32>
      %cst_21 = arith.constant dense<0xFF800000> : vector<16x128xf32>
      %36 = vector.multi_reduction <maximumf>, %35, %cst_21 [1] : vector<16x64x128xf32> to vector<16x128xf32>
      %37 = vector.broadcast %cst : f32 to vector<16x128xf32>
      %38 = arith.cmpf ogt, %36, %37 : vector<16x128xf32>
      %cst_22 = arith.constant 0.000000e+00 : f32
      %39 = vector.broadcast %cst_22 : f32 to vector<16x128xf32>
      %40 = arith.select %38, %36, %39 : vector<16x128xi1>, vector<16x128xf32>
      %41 = arith.index_cast %12 : i32 to index
      %c0_23 = arith.constant 0 : index
      %42 = vector.load %arg9[%41, %c0_23] : memref<64x128xf32, #tpu.memory_space<vmem>>, vector<16x128xf32>
      tpu.vector_store %arg9[%41, %c0_23], %40 {strides = array<i32>} : memref<64x128xf32, #tpu.memory_space<vmem>>, vector<16x128xf32>,
    }
    %c4_i32_11 = arith.constant 4 : i32
    return
  }
  func.func @transform_0(%arg0: i32) -> (i32, i32) {
    %c0_i32 = arith.constant 0 : i32
    %c0_i32_0 = arith.constant 0 : i32
    return %arg0, %c0_i32 : i32, i32
  }
  func.func @transform_1(%arg0: i32) -> (i32, i32) {
    %c0_i32 = arith.constant 0 : i32
    %c0_i32_0 = arith.constant 0 : i32
    return %arg0, %c0_i32 : i32, i32
  }
  func.func @transform_2(%arg0: i32) -> (i32, i32) {
    %c0_i32 = arith.constant 0 : i32
    %c0_i32_0 = arith.constant 0 : i32
    %c0_i32_1 = arith.constant 0 : i32
    return %c0_i32, %c0_i32_0 : i32, i32
  }
  func.func @transform_3(%arg0: i32) -> (i32, i32) {
    %c0_i32 = arith.constant 0 : i32
    %c0_i32_0 = arith.constant 0 : i32
    %c0_i32_1 = arith.constant 0 : i32
    return %c0_i32, %c0_i32_0 : i32, i32
  }
  func.func @transform_4(%arg0: i32) -> (i32, i32) {
    %c0_i32 = arith.constant 0 : i32
    %c0_i32_0 = arith.constant 0 : i32
    %c0_i32_1 = arith.constant 0 : i32
    return %c0_i32, %c0_i32_0 : i32, i32
  }
  func.func @transform_5(%arg0: i32) -> (i32, i32) {
    %c0_i32 = arith.constant 0 : i32
    %c0_i32_0 = arith.constant 0 : i32
    %c0_i32_1 = arith.constant 0 : i32
    return %c0_i32, %c0_i32_0 : i32, i32
  }
  func.func @transform_6(%arg0: i32) -> (i32, i32) {
    %c0_i32 = arith.constant 0 : i32
    %c0_i32_0 = arith.constant 0 : i32
    %c0_i32_1 = arith.constant 0 : i32
    return %c0_i32, %c0_i32_0 : i32, i32
  }
  func.func @transform_7(%arg0: i32) -> (i32, i32) {
    %c0_i32 = arith.constant 0 : i32
    %c0_i32_0 = arith.constant 0 : i32
    %c0_i32_1 = arith.constant 0 : i32
    return %c0_i32, %c0_i32_0 : i32, i32
  }
  func.func @transform_8(%arg0: i32) -> (i32, i32) {
    %c0_i32 = arith.constant 0 : i32
    %c0_i32_0 = arith.constant 0 : i32
    return %arg0, %c0_i32 : i32, i32
  }
}

module attributes {stable_mosaic.version = 11 : i64} {
  func.func @pointconv_kernel(%arg0: i32, %arg1: memref<2048x35xbf16, #tpu.memory_space<vmem>>, %arg2: memref<32x64xf32, #tpu.memory_space<vmem>>, %arg3: memref<35x32xbf16, #tpu.memory_space<vmem>>, %arg4: memref<1x32xf32, #tpu.memory_space<vmem>>, %arg5: memref<32x32xbf16, #tpu.memory_space<vmem>>, %arg6: memref<1x32xf32, #tpu.memory_space<vmem>>, %arg7: memref<32x128xbf16, #tpu.memory_space<vmem>>, %arg8: memref<1x128xf32, #tpu.memory_space<vmem>>, %arg9: memref<32x128xf32, #tpu.memory_space<vmem>>) attributes {dimension_semantics = [#tpu.dimension_semantics<parallel>], iteration_bounds = array<i64: 1>, scalar_prefetch = 0 : i64, scratch_operands = 0 : i64, tpu.core_type = #tpu.core_type<tc>, window_params = [{transform_indices = @transform_0, window_bounds = array<i64: 2048, 35>}, {transform_indices = @transform_1, window_bounds = array<i64: 32, 64>}, {pipeline_mode = #tpu.pipeline_mode<synchronous>, transform_indices = @transform_2, window_bounds = array<i64: 35, 32>}, {pipeline_mode = #tpu.pipeline_mode<synchronous>, transform_indices = @transform_3, window_bounds = array<i64: 1, 32>}, {pipeline_mode = #tpu.pipeline_mode<synchronous>, transform_indices = @transform_4, window_bounds = array<i64: 32, 32>}, {pipeline_mode = #tpu.pipeline_mode<synchronous>, transform_indices = @transform_5, window_bounds = array<i64: 1, 32>}, {pipeline_mode = #tpu.pipeline_mode<synchronous>, transform_indices = @transform_6, window_bounds = array<i64: 32, 128>}, {pipeline_mode = #tpu.pipeline_mode<synchronous>, transform_indices = @transform_7, window_bounds = array<i64: 1, 128>}, {transform_indices = @transform_8, window_bounds = array<i64: 32, 128>}]} {
    %c0 = arith.constant 0 : index
    %c0_0 = arith.constant 0 : index
    %0 = vector.load %arg3[%c0, %c0_0] : memref<35x32xbf16, #tpu.memory_space<vmem>>, vector<35x32xbf16>
    %c0_1 = arith.constant 0 : index
    %c0_2 = arith.constant 0 : index
    %1 = vector.load %arg4[%c0_1, %c0_2] : memref<1x32xf32, #tpu.memory_space<vmem>>, vector<1x32xf32>
    %c0_3 = arith.constant 0 : index
    %c0_4 = arith.constant 0 : index
    %2 = vector.load %arg5[%c0_3, %c0_4] : memref<32x32xbf16, #tpu.memory_space<vmem>>, vector<32x32xbf16>
    %c0_5 = arith.constant 0 : index
    %c0_6 = arith.constant 0 : index
    %3 = vector.load %arg6[%c0_5, %c0_6] : memref<1x32xf32, #tpu.memory_space<vmem>>, vector<1x32xf32>
    %c0_7 = arith.constant 0 : index
    %c0_8 = arith.constant 0 : index
    %4 = vector.load %arg7[%c0_7, %c0_8] : memref<32x128xbf16, #tpu.memory_space<vmem>>, vector<32x128xbf16>
    %c0_9 = arith.constant 0 : index
    %c0_10 = arith.constant 0 : index
    %5 = vector.load %arg8[%c0_9, %c0_10] : memref<1x128xf32, #tpu.memory_space<vmem>>, vector<1x128xf32>
    %cst = arith.constant -9.99999968E+37 : f32
    %c0_i32 = arith.constant 0 : i32
    %c2_i32 = arith.constant 2 : i32
    %6 = arith.addi %c0_i32, %c2_i32 : i32
    %c1_i32 = arith.constant 1 : i32
    scf.for %arg10 = %c0_i32 to %6 step %c1_i32  : i32 {
      %c1_i32_12 = arith.constant 1 : i32
      %7 = arith.muli %arg10, %c1_i32_12 : i32
      %c0_i32_13 = arith.constant 0 : i32
      %8 = arith.addi %c0_i32_13, %7 : i32
      %c1024_i32 = arith.constant 1024 : i32
      %9 = arith.muli %8, %c1024_i32 : i32
      %10 = tpu.assume_multiple %9, 1024 : i32
      %c16_i32 = arith.constant 16 : i32
      %11 = arith.muli %8, %c16_i32 : i32
      %12 = tpu.assume_multiple %11, 16 : i32
      %13 = arith.index_cast %10 : i32 to index
      %c0_14 = arith.constant 0 : index
      %14 = vector.load %arg1[%13, %c0_14] : memref<2048x35xbf16, #tpu.memory_space<vmem>>, vector<1024x35xbf16>
      %cst_15 = arith.constant dense<0.000000e+00> : vector<1024x32xf32>
      %15 = tpu.matmul %14, %0, %cst_15 {dimension_numbers = #tpu.dot_dimension_numbers<[1], [0], [0], [1], [0, 0, 1, 1], [], []>} : vector<1024x35xbf16>, vector<35x32xbf16>, vector<1024x32xf32> -> vector<1024x32xf32>
      %16 = vector.broadcast %1 : vector<1x32xf32> to vector<1024x32xf32>
      %17 = arith.addf %15, %16 : vector<1024x32xf32>
      %cst_16 = arith.constant 0.000000e+00 : f32
      %18 = vector.broadcast %cst_16 : f32 to vector<1024x32xf32>
      %19 = arith.maximumf %17, %18 : vector<1024x32xf32>
      %20 = arith.truncf %19 : vector<1024x32xf32> to vector<1024x32xbf16>
      %cst_17 = arith.constant dense<0.000000e+00> : vector<1024x32xf32>
      %21 = tpu.matmul %20, %2, %cst_17 {dimension_numbers = #tpu.dot_dimension_numbers<[1], [0], [0], [1], [0, 0, 1, 1], [], []>} : vector<1024x32xbf16>, vector<32x32xbf16>, vector<1024x32xf32> -> vector<1024x32xf32>
      %22 = vector.broadcast %3 : vector<1x32xf32> to vector<1024x32xf32>
      %23 = arith.addf %21, %22 : vector<1024x32xf32>
      %cst_18 = arith.constant 0.000000e+00 : f32
      %24 = vector.broadcast %cst_18 : f32 to vector<1024x32xf32>
      %25 = arith.maximumf %23, %24 : vector<1024x32xf32>
      %26 = arith.truncf %25 : vector<1024x32xf32> to vector<1024x32xbf16>
      %cst_19 = arith.constant dense<0.000000e+00> : vector<1024x128xf32>
      %27 = tpu.matmul %26, %4, %cst_19 {dimension_numbers = #tpu.dot_dimension_numbers<[1], [0], [0], [1], [0, 0, 1, 1], [], []>} : vector<1024x32xbf16>, vector<32x128xbf16>, vector<1024x128xf32> -> vector<1024x128xf32>
      %28 = vector.broadcast %5 : vector<1x128xf32> to vector<1024x128xf32>
      %29 = arith.addf %27, %28 : vector<1024x128xf32>
      %30 = arith.index_cast %12 : i32 to index
      %c0_20 = arith.constant 0 : index
      %31 = vector.load %arg2[%30, %c0_20] : memref<32x64xf32, #tpu.memory_space<vmem>>, vector<16x64xf32>
      %32 = vector.shape_cast %29 : vector<1024x128xf32> to vector<16x64x128xf32>
      %33 = vector.shape_cast %31 : vector<16x64xf32> to vector<16x64x1xf32>
      %34 = vector.broadcast %33 : vector<16x64x1xf32> to vector<16x64x128xf32>
      %35 = arith.addf %32, %34 : vector<16x64x128xf32>
      %cst_21 = arith.constant dense<0xFF800000> : vector<16x128xf32>
      %36 = vector.multi_reduction <maximumf>, %35, %cst_21 [1] : vector<16x64x128xf32> to vector<16x128xf32>
      %37 = vector.broadcast %cst : f32 to vector<16x128xf32>
      %38 = arith.cmpf ogt, %36, %37 : vector<16x128xf32>
      %cst_22 = arith.constant 0.000000e+00 : f32
      %39 = vector.broadcast %cst_22 : f32 to vector<16x128xf32>
      %40 = arith.select %38, %36, %39 : vector<16x128xi1>, vector<16x128xf32>
      %41 = arith.index_cast %12 : i32 to index
      %c0_23 = arith.constant 0 : index
      %42 = vector.load %arg9[%41, %c0_23] : memref<32x128xf32, #tpu.memory_space<vmem>>, vector<16x128xf32>
      tpu.vector_store %arg9[%41, %c0_23], %40 {strides = array<i32>} : memref<32x128xf32, #tpu.memory_space<vmem>>, vector<16x128xf32>,
    }
    %c2_i32_11 = arith.constant 2 : i32
    return
  }
  func.func @transform_0(%arg0: i32) -> (i32, i32) {
    %c0_i32 = arith.constant 0 : i32
    %c0_i32_0 = arith.constant 0 : i32
    return %arg0, %c0_i32 : i32, i32
  }
  func.func @transform_1(%arg0: i32) -> (i32, i32) {
    %c0_i32 = arith.constant 0 : i32
    %c0_i32_0 = arith.constant 0 : i32
    return %arg0, %c0_i32 : i32, i32
  }
  func.func @transform_2(%arg0: i32) -> (i32, i32) {
    %c0_i32 = arith.constant 0 : i32
    %c0_i32_0 = arith.constant 0 : i32
    %c0_i32_1 = arith.constant 0 : i32
    return %c0_i32, %c0_i32_0 : i32, i32
  }
  func.func @transform_3(%arg0: i32) -> (i32, i32) {
    %c0_i32 = arith.constant 0 : i32
    %c0_i32_0 = arith.constant 0 : i32
    %c0_i32_1 = arith.constant 0 : i32
    return %c0_i32, %c0_i32_0 : i32, i32
  }
  func.func @transform_4(%arg0: i32) -> (i32, i32) {
    %c0_i32 = arith.constant 0 : i32
    %c0_i32_0 = arith.constant 0 : i32
    %c0_i32_1 = arith.constant 0 : i32
    return %c0_i32, %c0_i32_0 : i32, i32
  }
  func.func @transform_5(%arg0: i32) -> (i32, i32) {
    %c0_i32 = arith.constant 0 : i32
    %c0_i32_0 = arith.constant 0 : i32
    %c0_i32_1 = arith.constant 0 : i32
    return %c0_i32, %c0_i32_0 : i32, i32
  }
  func.func @transform_6(%arg0: i32) -> (i32, i32) {
    %c0_i32 = arith.constant 0 : i32
    %c0_i32_0 = arith.constant 0 : i32
    %c0_i32_1 = arith.constant 0 : i32
    return %c0_i32, %c0_i32_0 : i32, i32
  }
  func.func @transform_7(%arg0: i32) -> (i32, i32) {
    %c0_i32 = arith.constant 0 : i32
    %c0_i32_0 = arith.constant 0 : i32
    %c0_i32_1 = arith.constant 0 : i32
    return %c0_i32, %c0_i32_0 : i32, i32
  }
  func.func @transform_8(%arg0: i32) -> (i32, i32) {
    %c0_i32 = arith.constant 0 : i32
    %c0_i32_0 = arith.constant 0 : i32
    return %arg0, %c0_i32 : i32, i32
  }
}

module attributes {stable_mosaic.version = 11 : i64} {
  func.func @global_head_kernel(%arg0: i32, %arg1: memref<2x64x67xbf16, #tpu.memory_space<vmem>>, %arg2: memref<67x64xbf16, #tpu.memory_space<vmem>>, %arg3: memref<1x64xf32, #tpu.memory_space<vmem>>, %arg4: memref<64x128xbf16, #tpu.memory_space<vmem>>, %arg5: memref<1x128xf32, #tpu.memory_space<vmem>>, %arg6: memref<128x256xbf16, #tpu.memory_space<vmem>>, %arg7: memref<1x256xf32, #tpu.memory_space<vmem>>, %arg8: memref<256x128xbf16, #tpu.memory_space<vmem>>, %arg9: memref<1x128xf32, #tpu.memory_space<vmem>>, %arg10: memref<128x64xbf16, #tpu.memory_space<vmem>>, %arg11: memref<1x64xf32, #tpu.memory_space<vmem>>, %arg12: memref<64x128xbf16, #tpu.memory_space<vmem>>, %arg13: memref<1x128xf32, #tpu.memory_space<vmem>>, %arg14: memref<2x128xf32, #tpu.memory_space<vmem>>) attributes {dimension_semantics = [#tpu.dimension_semantics<parallel>], iteration_bounds = array<i64: 1>, scalar_prefetch = 0 : i64, scratch_operands = 0 : i64, tpu.core_type = #tpu.core_type<tc>, window_params = [{transform_indices = @transform_0, window_bounds = array<i64: 2, 64, 67>}, {pipeline_mode = #tpu.pipeline_mode<synchronous>, transform_indices = @transform_1, window_bounds = array<i64: 67, 64>}, {pipeline_mode = #tpu.pipeline_mode<synchronous>, transform_indices = @transform_2, window_bounds = array<i64: 1, 64>}, {pipeline_mode = #tpu.pipeline_mode<synchronous>, transform_indices = @transform_3, window_bounds = array<i64: 64, 128>}, {pipeline_mode = #tpu.pipeline_mode<synchronous>, transform_indices = @transform_4, window_bounds = array<i64: 1, 128>}, {pipeline_mode = #tpu.pipeline_mode<synchronous>, transform_indices = @transform_5, window_bounds = array<i64: 128, 256>}, {pipeline_mode = #tpu.pipeline_mode<synchronous>, transform_indices = @transform_6, window_bounds = array<i64: 1, 256>}, {pipeline_mode = #tpu.pipeline_mode<synchronous>, transform_indices = @transform_7, window_bounds = array<i64: 256, 128>}, {pipeline_mode = #tpu.pipeline_mode<synchronous>, transform_indices = @transform_8, window_bounds = array<i64: 1, 128>}, {pipeline_mode = #tpu.pipeline_mode<synchronous>, transform_indices = @transform_9, window_bounds = array<i64: 128, 64>}, {pipeline_mode = #tpu.pipeline_mode<synchronous>, transform_indices = @transform_10, window_bounds = array<i64: 1, 64>}, {pipeline_mode = #tpu.pipeline_mode<synchronous>, transform_indices = @transform_11, window_bounds = array<i64: 64, 128>}, {pipeline_mode = #tpu.pipeline_mode<synchronous>, transform_indices = @transform_12, window_bounds = array<i64: 1, 128>}, {transform_indices = @transform_13, window_bounds = array<i64: 2, 128>}]} {
    %c0 = arith.constant 0 : index
    %c0_0 = arith.constant 0 : index
    %c0_1 = arith.constant 0 : index
    %0 = vector.load %arg1[%c0, %c0_0, %c0_1] : memref<2x64x67xbf16, #tpu.memory_space<vmem>>, vector<2x64x67xbf16>
    %1 = vector.shape_cast %0 : vector<2x64x67xbf16> to vector<128x67xbf16>
    %c0_2 = arith.constant 0 : index
    %c0_3 = arith.constant 0 : index
    %2 = vector.load %arg2[%c0_2, %c0_3] : memref<67x64xbf16, #tpu.memory_space<vmem>>, vector<67x64xbf16>
    %cst = arith.constant dense<0.000000e+00> : vector<128x64xf32>
    %3 = tpu.matmul %1, %2, %cst {dimension_numbers = #tpu.dot_dimension_numbers<[1], [0], [0], [1], [0, 0, 1, 1], [], []>} : vector<128x67xbf16>, vector<67x64xbf16>, vector<128x64xf32> -> vector<128x64xf32>
    %c0_4 = arith.constant 0 : index
    %c0_5 = arith.constant 0 : index
    %4 = vector.load %arg3[%c0_4, %c0_5] : memref<1x64xf32, #tpu.memory_space<vmem>>, vector<1x64xf32>
    %5 = vector.broadcast %4 : vector<1x64xf32> to vector<128x64xf32>
    %6 = arith.addf %3, %5 : vector<128x64xf32>
    %cst_6 = arith.constant 0.000000e+00 : f32
    %7 = vector.broadcast %cst_6 : f32 to vector<128x64xf32>
    %8 = arith.maximumf %6, %7 : vector<128x64xf32>
    %9 = arith.truncf %8 : vector<128x64xf32> to vector<128x64xbf16>
    %c0_7 = arith.constant 0 : index
    %c0_8 = arith.constant 0 : index
    %10 = vector.load %arg4[%c0_7, %c0_8] : memref<64x128xbf16, #tpu.memory_space<vmem>>, vector<64x128xbf16>
    %cst_9 = arith.constant dense<0.000000e+00> : vector<128x128xf32>
    %11 = tpu.matmul %9, %10, %cst_9 {dimension_numbers = #tpu.dot_dimension_numbers<[1], [0], [0], [1], [0, 0, 1, 1], [], []>} : vector<128x64xbf16>, vector<64x128xbf16>, vector<128x128xf32> -> vector<128x128xf32>
    %c0_10 = arith.constant 0 : index
    %c0_11 = arith.constant 0 : index
    %12 = vector.load %arg5[%c0_10, %c0_11] : memref<1x128xf32, #tpu.memory_space<vmem>>, vector<1x128xf32>
    %13 = vector.broadcast %12 : vector<1x128xf32> to vector<128x128xf32>
    %14 = arith.addf %11, %13 : vector<128x128xf32>
    %cst_12 = arith.constant 0.000000e+00 : f32
    %15 = vector.broadcast %cst_12 : f32 to vector<128x128xf32>
    %16 = arith.maximumf %14, %15 : vector<128x128xf32>
    %17 = arith.truncf %16 : vector<128x128xf32> to vector<128x128xbf16>
    %c0_13 = arith.constant 0 : index
    %c0_14 = arith.constant 0 : index
    %18 = vector.load %arg6[%c0_13, %c0_14] : memref<128x256xbf16, #tpu.memory_space<vmem>>, vector<128x256xbf16>
    %cst_15 = arith.constant dense<0.000000e+00> : vector<128x256xf32>
    %19 = tpu.matmul %17, %18, %cst_15 {dimension_numbers = #tpu.dot_dimension_numbers<[1], [0], [0], [1], [0, 0, 1, 1], [], []>} : vector<128x128xbf16>, vector<128x256xbf16>, vector<128x256xf32> -> vector<128x256xf32>
    %c0_16 = arith.constant 0 : index
    %c0_17 = arith.constant 0 : index
    %20 = vector.load %arg7[%c0_16, %c0_17] : memref<1x256xf32, #tpu.memory_space<vmem>>, vector<1x256xf32>
    %21 = vector.broadcast %20 : vector<1x256xf32> to vector<128x256xf32>
    %22 = arith.addf %19, %21 : vector<128x256xf32>
    %23 = vector.shape_cast %22 : vector<128x256xf32> to vector<2x64x256xf32>
    %cst_18 = arith.constant dense<0xFF800000> : vector<2x256xf32>
    %24 = vector.multi_reduction <maximumf>, %23, %cst_18 [1] : vector<2x64x256xf32> to vector<2x256xf32>
    %25 = arith.truncf %24 : vector<2x256xf32> to vector<2x256xbf16>
    %c0_19 = arith.constant 0 : index
    %c0_20 = arith.constant 0 : index
    %26 = vector.load %arg8[%c0_19, %c0_20] : memref<256x128xbf16, #tpu.memory_space<vmem>>, vector<256x128xbf16>
    %cst_21 = arith.constant dense<0.000000e+00> : vector<2x128xf32>
    %27 = tpu.matmul %25, %26, %cst_21 {dimension_numbers = #tpu.dot_dimension_numbers<[1], [0], [0], [1], [0, 0, 1, 1], [], []>} : vector<2x256xbf16>, vector<256x128xbf16>, vector<2x128xf32> -> vector<2x128xf32>
    %c0_22 = arith.constant 0 : index
    %c0_23 = arith.constant 0 : index
    %28 = vector.load %arg9[%c0_22, %c0_23] : memref<1x128xf32, #tpu.memory_space<vmem>>, vector<1x128xf32>
    %29 = vector.broadcast %28 : vector<1x128xf32> to vector<2x128xf32>
    %30 = arith.addf %27, %29 : vector<2x128xf32>
    %cst_24 = arith.constant 0.000000e+00 : f32
    %31 = vector.broadcast %cst_24 : f32 to vector<2x128xf32>
    %32 = arith.maximumf %30, %31 : vector<2x128xf32>
    %33 = arith.truncf %32 : vector<2x128xf32> to vector<2x128xbf16>
    %c0_25 = arith.constant 0 : index
    %c0_26 = arith.constant 0 : index
    %34 = vector.load %arg10[%c0_25, %c0_26] : memref<128x64xbf16, #tpu.memory_space<vmem>>, vector<128x64xbf16>
    %cst_27 = arith.constant dense<0.000000e+00> : vector<2x64xf32>
    %35 = tpu.matmul %33, %34, %cst_27 {dimension_numbers = #tpu.dot_dimension_numbers<[1], [0], [0], [1], [0, 0, 1, 1], [], []>} : vector<2x128xbf16>, vector<128x64xbf16>, vector<2x64xf32> -> vector<2x64xf32>
    %c0_28 = arith.constant 0 : index
    %c0_29 = arith.constant 0 : index
    %36 = vector.load %arg11[%c0_28, %c0_29] : memref<1x64xf32, #tpu.memory_space<vmem>>, vector<1x64xf32>
    %37 = vector.broadcast %36 : vector<1x64xf32> to vector<2x64xf32>
    %38 = arith.addf %35, %37 : vector<2x64xf32>
    %cst_30 = arith.constant 0.000000e+00 : f32
    %39 = vector.broadcast %cst_30 : f32 to vector<2x64xf32>
    %40 = arith.maximumf %38, %39 : vector<2x64xf32>
    %41 = arith.truncf %40 : vector<2x64xf32> to vector<2x64xbf16>
    %c0_31 = arith.constant 0 : index
    %c0_32 = arith.constant 0 : index
    %42 = vector.load %arg12[%c0_31, %c0_32] : memref<64x128xbf16, #tpu.memory_space<vmem>>, vector<64x128xbf16>
    %cst_33 = arith.constant dense<0.000000e+00> : vector<2x128xf32>
    %43 = tpu.matmul %41, %42, %cst_33 {dimension_numbers = #tpu.dot_dimension_numbers<[1], [0], [0], [1], [0, 0, 1, 1], [], []>} : vector<2x64xbf16>, vector<64x128xbf16>, vector<2x128xf32> -> vector<2x128xf32>
    %c0_34 = arith.constant 0 : index
    %c0_35 = arith.constant 0 : index
    %44 = vector.load %arg13[%c0_34, %c0_35] : memref<1x128xf32, #tpu.memory_space<vmem>>, vector<1x128xf32>
    %45 = vector.broadcast %44 : vector<1x128xf32> to vector<2x128xf32>
    %46 = arith.addf %43, %45 : vector<2x128xf32>
    %47 = tpu.iota {dimensions = array<i32: 1>} : vector<2x128xi32>
    %c2_i32 = arith.constant 2 : i32
    %48 = vector.broadcast %c2_i32 : i32 to vector<2x128xi32>
    %49 = arith.cmpi slt, %47, %48 : vector<2x128xi32>
    %cst_36 = arith.constant -3.000000e+38 : f32
    %50 = vector.broadcast %cst_36 : f32 to vector<2x128xf32>
    %51 = arith.select %49, %46, %50 : vector<2x128xi1>, vector<2x128xf32>
    %cst_37 = arith.constant dense<0xFF800000> : vector<2xf32>
    %52 = vector.multi_reduction <maximumf>, %51, %cst_37 [1] : vector<2x128xf32> to vector<2xf32>
    %53 = vector.shape_cast %52 : vector<2xf32> to vector<2x1xf32>
    %54 = vector.broadcast %53 : vector<2x1xf32> to vector<2x128xf32>
    %55 = arith.subf %51, %54 : vector<2x128xf32>
    %56 = math.exp %55 : vector<2x128xf32>
    %cst_38 = arith.constant 0.000000e+00 : f32
    %57 = vector.broadcast %cst_38 : f32 to vector<2x128xf32>
    %58 = arith.select %49, %56, %57 : vector<2x128xi1>, vector<2x128xf32>
    %cst_39 = arith.constant dense<0.000000e+00> : vector<2xf32>
    %59 = vector.multi_reduction <add>, %58, %cst_39 [1] : vector<2x128xf32> to vector<2xf32>
    %60 = vector.shape_cast %59 : vector<2xf32> to vector<2x1xf32>
    %61 = math.log %60 : vector<2x1xf32>
    %62 = arith.addf %61, %53 : vector<2x1xf32>
    %63 = vector.broadcast %62 : vector<2x1xf32> to vector<2x128xf32>
    %64 = arith.subf %46, %63 : vector<2x128xf32>
    %cst_40 = arith.constant 0.000000e+00 : f32
    %65 = vector.broadcast %cst_40 : f32 to vector<2x128xf32>
    %66 = arith.select %49, %64, %65 : vector<2x128xi1>, vector<2x128xf32>
    %c0_41 = arith.constant 0 : index
    %c0_42 = arith.constant 0 : index
    %67 = vector.load %arg14[%c0_41, %c0_42] : memref<2x128xf32, #tpu.memory_space<vmem>>, vector<2x128xf32>
    tpu.vector_store %arg14[%c0_41, %c0_42], %66 {strides = array<i32>} : memref<2x128xf32, #tpu.memory_space<vmem>>, vector<2x128xf32>,
    return
  }
  func.func @transform_0(%arg0: i32) -> (i32, i32, i32) {
    %c0_i32 = arith.constant 0 : i32
    %c0_i32_0 = arith.constant 0 : i32
    %c0_i32_1 = arith.constant 0 : i32
    return %arg0, %c0_i32, %c0_i32_0 : i32, i32, i32
  }
  func.func @transform_1(%arg0: i32) -> (i32, i32) {
    %c0_i32 = arith.constant 0 : i32
    %c0_i32_0 = arith.constant 0 : i32
    %c0_i32_1 = arith.constant 0 : i32
    return %c0_i32, %c0_i32_0 : i32, i32
  }
  func.func @transform_2(%arg0: i32) -> (i32, i32) {
    %c0_i32 = arith.constant 0 : i32
    %c0_i32_0 = arith.constant 0 : i32
    %c0_i32_1 = arith.constant 0 : i32
    return %c0_i32, %c0_i32_0 : i32, i32
  }
  func.func @transform_3(%arg0: i32) -> (i32, i32) {
    %c0_i32 = arith.constant 0 : i32
    %c0_i32_0 = arith.constant 0 : i32
    %c0_i32_1 = arith.constant 0 : i32
    return %c0_i32, %c0_i32_0 : i32, i32
  }
  func.func @transform_4(%arg0: i32) -> (i32, i32) {
    %c0_i32 = arith.constant 0 : i32
    %c0_i32_0 = arith.constant 0 : i32
    %c0_i32_1 = arith.constant 0 : i32
    return %c0_i32, %c0_i32_0 : i32, i32
  }
  func.func @transform_5(%arg0: i32) -> (i32, i32) {
    %c0_i32 = arith.constant 0 : i32
    %c0_i32_0 = arith.constant 0 : i32
    %c0_i32_1 = arith.constant 0 : i32
    return %c0_i32, %c0_i32_0 : i32, i32
  }
  func.func @transform_6(%arg0: i32) -> (i32, i32) {
    %c0_i32 = arith.constant 0 : i32
    %c0_i32_0 = arith.constant 0 : i32
    %c0_i32_1 = arith.constant 0 : i32
    return %c0_i32, %c0_i32_0 : i32, i32
  }
  func.func @transform_7(%arg0: i32) -> (i32, i32) {
    %c0_i32 = arith.constant 0 : i32
    %c0_i32_0 = arith.constant 0 : i32
    %c0_i32_1 = arith.constant 0 : i32
    return %c0_i32, %c0_i32_0 : i32, i32
  }
  func.func @transform_8(%arg0: i32) -> (i32, i32) {
    %c0_i32 = arith.constant 0 : i32
    %c0_i32_0 = arith.constant 0 : i32
    %c0_i32_1 = arith.constant 0 : i32
    return %c0_i32, %c0_i32_0 : i32, i32
  }
  func.func @transform_9(%arg0: i32) -> (i32, i32) {
    %c0_i32 = arith.constant 0 : i32
    %c0_i32_0 = arith.constant 0 : i32
    %c0_i32_1 = arith.constant 0 : i32
    return %c0_i32, %c0_i32_0 : i32, i32
  }
  func.func @transform_10(%arg0: i32) -> (i32, i32) {
    %c0_i32 = arith.constant 0 : i32
    %c0_i32_0 = arith.constant 0 : i32
    %c0_i32_1 = arith.constant 0 : i32
    return %c0_i32, %c0_i32_0 : i32, i32
  }
  func.func @transform_11(%arg0: i32) -> (i32, i32) {
    %c0_i32 = arith.constant 0 : i32
    %c0_i32_0 = arith.constant 0 : i32
    %c0_i32_1 = arith.constant 0 : i32
    return %c0_i32, %c0_i32_0 : i32, i32
  }
  func.func @transform_12(%arg0: i32) -> (i32, i32) {
    %c0_i32 = arith.constant 0 : i32
    %c0_i32_0 = arith.constant 0 : i32
    %c0_i32_1 = arith.constant 0 : i32
    return %c0_i32, %c0_i32_0 : i32, i32
  }
  func.func @transform_13(%arg0: i32) -> (i32, i32) {
    %c0_i32 = arith.constant 0 : i32
    %c0_i32_0 = arith.constant 0 : i32
    return %arg0, %c0_i32 : i32, i32
  }
}

</mosaic_0001>

<llo_original>
// kernel: custom-call.8
$region0: #{custom-call.8}
  %s0 = inlined_call_operand.vmem [shape: f32[2,64], index: 0, kind: output, shape index: {}]

// kernel: net_forward.3
$region0: #{net_forward.3}
  #allocation0 [shape = 'u32[]', space=smem, size = 0x4, offset = 0x4, fixed_abs, tag = 'smem constant byte address 0x4 - core index']
  #allocation1 [shape = 'u32[72,128]{1,0:T(1,128)}', space=vmem, size = 0x9000, scoped, tag = 'internal scratch']
  %s0 = inlined_call_operand.vmem [shape: bf16[4096,3], index: 0, kind: input, shape index: {}]
  %s1 = inlined_call_operand.vmem [shape: f32[64,64], index: 1, kind: input, shape index: {}]
  %s2 = inlined_call_operand.vmem [shape: bf16[3,16], index: 2, kind: input, shape index: {}]
  %s3 = inlined_call_operand.vmem [shape: f32[1,16], index: 3, kind: input, shape index: {}]
  %s4 = inlined_call_operand.vmem [shape: bf16[16,16], index: 4, kind: input, shape index: {}]
  %s5 = inlined_call_operand.vmem [shape: f32[1,16], index: 5, kind: input, shape index: {}]
  %s6 = inlined_call_operand.vmem [shape: bf16[16,128], index: 6, kind: input, shape index: {}]
  %s7 = inlined_call_operand.vmem [shape: f32[1,128], index: 7, kind: input, shape index: {}]
  %s8 = inlined_call_operand.vmem [shape: f32[64,128], index: 8, kind: output, shape index: {}]
  %s9 = sld [smem:[#allocation0]]
  $region49: #{net_forward.3} parent=0
    _
  %s11 = ssub.s32 1, %s9
  %s12 = scalar_select 0, %s11, %s9
  // Predicated region
  $region2: #{net_forward.3} parent=0 // pred_check
    _
  $region3: #{net_forward.3} parent=0 // pred_check_branch
    %14 = sbr.rel (0) target = $region5
  $region4: #{net_forward.3} parent=0 // pred_region
    _
  $region5: #{net_forward.3} parent=0 // pred_fallthru
    _
  // Predicated region
  $region6: #{net_forward.3} parent=0 // pred_check
    _
  $region7: #{net_forward.3} parent=0 // pred_check_branch
    %16 = sbr.rel (0) target = $region9
  $region8: #{net_forward.3} parent=0 // pred_region
    _
  $region9: #{net_forward.3} parent=0 // pred_fallthru
    _
  // Predicated region
  $region10: #{net_forward.3} parent=0 // pred_check
    _
  $region11: #{net_forward.3} parent=0 // pred_check_branch
    %18 = sbr.rel (0) target = $region13
  $region12: #{net_forward.3} parent=0 // pred_region
    _
  $region13: #{net_forward.3} parent=0 // pred_fallthru
    _
  // Predicated region
  $region14: #{net_forward.3} parent=0 // pred_check
    _
  $region15: #{net_forward.3} parent=0 // pred_check_branch
    %20 = sbr.rel (0) target = $region17
  $region16: #{net_forward.3} parent=0 // pred_region
    _
  $region17: #{net_forward.3} parent=0 // pred_fallthru
    _
  // Predicated region
  $region18: #{net_forward.3} parent=0 // pred_check
    _
  $region19: #{net_forward.3} parent=0 // pred_check_branch
    %22 = sbr.rel (0) target = $region21
  $region20: #{net_forward.3} parent=0 // pred_region
    _
  $region21: #{net_forward.3} parent=0 // pred_fallthru
    _
  // Predicated region
  $region22: #{net_forward.3} parent=0 // pred_check
    _
  $region23: #{net_forward.3} parent=0 // pred_check_branch
    %24 = sbr.rel (0) target = $region25
  $region24: #{net_forward.3} parent=0 // pred_region
    _
  $region25: #{net_forward.3} parent=0 // pred_fallthru
    _
  // Predicated region
  $region26: #{net_forward.3} parent=0 // pred_check
    _
  $region27: #{net_forward.3} parent=0 // pred_check_branch
    %26 = sbr.rel (0) target = $region29
  $region28: #{net_forward.3} parent=0 // pred_region
    _
  $region29: #{net_forward.3} parent=0 // pred_fallthru
    _
  // Predicated region
  $region30: #{net_forward.3} parent=0 // pred_check
    _
  $region31: #{net_forward.3} parent=0 // pred_check_branch
    %28 = sbr.rel (0) target = $region33
  $region32: #{net_forward.3} parent=0 // pred_region
    _
  $region33: #{net_forward.3} parent=0 // pred_fallthru
    _
  %v30 = vld [vmem:[%s2] sm:$0x3]
  %v31 = vld [vmem:[%s3] sm:$0x1]
  %v32 = vld [vmem:[%s4] sm:$0xf]
  %v33 = vld [vmem:[%s4 + $0x4] sm:$0xf]
  %v34 = vld [vmem:[%s5] sm:$0x1]
  %v35 = vld [vmem:[%s6] sm:$0xf]
  %v36 = vld [vmem:[%s6 + $0x4] sm:$0xf]
  %v37 = vld [vmem:[%s7] sm:$0x1]
  loop: start=0, step=1, limit=4
  $region34: #{net_forward.3} parent=0 // loop_pre_header
    _
  $region35: #{net_forward.3} parent=0 // loop_header
    %s39 = sphi 0, %s43
    %p40 = scmp.ge.s32.totalorder %s39, 4
  $region36: #{net_forward.3} parent=0 // loop_header_branch
    %42 = sbr.rel (%p40) target = $region40
  $region37: #{net_forward.3} parent=0 // loop_body
    %s44 = smul.u32 %s39, 1024
    %s45 = smul.u32 %s39, 16
    %s46 = sshra.s32 %s44, 3
    %s47 = sand.u32 %s44, 7
    %s48 = smul.addr %s46, 4
    %s49 = scalar_lea.vmem %s0, %s48
    %v50 = vld [vmem:[%s49] sm:$0xf]
    %v51 = vld [vmem:[%s49 + $0x4] sm:$0xf]
    %v52 = vld [vmem:[%s49 + $0x8] sm:$0xf]
    %v53 = vld [vmem:[%s49 + $0xc] sm:$0xf]
    %v54 = vld [vmem:[%s49 + $0x10] sm:$0xf]
    %v55 = vld [vmem:[%s49 + $0x14] sm:$0xf]
    %v56 = vld [vmem:[%s49 + $0x18] sm:$0xf]
    %v57 = vld [vmem:[%s49 + $0x1c] sm:$0xf]
    %v58 = vld [vmem:[%s49 + $0x20] sm:$0xf]
    %v59 = vld [vmem:[%s49 + $0x24] sm:$0xf]
    %v60 = vld [vmem:[%s49 + $0x28] sm:$0xf]
    %v61 = vld [vmem:[%s49 + $0x2c] sm:$0xf]
    %v62 = vld [vmem:[%s49 + $0x30] sm:$0xf]
    %v63 = vld [vmem:[%s49 + $0x34] sm:$0xf]
    %v64 = vld [vmem:[%s49 + $0x38] sm:$0xf]
    %v65 = vld [vmem:[%s49 + $0x3c] sm:$0xf]
    %v66 = vld [vmem:[%s49 + $0x40] sm:$0xf]
    %v67 = vld [vmem:[%s49 + $0x44] sm:$0xf]
    %v68 = vld [vmem:[%s49 + $0x48] sm:$0xf]
    %v69 = vld [vmem:[%s49 + $0x4c] sm:$0xf]
    %v70 = vld [vmem:[%s49 + $0x50] sm:$0xf]
    %v71 = vld [vmem:[%s49 + $0x54] sm:$0xf]
    %v72 = vld [vmem:[%s49 + $0x58] sm:$0xf]
    %v73 = vld [vmem:[%s49 + $0x5c] sm:$0xf]
    %v74 = vld [vmem:[%s49 + $0x60] sm:$0xf]
    %v75 = vld [vmem:[%s49 + $0x64] sm:$0xf]
    %v76 = vld [vmem:[%s49 + $0x68] sm:$0xf]
    %v77 = vld [vmem:[%s49 + $0x6c] sm:$0xf]
    %v78 = vld [vmem:[%s49 + $0x70] sm:$0xf]
    %v79 = vld [vmem:[%s49 + $0x74] sm:$0xf]
    %v80 = vld [vmem:[%s49 + $0x78] sm:$0xf]
    %v81 = vld [vmem:[%s49 + $0x7c] sm:$0xf]
    %v82 = vld [vmem:[%s49 + $0x80] sm:$0xf]
    %v83 = vld [vmem:[%s49 + $0x84] sm:$0xf]
    %v84 = vld [vmem:[%s49 + $0x88] sm:$0xf]
    %v85 = vld [vmem:[%s49 + $0x8c] sm:$0xf]
    %v86 = vld [vmem:[%s49 + $0x90] sm:$0xf]
    %v87 = vld [vmem:[%s49 + $0x94] sm:$0xf]
    %v88 = vld [vmem:[%s49 + $0x98] sm:$0xf]
    %v89 = vld [vmem:[%s49 + $0x9c] sm:$0xf]
    %v90 = vld [vmem:[%s49 + $0xa0] sm:$0xf]
    %v91 = vld [vmem:[%s49 + $0xa4] sm:$0xf]
    %v92 = vld [vmem:[%s49 + $0xa8] sm:$0xf]
    %v93 = vld [vmem:[%s49 + $0xac] sm:$0xf]
    %v94 = vld [vmem:[%s49 + $0xb0] sm:$0xf]
    %v95 = vld [vmem:[%s49 + $0xb4] sm:$0xf]
    %v96 = vld [vmem:[%s49 + $0xb8] sm:$0xf]
    %v97 = vld [vmem:[%s49 + $0xbc] sm:$0xf]
    %v98 = vld [vmem:[%s49 + $0xc0] sm:$0xf]
    %v99 = vld [vmem:[%s49 + $0xc4] sm:$0xf]
    %v100 = vld [vmem:[%s49 + $0xc8] sm:$0xf]
    %v101 = vld [vmem:[%s49 + $0xcc] sm:$0xf]
    %v102 = vld [vmem:[%s49 + $0xd0] sm:$0xf]
    %v103 = vld [vmem:[%s49 + $0xd4] sm:$0xf]
    %v104 = vld [vmem:[%s49 + $0xd8] sm:$0xf]
    %v105 = vld [vmem:[%s49 + $0xdc] sm:$0xf]
    %v106 = vld [vmem:[%s49 + $0xe0] sm:$0xf]
    %v107 = vld [vmem:[%s49 + $0xe4] sm:$0xf]
    %v108 = vld [vmem:[%s49 + $0xe8] sm:$0xf]
    %v109 = vld [vmem:[%s49 + $0xec] sm:$0xf]
    %v110 = vld [vmem:[%s49 + $0xf0] sm:$0xf]
    %v111 = vld [vmem:[%s49 + $0xf4] sm:$0xf]
    %v112 = vld [vmem:[%s49 + $0xf8] sm:$0xf]
    %v113 = vld [vmem:[%s49 + $0xfc] sm:$0xf]
    %v114 = vld [vmem:[%s49 + $0x100] sm:$0xf]
    %v115 = vld [vmem:[%s49 + $0x104] sm:$0xf]
    %v116 = vld [vmem:[%s49 + $0x108] sm:$0xf]
    %v117 = vld [vmem:[%s49 + $0x10c] sm:$0xf]
    %v118 = vld [vmem:[%s49 + $0x110] sm:$0xf]
    %v119 = vld [vmem:[%s49 + $0x114] sm:$0xf]
    %v120 = vld [vmem:[%s49 + $0x118] sm:$0xf]
    %v121 = vld [vmem:[%s49 + $0x11c] sm:$0xf]
    %v122 = vld [vmem:[%s49 + $0x120] sm:$0xf]
    %v123 = vld [vmem:[%s49 + $0x124] sm:$0xf]
    %v124 = vld [vmem:[%s49 + $0x128] sm:$0xf]
    %v125 = vld [vmem:[%s49 + $0x12c] sm:$0xf]
    %v126 = vld [vmem:[%s49 + $0x130] sm:$0xf]
    %v127 = vld [vmem:[%s49 + $0x134] sm:$0xf]
    %v128 = vld [vmem:[%s49 + $0x138] sm:$0xf]
    %v129 = vld [vmem:[%s49 + $0x13c] sm:$0xf]
    %v130 = vld [vmem:[%s49 + $0x140] sm:$0xf]
    %v131 = vld [vmem:[%s49 + $0x144] sm:$0xf]
    %v132 = vld [vmem:[%s49 + $0x148] sm:$0xf]
    %v133 = vld [vmem:[%s49 + $0x14c] sm:$0xf]
    %v134 = vld [vmem:[%s49 + $0x150] sm:$0xf]
    %v135 = vld [vmem:[%s49 + $0x154] sm:$0xf]
    %v136 = vld [vmem:[%s49 + $0x158] sm:$0xf]
    %v137 = vld [vmem:[%s49 + $0x15c] sm:$0xf]
    %v138 = vld [vmem:[%s49 + $0x160] sm:$0xf]
    %v139 = vld [vmem:[%s49 + $0x164] sm:$0xf]
    %v140 = vld [vmem:[%s49 + $0x168] sm:$0xf]
    %v141 = vld [vmem:[%s49 + $0x16c] sm:$0xf]
    %v142 = vld [vmem:[%s49 + $0x170] sm:$0xf]
    %v143 = vld [vmem:[%s49 + $0x174] sm:$0xf]
    %v144 = vld [vmem:[%s49 + $0x178] sm:$0xf]
    %v145 = vld [vmem:[%s49 + $0x17c] sm:$0xf]
    %v146 = vld [vmem:[%s49 + $0x180] sm:$0xf]
    %v147 = vld [vmem:[%s49 + $0x184] sm:$0xf]
    %v148 = vld [vmem:[%s49 + $0x188] sm:$0xf]
    %v149 = vld [vmem:[%s49 + $0x18c] sm:$0xf]
    %v150 = vld [vmem:[%s49 + $0x190] sm:$0xf]
    %v151 = vld [vmem:[%s49 + $0x194] sm:$0xf]
    %v152 = vld [vmem:[%s49 + $0x198] sm:$0xf]
    %v153 = vld [vmem:[%s49 + $0x19c] sm:$0xf]
    %v154 = vld [vmem:[%s49 + $0x1a0] sm:$0xf]
    %v155 = vld [vmem:[%s49 + $0x1a4] sm:$0xf]
    %v156 = vld [vmem:[%s49 + $0x1a8] sm:$0xf]
    %v157 = vld [vmem:[%s49 + $0x1ac] sm:$0xf]
    %v158 = vld [vmem:[%s49 + $0x1b0] sm:$0xf]
    %v159 = vld [vmem:[%s49 + $0x1b4] sm:$0xf]
    %v160 = vld [vmem:[%s49 + $0x1b8] sm:$0xf]
    %v161 = vld [vmem:[%s49 + $0x1bc] sm:$0xf]
    %v162 = vld [vmem:[%s49 + $0x1c0] sm:$0xf]
    %v163 = vld [vmem:[%s49 + $0x1c4] sm:$0xf]
    %v164 = vld [vmem:[%s49 + $0x1c8] sm:$0xf]
    %v165 = vld [vmem:[%s49 + $0x1cc] sm:$0xf]
    %v166 = vld [vmem:[%s49 + $0x1d0] sm:$0xf]
    %v167 = vld [vmem:[%s49 + $0x1d4] sm:$0xf]
    %v168 = vld [vmem:[%s49 + $0x1d8] sm:$0xf]
    %v169 = vld [vmem:[%s49 + $0x1dc] sm:$0xf]
    %v170 = vld [vmem:[%s49 + $0x1e0] sm:$0xf]
    %v171 = vld [vmem:[%s49 + $0x1e4] sm:$0xf]
    %v172 = vld [vmem:[%s49 + $0x1e8] sm:$0xf]
    %v173 = vld [vmem:[%s49 + $0x1ec] sm:$0xf]
    %v174 = vld [vmem:[%s49 + $0x1f0] sm:$0xf]
    %v175 = vld [vmem:[%s49 + $0x1f4] sm:$0xf]
    %v176 = vld [vmem:[%s49 + $0x1f8] sm:$0xf]
    %v177 = vld [vmem:[%s49 + $0x1fc] sm:$0xf]
    %v179 = vperm.slane %v31, 0
    %v309 = vunpack.c.l.b16 %v50
    %v310 = vunpack.c.l.b16 %v51
    %v311 = vunpack.c.l.b16 %v52
    %v312 = vunpack.c.l.b16 %v53
    %v313 = vunpack.c.l.b16 %v54
    %v314 = vunpack.c.l.b16 %v55
    %v315 = vunpack.c.l.b16 %v56
    %v316 = vunpack.c.l.b16 %v57
    %v317 = vunpack.c.l.b16 %v58
    %v318 = vunpack.c.l.b16 %v59
    %v319 = vunpack.c.l.b16 %v60
    %v320 = vunpack.c.l.b16 %v61
    %v321 = vunpack.c.l.b16 %v62
    %v322 = vunpack.c.l.b16 %v63
    %v323 = vunpack.c.l.b16 %v64
    %v324 = vunpack.c.l.b16 %v65
    %v325 = vunpack.c.l.b16 %v66
    %v326 = vunpack.c.l.b16 %v67
    %v327 = vunpack.c.l.b16 %v68
    %v328 = vunpack.c.l.b16 %v69
    %v329 = vunpack.c.l.b16 %v70
    %v330 = vunpack.c.l.b16 %v71
    %v331 = vunpack.c.l.b16 %v72
    %v332 = vunpack.c.l.b16 %v73
    %v333 = vunpack.c.l.b16 %v74
    %v334 = vunpack.c.l.b16 %v75
    %v335 = vunpack.c.l.b16 %v76
    %v336 = vunpack.c.l.b16 %v77
    %v337 = vunpack.c.l.b16 %v78
    %v338 = vunpack.c.l.b16 %v79
    %v339 = vunpack.c.l.b16 %v80
    %v340 = vunpack.c.l.b16 %v81
    %v341 = vunpack.c.l.b16 %v82
    %v342 = vunpack.c.l.b16 %v83
    %v343 = vunpack.c.l.b16 %v84
    %v344 = vunpack.c.l.b16 %v85
    %v345 = vunpack.c.l.b16 %v86
    %v346 = vunpack.c.l.b16 %v87
    %v347 = vunpack.c.l.b16 %v88
    %v348 = vunpack.c.l.b16 %v89
    %v349 = vunpack.c.l.b16 %v90
    %v350 = vunpack.c.l.b16 %v91
    %v351 = vunpack.c.l.b16 %v92
    %v352 = vunpack.c.l.b16 %v93
    %v353 = vunpack.c.l.b16 %v94
    %v354 = vunpack.c.l.b16 %v95
    %v355 = vunpack.c.l.b16 %v96
    %v356 = vunpack.c.l.b16 %v97
    %v357 = vunpack.c.l.b16 %v98
    %v358 = vunpack.c.l.b16 %v99
    %v359 = vunpack.c.l.b16 %v100
    %v360 = vunpack.c.l.b16 %v101
    %v361 = vunpack.c.l.b16 %v102
    %v362 = vunpack.c.l.b16 %v103
    %v363 = vunpack.c.l.b16 %v104
    %v364 = vunpack.c.l.b16 %v105
    %v365 = vunpack.c.l.b16 %v106
    %v366 = vunpack.c.l.b16 %v107
    %v367 = vunpack.c.l.b16 %v108
    %v368 = vunpack.c.l.b16 %v109
    %v369 = vunpack.c.l.b16 %v110
    %v370 = vunpack.c.l.b16 %v111
    %v371 = vunpack.c.l.b16 %v112
    %v372 = vunpack.c.l.b16 %v113
    %v373 = vunpack.c.l.b16 %v114
    %v374 = vunpack.c.l.b16 %v115
    %v375 = vunpack.c.l.b16 %v116
    %v376 = vunpack.c.l.b16 %v117
    %v377 = vunpack.c.l.b16 %v118
    %v378 = vunpack.c.l.b16 %v119
    %v379 = vunpack.c.l.b16 %v120
    %v380 = vunpack.c.l.b16 %v121
    %v381 = vunpack.c.l.b16 %v122
    %v382 = vunpack.c.l.b16 %v123
    %v383 = vunpack.c.l.b16 %v124
    %v384 = vunpack.c.l.b16 %v125
    %v385 = vunpack.c.l.b16 %v126
    %v386 = vunpack.c.l.b16 %v127
    %v387 = vunpack.c.l.b16 %v128
    %v388 = vunpack.c.l.b16 %v129
    %v389 = vunpack.c.l.b16 %v130
    %v390 = vunpack.c.l.b16 %v131
    %v391 = vunpack.c.l.b16 %v132
    %v392 = vunpack.c.l.b16 %v133
    %v393 = vunpack.c.l.b16 %v134
    %v394 = vunpack.c.l.b16 %v135
    %v395 = vunpack.c.l.b16 %v136
    %v396 = vunpack.c.l.b16 %v137
    %v397 = vunpack.c.l.b16 %v138
    %v398 = vunpack.c.l.b16 %v139
    %v399 = vunpack.c.l.b16 %v140
    %v400 = vunpack.c.l.b16 %v141
    %v401 = vunpack.c.l.b16 %v142
    %v402 = vunpack.c.l.b16 %v143
    %v403 = vunpack.c.l.b16 %v144
    %v404 = vunpack.c.l.b16 %v145
    %v405 = vunpack.c.l.b16 %v146
    %v406 = vunpack.c.l.b16 %v147
    %v407 = vunpack.c.l.b16 %v148
    %v408 = vunpack.c.l.b16 %v149
    %v409 = vunpack.c.l.b16 %v150
    %v410 = vunpack.c.l.b16 %v151
    %v411 = vunpack.c.l.b16 %v152
    %v412 = vunpack.c.l.b16 %v153
    %v413 = vunpack.c.l.b16 %v154
    %v414 = vunpack.c.l.b16 %v155
    %v415 = vunpack.c.l.b16 %v156
    %v416 = vunpack.c.l.b16 %v157
    %v417 = vunpack.c.l.b16 %v158
    %v418 = vunpack.c.l.b16 %v159
    %v419 = vunpack.c.l.b16 %v160
    %v420 = vunpack.c.l.b16 %v161
    %v421 = vunpack.c.l.b16 %v162
    %v422 = vunpack.c.l.b16 %v163
    %v423 = vunpack.c.l.b16 %v164
    %v424 = vunpack.c.l.b16 %v165
    %v425 = vunpack.c.l.b16 %v166
    %v426 = vunpack.c.l.b16 %v167
    %v427 = vunpack.c.l.b16 %v168
    %v428 = vunpack.c.l.b16 %v169
    %v429 = vunpack.c.l.b16 %v170
    %v430 = vunpack.c.l.b16 %v171
    %v431 = vunpack.c.l.b16 %v172
    %v432 = vunpack.c.l.b16 %v173
    %v433 = vunpack.c.l.b16 %v174
    %v434 = vunpack.c.l.b16 %v175
    %v435 = vunpack.c.l.b16 %v176
    %v436 = vunpack.c.l.b16 %v177
    %v437 = vpack.c.b16 %v310, %v309
    %v438 = vpack.c.b16 %v312, %v311
    %v439 = vpack.c.b16 %v314, %v313
    %v440 = vpack.c.b16 %v316, %v315
    %v441 = vpack.c.b16 %v318, %v317
    %v442 = vpack.c.b16 %v320, %v319
    %v443 = vpack.c.b16 %v322, %v321
    %v444 = vpack.c.b16 %v324, %v323
    %v445 = vpack.c.b16 %v326, %v325
    %v446 = vpack.c.b16 %v328, %v327
    %v447 = vpack.c.b16 %v330, %v329
    %v448 = vpack.c.b16 %v332, %v331
    %v449 = vpack.c.b16 %v334, %v333
    %v450 = vpack.c.b16 %v336, %v335
    %v451 = vpack.c.b16 %v338, %v337
    %v452 = vpack.c.b16 %v340, %v339
    %v453 = vpack.c.b16 %v342, %v341
    %v454 = vpack.c.b16 %v344, %v343
    %v455 = vpack.c.b16 %v346, %v345
    %v456 = vpack.c.b16 %v348, %v347
    %v457 = vpack.c.b16 %v350, %v349
    %v458 = vpack.c.b16 %v352, %v351
    %v459 = vpack.c.b16 %v354, %v353
    %v460 = vpack.c.b16 %v356, %v355
    %v461 = vpack.c.b16 %v358, %v357
    %v462 = vpack.c.b16 %v360, %v359
    %v463 = vpack.c.b16 %v362, %v361
    %v464 = vpack.c.b16 %v364, %v363
    %v465 = vpack.c.b16 %v366, %v365
    %v466 = vpack.c.b16 %v368, %v367
    %v467 = vpack.c.b16 %v370, %v369
    %v468 = vpack.c.b16 %v372, %v371
    %v469 = vpack.c.b16 %v374, %v373
    %v470 = vpack.c.b16 %v376, %v375
    %v471 = vpack.c.b16 %v378, %v377
    %v472 = vpack.c.b16 %v380, %v379
    %v473 = vpack.c.b16 %v382, %v381
    %v474 = vpack.c.b16 %v384, %v383
    %v475 = vpack.c.b16 %v386, %v385
    %v476 = vpack.c.b16 %v388, %v387
    %v477 = vpack.c.b16 %v390, %v389
    %v478 = vpack.c.b16 %v392, %v391
    %v479 = vpack.c.b16 %v394, %v393
    %v480 = vpack.c.b16 %v396, %v395
    %v481 = vpack.c.b16 %v398, %v397
    %v482 = vpack.c.b16 %v400, %v399
    %v483 = vpack.c.b16 %v402, %v401
    %v484 = vpack.c.b16 %v404, %v403
    %v485 = vpack.c.b16 %v406, %v405
    %v486 = vpack.c.b16 %v408, %v407
    %v487 = vpack.c.b16 %v410, %v409
    %v488 = vpack.c.b16 %v412, %v411
    %v489 = vpack.c.b16 %v414, %v413
    %v490 = vpack.c.b16 %v416, %v415
    %v491 = vpack.c.b16 %v418, %v417
    %v492 = vpack.c.b16 %v420, %v419
    %v493 = vpack.c.b16 %v422, %v421
    %v494 = vpack.c.b16 %v424, %v423
    %v495 = vpack.c.b16 %v426, %v425
    %v496 = vpack.c.b16 %v428, %v427
    %v497 = vpack.c.b16 %v430, %v429
    %v498 = vpack.c.b16 %v432, %v431
    %v499 = vpack.c.b16 %v434, %v433
    %v500 = vpack.c.b16 %v436, %v435
    %vm501 = vcmask 23552
    %v503 = vsel %vm501, %v437, 0
    %v506 = vsel %vm501, %v438, 0
    %v509 = vsel %vm501, %v439, 0
    %v512 = vsel %vm501, %v440, 0
    %v515 = vsel %vm501, %v441, 0
    %v518 = vsel %vm501, %v442, 0
    %v521 = vsel %vm501, %v443, 0
    %v524 = vsel %vm501, %v444, 0
    %v527 = vsel %vm501, %v445, 0
    %v530 = vsel %vm501, %v446, 0
    %v533 = vsel %vm501, %v447, 0
    %v536 = vsel %vm501, %v448, 0
    %v539 = vsel %vm501, %v449, 0
    %v542 = vsel %vm501, %v450, 0
    %v545 = vsel %vm501, %v451, 0
    %v548 = vsel %vm501, %v452, 0
    %v551 = vsel %vm501, %v453, 0
    %v554 = vsel %vm501, %v454, 0
    %v557 = vsel %vm501, %v455, 0
    %v560 = vsel %vm501, %v456, 0
    %v563 = vsel %vm501, %v457, 0
    %v566 = vsel %vm501, %v458, 0
    %v569 = vsel %vm501, %v459, 0
    %v572 = vsel %vm501, %v460, 0
    %v575 = vsel %vm501, %v461, 0
    %v578 = vsel %vm501, %v462, 0
    %v581 = vsel %vm501, %v463, 0
    %v584 = vsel %vm501, %v464, 0
    %v587 = vsel %vm501, %v465, 0
    %v590 = vsel %vm501, %v466, 0
    %v593 = vsel %vm501, %v467, 0
    %v596 = vsel %vm501, %v468, 0
    %v599 = vsel %vm501, %v469, 0
    %v602 = vsel %vm501, %v470, 0
    %v605 = vsel %vm501, %v471, 0
    %v608 = vsel %vm501, %v472, 0
    %v611 = vsel %vm501, %v473, 0
    %v614 = vsel %vm501, %v474, 0
    %v617 = vsel %vm501, %v475, 0
    %v620 = vsel %vm501, %v476, 0
    %v623 = vsel %vm501, %v477, 0
    %v626 = vsel %vm501, %v478, 0
    %v629 = vsel %vm501, %v479, 0
    %v632 = vsel %vm501, %v480, 0
    %v635 = vsel %vm501, %v481, 0
    %v638 = vsel %vm501, %v482, 0
    %v641 = vsel %vm501, %v483, 0
    %v644 = vsel %vm501, %v484, 0
    %v647 = vsel %vm501, %v485, 0
    %v650 = vsel %vm501, %v486, 0
    %v653 = vsel %vm501, %v487, 0
    %v656 = vsel %vm501, %v488, 0
    %v659 = vsel %vm501, %v489, 0
    %v662 = vsel %vm501, %v490, 0
    %v665 = vsel %vm501, %v491, 0
    %v668 = vsel %vm501, %v492, 0
    %v671 = vsel %vm501, %v493, 0
    %v674 = vsel %vm501, %v494, 0
    %v677 = vsel %vm501, %v495, 0
    %v680 = vsel %vm501, %v496, 0
    %v683 = vsel %vm501, %v497, 0
    %v686 = vsel %vm501, %v498, 0
    %v689 = vsel %vm501, %v499, 0
    %v692 = vsel %vm501, %v500, 0
    %vm694 = vcmask 1040384
    %vm695 = vcmask 1041408
    %v696 = vsel %vm694, 4294967295, 65535
    %v697 = vsel %vm695, %v696, 0
    %v699 = vand.u32 %v30, %v697
    %701 = vmatpush.bf16.msra.mxu0 0
    %702 = vmatpush.bf16.msra.mxu0 0
    %703 = vmatpush.bf16.msra.mxu0 0
    %704 = vmatpush.bf16.msra.mxu0 0
    %705 = vmatpush.bf16.msra.mxu0 0
    %706 = vmatpush.bf16.msra.mxu0 0
    %707 = vmatpush.bf16.msra.mxu0 0
    %708 = vmatpush.bf16.msra.mxu0 %v699
    %709 = vmatmul.bf16.gmra.mxu0 %v503
    %v710 = vpop.f32.mrf.mxu0
    %v711 = vadd.f32 %v179, %v710
    %v712 = vpop.f32.mrf.mxu0
    %v713 = vadd.f32 %v179, %v712
    %714 = vmatmul.bf16.gmra.mxu0 %v506
    %v715 = vpop.f32.mrf.mxu0
    %v716 = vadd.f32 %v179, %v715
    %v717 = vpop.f32.mrf.mxu0
    %v718 = vadd.f32 %v179, %v717
    %719 = vmatmul.bf16.gmra.mxu0 %v509
    %v720 = vpop.f32.mrf.mxu0
    %v721 = vadd.f32 %v179, %v720
    %v722 = vpop.f32.mrf.mxu0
    %v723 = vadd.f32 %v179, %v722
    %724 = vmatmul.bf16.gmra.mxu0 %v512
    %v725 = vpop.f32.mrf.mxu0
    %v726 = vadd.f32 %v179, %v725
    %v727 = vpop.f32.mrf.mxu0
    %v728 = vadd.f32 %v179, %v727
    %729 = vmatmul.bf16.gmra.mxu0 %v515
    %v730 = vpop.f32.mrf.mxu0
    %v731 = vadd.f32 %v179, %v730
    %v732 = vpop.f32.mrf.mxu0
    %v733 = vadd.f32 %v179, %v732
    %734 = vmatmul.bf16.gmra.mxu0 %v518
    %v735 = vpop.f32.mrf.mxu0
    %v736 = vadd.f32 %v179, %v735
    %v737 = vpop.f32.mrf.mxu0
    %v738 = vadd.f32 %v179, %v737
    %739 = vmatmul.bf16.gmra.mxu0 %v521
    %v740 = vpop.f32.mrf.mxu0
    %v741 = vadd.f32 %v179, %v740
    %v742 = vpop.f32.mrf.mxu0
    %v743 = vadd.f32 %v179, %v742
    %744 = vmatmul.bf16.gmra.mxu0 %v524
    %v745 = vpop.f32.mrf.mxu0
    %v746 = vadd.f32 %v179, %v745
    %v747 = vpop.f32.mrf.mxu0
    %v748 = vadd.f32 %v179, %v747
    %749 = vmatmul.bf16.gmra.mxu0 %v527
    %v750 = vpop.f32.mrf.mxu0
    %v751 = vadd.f32 %v179, %v750
    %v752 = vpop.f32.mrf.mxu0
    %v753 = vadd.f32 %v179, %v752
    %754 = vmatmul.bf16.gmra.mxu0 %v530
    %v755 = vpop.f32.mrf.mxu0
    %v756 = vadd.f32 %v179, %v755
    %v757 = vpop.f32.mrf.mxu0
    %v758 = vadd.f32 %v179, %v757
    %759 = vmatmul.bf16.gmra.mxu0 %v533
    %v760 = vpop.f32.mrf.mxu0
    %v761 = vadd.f32 %v179, %v760
    %v762 = vpop.f32.mrf.mxu0
    %v763 = vadd.f32 %v179, %v762
    %764 = vmatmul.bf16.gmra.mxu0 %v536
    %v765 = vpop.f32.mrf.mxu0
    %v766 = vadd.f32 %v179, %v765
    %v767 = vpop.f32.mrf.mxu0
    %v768 = vadd.f32 %v179, %v767
    %769 = vmatmul.bf16.gmra.mxu0 %v539
    %v770 = vpop.f32.mrf.mxu0
    %v771 = vadd.f32 %v179, %v770
    %v772 = vpop.f32.mrf.mxu0
    %v773 = vadd.f32 %v179, %v772
    %774 = vmatmul.bf16.gmra.mxu0 %v542
    %v775 = vpop.f32.mrf.mxu0
    %v776 = vadd.f32 %v179, %v775
    %v777 = vpop.f32.mrf.mxu0
    %v778 = vadd.f32 %v179, %v777
    %779 = vmatmul.bf16.gmra.mxu0 %v545
    %v780 = vpop.f32.mrf.mxu0
    %v781 = vadd.f32 %v179, %v780
    %v782 = vpop.f32.mrf.mxu0
    %v783 = vadd.f32 %v179, %v782
    %784 = vmatmul.bf16.gmra.mxu0 %v548
    %v785 = vpop.f32.mrf.mxu0
    %v786 = vadd.f32 %v179, %v785
    %v787 = vpop.f32.mrf.mxu0
    %v788 = vadd.f32 %v179, %v787
    %789 = vmatmul.bf16.gmra.mxu0 %v551
    %v790 = vpop.f32.mrf.mxu0
    %v791 = vadd.f32 %v179, %v790
    %v792 = vpop.f32.mrf.mxu0
    %v793 = vadd.f32 %v179, %v792
    %794 = vmatmul.bf16.gmra.mxu0 %v554
    %v795 = vpop.f32.mrf.mxu0
    %v796 = vadd.f32 %v179, %v795
    %v797 = vpop.f32.mrf.mxu0
    %v798 = vadd.f32 %v179, %v797
    %799 = vmatmul.bf16.gmra.mxu0 %v557
    %v800 = vpop.f32.mrf.mxu0
    %v801 = vadd.f32 %v179, %v800
    %v802 = vpop.f32.mrf.mxu0
    %v803 = vadd.f32 %v179, %v802
    %804 = vmatmul.bf16.gmra.mxu0 %v560
    %v805 = vpop.f32.mrf.mxu0
    %v806 = vadd.f32 %v179, %v805
    %v807 = vpop.f32.mrf.mxu0
    %v808 = vadd.f32 %v179, %v807
    %809 = vmatmul.bf16.gmra.mxu0 %v563
    %v810 = vpop.f32.mrf.mxu0
    %v811 = vadd.f32 %v179, %v810
    %v812 = vpop.f32.mrf.mxu0
    %v813 = vadd.f32 %v179, %v812
    %814 = vmatmul.bf16.gmra.mxu0 %v566
    %v815 = vpop.f32.mrf.mxu0
    %v816 = vadd.f32 %v179, %v815
    %v817 = vpop.f32.mrf.mxu0
    %v818 = vadd.f32 %v179, %v817
    %819 = vmatmul.bf16.gmra.mxu0 %v569
    %v820 = vpop.f32.mrf.mxu0
    %v821 = vadd.f32 %v179, %v820
    %v822 = vpop.f32.mrf.mxu0
    %v823 = vadd.f32 %v179, %v822
    %824 = vmatmul.bf16.gmra.mxu0 %v572
    %v825 = vpop.f32.mrf.mxu0
    %v826 = vadd.f32 %v179, %v825
    %v827 = vpop.f32.mrf.mxu0
    %v828 = vadd.f32 %v179, %v827
    %829 = vmatmul.bf16.gmra.mxu0 %v575
    %v830 = vpop.f32.mrf.mxu0
    %v831 = vadd.f32 %v179, %v830
    %v832 = vpop.f32.mrf.mxu0
    %v833 = vadd.f32 %v179, %v832
    %834 = vmatmul.bf16.gmra.mxu0 %v578
    %v835 = vpop.f32.mrf.mxu0
    %v836 = vadd.f32 %v179, %v835
    %v837 = vpop.f32.mrf.mxu0
    %v838 = vadd.f32 %v179, %v837
    %839 = vmatmul.bf16.gmra.mxu0 %v581
    %v840 = vpop.f32.mrf.mxu0
    %v841 = vadd.f32 %v179, %v840
    %v842 = vpop.f32.mrf.mxu0
    %v843 = vadd.f32 %v179, %v842
    %844 = vmatmul.bf16.gmra.mxu0 %v584
    %v845 = vpop.f32.mrf.mxu0
    %v846 = vadd.f32 %v179, %v845
    %v847 = vpop.f32.mrf.mxu0
    %v848 = vadd.f32 %v179, %v847
    %849 = vmatmul.bf16.gmra.mxu0 %v587
    %v850 = vpop.f32.mrf.mxu0
    %v851 = vadd.f32 %v179, %v850
    %v852 = vpop.f32.mrf.mxu0
    %v853 = vadd.f32 %v179, %v852
    %854 = vmatmul.bf16.gmra.mxu0 %v590
    %v855 = vpop.f32.mrf.mxu0
    %v856 = vadd.f32 %v179, %v855
    %v857 = vpop.f32.mrf.mxu0
    %v858 = vadd.f32 %v179, %v857
    %859 = vmatmul.bf16.gmra.mxu0 %v593
    %v860 = vpop.f32.mrf.mxu0
    %v861 = vadd.f32 %v179, %v860
    %v862 = vpop.f32.mrf.mxu0
    %v863 = vadd.f32 %v179, %v862
    %864 = vmatmul.bf16.gmra.mxu0 %v596
    %v865 = vpop.f32.mrf.mxu0
    %v866 = vadd.f32 %v179, %v865
    %v867 = vpop.f32.mrf.mxu0
    %v868 = vadd.f32 %v179, %v867
    %869 = vmatmul.bf16.gmra.mxu0 %v599
    %v870 = vpop.f32.mrf.mxu0
    %v871 = vadd.f32 %v179, %v870
    %v872 = vpop.f32.mrf.mxu0
    %v873 = vadd.f32 %v179, %v872
    %874 = vmatmul.bf16.gmra.mxu0 %v602
    %v875 = vpop.f32.mrf.mxu0
    %v876 = vadd.f32 %v179, %v875
    %v877 = vpop.f32.mrf.mxu0
    %v878 = vadd.f32 %v179, %v877
    %879 = vmatmul.bf16.gmra.mxu0 %v605
    %v880 = vpop.f32.mrf.mxu0
    %v881 = vadd.f32 %v179, %v880
    %v882 = vpop.f32.mrf.mxu0
    %v883 = vadd.f32 %v179, %v882
    %884 = vmatmul.bf16.gmra.mxu0 %v608
    %v885 = vpop.f32.mrf.mxu0
    %v886 = vadd.f32 %v179, %v885
    %v887 = vpop.f32.mrf.mxu0
    %v888 = vadd.f32 %v179, %v887
    %889 = vmatmul.bf16.gmra.mxu0 %v611
    %v890 = vpop.f32.mrf.mxu0
    %v891 = vadd.f32 %v179, %v890
    %v892 = vpop.f32.mrf.mxu0
    %v893 = vadd.f32 %v179, %v892
    %894 = vmatmul.bf16.gmra.mxu0 %v614
    %v895 = vpop.f32.mrf.mxu0
    %v896 = vadd.f32 %v179, %v895
    %v897 = vpop.f32.mrf.mxu0
    %v898 = vadd.f32 %v179, %v897
    %899 = vmatmul.bf16.gmra.mxu0 %v617
    %v900 = vpop.f32.mrf.mxu0
    %v901 = vadd.f32 %v179, %v900
    %v902 = vpop.f32.mrf.mxu0
    %v903 = vadd.f32 %v179, %v902
    %904 = vmatmul.bf16.gmra.mxu0 %v620
    %v905 = vpop.f32.mrf.mxu0
    %v906 = vadd.f32 %v179, %v905
    %v907 = vpop.f32.mrf.mxu0
    %v908 = vadd.f32 %v179, %v907
    %909 = vmatmul.bf16.gmra.mxu0 %v623
    %v910 = vpop.f32.mrf.mxu0
    %v911 = vadd.f32 %v179, %v910
    %v912 = vpop.f32.mrf.mxu0
    %v913 = vadd.f32 %v179, %v912
    %914 = vmatmul.bf16.gmra.mxu0 %v626
    %v915 = vpop.f32.mrf.mxu0
    %v916 = vadd.f32 %v179, %v915
    %v917 = vpop.f32.mrf.mxu0
    %v918 = vadd.f32 %v179, %v917
    %919 = vmatmul.bf16.gmra.mxu0 %v629
    %v920 = vpop.f32.mrf.mxu0
    %v921 = vadd.f32 %v179, %v920
    %v922 = vpop.f32.mrf.mxu0
    %v923 = vadd.f32 %v179, %v922
    %924 = vmatmul.bf16.gmra.mxu0 %v632
    %v925 = vpop.f32.mrf.mxu0
    %v926 = vadd.f32 %v179, %v925
    %v927 = vpop.f32.mrf.mxu0
    %v928 = vadd.f32 %v179, %v927
    %929 = vmatmul.bf16.gmra.mxu0 %v635
    %v930 = vpop.f32.mrf.mxu0
    %v931 = vadd.f32 %v179, %v930
    %v932 = vpop.f32.mrf.mxu0
    %v933 = vadd.f32 %v179, %v932
    %934 = vmatmul.bf16.gmra.mxu0 %v638
    %v935 = vpop.f32.mrf.mxu0
    %v936 = vadd.f32 %v179, %v935
    %v937 = vpop.f32.mrf.mxu0
    %v938 = vadd.f32 %v179, %v937
    %939 = vmatmul.bf16.gmra.mxu0 %v641
    %v940 = vpop.f32.mrf.mxu0
    %v941 = vadd.f32 %v179, %v940
    %v942 = vpop.f32.mrf.mxu0
    %v943 = vadd.f32 %v179, %v942
    %944 = vmatmul.bf16.gmra.mxu0 %v644
    %v945 = vpop.f32.mrf.mxu0
    %v946 = vadd.f32 %v179, %v945
    %v947 = vpop.f32.mrf.mxu0
    %v948 = vadd.f32 %v179, %v947
    %949 = vmatmul.bf16.gmra.mxu0 %v647
    %v950 = vpop.f32.mrf.mxu0
    %v951 = vadd.f32 %v179, %v950
    %v952 = vpop.f32.mrf.mxu0
    %v953 = vadd.f32 %v179, %v952
    %954 = vmatmul.bf16.gmra.mxu0 %v650
    %v955 = vpop.f32.mrf.mxu0
    %v956 = vadd.f32 %v179, %v955
    %v957 = vpop.f32.mrf.mxu0
    %v958 = vadd.f32 %v179, %v957
    %959 = vmatmul.bf16.gmra.mxu0 %v653
    %v960 = vpop.f32.mrf.mxu0
    %v961 = vadd.f32 %v179, %v960
    %v962 = vpop.f32.mrf.mxu0
    %v963 = vadd.f32 %v179, %v962
    %964 = vmatmul.bf16.gmra.mxu0 %v656
    %v965 = vpop.f32.mrf.mxu0
    %v966 = vadd.f32 %v179, %v965
    %v967 = vpop.f32.mrf.mxu0
    %v968 = vadd.f32 %v179, %v967
    %969 = vmatmul.bf16.gmra.mxu0 %v659
    %v970 = vpop.f32.mrf.mxu0
    %v971 = vadd.f32 %v179, %v970
    %v972 = vpop.f32.mrf.mxu0
    %v973 = vadd.f32 %v179, %v972
    %974 = vmatmul.bf16.gmra.mxu0 %v662
    %v975 = vpop.f32.mrf.mxu0
    %v976 = vadd.f32 %v179, %v975
    %v977 = vpop.f32.mrf.mxu0
    %v978 = vadd.f32 %v179, %v977
    %979 = vmatmul.bf16.gmra.mxu0 %v665
    %v980 = vpop.f32.mrf.mxu0
    %v981 = vadd.f32 %v179, %v980
    %v982 = vpop.f32.mrf.mxu0
    %v983 = vadd.f32 %v179, %v982
    %984 = vmatmul.bf16.gmra.mxu0 %v668
    %v985 = vpop.f32.mrf.mxu0
    %v986 = vadd.f32 %v179, %v985
    %v987 = vpop.f32.mrf.mxu0
    %v988 = vadd.f32 %v179, %v987
    %989 = vmatmul.bf16.gmra.mxu0 %v671
    %v990 = vpop.f32.mrf.mxu0
    %v991 = vadd.f32 %v179, %v990
    %v992 = vpop.f32.mrf.mxu0
    %v993 = vadd.f32 %v179, %v992
    %994 = vmatmul.bf16.gmra.mxu0 %v674
    %v995 = vpop.f32.mrf.mxu0
    %v996 = vadd.f32 %v179, %v995
    %v997 = vpop.f32.mrf.mxu0
    %v998 = vadd.f32 %v179, %v997
    %999 = vmatmul.bf16.gmra.mxu0 %v677
    %v1000 = vpop.f32.mrf.mxu0
    %v1001 = vadd.f32 %v179, %v1000
    %v1002 = vpop.f32.mrf.mxu0
    %v1003 = vadd.f32 %v179, %v1002
    %1004 = vmatmul.bf16.gmra.mxu0 %v680
    %v1005 = vpop.f32.mrf.mxu0
    %v1006 = vadd.f32 %v179, %v1005
    %v1007 = vpop.f32.mrf.mxu0
    %v1008 = vadd.f32 %v179, %v1007
    %1009 = vmatmul.bf16.gmra.mxu0 %v683
    %v1010 = vpop.f32.mrf.mxu0
    %v1011 = vadd.f32 %v179, %v1010
    %v1012 = vpop.f32.mrf.mxu0
    %v1013 = vadd.f32 %v179, %v1012
    %1014 = vmatmul.bf16.gmra.mxu0 %v686
    %v1015 = vpop.f32.mrf.mxu0
    %v1016 = vadd.f32 %v179, %v1015
    %v1017 = vpop.f32.mrf.mxu0
    %v1018 = vadd.f32 %v179, %v1017
    %1019 = vmatmul.bf16.gmra.mxu0 %v689
    %v1020 = vpop.f32.mrf.mxu0
    %v1021 = vadd.f32 %v179, %v1020
    %v1022 = vpop.f32.mrf.mxu0
    %v1023 = vadd.f32 %v179, %v1022
    %1024 = vmatmul.bf16.gmra.mxu0 %v692
    %v1025 = vpop.f32.mrf.mxu0
    %v1026 = vadd.f32 %v179, %v1025
    %v1027 = vpop.f32.mrf.mxu0
    %v1028 = vadd.f32 %v179, %v1027
    %1029 = vdwg.mxu0
    %v1030 = vmax.f32 %v711, 0.0
    %v1031 = vmax.f32 %v713, 0.0
    %v1032 = vmax.f32 %v716, 0.0
    %v1033 = vmax.f32 %v718, 0.0
    %v1034 = vmax.f32 %v721, 0.0
    %v1035 = vmax.f32 %v723, 0.0
    %v1036 = vmax.f32 %v726, 0.0
    %v1037 = vmax.f32 %v728, 0.0
    %v1038 = vmax.f32 %v731, 0.0
    %v1039 = vmax.f32 %v733, 0.0
    %v1040 = vmax.f32 %v736, 0.0
    %v1041 = vmax.f32 %v738, 0.0
    %v1042 = vmax.f32 %v741, 0.0
    %v1043 = vmax.f32 %v743, 0.0
    %v1044 = vmax.f32 %v746, 0.0
    %v1045 = vmax.f32 %v748, 0.0
    %v1046 = vmax.f32 %v751, 0.0
    %v1047 = vmax.f32 %v753, 0.0
    %v1048 = vmax.f32 %v756, 0.0
    %v1049 = vmax.f32 %v758, 0.0
    %v1050 = vmax.f32 %v761, 0.0
    %v1051 = vmax.f32 %v763, 0.0
    %v1052 = vmax.f32 %v766, 0.0
    %v1053 = vmax.f32 %v768, 0.0
    %v1054 = vmax.f32 %v771, 0.0
    %v1055 = vmax.f32 %v773, 0.0
    %v1056 = vmax.f32 %v776, 0.0
    %v1057 = vmax.f32 %v778, 0.0
    %v1058 = vmax.f32 %v781, 0.0
    %v1059 = vmax.f32 %v783, 0.0
    %v1060 = vmax.f32 %v786, 0.0
    %v1061 = vmax.f32 %v788, 0.0
    %v1062 = vmax.f32 %v791, 0.0
    %v1063 = vmax.f32 %v793, 0.0
    %v1064 = vmax.f32 %v796, 0.0
    %v1065 = vmax.f32 %v798, 0.0
    %v1066 = vmax.f32 %v801, 0.0
    %v1067 = vmax.f32 %v803, 0.0
    %v1068 = vmax.f32 %v806, 0.0
    %v1069 = vmax.f32 %v808, 0.0
    %v1070 = vmax.f32 %v811, 0.0
    %v1071 = vmax.f32 %v813, 0.0
    %v1072 = vmax.f32 %v816, 0.0
    %v1073 = vmax.f32 %v818, 0.0
    %v1074 = vmax.f32 %v821, 0.0
    %v1075 = vmax.f32 %v823, 0.0
    %v1076 = vmax.f32 %v826, 0.0
    %v1077 = vmax.f32 %v828, 0.0
    %v1078 = vmax.f32 %v831, 0.0
    %v1079 = vmax.f32 %v833, 0.0
    %v1080 = vmax.f32 %v836, 0.0
    %v1081 = vmax.f32 %v838, 0.0
    %v1082 = vmax.f32 %v841, 0.0
    %v1083 = vmax.f32 %v843, 0.0
    %v1084 = vmax.f32 %v846, 0.0
    %v1085 = vmax.f32 %v848, 0.0
    %v1086 = vmax.f32 %v851, 0.0
    %v1087 = vmax.f32 %v853, 0.0
    %v1088 = vmax.f32 %v856, 0.0
    %v1089 = vmax.f32 %v858, 0.0
    %v1090 = vmax.f32 %v861, 0.0
    %v1091 = vmax.f32 %v863, 0.0
    %v1092 = vmax.f32 %v866, 0.0
    %v1093 = vmax.f32 %v868, 0.0
    %v1094 = vmax.f32 %v871, 0.0
    %v1095 = vmax.f32 %v873, 0.0
    %v1096 = vmax.f32 %v876, 0.0
    %v1097 = vmax.f32 %v878, 0.0
    %v1098 = vmax.f32 %v881, 0.0
    %v1099 = vmax.f32 %v883, 0.0
    %v1100 = vmax.f32 %v886, 0.0
    %v1101 = vmax.f32 %v888, 0.0
    %v1102 = vmax.f32 %v891, 0.0
    %v1103 = vmax.f32 %v893, 0.0
    %v1104 = vmax.f32 %v896, 0.0
    %v1105 = vmax.f32 %v898, 0.0
    %v1106 = vmax.f32 %v901, 0.0
    %v1107 = vmax.f32 %v903, 0.0
    %v1108 = vmax.f32 %v906, 0.0
    %v1109 = vmax.f32 %v908, 0.0
    %v1110 = vmax.f32 %v911, 0.0
    %v1111 = vmax.f32 %v913, 0.0
    %v1112 = vmax.f32 %v916, 0.0
    %v1113 = vmax.f32 %v918, 0.0
    %v1114 = vmax.f32 %v921, 0.0
    %v1115 = vmax.f32 %v923, 0.0
    %v1116 = vmax.f32 %v926, 0.0
    %v1117 = vmax.f32 %v928, 0.0
    %v1118 = vmax.f32 %v931, 0.0
    %v1119 = vmax.f32 %v933, 0.0
    %v1120 = vmax.f32 %v936, 0.0
    %v1121 = vmax.f32 %v938, 0.0
    %v1122 = vmax.f32 %v941, 0.0
    %v1123 = vmax.f32 %v943, 0.0
    %v1124 = vmax.f32 %v946, 0.0
    %v1125 = vmax.f32 %v948, 0.0
    %v1126 = vmax.f32 %v951, 0.0
    %v1127 = vmax.f32 %v953, 0.0
    %v1128 = vmax.f32 %v956, 0.0
    %v1129 = vmax.f32 %v958, 0.0
    %v1130 = vmax.f32 %v961, 0.0
    %v1131 = vmax.f32 %v963, 0.0
    %v1132 = vmax.f32 %v966, 0.0
    %v1133 = vmax.f32 %v968, 0.0
    %v1134 = vmax.f32 %v971, 0.0
    %v1135 = vmax.f32 %v973, 0.0
    %v1136 = vmax.f32 %v976, 0.0
    %v1137 = vmax.f32 %v978, 0.0
    %v1138 = vmax.f32 %v981, 0.0
    %v1139 = vmax.f32 %v983, 0.0
    %v1140 = vmax.f32 %v986, 0.0
    %v1141 = vmax.f32 %v988, 0.0
    %v1142 = vmax.f32 %v991, 0.0
    %v1143 = vmax.f32 %v993, 0.0
    %v1144 = vmax.f32 %v996, 0.0
    %v1145 = vmax.f32 %v998, 0.0
    %v1146 = vmax.f32 %v1001, 0.0
    %v1147 = vmax.f32 %v1003, 0.0
    %v1148 = vmax.f32 %v1006, 0.0
    %v1149 = vmax.f32 %v1008, 0.0
    %v1150 = vmax.f32 %v1011, 0.0
    %v1151 = vmax.f32 %v1013, 0.0
    %v1152 = vmax.f32 %v1016, 0.0
    %v1153 = vmax.f32 %v1018, 0.0
    %v1154 = vmax.f32 %v1021, 0.0
    %v1155 = vmax.f32 %v1023, 0.0
    %v1156 = vmax.f32 %v1026, 0.0
    %v1157 = vmax.f32 %v1028, 0.0
    %v1158 = vpack.c.bf16 %v1031, %v1030
    %v1159 = vpack.c.bf16 %v1033, %v1032
    %v1160 = vpack.c.bf16 %v1035, %v1034
    %v1161 = vpack.c.bf16 %v1037, %v1036
    %v1162 = vpack.c.bf16 %v1039, %v1038
    %v1163 = vpack.c.bf16 %v1041, %v1040
    %v1164 = vpack.c.bf16 %v1043, %v1042
    %v1165 = vpack.c.bf16 %v1045, %v1044
    %v1166 = vpack.c.bf16 %v1047, %v1046
    %v1167 = vpack.c.bf16 %v1049, %v1048
    %v1168 = vpack.c.bf16 %v1051, %v1050
    %v1169 = vpack.c.bf16 %v1053, %v1052
    %v1170 = vpack.c.bf16 %v1055, %v1054
    %v1171 = vpack.c.bf16 %v1057, %v1056
    %v1172 = vpack.c.bf16 %v1059, %v1058
    %v1173 = vpack.c.bf16 %v1061, %v1060
    %v1174 = vpack.c.bf16 %v1063, %v1062
    %v1175 = vpack.c.bf16 %v1065, %v1064
    %v1176 = vpack.c.bf16 %v1067, %v1066
    %v1177 = vpack.c.bf16 %v1069, %v1068
    %v1178 = vpack.c.bf16 %v1071, %v1070
    %v1179 = vpack.c.bf16 %v1073, %v1072
    %v1180 = vpack.c.bf16 %v1075, %v1074
    %v1181 = vpack.c.bf16 %v1077, %v1076
    %v1182 = vpack.c.bf16 %v1079, %v1078
    %v1183 = vpack.c.bf16 %v1081, %v1080
    %v1184 = vpack.c.bf16 %v1083, %v1082
    %v1185 = vpack.c.bf16 %v1085, %v1084
    %v1186 = vpack.c.bf16 %v1087, %v1086
    %v1187 = vpack.c.bf16 %v1089, %v1088
    %v1188 = vpack.c.bf16 %v1091, %v1090
    %v1189 = vpack.c.bf16 %v1093, %v1092
    %v1190 = vpack.c.bf16 %v1095, %v1094
    %v1191 = vpack.c.bf16 %v1097, %v1096
    %v1192 = vpack.c.bf16 %v1099, %v1098
    %v1193 = vpack.c.bf16 %v1101, %v1100
    %v1194 = vpack.c.bf16 %v1103, %v1102
    %v1195 = vpack.c.bf16 %v1105, %v1104
    %v1196 = vpack.c.bf16 %v1107, %v1106
    %v1197 = vpack.c.bf16 %v1109, %v1108
    %v1198 = vpack.c.bf16 %v1111, %v1110
    %v1199 = vpack.c.bf16 %v1113, %v1112
    %v1200 = vpack.c.bf16 %v1115, %v1114
    %v1201 = vpack.c.bf16 %v1117, %v1116
    %v1202 = vpack.c.bf16 %v1119, %v1118
    %v1203 = vpack.c.bf16 %v1121, %v1120
    %v1204 = vpack.c.bf16 %v1123, %v1122
    %v1205 = vpack.c.bf16 %v1125, %v1124
    %v1206 = vpack.c.bf16 %v1127, %v1126
    %v1207 = vpack.c.bf16 %v1129, %v1128
    %v1208 = vpack.c.bf16 %v1131, %v1130
    %v1209 = vpack.c.bf16 %v1133, %v1132
    %v1210 = vpack.c.bf16 %v1135, %v1134
    %v1211 = vpack.c.bf16 %v1137, %v1136
    %v1212 = vpack.c.bf16 %v1139, %v1138
    %v1213 = vpack.c.bf16 %v1141, %v1140
    %v1214 = vpack.c.bf16 %v1143, %v1142
    %v1215 = vpack.c.bf16 %v1145, %v1144
    %v1216 = vpack.c.bf16 %v1147, %v1146
    %v1217 = vpack.c.bf16 %v1149, %v1148
    %v1218 = vpack.c.bf16 %v1151, %v1150
    %v1219 = vpack.c.bf16 %v1153, %v1152
    %v1220 = vpack.c.bf16 %v1155, %v1154
    %v1221 = vpack.c.bf16 %v1157, %v1156
    %v1223 = vperm.slane %v34, 0
    %v1227 = vunpack.c.l.b16 %v32
    %v1228 = vunpack.c.l.b16 %v33
    %v1229 = vpack.c.b16 %v1228, %v1227
    %vm1231 = vcmask 130048
    %v1233 = vsel %vm1231, %v1158, 0
    %v1236 = vsel %vm1231, %v1159, 0
    %v1239 = vsel %vm1231, %v1160, 0
    %v1242 = vsel %vm1231, %v1161, 0
    %v1245 = vsel %vm1231, %v1162, 0
    %v1248 = vsel %vm1231, %v1163, 0
    %v1251 = vsel %vm1231, %v1164, 0
    %v1254 = vsel %vm1231, %v1165, 0
    %v1257 = vsel %vm1231, %v1166, 0
    %v1260 = vsel %vm1231, %v1167, 0
    %v1263 = vsel %vm1231, %v1168, 0
    %v1266 = vsel %vm1231, %v1169, 0
    %v1269 = vsel %vm1231, %v1170, 0
    %v1272 = vsel %vm1231, %v1171, 0
    %v1275 = vsel %vm1231, %v1172, 0
    %v1278 = vsel %vm1231, %v1173, 0
    %v1281 = vsel %vm1231, %v1174, 0
    %v1284 = vsel %vm1231, %v1175, 0
    %v1287 = vsel %vm1231, %v1176, 0
    %v1290 = vsel %vm1231, %v1177, 0
    %v1293 = vsel %vm1231, %v1178, 0
    %v1296 = vsel %vm1231, %v1179, 0
    %v1299 = vsel %vm1231, %v1180, 0
    %v1302 = vsel %vm1231, %v1181, 0
    %v1305 = vsel %vm1231, %v1182, 0
    %v1308 = vsel %vm1231, %v1183, 0
    %v1311 = vsel %vm1231, %v1184, 0
    %v1314 = vsel %vm1231, %v1185, 0
    %v1317 = vsel %vm1231, %v1186, 0
    %v1320 = vsel %vm1231, %v1187, 0
    %v1323 = vsel %vm1231, %v1188, 0
    %v1326 = vsel %vm1231, %v1189, 0
    %v1329 = vsel %vm1231, %v1190, 0
    %v1332 = vsel %vm1231, %v1191, 0
    %v1335 = vsel %vm1231, %v1192, 0
    %v1338 = vsel %vm1231, %v1193, 0
    %v1341 = vsel %vm1231, %v1194, 0
    %v1344 = vsel %vm1231, %v1195, 0
    %v1347 = vsel %vm1231, %v1196, 0
    %v1350 = vsel %vm1231, %v1197, 0
    %v1353 = vsel %vm1231, %v1198, 0
    %v1356 = vsel %vm1231, %v1199, 0
    %v1359 = vsel %vm1231, %v1200, 0
    %v1362 = vsel %vm1231, %v1201, 0
    %v1365 = vsel %vm1231, %v1202, 0
    %v1368 = vsel %vm1231, %v1203, 0
    %v1371 = vsel %vm1231, %v1204, 0
    %v1374 = vsel %vm1231, %v1205, 0
    %v1377 = vsel %vm1231, %v1206, 0
    %v1380 = vsel %vm1231, %v1207, 0
    %v1383 = vsel %vm1231, %v1208, 0
    %v1386 = vsel %vm1231, %v1209, 0
    %v1389 = vsel %vm1231, %v1210, 0
    %v1392 = vsel %vm1231, %v1211, 0
    %v1395 = vsel %vm1231, %v1212, 0
    %v1398 = vsel %vm1231, %v1213, 0
    %v1401 = vsel %vm1231, %v1214, 0
    %v1404 = vsel %vm1231, %v1215, 0
    %v1407 = vsel %vm1231, %v1216, 0
    %v1410 = vsel %vm1231, %v1217, 0
    %v1413 = vsel %vm1231, %v1218, 0
    %v1416 = vsel %vm1231, %v1219, 0
    %v1419 = vsel %vm1231, %v1220, 0
    %v1422 = vsel %vm1231, %v1221, 0
    %1424 = vmatpush.bf16.msra.mxu0 0
    %1425 = vmatpush.bf16.msra.mxu0 0
    %1426 = vmatpush.bf16.msra.mxu0 0
    %1427 = vmatpush.bf16.msra.mxu0 0
    %1428 = vmatpush.bf16.msra.mxu0 0
    %1429 = vmatpush.bf16.msra.mxu0 0
    %1430 = vmatpush.bf16.msra.mxu0 0
    %1431 = vmatpush.bf16.msra.mxu0 %v1229
    %1432 = vmatmul.bf16.gmra.mxu0 %v1233
    %v1433 = vpop.f32.mrf.mxu0
    %v1434 = vadd.f32 %v1223, %v1433
    %v1435 = vpop.f32.mrf.mxu0
    %v1436 = vadd.f32 %v1223, %v1435
    %1437 = vmatmul.bf16.gmra.mxu0 %v1236
    %v1438 = vpop.f32.mrf.mxu0
    %v1439 = vadd.f32 %v1223, %v1438
    %v1440 = vpop.f32.mrf.mxu0
    %v1441 = vadd.f32 %v1223, %v1440
    %1442 = vmatmul.bf16.gmra.mxu0 %v1239
    %v1443 = vpop.f32.mrf.mxu0
    %v1444 = vadd.f32 %v1223, %v1443
    %v1445 = vpop.f32.mrf.mxu0
    %v1446 = vadd.f32 %v1223, %v1445
    %1447 = vmatmul.bf16.gmra.mxu0 %v1242
    %v1448 = vpop.f32.mrf.mxu0
    %v1449 = vadd.f32 %v1223, %v1448
    %v1450 = vpop.f32.mrf.mxu0
    %v1451 = vadd.f32 %v1223, %v1450
    %1452 = vmatmul.bf16.gmra.mxu0 %v1245
    %v1453 = vpop.f32.mrf.mxu0
    %v1454 = vadd.f32 %v1223, %v1453
    %v1455 = vpop.f32.mrf.mxu0
    %v1456 = vadd.f32 %v1223, %v1455
    %1457 = vmatmul.bf16.gmra.mxu0 %v1248
    %v1458 = vpop.f32.mrf.mxu0
    %v1459 = vadd.f32 %v1223, %v1458
    %v1460 = vpop.f32.mrf.mxu0
    %v1461 = vadd.f32 %v1223, %v1460
    %1462 = vmatmul.bf16.gmra.mxu0 %v1251
    %v1463 = vpop.f32.mrf.mxu0
    %v1464 = vadd.f32 %v1223, %v1463
    %v1465 = vpop.f32.mrf.mxu0
    %v1466 = vadd.f32 %v1223, %v1465
    %1467 = vmatmul.bf16.gmra.mxu0 %v1254
    %v1468 = vpop.f32.mrf.mxu0
    %v1469 = vadd.f32 %v1223, %v1468
    %v1470 = vpop.f32.mrf.mxu0
    %v1471 = vadd.f32 %v1223, %v1470
    %1472 = vmatmul.bf16.gmra.mxu0 %v1257
    %v1473 = vpop.f32.mrf.mxu0
    %v1474 = vadd.f32 %v1223, %v1473
    %v1475 = vpop.f32.mrf.mxu0
    %v1476 = vadd.f32 %v1223, %v1475
    %1477 = vmatmul.bf16.gmra.mxu0 %v1260
    %v1478 = vpop.f32.mrf.mxu0
    %v1479 = vadd.f32 %v1223, %v1478
    %v1480 = vpop.f32.mrf.mxu0
    %v1481 = vadd.f32 %v1223, %v1480
    %1482 = vmatmul.bf16.gmra.mxu0 %v1263
    %v1483 = vpop.f32.mrf.mxu0
    %v1484 = vadd.f32 %v1223, %v1483
    %v1485 = vpop.f32.mrf.mxu0
    %v1486 = vadd.f32 %v1223, %v1485
    %1487 = vmatmul.bf16.gmra.mxu0 %v1266
    %v1488 = vpop.f32.mrf.mxu0
    %v1489 = vadd.f32 %v1223, %v1488
    %v1490 = vpop.f32.mrf.mxu0
    %v1491 = vadd.f32 %v1223, %v1490
    %1492 = vmatmul.bf16.gmra.mxu0 %v1269
    %v1493 = vpop.f32.mrf.mxu0
    %v1494 = vadd.f32 %v1223, %v1493
    %v1495 = vpop.f32.mrf.mxu0
    %v1496 = vadd.f32 %v1223, %v1495
    %1497 = vmatmul.bf16.gmra.mxu0 %v1272
    %v1498 = vpop.f32.mrf.mxu0
    %v1499 = vadd.f32 %v1223, %v1498
    %v1500 = vpop.f32.mrf.mxu0
    %v1501 = vadd.f32 %v1223, %v1500
    %1502 = vmatmul.bf16.gmra.mxu0 %v1275
    %v1503 = vpop.f32.mrf.mxu0
    %v1504 = vadd.f32 %v1223, %v1503
    %v1505 = vpop.f32.mrf.mxu0
    %v1506 = vadd.f32 %v1223, %v1505
    %1507 = vmatmul.bf16.gmra.mxu0 %v1278
    %v1508 = vpop.f32.mrf.mxu0
    %v1509 = vadd.f32 %v1223, %v1508
    %v1510 = vpop.f32.mrf.mxu0
    %v1511 = vadd.f32 %v1223, %v1510
    %1512 = vmatmul.bf16.gmra.mxu0 %v1281
    %v1513 = vpop.f32.mrf.mxu0
    %v1514 = vadd.f32 %v1223, %v1513
    %v1515 = vpop.f32.mrf.mxu0
    %v1516 = vadd.f32 %v1223, %v1515
    %1517 = vmatmul.bf16.gmra.mxu0 %v1284
    %v1518 = vpop.f32.mrf.mxu0
    %v1519 = vadd.f32 %v1223, %v1518
    %v1520 = vpop.f32.mrf.mxu0
    %v1521 = vadd.f32 %v1223, %v1520
    %1522 = vmatmul.bf16.gmra.mxu0 %v1287
    %v1523 = vpop.f32.mrf.mxu0
    %v1524 = vadd.f32 %v1223, %v1523
    %v1525 = vpop.f32.mrf.mxu0
    %v1526 = vadd.f32 %v1223, %v1525
    %1527 = vmatmul.bf16.gmra.mxu0 %v1290
    %v1528 = vpop.f32.mrf.mxu0
    %v1529 = vadd.f32 %v1223, %v1528
    %v1530 = vpop.f32.mrf.mxu0
    %v1531 = vadd.f32 %v1223, %v1530
    %1532 = vmatmul.bf16.gmra.mxu0 %v1293
    %v1533 = vpop.f32.mrf.mxu0
    %v1534 = vadd.f32 %v1223, %v1533
    %v1535 = vpop.f32.mrf.mxu0
    %v1536 = vadd.f32 %v1223, %v1535
    %1537 = vmatmul.bf16.gmra.mxu0 %v1296
    %v1538 = vpop.f32.mrf.mxu0
    %v1539 = vadd.f32 %v1223, %v1538
    %v1540 = vpop.f32.mrf.mxu0
    %v1541 = vadd.f32 %v1223, %v1540
    %1542 = vmatmul.bf16.gmra.mxu0 %v1299
    %v1543 = vpop.f32.mrf.mxu0
    %v1544 = vadd.f32 %v1223, %v1543
    %v1545 = vpop.f32.mrf.mxu0
    %v1546 = vadd.f32 %v1223, %v1545
    %1547 = vmatmul.bf16.gmra.mxu0 %v1302
    %v1548 = vpop.f32.mrf.mxu0
    %v1549 = vadd.f32 %v1223, %v1548
    %v1550 = vpop.f32.mrf.mxu0
    %v1551 = vadd.f32 %v1223, %v1550
    %1552 = vmatmul.bf16.gmra.mxu0 %v1305
    %v1553 = vpop.f32.mrf.mxu0
    %v1554 = vadd.f32 %v1223, %v1553
    %v1555 = vpop.f32.mrf.mxu0
    %v1556 = vadd.f32 %v1223, %v1555
    %1557 = vmatmul.bf16.gmra.mxu0 %v1308
    %v1558 = vpop.f32.mrf.mxu0
    %v1559 = vadd.f32 %v1223, %v1558
    %v1560 = vpop.f32.mrf.mxu0
    %v1561 = vadd.f32 %v1223, %v1560
    %1562 = vmatmul.bf16.gmra.mxu0 %v1311
    %v1563 = vpop.f32.mrf.mxu0
    %v1564 = vadd.f32 %v1223, %v1563
    %v1565 = vpop.f32.mrf.mxu0
    %v1566 = vadd.f32 %v1223, %v1565
    %1567 = vmatmul.bf16.gmra.mxu0 %v1314
    %v1568 = vpop.f32.mrf.mxu0
    %v1569 = vadd.f32 %v1223, %v1568
    %v1570 = vpop.f32.mrf.mxu0
    %v1571 = vadd.f32 %v1223, %v1570
    %1572 = vmatmul.bf16.gmra.mxu0 %v1317
    %v1573 = vpop.f32.mrf.mxu0
    %v1574 = vadd.f32 %v1223, %v1573
    %v1575 = vpop.f32.mrf.mxu0
    %v1576 = vadd.f32 %v1223, %v1575
    %1577 = vmatmul.bf16.gmra.mxu0 %v1320
    %v1578 = vpop.f32.mrf.mxu0
    %v1579 = vadd.f32 %v1223, %v1578
    %v1580 = vpop.f32.mrf.mxu0
    %v1581 = vadd.f32 %v1223, %v1580
    %1582 = vmatmul.bf16.gmra.mxu0 %v1323
    %v1583 = vpop.f32.mrf.mxu0
    %v1584 = vadd.f32 %v1223, %v1583
    %v1585 = vpop.f32.mrf.mxu0
    %v1586 = vadd.f32 %v1223, %v1585
    %1587 = vmatmul.bf16.gmra.mxu0 %v1326
    %v1588 = vpop.f32.mrf.mxu0
    %v1589 = vadd.f32 %v1223, %v1588
    %v1590 = vpop.f32.mrf.mxu0
    %v1591 = vadd.f32 %v1223, %v1590
    %1592 = vmatmul.bf16.gmra.mxu0 %v1329
    %v1593 = vpop.f32.mrf.mxu0
    %v1594 = vadd.f32 %v1223, %v1593
    %v1595 = vpop.f32.mrf.mxu0
    %v1596 = vadd.f32 %v1223, %v1595
    %1597 = vmatmul.bf16.gmra.mxu0 %v1332
    %v1598 = vpop.f32.mrf.mxu0
    %v1599 = vadd.f32 %v1223, %v1598
    %v1600 = vpop.f32.mrf.mxu0
    %v1601 = vadd.f32 %v1223, %v1600
    %1602 = vmatmul.bf16.gmra.mxu0 %v1335
    %v1603 = vpop.f32.mrf.mxu0
    %v1604 = vadd.f32 %v1223, %v1603
    %v1605 = vpop.f32.mrf.mxu0
    %v1606 = vadd.f32 %v1223, %v1605
    %1607 = vmatmul.bf16.gmra.mxu0 %v1338
    %v1608 = vpop.f32.mrf.mxu0
    %v1609 = vadd.f32 %v1223, %v1608
    %v1610 = vpop.f32.mrf.mxu0
    %v1611 = vadd.f32 %v1223, %v1610
    %1612 = vmatmul.bf16.gmra.mxu0 %v1341
    %v1613 = vpop.f32.mrf.mxu0
    %v1614 = vadd.f32 %v1223, %v1613
    %v1615 = vpop.f32.mrf.mxu0
    %v1616 = vadd.f32 %v1223, %v1615
    %1617 = vmatmul.bf16.gmra.mxu0 %v1344
    %v1618 = vpop.f32.mrf.mxu0
    %v1619 = vadd.f32 %v1223, %v1618
    %v1620 = vpop.f32.mrf.mxu0
    %v1621 = vadd.f32 %v1223, %v1620
    %1622 = vmatmul.bf16.gmra.mxu0 %v1347
    %v1623 = vpop.f32.mrf.mxu0
    %v1624 = vadd.f32 %v1223, %v1623
    %v1625 = vpop.f32.mrf.mxu0
    %v1626 = vadd.f32 %v1223, %v1625
    %1627 = vmatmul.bf16.gmra.mxu0 %v1350
    %v1628 = vpop.f32.mrf.mxu0
    %v1629 = vadd.f32 %v1223, %v1628
    %v1630 = vpop.f32.mrf.mxu0
    %v1631 = vadd.f32 %v1223, %v1630
    %1632 = vmatmul.bf16.gmra.mxu0 %v1353
    %v1633 = vpop.f32.mrf.mxu0
    %v1634 = vadd.f32 %v1223, %v1633
    %v1635 = vpop.f32.mrf.mxu0
    %v1636 = vadd.f32 %v1223, %v1635
    %1637 = vmatmul.bf16.gmra.mxu0 %v1356
    %v1638 = vpop.f32.mrf.mxu0
    %v1639 = vadd.f32 %v1223, %v1638
    %v1640 = vpop.f32.mrf.mxu0
    %v1641 = vadd.f32 %v1223, %v1640
    %1642 = vmatmul.bf16.gmra.mxu0 %v1359
    %v1643 = vpop.f32.mrf.mxu0
    %v1644 = vadd.f32 %v1223, %v1643
    %v1645 = vpop.f32.mrf.mxu0
    %v1646 = vadd.f32 %v1223, %v1645
    %1647 = vmatmul.bf16.gmra.mxu0 %v1362
    %v1648 = vpop.f32.mrf.mxu0
    %v1649 = vadd.f32 %v1223, %v1648
    %v1650 = vpop.f32.mrf.mxu0
    %v1651 = vadd.f32 %v1223, %v1650
    %1652 = vmatmul.bf16.gmra.mxu0 %v1365
    %v1653 = vpop.f32.mrf.mxu0
    %v1654 = vadd.f32 %v1223, %v1653
    %v1655 = vpop.f32.mrf.mxu0
    %v1656 = vadd.f32 %v1223, %v1655
    %1657 = vmatmul.bf16.gmra.mxu0 %v1368
    %v1658 = vpop.f32.mrf.mxu0
    %v1659 = vadd.f32 %v1223, %v1658
    %v1660 = vpop.f32.mrf.mxu0
    %v1661 = vadd.f32 %v1223, %v1660
    %1662 = vmatmul.bf16.gmra.mxu0 %v1371
    %v1663 = vpop.f32.mrf.mxu0
    %v1664 = vadd.f32 %v1223, %v1663
    %v1665 = vpop.f32.mrf.mxu0
    %v1666 = vadd.f32 %v1223, %v1665
    %1667 = vmatmul.bf16.gmra.mxu0 %v1374
    %v1668 = vpop.f32.mrf.mxu0
    %v1669 = vadd.f32 %v1223, %v1668
    %v1670 = vpop.f32.mrf.mxu0
    %v1671 = vadd.f32 %v1223, %v1670
    %1672 = vmatmul.bf16.gmra.mxu0 %v1377
    %v1673 = vpop.f32.mrf.mxu0
    %v1674 = vadd.f32 %v1223, %v1673
    %v1675 = vpop.f32.mrf.mxu0
    %v1676 = vadd.f32 %v1223, %v1675
    %1677 = vmatmul.bf16.gmra.mxu0 %v1380
    %v1678 = vpop.f32.mrf.mxu0
    %v1679 = vadd.f32 %v1223, %v1678
    %v1680 = vpop.f32.mrf.mxu0
    %v1681 = vadd.f32 %v1223, %v1680
    %1682 = vmatmul.bf16.gmra.mxu0 %v1383
    %v1683 = vpop.f32.mrf.mxu0
    %v1684 = vadd.f32 %v1223, %v1683
    %v1685 = vpop.f32.mrf.mxu0
    %v1686 = vadd.f32 %v1223, %v1685
    %1687 = vmatmul.bf16.gmra.mxu0 %v1386
    %v1688 = vpop.f32.mrf.mxu0
    %v1689 = vadd.f32 %v1223, %v1688
    %v1690 = vpop.f32.mrf.mxu0
    %v1691 = vadd.f32 %v1223, %v1690
    %1692 = vmatmul.bf16.gmra.mxu0 %v1389
    %v1693 = vpop.f32.mrf.mxu0
    %v1694 = vadd.f32 %v1223, %v1693
    %v1695 = vpop.f32.mrf.mxu0
    %v1696 = vadd.f32 %v1223, %v1695
    %1697 = vmatmul.bf16.gmra.mxu0 %v1392
    %v1698 = vpop.f32.mrf.mxu0
    %v1699 = vadd.f32 %v1223, %v1698
    %v1700 = vpop.f32.mrf.mxu0
    %v1701 = vadd.f32 %v1223, %v1700
    %1702 = vmatmul.bf16.gmra.mxu0 %v1395
    %v1703 = vpop.f32.mrf.mxu0
    %v1704 = vadd.f32 %v1223, %v1703
    %v1705 = vpop.f32.mrf.mxu0
    %v1706 = vadd.f32 %v1223, %v1705
    %1707 = vmatmul.bf16.gmra.mxu0 %v1398
    %v1708 = vpop.f32.mrf.mxu0
    %v1709 = vadd.f32 %v1223, %v1708
    %v1710 = vpop.f32.mrf.mxu0
    %v1711 = vadd.f32 %v1223, %v1710
    %1712 = vmatmul.bf16.gmra.mxu0 %v1401
    %v1713 = vpop.f32.mrf.mxu0
    %v1714 = vadd.f32 %v1223, %v1713
    %v1715 = vpop.f32.mrf.mxu0
    %v1716 = vadd.f32 %v1223, %v1715
    %1717 = vmatmul.bf16.gmra.mxu0 %v1404
    %v1718 = vpop.f32.mrf.mxu0
    %v1719 = vadd.f32 %v1223, %v1718
    %v1720 = vpop.f32.mrf.mxu0
    %v1721 = vadd.f32 %v1223, %v1720
    %1722 = vmatmul.bf16.gmra.mxu0 %v1407
    %v1723 = vpop.f32.mrf.mxu0
    %v1724 = vadd.f32 %v1223, %v1723
    %v1725 = vpop.f32.mrf.mxu0
    %v1726 = vadd.f32 %v1223, %v1725
    %1727 = vmatmul.bf16.gmra.mxu0 %v1410
    %v1728 = vpop.f32.mrf.mxu0
    %v1729 = vadd.f32 %v1223, %v1728
    %v1730 = vpop.f32.mrf.mxu0
    %v1731 = vadd.f32 %v1223, %v1730
    %1732 = vmatmul.bf16.gmra.mxu0 %v1413
    %v1733 = vpop.f32.mrf.mxu0
    %v1734 = vadd.f32 %v1223, %v1733
    %v1735 = vpop.f32.mrf.mxu0
    %v1736 = vadd.f32 %v1223, %v1735
    %1737 = vmatmul.bf16.gmra.mxu0 %v1416
    %v1738 = vpop.f32.mrf.mxu0
    %v1739 = vadd.f32 %v1223, %v1738
    %v1740 = vpop.f32.mrf.mxu0
    %v1741 = vadd.f32 %v1223, %v1740
    %1742 = vmatmul.bf16.gmra.mxu0 %v1419
    %v1743 = vpop.f32.mrf.mxu0
    %v1744 = vadd.f32 %v1223, %v1743
    %v1745 = vpop.f32.mrf.mxu0
    %v1746 = vadd.f32 %v1223, %v1745
    %1747 = vmatmul.bf16.gmra.mxu0 %v1422
    %v1748 = vpop.f32.mrf.mxu0
    %v1749 = vadd.f32 %v1223, %v1748
    %v1750 = vpop.f32.mrf.mxu0
    %v1751 = vadd.f32 %v1223, %v1750
    %1752 = vdwg.mxu0
    %v1753 = vmax.f32 %v1434, 0.0
    %v1754 = vmax.f32 %v1436, 0.0
    %v1755 = vmax.f32 %v1439, 0.0
    %v1756 = vmax.f32 %v1441, 0.0
    %v1757 = vmax.f32 %v1444, 0.0
    %v1758 = vmax.f32 %v1446, 0.0
    %v1759 = vmax.f32 %v1449, 0.0
    %v1760 = vmax.f32 %v1451, 0.0
    %v1761 = vmax.f32 %v1454, 0.0
    %v1762 = vmax.f32 %v1456, 0.0
    %v1763 = vmax.f32 %v1459, 0.0
    %v1764 = vmax.f32 %v1461, 0.0
    %v1765 = vmax.f32 %v1464, 0.0
    %v1766 = vmax.f32 %v1466, 0.0
    %v1767 = vmax.f32 %v1469, 0.0
    %v1768 = vmax.f32 %v1471, 0.0
    %v1769 = vmax.f32 %v1474, 0.0
    %v1770 = vmax.f32 %v1476, 0.0
    %v1771 = vmax.f32 %v1479, 0.0
    %v1772 = vmax.f32 %v1481, 0.0
    %v1773 = vmax.f32 %v1484, 0.0
    %v1774 = vmax.f32 %v1486, 0.0
    %v1775 = vmax.f32 %v1489, 0.0
    %v1776 = vmax.f32 %v1491, 0.0
    %v1777 = vmax.f32 %v1494, 0.0
    %v1778 = vmax.f32 %v1496, 0.0
    %v1779 = vmax.f32 %v1499, 0.0
    %v1780 = vmax.f32 %v1501, 0.0
    %v1781 = vmax.f32 %v1504, 0.0
    %v1782 = vmax.f32 %v1506, 0.0
    %v1783 = vmax.f32 %v1509, 0.0
    %v1784 = vmax.f32 %v1511, 0.0
    %v1785 = vmax.f32 %v1514, 0.0
    %v1786 = vmax.f32 %v1516, 0.0
    %v1787 = vmax.f32 %v1519, 0.0
    %v1788 = vmax.f32 %v1521, 0.0
    %v1789 = vmax.f32 %v1524, 0.0
    %v1790 = vmax.f32 %v1526, 0.0
    %v1791 = vmax.f32 %v1529, 0.0
    %v1792 = vmax.f32 %v1531, 0.0
    %v1793 = vmax.f32 %v1534, 0.0
    %v1794 = vmax.f32 %v1536, 0.0
    %v1795 = vmax.f32 %v1539, 0.0
    %v1796 = vmax.f32 %v1541, 0.0
    %v1797 = vmax.f32 %v1544, 0.0
    %v1798 = vmax.f32 %v1546, 0.0
    %v1799 = vmax.f32 %v1549, 0.0
    %v1800 = vmax.f32 %v1551, 0.0
    %v1801 = vmax.f32 %v1554, 0.0
    %v1802 = vmax.f32 %v1556, 0.0
    %v1803 = vmax.f32 %v1559, 0.0
    %v1804 = vmax.f32 %v1561, 0.0
    %v1805 = vmax.f32 %v1564, 0.0
    %v1806 = vmax.f32 %v1566, 0.0
    %v1807 = vmax.f32 %v1569, 0.0
    %v1808 = vmax.f32 %v1571, 0.0
    %v1809 = vmax.f32 %v1574, 0.0
    %v1810 = vmax.f32 %v1576, 0.0
    %v1811 = vmax.f32 %v1579, 0.0
    %v1812 = vmax.f32 %v1581, 0.0
    %v1813 = vmax.f32 %v1584, 0.0
    %v1814 = vmax.f32 %v1586, 0.0
    %v1815 = vmax.f32 %v1589, 0.0
    %v1816 = vmax.f32 %v1591, 0.0
    %v1817 = vmax.f32 %v1594, 0.0
    %v1818 = vmax.f32 %v1596, 0.0
    %v1819 = vmax.f32 %v1599, 0.0
    %v1820 = vmax.f32 %v1601, 0.0
    %v1821 = vmax.f32 %v1604, 0.0
    %v1822 = vmax.f32 %v1606, 0.0
    %v1823 = vmax.f32 %v1609, 0.0
    %v1824 = vmax.f32 %v1611, 0.0
    %v1825 = vmax.f32 %v1614, 0.0
    %v1826 = vmax.f32 %v1616, 0.0
    %v1827 = vmax.f32 %v1619, 0.0
    %v1828 = vmax.f32 %v1621, 0.0
    %v1829 = vmax.f32 %v1624, 0.0
    %v1830 = vmax.f32 %v1626, 0.0
    %v1831 = vmax.f32 %v1629, 0.0
    %v1832 = vmax.f32 %v1631, 0.0
    %v1833 = vmax.f32 %v1634, 0.0
    %v1834 = vmax.f32 %v1636, 0.0
    %v1835 = vmax.f32 %v1639, 0.0
    %v1836 = vmax.f32 %v1641, 0.0
    %v1837 = vmax.f32 %v1644, 0.0
    %v1838 = vmax.f32 %v1646, 0.0
    %v1839 = vmax.f32 %v1649, 0.0
    %v1840 = vmax.f32 %v1651, 0.0
    %v1841 = vmax.f32 %v1654, 0.0
    %v1842 = vmax.f32 %v1656, 0.0
    %v1843 = vmax.f32 %v1659, 0.0
    %v1844 = vmax.f32 %v1661, 0.0
    %v1845 = vmax.f32 %v1664, 0.0
    %v1846 = vmax.f32 %v1666, 0.0
    %v1847 = vmax.f32 %v1669, 0.0
    %v1848 = vmax.f32 %v1671, 0.0
    %v1849 = vmax.f32 %v1674, 0.0
    %v1850 = vmax.f32 %v1676, 0.0
    %v1851 = vmax.f32 %v1679, 0.0
    %v1852 = vmax.f32 %v1681, 0.0
    %v1853 = vmax.f32 %v1684, 0.0
    %v1854 = vmax.f32 %v1686, 0.0
    %v1855 = vmax.f32 %v1689, 0.0
    %v1856 = vmax.f32 %v1691, 0.0
    %v1857 = vmax.f32 %v1694, 0.0
    %v1858 = vmax.f32 %v1696, 0.0
    %v1859 = vmax.f32 %v1699, 0.0
    %v1860 = vmax.f32 %v1701, 0.0
    %v1861 = vmax.f32 %v1704, 0.0
    %v1862 = vmax.f32 %v1706, 0.0
    %v1863 = vmax.f32 %v1709, 0.0
    %v1864 = vmax.f32 %v1711, 0.0
    %v1865 = vmax.f32 %v1714, 0.0
    %v1866 = vmax.f32 %v1716, 0.0
    %v1867 = vmax.f32 %v1719, 0.0
    %v1868 = vmax.f32 %v1721, 0.0
    %v1869 = vmax.f32 %v1724, 0.0
    %v1870 = vmax.f32 %v1726, 0.0
    %v1871 = vmax.f32 %v1729, 0.0
    %v1872 = vmax.f32 %v1731, 0.0
    %v1873 = vmax.f32 %v1734, 0.0
    %v1874 = vmax.f32 %v1736, 0.0
    %v1875 = vmax.f32 %v1739, 0.0
    %v1876 = vmax.f32 %v1741, 0.0
    %v1877 = vmax.f32 %v1744, 0.0
    %v1878 = vmax.f32 %v1746, 0.0
    %v1879 = vmax.f32 %v1749, 0.0
    %v1880 = vmax.f32 %v1751, 0.0
    %v1881 = vpack.c.bf16 %v1754, %v1753
    %v1882 = vpack.c.bf16 %v1756, %v1755
    %v1883 = vpack.c.bf16 %v1758, %v1757
    %v1884 = vpack.c.bf16 %v1760, %v1759
    %v1885 = vpack.c.bf16 %v1762, %v1761
    %v1886 = vpack.c.bf16 %v1764, %v1763
    %v1887 = vpack.c.bf16 %v1766, %v1765
    %v1888 = vpack.c.bf16 %v1768, %v1767
    %v1889 = vpack.c.bf16 %v1770, %v1769
    %v1890 = vpack.c.bf16 %v1772, %v1771
    %v1891 = vpack.c.bf16 %v1774, %v1773
    %v1892 = vpack.c.bf16 %v1776, %v1775
    %v1893 = vpack.c.bf16 %v1778, %v1777
    %v1894 = vpack.c.bf16 %v1780, %v1779
    %v1895 = vpack.c.bf16 %v1782, %v1781
    %v1896 = vpack.c.bf16 %v1784, %v1783
    %v1897 = vpack.c.bf16 %v1786, %v1785
    %v1898 = vpack.c.bf16 %v1788, %v1787
    %v1899 = vpack.c.bf16 %v1790, %v1789
    %v1900 = vpack.c.bf16 %v1792, %v1791
    %v1901 = vpack.c.bf16 %v1794, %v1793
    %v1902 = vpack.c.bf16 %v1796, %v1795
    %v1903 = vpack.c.bf16 %v1798, %v1797
    %v1904 = vpack.c.bf16 %v1800, %v1799
    %v1905 = vpack.c.bf16 %v1802, %v1801
    %v1906 = vpack.c.bf16 %v1804, %v1803
    %v1907 = vpack.c.bf16 %v1806, %v1805
    %v1908 = vpack.c.bf16 %v1808, %v1807
    %v1909 = vpack.c.bf16 %v1810, %v1809
    %v1910 = vpack.c.bf16 %v1812, %v1811
    %v1911 = vpack.c.bf16 %v1814, %v1813
    %v1912 = vpack.c.bf16 %v1816, %v1815
    %v1913 = vpack.c.bf16 %v1818, %v1817
    %v1914 = vpack.c.bf16 %v1820, %v1819
    %v1915 = vpack.c.bf16 %v1822, %v1821
    %v1916 = vpack.c.bf16 %v1824, %v1823
    %v1917 = vpack.c.bf16 %v1826, %v1825
    %v1918 = vpack.c.bf16 %v1828, %v1827
    %v1919 = vpack.c.bf16 %v1830, %v1829
    %v1920 = vpack.c.bf16 %v1832, %v1831
    %v1921 = vpack.c.bf16 %v1834, %v1833
    %v1922 = vpack.c.bf16 %v1836, %v1835
    %v1923 = vpack.c.bf16 %v1838, %v1837
    %v1924 = vpack.c.bf16 %v1840, %v1839
    %v1925 = vpack.c.bf16 %v1842, %v1841
    %v1926 = vpack.c.bf16 %v1844, %v1843
    %v1927 = vpack.c.bf16 %v1846, %v1845
    %v1928 = vpack.c.bf16 %v1848, %v1847
    %v1929 = vpack.c.bf16 %v1850, %v1849
    %v1930 = vpack.c.bf16 %v1852, %v1851
    %v1931 = vpack.c.bf16 %v1854, %v1853
    %v1932 = vpack.c.bf16 %v1856, %v1855
    %v1933 = vpack.c.bf16 %v1858, %v1857
    %v1934 = vpack.c.bf16 %v1860, %v1859
    %v1935 = vpack.c.bf16 %v1862, %v1861
    %v1936 = vpack.c.bf16 %v1864, %v1863
    %v1937 = vpack.c.bf16 %v1866, %v1865
    %v1938 = vpack.c.bf16 %v1868, %v1867
    %v1939 = vpack.c.bf16 %v1870, %v1869
    %v1940 = vpack.c.bf16 %v1872, %v1871
    %v1941 = vpack.c.bf16 %v1874, %v1873
    %v1942 = vpack.c.bf16 %v1876, %v1875
    %v1943 = vpack.c.bf16 %v1878, %v1877
    %v1944 = vpack.c.bf16 %v1880, %v1879
    %v1946 = vperm.slane %v37, 0
    %v1950 = vunpack.c.l.b16 %v35
    %v1951 = vunpack.c.l.b16 %v36
    %v1952 = vpack.c.b16 %v1951, %v1950
    %v1955 = vsel %vm1231, %v1881, 0
    %v1958 = vsel %vm1231, %v1882, 0
    %v1961 = vsel %vm1231, %v1883, 0
    %v1964 = vsel %vm1231, %v1884, 0
    %v1967 = vsel %vm1231, %v1885, 0
    %v1970 = vsel %vm1231, %v1886, 0
    %v1973 = vsel %vm1231, %v1887, 0
    %v1976 = vsel %vm1231, %v1888, 0
    %v1979 = vsel %vm1231, %v1889, 0
    %v1982 = vsel %vm1231, %v1890, 0
    %v1985 = vsel %vm1231, %v1891, 0
    %v1988 = vsel %vm1231, %v1892, 0
    %v1991 = vsel %vm1231, %v1893, 0
    %v1994 = vsel %vm1231, %v1894, 0
    %v1997 = vsel %vm1231, %v1895, 0
    %v2000 = vsel %vm1231, %v1896, 0
    %v2003 = vsel %vm1231, %v1897, 0
    %v2006 = vsel %vm1231, %v1898, 0
    %v2009 = vsel %vm1231, %v1899, 0
    %v2012 = vsel %vm1231, %v1900, 0
    %v2015 = vsel %vm1231, %v1901, 0
    %v2018 = vsel %vm1231, %v1902, 0
    %v2021 = vsel %vm1231, %v1903, 0
    %v2024 = vsel %vm1231, %v1904, 0
    %v2027 = vsel %vm1231, %v1905, 0
    %v2030 = vsel %vm1231, %v1906, 0
    %v2033 = vsel %vm1231, %v1907, 0
    %v2036 = vsel %vm1231, %v1908, 0
    %v2039 = vsel %vm1231, %v1909, 0
    %v2042 = vsel %vm1231, %v1910, 0
    %v2045 = vsel %vm1231, %v1911, 0
    %v2048 = vsel %vm1231, %v1912, 0
    %v2051 = vsel %vm1231, %v1913, 0
    %v2054 = vsel %vm1231, %v1914, 0
    %v2057 = vsel %vm1231, %v1915, 0
    %v2060 = vsel %vm1231, %v1916, 0
    %v2063 = vsel %vm1231, %v1917, 0
    %v2066 = vsel %vm1231, %v1918, 0
    %v2069 = vsel %vm1231, %v1919, 0
    %v2072 = vsel %vm1231, %v1920, 0
    %v2075 = vsel %vm1231, %v1921, 0
    %v2078 = vsel %vm1231, %v1922, 0
    %v2081 = vsel %vm1231, %v1923, 0
    %v2084 = vsel %vm1231, %v1924, 0
    %v2087 = vsel %vm1231, %v1925, 0
    %v2090 = vsel %vm1231, %v1926, 0
    %v2093 = vsel %vm1231, %v1927, 0
    %v2096 = vsel %vm1231, %v1928, 0
    %v2099 = vsel %vm1231, %v1929, 0
    %v2102 = vsel %vm1231, %v1930, 0
    %v2105 = vsel %vm1231, %v1931, 0
    %v2108 = vsel %vm1231, %v1932, 0
    %v2111 = vsel %vm1231, %v1933, 0
    %v2114 = vsel %vm1231, %v1934, 0
    %v2117 = vsel %vm1231, %v1935, 0
    %v2120 = vsel %vm1231, %v1936, 0
    %v2123 = vsel %vm1231, %v1937, 0
    %v2126 = vsel %vm1231, %v1938, 0
    %v2129 = vsel %vm1231, %v1939, 0
    %v2132 = vsel %vm1231, %v1940, 0
    %v2135 = vsel %vm1231, %v1941, 0
    %v2138 = vsel %vm1231, %v1942, 0
    %v2141 = vsel %vm1231, %v1943, 0
    %v2144 = vsel %vm1231, %v1944, 0
    %2146 = vmatpush.bf16.msra.mxu0 0
    %2147 = vmatpush.bf16.msra.mxu0 0
    %2148 = vmatpush.bf16.msra.mxu0 0
    %2149 = vmatpush.bf16.msra.mxu0 0
    %2150 = vmatpush.bf16.msra.mxu0 0
    %2151 = vmatpush.bf16.msra.mxu0 0
    %2152 = vmatpush.bf16.msra.mxu0 0
    %2153 = vmatpush.bf16.msra.mxu0 %v1952
    %2154 = vmatmul.bf16.gmra.mxu0 %v1955
    %v2155 = vpop.f32.mrf.mxu0
    %v2156 = vadd.f32 %v1946, %v2155
    %v2157 = vpop.f32.mrf.mxu0
    %v2158 = vadd.f32 %v1946, %v2157
    %2159 = vmatmul.bf16.gmra.mxu0 %v1958
    %v2160 = vpop.f32.mrf.mxu0
    %v2161 = vadd.f32 %v1946, %v2160
    %v2162 = vpop.f32.mrf.mxu0
    %v2163 = vadd.f32 %v1946, %v2162
    %2164 = vmatmul.bf16.gmra.mxu0 %v1961
    %v2165 = vpop.f32.mrf.mxu0
    %v2166 = vadd.f32 %v1946, %v2165
    %v2167 = vpop.f32.mrf.mxu0
    %v2168 = vadd.f32 %v1946, %v2167
    %2169 = vmatmul.bf16.gmra.mxu0 %v1964
    %v2170 = vpop.f32.mrf.mxu0
    %v2171 = vadd.f32 %v1946, %v2170
    %v2172 = vpop.f32.mrf.mxu0
    %v2173 = vadd.f32 %v1946, %v2172
    %2174 = vmatmul.bf16.gmra.mxu0 %v1967
    %v2175 = vpop.f32.mrf.mxu0
    %v2176 = vadd.f32 %v1946, %v2175
    %v2177 = vpop.f32.mrf.mxu0
    %v2178 = vadd.f32 %v1946, %v2177
    %2179 = vmatmul.bf16.gmra.mxu0 %v1970
    %v2180 = vpop.f32.mrf.mxu0
    %v2181 = vadd.f32 %v1946, %v2180
    %v2182 = vpop.f32.mrf.mxu0
    %v2183 = vadd.f32 %v1946, %v2182
    %2184 = vmatmul.bf16.gmra.mxu0 %v1973
    %v2185 = vpop.f32.mrf.mxu0
    %v2186 = vadd.f32 %v1946, %v2185
    %v2187 = vpop.f32.mrf.mxu0
    %v2188 = vadd.f32 %v1946, %v2187
    %2189 = vmatmul.bf16.gmra.mxu0 %v1976
    %v2190 = vpop.f32.mrf.mxu0
    %v2191 = vadd.f32 %v1946, %v2190
    %v2192 = vpop.f32.mrf.mxu0
    %v2193 = vadd.f32 %v1946, %v2192
    %2194 = vmatmul.bf16.gmra.mxu0 %v1979
    %v2195 = vpop.f32.mrf.mxu0
    %v2196 = vadd.f32 %v1946, %v2195
    %v2197 = vpop.f32.mrf.mxu0
    %v2198 = vadd.f32 %v1946, %v2197
    %2199 = vmatmul.bf16.gmra.mxu0 %v1982
    %v2200 = vpop.f32.mrf.mxu0
    %v2201 = vadd.f32 %v1946, %v2200
    %v2202 = vpop.f32.mrf.mxu0
    %v2203 = vadd.f32 %v1946, %v2202
    %2204 = vmatmul.bf16.gmra.mxu0 %v1985
    %v2205 = vpop.f32.mrf.mxu0
    %v2206 = vadd.f32 %v1946, %v2205
    %v2207 = vpop.f32.mrf.mxu0
    %v2208 = vadd.f32 %v1946, %v2207
    %2209 = vmatmul.bf16.gmra.mxu0 %v1988
    %v2210 = vpop.f32.mrf.mxu0
    %v2211 = vadd.f32 %v1946, %v2210
    %v2212 = vpop.f32.mrf.mxu0
    %v2213 = vadd.f32 %v1946, %v2212
    %2214 = vmatmul.bf16.gmra.mxu0 %v1991
    %v2215 = vpop.f32.mrf.mxu0
    %v2216 = vadd.f32 %v1946, %v2215
    %v2217 = vpop.f32.mrf.mxu0
    %v2218 = vadd.f32 %v1946, %v2217
    %2219 = vmatmul.bf16.gmra.mxu0 %v1994
    %v2220 = vpop.f32.mrf.mxu0
    %v2221 = vadd.f32 %v1946, %v2220
    %v2222 = vpop.f32.mrf.mxu0
    %v2223 = vadd.f32 %v1946, %v2222
    %2224 = vmatmul.bf16.gmra.mxu0 %v1997
    %v2225 = vpop.f32.mrf.mxu0
    %v2226 = vadd.f32 %v1946, %v2225
    %v2227 = vpop.f32.mrf.mxu0
    %v2228 = vadd.f32 %v1946, %v2227
    %2229 = vmatmul.bf16.gmra.mxu0 %v2000
    %v2230 = vpop.f32.mrf.mxu0
    %v2231 = vadd.f32 %v1946, %v2230
    %v2232 = vpop.f32.mrf.mxu0
    %v2233 = vadd.f32 %v1946, %v2232
    %2234 = vmatmul.bf16.gmra.mxu0 %v2003
    %v2235 = vpop.f32.mrf.mxu0
    %v2236 = vadd.f32 %v1946, %v2235
    %v2237 = vpop.f32.mrf.mxu0
    %v2238 = vadd.f32 %v1946, %v2237
    %2239 = vmatmul.bf16.gmra.mxu0 %v2006
    %v2240 = vpop.f32.mrf.mxu0
    %v2241 = vadd.f32 %v1946, %v2240
    %v2242 = vpop.f32.mrf.mxu0
    %v2243 = vadd.f32 %v1946, %v2242
    %2244 = vmatmul.bf16.gmra.mxu0 %v2009
    %v2245 = vpop.f32.mrf.mxu0
    %v2246 = vadd.f32 %v1946, %v2245
    %v2247 = vpop.f32.mrf.mxu0
    %v2248 = vadd.f32 %v1946, %v2247
    %2249 = vmatmul.bf16.gmra.mxu0 %v2012
    %v2250 = vpop.f32.mrf.mxu0
    %v2251 = vadd.f32 %v1946, %v2250
    %v2252 = vpop.f32.mrf.mxu0
    %v2253 = vadd.f32 %v1946, %v2252
    %2254 = vmatmul.bf16.gmra.mxu0 %v2015
    %v2255 = vpop.f32.mrf.mxu0
    %v2256 = vadd.f32 %v1946, %v2255
    %v2257 = vpop.f32.mrf.mxu0
    %v2258 = vadd.f32 %v1946, %v2257
    %2259 = vmatmul.bf16.gmra.mxu0 %v2018
    %v2260 = vpop.f32.mrf.mxu0
    %v2261 = vadd.f32 %v1946, %v2260
    %v2262 = vpop.f32.mrf.mxu0
    %v2263 = vadd.f32 %v1946, %v2262
    %2264 = vmatmul.bf16.gmra.mxu0 %v2021
    %v2265 = vpop.f32.mrf.mxu0
    %v2266 = vadd.f32 %v1946, %v2265
    %v2267 = vpop.f32.mrf.mxu0
    %v2268 = vadd.f32 %v1946, %v2267
    %2269 = vmatmul.bf16.gmra.mxu0 %v2024
    %v2270 = vpop.f32.mrf.mxu0
    %v2271 = vadd.f32 %v1946, %v2270
    %v2272 = vpop.f32.mrf.mxu0
    %v2273 = vadd.f32 %v1946, %v2272
    %2274 = vmatmul.bf16.gmra.mxu0 %v2027
    %v2275 = vpop.f32.mrf.mxu0
    %v2276 = vadd.f32 %v1946, %v2275
    %v2277 = vpop.f32.mrf.mxu0
    %v2278 = vadd.f32 %v1946, %v2277
    %2279 = vmatmul.bf16.gmra.mxu0 %v2030
    %v2280 = vpop.f32.mrf.mxu0
    %v2281 = vadd.f32 %v1946, %v2280
    %v2282 = vpop.f32.mrf.mxu0
    %v2283 = vadd.f32 %v1946, %v2282
    %2284 = vmatmul.bf16.gmra.mxu0 %v2033
    %v2285 = vpop.f32.mrf.mxu0
    %v2286 = vadd.f32 %v1946, %v2285
    %v2287 = vpop.f32.mrf.mxu0
    %v2288 = vadd.f32 %v1946, %v2287
    %2289 = vmatmul.bf16.gmra.mxu0 %v2036
    %v2290 = vpop.f32.mrf.mxu0
    %v2291 = vadd.f32 %v1946, %v2290
    %v2292 = vpop.f32.mrf.mxu0
    %v2293 = vadd.f32 %v1946, %v2292
    %2294 = vmatmul.bf16.gmra.mxu0 %v2039
    %v2295 = vpop.f32.mrf.mxu0
    %v2296 = vadd.f32 %v1946, %v2295
    %v2297 = vpop.f32.mrf.mxu0
    %v2298 = vadd.f32 %v1946, %v2297
    %2299 = vmatmul.bf16.gmra.mxu0 %v2042
    %v2300 = vpop.f32.mrf.mxu0
    %v2301 = vadd.f32 %v1946, %v2300
    %v2302 = vpop.f32.mrf.mxu0
    %v2303 = vadd.f32 %v1946, %v2302
    %2304 = vmatmul.bf16.gmra.mxu0 %v2045
    %v2305 = vpop.f32.mrf.mxu0
    %v2306 = vadd.f32 %v1946, %v2305
    %v2307 = vpop.f32.mrf.mxu0
    %v2308 = vadd.f32 %v1946, %v2307
    %2309 = vmatmul.bf16.gmra.mxu0 %v2048
    %v2310 = vpop.f32.mrf.mxu0
    %v2311 = vadd.f32 %v1946, %v2310
    %v2312 = vpop.f32.mrf.mxu0
    %v2313 = vadd.f32 %v1946, %v2312
    %2314 = vmatmul.bf16.gmra.mxu0 %v2051
    %v2315 = vpop.f32.mrf.mxu0
    %v2316 = vadd.f32 %v1946, %v2315
    %v2317 = vpop.f32.mrf.mxu0
    %v2318 = vadd.f32 %v1946, %v2317
    %2319 = vmatmul.bf16.gmra.mxu0 %v2054
    %v2320 = vpop.f32.mrf.mxu0
    %v2321 = vadd.f32 %v1946, %v2320
    %v2322 = vpop.f32.mrf.mxu0
    %v2323 = vadd.f32 %v1946, %v2322
    %2324 = vmatmul.bf16.gmra.mxu0 %v2057
    %v2325 = vpop.f32.mrf.mxu0
    %v2326 = vadd.f32 %v1946, %v2325
    %v2327 = vpop.f32.mrf.mxu0
    %v2328 = vadd.f32 %v1946, %v2327
    %2329 = vmatmul.bf16.gmra.mxu0 %v2060
    %v2330 = vpop.f32.mrf.mxu0
    %v2331 = vadd.f32 %v1946, %v2330
    %v2332 = vpop.f32.mrf.mxu0
    %v2333 = vadd.f32 %v1946, %v2332
    %2334 = vmatmul.bf16.gmra.mxu0 %v2063
    %v2335 = vpop.f32.mrf.mxu0
    %v2336 = vadd.f32 %v1946, %v2335
    %v2337 = vpop.f32.mrf.mxu0
    %v2338 = vadd.f32 %v1946, %v2337
    %2339 = vmatmul.bf16.gmra.mxu0 %v2066
    %v2340 = vpop.f32.mrf.mxu0
    %v2341 = vadd.f32 %v1946, %v2340
    %v2342 = vpop.f32.mrf.mxu0
    %v2343 = vadd.f32 %v1946, %v2342
    %2344 = vmatmul.bf16.gmra.mxu0 %v2069
    %v2345 = vpop.f32.mrf.mxu0
    %v2346 = vadd.f32 %v1946, %v2345
    %v2347 = vpop.f32.mrf.mxu0
    %v2348 = vadd.f32 %v1946, %v2347
    %2349 = vmatmul.bf16.gmra.mxu0 %v2072
    %v2350 = vpop.f32.mrf.mxu0
    %v2351 = vadd.f32 %v1946, %v2350
    %v2352 = vpop.f32.mrf.mxu0
    %v2353 = vadd.f32 %v1946, %v2352
    %2354 = vmatmul.bf16.gmra.mxu0 %v2075
    %v2355 = vpop.f32.mrf.mxu0
    %v2356 = vadd.f32 %v1946, %v2355
    %v2357 = vpop.f32.mrf.mxu0
    %v2358 = vadd.f32 %v1946, %v2357
    %2359 = vmatmul.bf16.gmra.mxu0 %v2078
    %v2360 = vpop.f32.mrf.mxu0
    %v2361 = vadd.f32 %v1946, %v2360
    %v2362 = vpop.f32.mrf.mxu0
    %v2363 = vadd.f32 %v1946, %v2362
    %2364 = vmatmul.bf16.gmra.mxu0 %v2081
    %v2365 = vpop.f32.mrf.mxu0
    %v2366 = vadd.f32 %v1946, %v2365
    %v2367 = vpop.f32.mrf.mxu0
    %v2368 = vadd.f32 %v1946, %v2367
    %2369 = vmatmul.bf16.gmra.mxu0 %v2084
    %v2370 = vpop.f32.mrf.mxu0
    %v2371 = vadd.f32 %v1946, %v2370
    %v2372 = vpop.f32.mrf.mxu0
    %v2373 = vadd.f32 %v1946, %v2372
    %2374 = vmatmul.bf16.gmra.mxu0 %v2087
    %v2375 = vpop.f32.mrf.mxu0
    %v2376 = vadd.f32 %v1946, %v2375
    %v2377 = vpop.f32.mrf.mxu0
    %v2378 = vadd.f32 %v1946, %v2377
    %2379 = vmatmul.bf16.gmra.mxu0 %v2090
    %v2380 = vpop.f32.mrf.mxu0
    %v2381 = vadd.f32 %v1946, %v2380
    %v2382 = vpop.f32.mrf.mxu0
    %v2383 = vadd.f32 %v1946, %v2382
    %2384 = vmatmul.bf16.gmra.mxu0 %v2093
    %v2385 = vpop.f32.mrf.mxu0
    %v2386 = vadd.f32 %v1946, %v2385
    %v2387 = vpop.f32.mrf.mxu0
    %v2388 = vadd.f32 %v1946, %v2387
    %2389 = vmatmul.bf16.gmra.mxu0 %v2096
    %v2390 = vpop.f32.mrf.mxu0
    %v2391 = vadd.f32 %v1946, %v2390
    %v2392 = vpop.f32.mrf.mxu0
    %v2393 = vadd.f32 %v1946, %v2392
    %2394 = vmatmul.bf16.gmra.mxu0 %v2099
    %v2395 = vpop.f32.mrf.mxu0
    %v2396 = vadd.f32 %v1946, %v2395
    %v2397 = vpop.f32.mrf.mxu0
    %v2398 = vadd.f32 %v1946, %v2397
    %2399 = vmatmul.bf16.gmra.mxu0 %v2102
    %v2400 = vpop.f32.mrf.mxu0
    %v2401 = vadd.f32 %v1946, %v2400
    %v2402 = vpop.f32.mrf.mxu0
    %v2403 = vadd.f32 %v1946, %v2402
    %2404 = vmatmul.bf16.gmra.mxu0 %v2105
    %v2405 = vpop.f32.mrf.mxu0
    %v2406 = vadd.f32 %v1946, %v2405
    %v2407 = vpop.f32.mrf.mxu0
    %v2408 = vadd.f32 %v1946, %v2407
    %2409 = vmatmul.bf16.gmra.mxu0 %v2108
    %v2410 = vpop.f32.mrf.mxu0
    %v2411 = vadd.f32 %v1946, %v2410
    %v2412 = vpop.f32.mrf.mxu0
    %v2413 = vadd.f32 %v1946, %v2412
    %2414 = vmatmul.bf16.gmra.mxu0 %v2111
    %v2415 = vpop.f32.mrf.mxu0
    %v2416 = vadd.f32 %v1946, %v2415
    %v2417 = vpop.f32.mrf.mxu0
    %v2418 = vadd.f32 %v1946, %v2417
    %2419 = vmatmul.bf16.gmra.mxu0 %v2114
    %v2420 = vpop.f32.mrf.mxu0
    %v2421 = vadd.f32 %v1946, %v2420
    %v2422 = vpop.f32.mrf.mxu0
    %v2423 = vadd.f32 %v1946, %v2422
    %2424 = vmatmul.bf16.gmra.mxu0 %v2117
    %v2425 = vpop.f32.mrf.mxu0
    %v2426 = vadd.f32 %v1946, %v2425
    %v2427 = vpop.f32.mrf.mxu0
    %v2428 = vadd.f32 %v1946, %v2427
    %2429 = vmatmul.bf16.gmra.mxu0 %v2120
    %v2430 = vpop.f32.mrf.mxu0
    %v2431 = vadd.f32 %v1946, %v2430
    %v2432 = vpop.f32.mrf.mxu0
    %v2433 = vadd.f32 %v1946, %v2432
    %2434 = vmatmul.bf16.gmra.mxu0 %v2123
    %v2435 = vpop.f32.mrf.mxu0
    %v2436 = vadd.f32 %v1946, %v2435
    %v2437 = vpop.f32.mrf.mxu0
    %v2438 = vadd.f32 %v1946, %v2437
    %2439 = vmatmul.bf16.gmra.mxu0 %v2126
    %v2440 = vpop.f32.mrf.mxu0
    %v2441 = vadd.f32 %v1946, %v2440
    %v2442 = vpop.f32.mrf.mxu0
    %v2443 = vadd.f32 %v1946, %v2442
    %2444 = vmatmul.bf16.gmra.mxu0 %v2129
    %v2445 = vpop.f32.mrf.mxu0
    %v2446 = vadd.f32 %v1946, %v2445
    %v2447 = vpop.f32.mrf.mxu0
    %v2448 = vadd.f32 %v1946, %v2447
    %2449 = vmatmul.bf16.gmra.mxu0 %v2132
    %v2450 = vpop.f32.mrf.mxu0
    %v2451 = vadd.f32 %v1946, %v2450
    %v2452 = vpop.f32.mrf.mxu0
    %v2453 = vadd.f32 %v1946, %v2452
    %2454 = vmatmul.bf16.gmra.mxu0 %v2135
    %v2455 = vpop.f32.mrf.mxu0
    %v2456 = vadd.f32 %v1946, %v2455
    %v2457 = vpop.f32.mrf.mxu0
    %v2458 = vadd.f32 %v1946, %v2457
    %2459 = vmatmul.bf16.gmra.mxu0 %v2138
    %v2460 = vpop.f32.mrf.mxu0
    %v2461 = vadd.f32 %v1946, %v2460
    %v2462 = vpop.f32.mrf.mxu0
    %v2463 = vadd.f32 %v1946, %v2462
    %2464 = vmatmul.bf16.gmra.mxu0 %v2141
    %v2465 = vpop.f32.mrf.mxu0
    %v2466 = vadd.f32 %v1946, %v2465
    %v2467 = vpop.f32.mrf.mxu0
    %v2468 = vadd.f32 %v1946, %v2467
    %2469 = vmatmul.bf16.gmra.mxu0 %v2144
    %v2470 = vpop.f32.mrf.mxu0
    %v2471 = vadd.f32 %v1946, %v2470
    %v2472 = vpop.f32.mrf.mxu0
    %v2473 = vadd.f32 %v1946, %v2472
    %2474 = vdwg.mxu0
    %s2475 = scalar_lea.vmem %s1, %s45
    %v2476 = vld [vmem:[%s2475] sm:$0xff]
    %v2477 = vld [vmem:[%s2475 + $0x8] sm:$0xff]
    %v2478 = vperm.slane %v2476, 0
    %v2479 = vlaneseq
    %v2480 = vshrl.u32 %v2479, 7
    %2482 = vset.pattern.permute.xlu0 %v2480
    %2483 = vperm.xlu0 %2482, %v2478
    %v2484 = vpop.permute.xlu0 %2483
    %v2485 = vlaneseq
    %v2486 = vshrl.u32 %v2485, 7
    %v2487 = vadd.s32 %v2486, 8
    %2488 = vset.pattern.permute.xlu0 %v2487
    %2489 = vperm.xlu0 %2488, %v2478
    %v2490 = vpop.permute.xlu0 %2489
    %v2491 = vlaneseq
    %v2492 = vshrl.u32 %v2491, 7
    %v2493 = vadd.s32 %v2492, 16
    %2494 = vset.pattern.permute.xlu0 %v2493
    %2495 = vperm.xlu0 %2494, %v2478
    %v2496 = vpop.permute.xlu0 %2495
    %v2497 = vlaneseq
    %v2498 = vshrl.u32 %v2497, 7
    %v2499 = vadd.s32 %v2498, 24
    %2500 = vset.pattern.permute.xlu0 %v2499
    %2501 = vperm.xlu0 %2500, %v2478
    %v2502 = vpop.permute.xlu0 %2501
    %v2503 = vlaneseq
    %v2504 = vshrl.u32 %v2503, 7
    %v2505 = vadd.s32 %v2504, 32
    %2506 = vset.pattern.permute.xlu0 %v2505
    %2507 = vperm.xlu0 %2506, %v2478
    %v2508 = vpop.permute.xlu0 %2507
    %v2509 = vlaneseq
    %v2510 = vshrl.u32 %v2509, 7
    %v2511 = vadd.s32 %v2510, 40
    %2512 = vset.pattern.permute.xlu0 %v2511
    %2513 = vperm.xlu0 %2512, %v2478
    %v2514 = vpop.permute.xlu0 %2513
    %v2515 = vlaneseq
    %v2516 = vshrl.u32 %v2515, 7
    %v2517 = vadd.s32 %v2516, 48
    %2518 = vset.pattern.permute.xlu0 %v2517
    %2519 = vperm.xlu0 %2518, %v2478
    %v2520 = vpop.permute.xlu0 %2519
    %v2521 = vlaneseq
    %v2522 = vshrl.u32 %v2521, 7
    %v2523 = vadd.s32 %v2522, 56
    %2524 = vset.pattern.permute.xlu0 %v2523
    %2525 = vperm.xlu0 %2524, %v2478
    %v2526 = vpop.permute.xlu0 %2525
    %v2527 = vperm.slane %v2476, 1
    %v2528 = vlaneseq
    %v2529 = vshrl.u32 %v2528, 7
    %2531 = vset.pattern.permute.xlu0 %v2529
    %2532 = vperm.xlu0 %2531, %v2527
    %v2533 = vpop.permute.xlu0 %2532
    %v2534 = vlaneseq
    %v2535 = vshrl.u32 %v2534, 7
    %v2536 = vadd.s32 %v2535, 8
    %2537 = vset.pattern.permute.xlu0 %v2536
    %2538 = vperm.xlu0 %2537, %v2527
    %v2539 = vpop.permute.xlu0 %2538
    %v2540 = vlaneseq
    %v2541 = vshrl.u32 %v2540, 7
    %v2542 = vadd.s32 %v2541, 16
    %2543 = vset.pattern.permute.xlu0 %v2542
    %2544 = vperm.xlu0 %2543, %v2527
    %v2545 = vpop.permute.xlu0 %2544
    %v2546 = vlaneseq
    %v2547 = vshrl.u32 %v2546, 7
    %v2548 = vadd.s32 %v2547, 24
    %2549 = vset.pattern.permute.xlu0 %v2548
    %2550 = vperm.xlu0 %2549, %v2527
    %v2551 = vpop.permute.xlu0 %2550
    %v2552 = vlaneseq
    %v2553 = vshrl.u32 %v2552, 7
    %v2554 = vadd.s32 %v2553, 32
    %2555 = vset.pattern.permute.xlu0 %v2554
    %2556 = vperm.xlu0 %2555, %v2527
    %v2557 = vpop.permute.xlu0 %2556
    %v2558 = vlaneseq
    %v2559 = vshrl.u32 %v2558, 7
    %v2560 = vadd.s32 %v2559, 40
    %2561 = vset.pattern.permute.xlu0 %v2560
    %2562 = vperm.xlu0 %2561, %v2527
    %v2563 = vpop.permute.xlu0 %2562
    %v2564 = vlaneseq
    %v2565 = vshrl.u32 %v2564, 7
    %v2566 = vadd.s32 %v2565, 48
    %2567 = vset.pattern.permute.xlu0 %v2566
    %2568 = vperm.xlu0 %2567, %v2527
    %v2569 = vpop.permute.xlu0 %2568
    %v2570 = vlaneseq
    %v2571 = vshrl.u32 %v2570, 7
    %v2572 = vadd.s32 %v2571, 56
    %2573 = vset.pattern.permute.xlu0 %v2572
    %2574 = vperm.xlu0 %2573, %v2527
    %v2575 = vpop.permute.xlu0 %2574
    %v2576 = vperm.slane %v2476, 2
    %v2577 = vlaneseq
    %v2578 = vshrl.u32 %v2577, 7
    %2580 = vset.pattern.permute.xlu0 %v2578
    %2581 = vperm.xlu0 %2580, %v2576
    %v2582 = vpop.permute.xlu0 %2581
    %v2583 = vlaneseq
    %v2584 = vshrl.u32 %v2583, 7
    %v2585 = vadd.s32 %v2584, 8
    %2586 = vset.pattern.permute.xlu0 %v2585
    %2587 = vperm.xlu0 %2586, %v2576
    %v2588 = vpop.permute.xlu0 %2587
    %v2589 = vlaneseq
    %v2590 = vshrl.u32 %v2589, 7
    %v2591 = vadd.s32 %v2590, 16
    %2592 = vset.pattern.permute.xlu0 %v2591
    %2593 = vperm.xlu0 %2592, %v2576
    %v2594 = vpop.permute.xlu0 %2593
    %v2595 = vlaneseq
    %v2596 = vshrl.u32 %v2595, 7
    %v2597 = vadd.s32 %v2596, 24
    %2598 = vset.pattern.permute.xlu0 %v2597
    %2599 = vperm.xlu0 %2598, %v2576
    %v2600 = vpop.permute.xlu0 %2599
    %v2601 = vlaneseq
    %v2602 = vshrl.u32 %v2601, 7
    %v2603 = vadd.s32 %v2602, 32
    %2604 = vset.pattern.permute.xlu0 %v2603
    %2605 = vperm.xlu0 %2604, %v2576
    %v2606 = vpop.permute.xlu0 %2605
    %v2607 = vlaneseq
    %v2608 = vshrl.u32 %v2607, 7
    %v2609 = vadd.s32 %v2608, 40
    %2610 = vset.pattern.permute.xlu0 %v2609
    %2611 = vperm.xlu0 %2610, %v2576
    %v2612 = vpop.permute.xlu0 %2611
    %v2613 = vlaneseq
    %v2614 = vshrl.u32 %v2613, 7
    %v2615 = vadd.s32 %v2614, 48
    %2616 = vset.pattern.permute.xlu0 %v2615
    %2617 = vperm.xlu0 %2616, %v2576
    %v2618 = vpop.permute.xlu0 %2617
    %v2619 = vlaneseq
    %v2620 = vshrl.u32 %v2619, 7
    %v2621 = vadd.s32 %v2620, 56
    %2622 = vset.pattern.permute.xlu0 %v2621
    %2623 = vperm.xlu0 %2622, %v2576
    %v2624 = vpop.permute.xlu0 %2623
    %v2625 = vperm.slane %v2476, 3
    %v2626 = vlaneseq
    %v2627 = vshrl.u32 %v2626, 7
    %2629 = vset.pattern.permute.xlu0 %v2627
    %2630 = vperm.xlu0 %2629, %v2625
    %v2631 = vpop.permute.xlu0 %2630
    %v2632 = vlaneseq
    %v2633 = vshrl.u32 %v2632, 7
    %v2634 = vadd.s32 %v2633, 8
    %2635 = vset.pattern.permute.xlu0 %v2634
    %2636 = vperm.xlu0 %2635, %v2625
    %v2637 = vpop.permute.xlu0 %2636
    %v2638 = vlaneseq
    %v2639 = vshrl.u32 %v2638, 7
    %v2640 = vadd.s32 %v2639, 16
    %2641 = vset.pattern.permute.xlu0 %v2640
    %2642 = vperm.xlu0 %2641, %v2625
    %v2643 = vpop.permute.xlu0 %2642
    %v2644 = vlaneseq
    %v2645 = vshrl.u32 %v2644, 7
    %v2646 = vadd.s32 %v2645, 24
    %2647 = vset.pattern.permute.xlu0 %v2646
    %2648 = vperm.xlu0 %2647, %v2625
    %v2649 = vpop.permute.xlu0 %2648
    %v2650 = vlaneseq
    %v2651 = vshrl.u32 %v2650, 7
    %v2652 = vadd.s32 %v2651, 32
    %2653 = vset.pattern.permute.xlu0 %v2652
    %2654 = vperm.xlu0 %2653, %v2625
    %v2655 = vpop.permute.xlu0 %2654
    %v2656 = vlaneseq
    %v2657 = vshrl.u32 %v2656, 7
    %v2658 = vadd.s32 %v2657, 40
    %2659 = vset.pattern.permute.xlu0 %v2658
    %2660 = vperm.xlu0 %2659, %v2625
    %v2661 = vpop.permute.xlu0 %2660
    %v2662 = vlaneseq
    %v2663 = vshrl.u32 %v2662, 7
    %v2664 = vadd.s32 %v2663, 48
    %2665 = vset.pattern.permute.xlu0 %v2664
    %2666 = vperm.xlu0 %2665, %v2625
    %v2667 = vpop.permute.xlu0 %2666
    %v2668 = vlaneseq
    %v2669 = vshrl.u32 %v2668, 7
    %v2670 = vadd.s32 %v2669, 56
    %2671 = vset.pattern.permute.xlu0 %v2670
    %2672 = vperm.xlu0 %2671, %v2625
    %v2673 = vpop.permute.xlu0 %2672
    %v2674 = vperm.slane %v2476, 4
    %v2675 = vlaneseq
    %v2676 = vshrl.u32 %v2675, 7
    %2678 = vset.pattern.permute.xlu0 %v2676
    %2679 = vperm.xlu0 %2678, %v2674
    %v2680 = vpop.permute.xlu0 %2679
    %v2681 = vlaneseq
    %v2682 = vshrl.u32 %v2681, 7
    %v2683 = vadd.s32 %v2682, 8
    %2684 = vset.pattern.permute.xlu0 %v2683
    %2685 = vperm.xlu0 %2684, %v2674
    %v2686 = vpop.permute.xlu0 %2685
    %v2687 = vlaneseq
    %v2688 = vshrl.u32 %v2687, 7
    %v2689 = vadd.s32 %v2688, 16
    %2690 = vset.pattern.permute.xlu0 %v2689
    %2691 = vperm.xlu0 %2690, %v2674
    %v2692 = vpop.permute.xlu0 %2691
    %v2693 = vlaneseq
    %v2694 = vshrl.u32 %v2693, 7
    %v2695 = vadd.s32 %v2694, 24
    %2696 = vset.pattern.permute.xlu0 %v2695
    %2697 = vperm.xlu0 %2696, %v2674
    %v2698 = vpop.permute.xlu0 %2697
    %v2699 = vlaneseq
    %v2700 = vshrl.u32 %v2699, 7
    %v2701 = vadd.s32 %v2700, 32
    %2702 = vset.pattern.permute.xlu0 %v2701
    %2703 = vperm.xlu0 %2702, %v2674
    %v2704 = vpop.permute.xlu0 %2703
    %v2705 = vlaneseq
    %v2706 = vshrl.u32 %v2705, 7
    %v2707 = vadd.s32 %v2706, 40
    %2708 = vset.pattern.permute.xlu0 %v2707
    %2709 = vperm.xlu0 %2708, %v2674
    %v2710 = vpop.permute.xlu0 %2709
    %v2711 = vlaneseq
    %v2712 = vshrl.u32 %v2711, 7
    %v2713 = vadd.s32 %v2712, 48
    %2714 = vset.pattern.permute.xlu0 %v2713
    %2715 = vperm.xlu0 %2714, %v2674
    %v2716 = vpop.permute.xlu0 %2715
    %v2717 = vlaneseq
    %v2718 = vshrl.u32 %v2717, 7
    %v2719 = vadd.s32 %v2718, 56
    %2720 = vset.pattern.permute.xlu0 %v2719
    %2721 = vperm.xlu0 %2720, %v2674
    %v2722 = vpop.permute.xlu0 %2721
    %v2723 = vperm.slane %v2476, 5
    %v2724 = vlaneseq
    %v2725 = vshrl.u32 %v2724, 7
    %2727 = vset.pattern.permute.xlu0 %v2725
    %2728 = vperm.xlu0 %2727, %v2723
    %v2729 = vpop.permute.xlu0 %2728
    %v2730 = vlaneseq
    %v2731 = vshrl.u32 %v2730, 7
    %v2732 = vadd.s32 %v2731, 8
    %2733 = vset.pattern.permute.xlu0 %v2732
    %2734 = vperm.xlu0 %2733, %v2723
    %v2735 = vpop.permute.xlu0 %2734
    %v2736 = vlaneseq
    %v2737 = vshrl.u32 %v2736, 7
    %v2738 = vadd.s32 %v2737, 16
    %2739 = vset.pattern.permute.xlu0 %v2738
    %2740 = vperm.xlu0 %2739, %v2723
    %v2741 = vpop.permute.xlu0 %2740
    %v2742 = vlaneseq
    %v2743 = vshrl.u32 %v2742, 7
    %v2744 = vadd.s32 %v2743, 24
    %2745 = vset.pattern.permute.xlu0 %v2744
    %2746 = vperm.xlu0 %2745, %v2723
    %v2747 = vpop.permute.xlu0 %2746
    %v2748 = vlaneseq
    %v2749 = vshrl.u32 %v2748, 7
    %v2750 = vadd.s32 %v2749, 32
    %2751 = vset.pattern.permute.xlu0 %v2750
    %2752 = vperm.xlu0 %2751, %v2723
    %v2753 = vpop.permute.xlu0 %2752
    %v2754 = vlaneseq
    %v2755 = vshrl.u32 %v2754, 7
    %v2756 = vadd.s32 %v2755, 40
    %2757 = vset.pattern.permute.xlu0 %v2756
    %2758 = vperm.xlu0 %2757, %v2723
    %v2759 = vpop.permute.xlu0 %2758
    %v2760 = vlaneseq
    %v2761 = vshrl.u32 %v2760, 7
    %v2762 = vadd.s32 %v2761, 48
    %2763 = vset.pattern.permute.xlu0 %v2762
    %2764 = vperm.xlu0 %2763, %v2723
    %v2765 = vpop.permute.xlu0 %2764
    %v2766 = vlaneseq
    %v2767 = vshrl.u32 %v2766, 7
    %v2768 = vadd.s32 %v2767, 56
    %2769 = vset.pattern.permute.xlu0 %v2768
    %2770 = vperm.xlu0 %2769, %v2723
    %v2771 = vpop.permute.xlu0 %2770
    %v2772 = vperm.slane %v2476, 6
    %v2773 = vlaneseq
    %v2774 = vshrl.u32 %v2773, 7
    %2776 = vset.pattern.permute.xlu0 %v2774
    %2777 = vperm.xlu0 %2776, %v2772
    %v2778 = vpop.permute.xlu0 %2777
    %v2779 = vlaneseq
    %v2780 = vshrl.u32 %v2779, 7
    %v2781 = vadd.s32 %v2780, 8
    %2782 = vset.pattern.permute.xlu0 %v2781
    %2783 = vperm.xlu0 %2782, %v2772
    %v2784 = vpop.permute.xlu0 %2783
    %v2785 = vlaneseq
    %v2786 = vshrl.u32 %v2785, 7
    %v2787 = vadd.s32 %v2786, 16
    %2788 = vset.pattern.permute.xlu0 %v2787
    %2789 = vperm.xlu0 %2788, %v2772
    %v2790 = vpop.permute.xlu0 %2789
    %v2791 = vlaneseq
    %v2792 = vshrl.u32 %v2791, 7
    %v2793 = vadd.s32 %v2792, 24
    %2794 = vset.pattern.permute.xlu0 %v2793
    %2795 = vperm.xlu0 %2794, %v2772
    %v2796 = vpop.permute.xlu0 %2795
    %v2797 = vlaneseq
    %v2798 = vshrl.u32 %v2797, 7
    %v2799 = vadd.s32 %v2798, 32
    %2800 = vset.pattern.permute.xlu0 %v2799
    %2801 = vperm.xlu0 %2800, %v2772
    %v2802 = vpop.permute.xlu0 %2801
    %v2803 = vlaneseq
    %v2804 = vshrl.u32 %v2803, 7
    %v2805 = vadd.s32 %v2804, 40
    %2806 = vset.pattern.permute.xlu0 %v2805
    %2807 = vperm.xlu0 %2806, %v2772
    %v2808 = vpop.permute.xlu0 %2807
    %v2809 = vlaneseq
    %v2810 = vshrl.u32 %v2809, 7
    %v2811 = vadd.s32 %v2810, 48
    %2812 = vset.pattern.permute.xlu0 %v2811
    %2813 = vperm.xlu0 %2812, %v2772
    %v2814 = vpop.permute.xlu0 %2813
    %v2815 = vlaneseq
    %v2816 = vshrl.u32 %v2815, 7
    %v2817 = vadd.s32 %v2816, 56
    %2818 = vset.pattern.permute.xlu0 %v2817
    %2819 = vperm.xlu0 %2818, %v2772
    %v2820 = vpop.permute.xlu0 %2819
    %v2821 = vperm.slane %v2476, 7
    %v2822 = vlaneseq
    %v2823 = vshrl.u32 %v2822, 7
    %2825 = vset.pattern.permute.xlu0 %v2823
    %2826 = vperm.xlu0 %2825, %v2821
    %v2827 = vpop.permute.xlu0 %2826
    %v2828 = vlaneseq
    %v2829 = vshrl.u32 %v2828, 7
    %v2830 = vadd.s32 %v2829, 8
    %2831 = vset.pattern.permute.xlu0 %v2830
    %2832 = vperm.xlu0 %2831, %v2821
    %v2833 = vpop.permute.xlu0 %2832
    %v2834 = vlaneseq
    %v2835 = vshrl.u32 %v2834, 7
    %v2836 = vadd.s32 %v2835, 16
    %2837 = vset.pattern.permute.xlu0 %v2836
    %2838 = vperm.xlu0 %2837, %v2821
    %v2839 = vpop.permute.xlu0 %2838
    %v2840 = vlaneseq
    %v2841 = vshrl.u32 %v2840, 7
    %v2842 = vadd.s32 %v2841, 24
    %2843 = vset.pattern.permute.xlu0 %v2842
    %2844 = vperm.xlu0 %2843, %v2821
    %v2845 = vpop.permute.xlu0 %2844
    %v2846 = vlaneseq
    %v2847 = vshrl.u32 %v2846, 7
    %v2848 = vadd.s32 %v2847, 32
    %2849 = vset.pattern.permute.xlu0 %v2848
    %2850 = vperm.xlu0 %2849, %v2821
    %v2851 = vpop.permute.xlu0 %2850
    %v2852 = vlaneseq
    %v2853 = vshrl.u32 %v2852, 7
    %v2854 = vadd.s32 %v2853, 40
    %2855 = vset.pattern.permute.xlu0 %v2854
    %2856 = vperm.xlu0 %2855, %v2821
    %v2857 = vpop.permute.xlu0 %2856
    %v2858 = vlaneseq
    %v2859 = vshrl.u32 %v2858, 7
    %v2860 = vadd.s32 %v2859, 48
    %2861 = vset.pattern.permute.xlu0 %v2860
    %2862 = vperm.xlu0 %2861, %v2821
    %v2863 = vpop.permute.xlu0 %2862
    %v2864 = vlaneseq
    %v2865 = vshrl.u32 %v2864, 7
    %v2866 = vadd.s32 %v2865, 56
    %2867 = vset.pattern.permute.xlu0 %v2866
    %2868 = vperm.xlu0 %2867, %v2821
    %v2869 = vpop.permute.xlu0 %2868
    %v2870 = vperm.slane %v2477, 0
    %v2871 = vlaneseq
    %v2872 = vshrl.u32 %v2871, 7
    %2874 = vset.pattern.permute.xlu0 %v2872
    %2875 = vperm.xlu0 %2874, %v2870
    %v2876 = vpop.permute.xlu0 %2875
    %v2877 = vlaneseq
    %v2878 = vshrl.u32 %v2877, 7
    %v2879 = vadd.s32 %v2878, 8
    %2880 = vset.pattern.permute.xlu0 %v2879
    %2881 = vperm.xlu0 %2880, %v2870
    %v2882 = vpop.permute.xlu0 %2881
    %v2883 = vlaneseq
    %v2884 = vshrl.u32 %v2883, 7
    %v2885 = vadd.s32 %v2884, 16
    %2886 = vset.pattern.permute.xlu0 %v2885
    %2887 = vperm.xlu0 %2886, %v2870
    %v2888 = vpop.permute.xlu0 %2887
    %v2889 = vlaneseq
    %v2890 = vshrl.u32 %v2889, 7
    %v2891 = vadd.s32 %v2890, 24
    %2892 = vset.pattern.permute.xlu0 %v2891
    %2893 = vperm.xlu0 %2892, %v2870
    %v2894 = vpop.permute.xlu0 %2893
    %v2895 = vlaneseq
    %v2896 = vshrl.u32 %v2895, 7
    %v2897 = vadd.s32 %v2896, 32
    %2898 = vset.pattern.permute.xlu0 %v2897
    %2899 = vperm.xlu0 %2898, %v2870
    %v2900 = vpop.permute.xlu0 %2899
    %v2901 = vlaneseq
    %v2902 = vshrl.u32 %v2901, 7
    %v2903 = vadd.s32 %v2902, 40
    %2904 = vset.pattern.permute.xlu0 %v2903
    %2905 = vperm.xlu0 %2904, %v2870
    %v2906 = vpop.permute.xlu0 %2905
    %v2907 = vlaneseq
    %v2908 = vshrl.u32 %v2907, 7
    %v2909 = vadd.s32 %v2908, 48
    %2910 = vset.pattern.permute.xlu0 %v2909
    %2911 = vperm.xlu0 %2910, %v2870
    %v2912 = vpop.permute.xlu0 %2911
    %v2913 = vlaneseq
    %v2914 = vshrl.u32 %v2913, 7
    %v2915 = vadd.s32 %v2914, 56
    %2916 = vset.pattern.permute.xlu0 %v2915
    %2917 = vperm.xlu0 %2916, %v2870
    %v2918 = vpop.permute.xlu0 %2917
    %v2919 = vperm.slane %v2477, 1
    %v2920 = vlaneseq
    %v2921 = vshrl.u32 %v2920, 7
    %2923 = vset.pattern.permute.xlu0 %v2921
    %2924 = vperm.xlu0 %2923, %v2919
    %v2925 = vpop.permute.xlu0 %2924
    %v2926 = vlaneseq
    %v2927 = vshrl.u32 %v2926, 7
    %v2928 = vadd.s32 %v2927, 8
    %2929 = vset.pattern.permute.xlu0 %v2928
    %2930 = vperm.xlu0 %2929, %v2919
    %v2931 = vpop.permute.xlu0 %2930
    %v2932 = vlaneseq
    %v2933 = vshrl.u32 %v2932, 7
    %v2934 = vadd.s32 %v2933, 16
    %2935 = vset.pattern.permute.xlu0 %v2934
    %2936 = vperm.xlu0 %2935, %v2919
    %v2937 = vpop.permute.xlu0 %2936
    %v2938 = vlaneseq
    %v2939 = vshrl.u32 %v2938, 7
    %v2940 = vadd.s32 %v2939, 24
    %2941 = vset.pattern.permute.xlu0 %v2940
    %2942 = vperm.xlu0 %2941, %v2919
    %v2943 = vpop.permute.xlu0 %2942
    %v2944 = vlaneseq
    %v2945 = vshrl.u32 %v2944, 7
    %v2946 = vadd.s32 %v2945, 32
    %2947 = vset.pattern.permute.xlu0 %v2946
    %2948 = vperm.xlu0 %2947, %v2919
    %v2949 = vpop.permute.xlu0 %2948
    %v2950 = vlaneseq
    %v2951 = vshrl.u32 %v2950, 7
    %v2952 = vadd.s32 %v2951, 40
    %2953 = vset.pattern.permute.xlu0 %v2952
    %2954 = vperm.xlu0 %2953, %v2919
    %v2955 = vpop.permute.xlu0 %2954
    %v2956 = vlaneseq
    %v2957 = vshrl.u32 %v2956, 7
    %v2958 = vadd.s32 %v2957, 48
    %2959 = vset.pattern.permute.xlu0 %v2958
    %2960 = vperm.xlu0 %2959, %v2919
    %v2961 = vpop.permute.xlu0 %2960
    %v2962 = vlaneseq
    %v2963 = vshrl.u32 %v2962, 7
    %v2964 = vadd.s32 %v2963, 56
    %2965 = vset.pattern.permute.xlu0 %v2964
    %2966 = vperm.xlu0 %2965, %v2919
    %v2967 = vpop.permute.xlu0 %2966
    %v2968 = vperm.slane %v2477, 2
    %v2969 = vlaneseq
    %v2970 = vshrl.u32 %v2969, 7
    %2972 = vset.pattern.permute.xlu0 %v2970
    %2973 = vperm.xlu0 %2972, %v2968
    %v2974 = vpop.permute.xlu0 %2973
    %v2975 = vlaneseq
    %v2976 = vshrl.u32 %v2975, 7
    %v2977 = vadd.s32 %v2976, 8
    %2978 = vset.pattern.permute.xlu0 %v2977
    %2979 = vperm.xlu0 %2978, %v2968
    %v2980 = vpop.permute.xlu0 %2979
    %v2981 = vlaneseq
    %v2982 = vshrl.u32 %v2981, 7
    %v2983 = vadd.s32 %v2982, 16
    %2984 = vset.pattern.permute.xlu0 %v2983
    %2985 = vperm.xlu0 %2984, %v2968
    %v2986 = vpop.permute.xlu0 %2985
    %v2987 = vlaneseq
    %v2988 = vshrl.u32 %v2987, 7
    %v2989 = vadd.s32 %v2988, 24
    %2990 = vset.pattern.permute.xlu0 %v2989
    %2991 = vperm.xlu0 %2990, %v2968
    %v2992 = vpop.permute.xlu0 %2991
    %v2993 = vlaneseq
    %v2994 = vshrl.u32 %v2993, 7
    %v2995 = vadd.s32 %v2994, 32
    %2996 = vset.pattern.permute.xlu0 %v2995
    %2997 = vperm.xlu0 %2996, %v2968
    %v2998 = vpop.permute.xlu0 %2997
    %v2999 = vlaneseq
    %v3000 = vshrl.u32 %v2999, 7
    %v3001 = vadd.s32 %v3000, 40
    %3002 = vset.pattern.permute.xlu0 %v3001
    %3003 = vperm.xlu0 %3002, %v2968
    %v3004 = vpop.permute.xlu0 %3003
    %v3005 = vlaneseq
    %v3006 = vshrl.u32 %v3005, 7
    %v3007 = vadd.s32 %v3006, 48
    %3008 = vset.pattern.permute.xlu0 %v3007
    %3009 = vperm.xlu0 %3008, %v2968
    %v3010 = vpop.permute.xlu0 %3009
    %v3011 = vlaneseq
    %v3012 = vshrl.u32 %v3011, 7
    %v3013 = vadd.s32 %v3012, 56
    %3014 = vset.pattern.permute.xlu0 %v3013
    %3015 = vperm.xlu0 %3014, %v2968
    %v3016 = vpop.permute.xlu0 %3015
    %v3017 = vperm.slane %v2477, 3
    %v3018 = vlaneseq
    %v3019 = vshrl.u32 %v3018, 7
    %3021 = vset.pattern.permute.xlu0 %v3019
    %3022 = vperm.xlu0 %3021, %v3017
    %v3023 = vpop.permute.xlu0 %3022
    %v3024 = vlaneseq
    %v3025 = vshrl.u32 %v3024, 7
    %v3026 = vadd.s32 %v3025, 8
    %3027 = vset.pattern.permute.xlu0 %v3026
    %3028 = vperm.xlu0 %3027, %v3017
    %v3029 = vpop.permute.xlu0 %3028
    %v3030 = vlaneseq
    %v3031 = vshrl.u32 %v3030, 7
    %v3032 = vadd.s32 %v3031, 16
    %3033 = vset.pattern.permute.xlu0 %v3032
    %3034 = vperm.xlu0 %3033, %v3017
    %v3035 = vpop.permute.xlu0 %3034
    %v3036 = vlaneseq
    %v3037 = vshrl.u32 %v3036, 7
    %v3038 = vadd.s32 %v3037, 24
    %3039 = vset.pattern.permute.xlu0 %v3038
    %3040 = vperm.xlu0 %3039, %v3017
    %v3041 = vpop.permute.xlu0 %3040
    %v3042 = vlaneseq
    %v3043 = vshrl.u32 %v3042, 7
    %v3044 = vadd.s32 %v3043, 32
    %3045 = vset.pattern.permute.xlu0 %v3044
    %3046 = vperm.xlu0 %3045, %v3017
    %v3047 = vpop.permute.xlu0 %3046
    %v3048 = vlaneseq
    %v3049 = vshrl.u32 %v3048, 7
    %v3050 = vadd.s32 %v3049, 40
    %3051 = vset.pattern.permute.xlu0 %v3050
    %3052 = vperm.xlu0 %3051, %v3017
    %v3053 = vpop.permute.xlu0 %3052
    %v3054 = vlaneseq
    %v3055 = vshrl.u32 %v3054, 7
    %v3056 = vadd.s32 %v3055, 48
    %3057 = vset.pattern.permute.xlu0 %v3056
    %3058 = vperm.xlu0 %3057, %v3017
    %v3059 = vpop.permute.xlu0 %3058
    %v3060 = vlaneseq
    %v3061 = vshrl.u32 %v3060, 7
    %v3062 = vadd.s32 %v3061, 56
    %3063 = vset.pattern.permute.xlu0 %v3062
    %3064 = vperm.xlu0 %3063, %v3017
    %v3065 = vpop.permute.xlu0 %3064
    %v3066 = vperm.slane %v2477, 4
    %v3067 = vlaneseq
    %v3068 = vshrl.u32 %v3067, 7
    %3070 = vset.pattern.permute.xlu0 %v3068
    %3071 = vperm.xlu0 %3070, %v3066
    %v3072 = vpop.permute.xlu0 %3071
    %v3073 = vlaneseq
    %v3074 = vshrl.u32 %v3073, 7
    %v3075 = vadd.s32 %v3074, 8
    %3076 = vset.pattern.permute.xlu0 %v3075
    %3077 = vperm.xlu0 %3076, %v3066
    %v3078 = vpop.permute.xlu0 %3077
    %v3079 = vlaneseq
    %v3080 = vshrl.u32 %v3079, 7
    %v3081 = vadd.s32 %v3080, 16
    %3082 = vset.pattern.permute.xlu0 %v3081
    %3083 = vperm.xlu0 %3082, %v3066
    %v3084 = vpop.permute.xlu0 %3083
    %v3085 = vlaneseq
    %v3086 = vshrl.u32 %v3085, 7
    %v3087 = vadd.s32 %v3086, 24
    %3088 = vset.pattern.permute.xlu0 %v3087
    %3089 = vperm.xlu0 %3088, %v3066
    %v3090 = vpop.permute.xlu0 %3089
    %v3091 = vlaneseq
    %v3092 = vshrl.u32 %v3091, 7
    %v3093 = vadd.s32 %v3092, 32
    %3094 = vset.pattern.permute.xlu0 %v3093
    %3095 = vperm.xlu0 %3094, %v3066
    %v3096 = vpop.permute.xlu0 %3095
    %v3097 = vlaneseq
    %v3098 = vshrl.u32 %v3097, 7
    %v3099 = vadd.s32 %v3098, 40
    %3100 = vset.pattern.permute.xlu0 %v3099
    %3101 = vperm.xlu0 %3100, %v3066
    %v3102 = vpop.permute.xlu0 %3101
    %v3103 = vlaneseq
    %v3104 = vshrl.u32 %v3103, 7
    %v3105 = vadd.s32 %v3104, 48
    %3106 = vset.pattern.permute.xlu0 %v3105
    %3107 = vperm.xlu0 %3106, %v3066
    %v3108 = vpop.permute.xlu0 %3107
    %v3109 = vlaneseq
    %v3110 = vshrl.u32 %v3109, 7
    %v3111 = vadd.s32 %v3110, 56
    %3112 = vset.pattern.permute.xlu0 %v3111
    %3113 = vperm.xlu0 %3112, %v3066
    %v3114 = vpop.permute.xlu0 %3113
    %v3115 = vperm.slane %v2477, 5
    %v3116 = vlaneseq
    %v3117 = vshrl.u32 %v3116, 7
    %3119 = vset.pattern.permute.xlu0 %v3117
    %3120 = vperm.xlu0 %3119, %v3115
    %v3121 = vpop.permute.xlu0 %3120
    %v3122 = vlaneseq
    %v3123 = vshrl.u32 %v3122, 7
    %v3124 = vadd.s32 %v3123, 8
    %3125 = vset.pattern.permute.xlu0 %v3124
    %3126 = vperm.xlu0 %3125, %v3115
    %v3127 = vpop.permute.xlu0 %3126
    %v3128 = vlaneseq
    %v3129 = vshrl.u32 %v3128, 7
    %v3130 = vadd.s32 %v3129, 16
    %3131 = vset.pattern.permute.xlu0 %v3130
    %3132 = vperm.xlu0 %3131, %v3115
    %v3133 = vpop.permute.xlu0 %3132
    %v3134 = vlaneseq
    %v3135 = vshrl.u32 %v3134, 7
    %v3136 = vadd.s32 %v3135, 24
    %3137 = vset.pattern.permute.xlu0 %v3136
    %3138 = vperm.xlu0 %3137, %v3115
    %v3139 = vpop.permute.xlu0 %3138
    %v3140 = vlaneseq
    %v3141 = vshrl.u32 %v3140, 7
    %v3142 = vadd.s32 %v3141, 32
    %3143 = vset.pattern.permute.xlu0 %v3142
    %3144 = vperm.xlu0 %3143, %v3115
    %v3145 = vpop.permute.xlu0 %3144
    %v3146 = vlaneseq
    %v3147 = vshrl.u32 %v3146, 7
    %v3148 = vadd.s32 %v3147, 40
    %3149 = vset.pattern.permute.xlu0 %v3148
    %3150 = vperm.xlu0 %3149, %v3115
    %v3151 = vpop.permute.xlu0 %3150
    %v3152 = vlaneseq
    %v3153 = vshrl.u32 %v3152, 7
    %v3154 = vadd.s32 %v3153, 48
    %3155 = vset.pattern.permute.xlu0 %v3154
    %3156 = vperm.xlu0 %3155, %v3115
    %v3157 = vpop.permute.xlu0 %3156
    %v3158 = vlaneseq
    %v3159 = vshrl.u32 %v3158, 7
    %v3160 = vadd.s32 %v3159, 56
    %3161 = vset.pattern.permute.xlu0 %v3160
    %3162 = vperm.xlu0 %3161, %v3115
    %v3163 = vpop.permute.xlu0 %3162
    %v3164 = vperm.slane %v2477, 6
    %v3165 = vlaneseq
    %v3166 = vshrl.u32 %v3165, 7
    %3168 = vset.pattern.permute.xlu0 %v3166
    %3169 = vperm.xlu0 %3168, %v3164
    %v3170 = vpop.permute.xlu0 %3169
    %v3171 = vlaneseq
    %v3172 = vshrl.u32 %v3171, 7
    %v3173 = vadd.s32 %v3172, 8
    %3174 = vset.pattern.permute.xlu0 %v3173
    %3175 = vperm.xlu0 %3174, %v3164
    %v3176 = vpop.permute.xlu0 %3175
    %v3177 = vlaneseq
    %v3178 = vshrl.u32 %v3177, 7
    %v3179 = vadd.s32 %v3178, 16
    %3180 = vset.pattern.permute.xlu0 %v3179
    %3181 = vperm.xlu0 %3180, %v3164
    %v3182 = vpop.permute.xlu0 %3181
    %v3183 = vlaneseq
    %v3184 = vshrl.u32 %v3183, 7
    %v3185 = vadd.s32 %v3184, 24
    %3186 = vset.pattern.permute.xlu0 %v3185
    %3187 = vperm.xlu0 %3186, %v3164
    %v3188 = vpop.permute.xlu0 %3187
    %v3189 = vlaneseq
    %v3190 = vshrl.u32 %v3189, 7
    %v3191 = vadd.s32 %v3190, 32
    %3192 = vset.pattern.permute.xlu0 %v3191
    %3193 = vperm.xlu0 %3192, %v3164
    %v3194 = vpop.permute.xlu0 %3193
    %v3195 = vlaneseq
    %v3196 = vshrl.u32 %v3195, 7
    %v3197 = vadd.s32 %v3196, 40
    %3198 = vset.pattern.permute.xlu0 %v3197
    %3199 = vperm.xlu0 %3198, %v3164
    %v3200 = vpop.permute.xlu0 %3199
    %v3201 = vlaneseq
    %v3202 = vshrl.u32 %v3201, 7
    %v3203 = vadd.s32 %v3202, 48
    %3204 = vset.pattern.permute.xlu0 %v3203
    %3205 = vperm.xlu0 %3204, %v3164
    %v3206 = vpop.permute.xlu0 %3205
    %v3207 = vlaneseq
    %v3208 = vshrl.u32 %v3207, 7
    %v3209 = vadd.s32 %v3208, 56
    %3210 = vset.pattern.permute.xlu0 %v3209
    %3211 = vperm.xlu0 %3210, %v3164
    %v3212 = vpop.permute.xlu0 %3211
    %v3213 = vperm.slane %v2477, 7
    %v3214 = vlaneseq
    %v3215 = vshrl.u32 %v3214, 7
    %3217 = vset.pattern.permute.xlu0 %v3215
    %3218 = vperm.xlu0 %3217, %v3213
    %v3219 = vpop.permute.xlu0 %3218
    %v3220 = vlaneseq
    %v3221 = vshrl.u32 %v3220, 7
    %v3222 = vadd.s32 %v3221, 8
    %3223 = vset.pattern.permute.xlu0 %v3222
    %3224 = vperm.xlu0 %3223, %v3213
    %v3225 = vpop.permute.xlu0 %3224
    %v3226 = vlaneseq
    %v3227 = vshrl.u32 %v3226, 7
    %v3228 = vadd.s32 %v3227, 16
    %3229 = vset.pattern.permute.xlu0 %v3228
    %3230 = vperm.xlu0 %3229, %v3213
    %v3231 = vpop.permute.xlu0 %3230
    %v3232 = vlaneseq
    %v3233 = vshrl.u32 %v3232, 7
    %v3234 = vadd.s32 %v3233, 24
    %3235 = vset.pattern.permute.xlu0 %v3234
    %3236 = vperm.xlu0 %3235, %v3213
    %v3237 = vpop.permute.xlu0 %3236
    %v3238 = vlaneseq
    %v3239 = vshrl.u32 %v3238, 7
    %v3240 = vadd.s32 %v3239, 32
    %3241 = vset.pattern.permute.xlu0 %v3240
    %3242 = vperm.xlu0 %3241, %v3213
    %v3243 = vpop.permute.xlu0 %3242
    %v3244 = vlaneseq
    %v3245 = vshrl.u32 %v3244, 7
    %v3246 = vadd.s32 %v3245, 40
    %3247 = vset.pattern.permute.xlu0 %v3246
    %3248 = vperm.xlu0 %3247, %v3213
    %v3249 = vpop.permute.xlu0 %3248
    %v3250 = vlaneseq
    %v3251 = vshrl.u32 %v3250, 7
    %v3252 = vadd.s32 %v3251, 48
    %3253 = vset.pattern.permute.xlu0 %v3252
    %3254 = vperm.xlu0 %3253, %v3213
    %v3255 = vpop.permute.xlu0 %3254
    %v3256 = vlaneseq
    %v3257 = vshrl.u32 %v3256, 7
    %v3258 = vadd.s32 %v3257, 56
    %3259 = vset.pattern.permute.xlu0 %v3258
    %3260 = vperm.xlu0 %3259, %v3213
    %v3261 = vpop.permute.xlu0 %3260
    %v3262 = vadd.f32 %v2156, %v2484
    %v3263 = vadd.f32 %v2158, %v2490
    %v3264 = vadd.f32 %v2161, %v2496
    %v3265 = vadd.f32 %v2163, %v2502
    %v3266 = vadd.f32 %v2166, %v2508
    %v3267 = vadd.f32 %v2168, %v2514
    %v3268 = vadd.f32 %v2171, %v2520
    %v3269 = vadd.f32 %v2173, %v2526
    %v3270 = vadd.f32 %v2176, %v2533
    %v3271 = vadd.f32 %v2178, %v2539
    %v3272 = vadd.f32 %v2181, %v2545
    %v3273 = vadd.f32 %v2183, %v2551
    %v3274 = vadd.f32 %v2186, %v2557
    %v3275 = vadd.f32 %v2188, %v2563
    %v3276 = vadd.f32 %v2191, %v2569
    %v3277 = vadd.f32 %v2193, %v2575
    %v3278 = vadd.f32 %v2196, %v2582
    %v3279 = vadd.f32 %v2198, %v2588
    %v3280 = vadd.f32 %v2201, %v2594
    %v3281 = vadd.f32 %v2203, %v2600
    %v3282 = vadd.f32 %v2206, %v2606
    %v3283 = vadd.f32 %v2208, %v2612
    %v3284 = vadd.f32 %v2211, %v2618
    %v3285 = vadd.f32 %v2213, %v2624
    %v3286 = vadd.f32 %v2216, %v2631
    %v3287 = vadd.f32 %v2218, %v2637
    %v3288 = vadd.f32 %v2221, %v2643
    %v3289 = vadd.f32 %v2223, %v2649
    %v3290 = vadd.f32 %v2226, %v2655
    %v3291 = vadd.f32 %v2228, %v2661
    %v3292 = vadd.f32 %v2231, %v2667
    %v3293 = vadd.f32 %v2233, %v2673
    %v3294 = vadd.f32 %v2236, %v2680
    %v3295 = vadd.f32 %v2238, %v2686
    %v3296 = vadd.f32 %v2241, %v2692
    %v3297 = vadd.f32 %v2243, %v2698
    %v3298 = vadd.f32 %v2246, %v2704
    %v3299 = vadd.f32 %v2248, %v2710
    %v3300 = vadd.f32 %v2251, %v2716
    %v3301 = vadd.f32 %v2253, %v2722
    %v3302 = vadd.f32 %v2256, %v2729
    %v3303 = vadd.f32 %v2258, %v2735
    %v3304 = vadd.f32 %v2261, %v2741
    %v3305 = vadd.f32 %v2263, %v2747
    %v3306 = vadd.f32 %v2266, %v2753
    %v3307 = vadd.f32 %v2268, %v2759
    %v3308 = vadd.f32 %v2271, %v2765
    %v3309 = vadd.f32 %v2273, %v2771
    %v3310 = vadd.f32 %v2276, %v2778
    %v3311 = vadd.f32 %v2278, %v2784
    %v3312 = vadd.f32 %v2281, %v2790
    %v3313 = vadd.f32 %v2283, %v2796
    %v3314 = vadd.f32 %v2286, %v2802
    %v3315 = vadd.f32 %v2288, %v2808
    %v3316 = vadd.f32 %v2291, %v2814
    %v3317 = vadd.f32 %v2293, %v2820
    %v3318 = vadd.f32 %v2296, %v2827
    %v3319 = vadd.f32 %v2298, %v2833
    %v3320 = vadd.f32 %v2301, %v2839
    %v3321 = vadd.f32 %v2303, %v2845
    %v3322 = vadd.f32 %v2306, %v2851
    %v3323 = vadd.f32 %v2308, %v2857
    %v3324 = vadd.f32 %v2311, %v2863
    %v3325 = vadd.f32 %v2313, %v2869
    %v3326 = vadd.f32 %v2316, %v2876
    %v3327 = vadd.f32 %v2318, %v2882
    %v3328 = vadd.f32 %v2321, %v2888
    %v3329 = vadd.f32 %v2323, %v2894
    %v3330 = vadd.f32 %v2326, %v2900
    %v3331 = vadd.f32 %v2328, %v2906
    %v3332 = vadd.f32 %v2331, %v2912
    %v3333 = vadd.f32 %v2333, %v2918
    %v3334 = vadd.f32 %v2336, %v2925
    %v3335 = vadd.f32 %v2338, %v2931
    %v3336 = vadd.f32 %v2341, %v2937
    %v3337 = vadd.f32 %v2343, %v2943
    %v3338 = vadd.f32 %v2346, %v2949
    %v3339 = vadd.f32 %v2348, %v2955
    %v3340 = vadd.f32 %v2351, %v2961
    %v3341 = vadd.f32 %v2353, %v2967
    %v3342 = vadd.f32 %v2356, %v2974
    %v3343 = vadd.f32 %v2358, %v2980
    %v3344 = vadd.f32 %v2361, %v2986
    %v3345 = vadd.f32 %v2363, %v2992
    %v3346 = vadd.f32 %v2366, %v2998
    %v3347 = vadd.f32 %v2368, %v3004
    %v3348 = vadd.f32 %v2371, %v3010
    %v3349 = vadd.f32 %v2373, %v3016
    %v3350 = vadd.f32 %v2376, %v3023
    %v3351 = vadd.f32 %v2378, %v3029
    %v3352 = vadd.f32 %v2381, %v3035
    %v3353 = vadd.f32 %v2383, %v3041
    %v3354 = vadd.f32 %v2386, %v3047
    %v3355 = vadd.f32 %v2388, %v3053
    %v3356 = vadd.f32 %v2391, %v3059
    %v3357 = vadd.f32 %v2393, %v3065
    %v3358 = vadd.f32 %v2396, %v3072
    %v3359 = vadd.f32 %v2398, %v3078
    %v3360 = vadd.f32 %v2401, %v3084
    %v3361 = vadd.f32 %v2403, %v3090
    %v3362 = vadd.f32 %v2406, %v3096
    %v3363 = vadd.f32 %v2408, %v3102
    %v3364 = vadd.f32 %v2411, %v3108
    %v3365 = vadd.f32 %v2413, %v3114
    %v3366 = vadd.f32 %v2416, %v3121
    %v3367 = vadd.f32 %v2418, %v3127
    %v3368 = vadd.f32 %v2421, %v3133
    %v3369 = vadd.f32 %v2423, %v3139
    %v3370 = vadd.f32 %v2426, %v3145
    %v3371 = vadd.f32 %v2428, %v3151
    %v3372 = vadd.f32 %v2431, %v3157
    %v3373 = vadd.f32 %v2433, %v3163
    %v3374 = vadd.f32 %v2436, %v3170
    %v3375 = vadd.f32 %v2438, %v3176
    %v3376 = vadd.f32 %v2441, %v3182
    %v3377 = vadd.f32 %v2443, %v3188
    %v3378 = vadd.f32 %v2446, %v3194
    %v3379 = vadd.f32 %v2448, %v3200
    %v3380 = vadd.f32 %v2451, %v3206
    %v3381 = vadd.f32 %v2453, %v3212
    %v3382 = vadd.f32 %v2456, %v3219
    %v3383 = vadd.f32 %v2458, %v3225
    %v3384 = vadd.f32 %v2461, %v3231
    %v3385 = vadd.f32 %v2463, %v3237
    %v3386 = vadd.f32 %v2466, %v3243
    %v3387 = vadd.f32 %v2468, %v3249
    %v3388 = vadd.f32 %v2471, %v3255
    %v3389 = vadd.f32 %v2473, %v3261
    %v3390 = vmax.f32 %v3262, %v3263
    %v3391 = vmax.f32 %v3390, %v3264
    %v3392 = vmax.f32 %v3391, %v3265
    %v3393 = vmax.f32 %v3392, %v3266
    %v3394 = vmax.f32 %v3393, %v3267
    %v3395 = vmax.f32 %v3394, %v3268
    %v3396 = vmax.f32 %v3395, %v3269
    %v3397 = vrot.slane %v3396, 4
    %v3398 = vmax.f32 %v3396, %v3397
    %v3399 = vrot.slane %v3398, 2
    %v3400 = vmax.f32 %v3398, %v3399
    %v3401 = vrot.slane %v3400, 1
    %v3402 = vmax.f32 %v3400, %v3401
    %v3403 = vmax.f32 %v3270, %v3271
    %v3404 = vmax.f32 %v3403, %v3272
    %v3405 = vmax.f32 %v3404, %v3273
    %v3406 = vmax.f32 %v3405, %v3274
    %v3407 = vmax.f32 %v3406, %v3275
    %v3408 = vmax.f32 %v3407, %v3276
    %v3409 = vmax.f32 %v3408, %v3277
    %v3410 = vrot.slane %v3409, 4
    %v3411 = vmax.f32 %v3409, %v3410
    %v3412 = vrot.slane %v3411, 2
    %v3413 = vmax.f32 %v3411, %v3412
    %v3414 = vrot.slane %v3413, 1
    %v3415 = vmax.f32 %v3413, %v3414
    %v3416 = vmax.f32 %v3278, %v3279
    %v3417 = vmax.f32 %v3416, %v3280
    %v3418 = vmax.f32 %v3417, %v3281
    %v3419 = vmax.f32 %v3418, %v3282
    %v3420 = vmax.f32 %v3419, %v3283
    %v3421 = vmax.f32 %v3420, %v3284
    %v3422 = vmax.f32 %v3421, %v3285
    %v3423 = vrot.slane %v3422, 4
    %v3424 = vmax.f32 %v3422, %v3423
    %v3425 = vrot.slane %v3424, 2
    %v3426 = vmax.f32 %v3424, %v3425
    %v3427 = vrot.slane %v3426, 1
    %v3428 = vmax.f32 %v3426, %v3427
    %v3429 = vmax.f32 %v3286, %v3287
    %v3430 = vmax.f32 %v3429, %v3288
    %v3431 = vmax.f32 %v3430, %v3289
    %v3432 = vmax.f32 %v3431, %v3290
    %v3433 = vmax.f32 %v3432, %v3291
    %v3434 = vmax.f32 %v3433, %v3292
    %v3435 = vmax.f32 %v3434, %v3293
    %v3436 = vrot.slane %v3435, 4
    %v3437 = vmax.f32 %v3435, %v3436
    %v3438 = vrot.slane %v3437, 2
    %v3439 = vmax.f32 %v3437, %v3438
    %v3440 = vrot.slane %v3439, 1
    %v3441 = vmax.f32 %v3439, %v3440
    %v3442 = vmax.f32 %v3294, %v3295
    %v3443 = vmax.f32 %v3442, %v3296
    %v3444 = vmax.f32 %v3443, %v3297
    %v3445 = vmax.f32 %v3444, %v3298
    %v3446 = vmax.f32 %v3445, %v3299
    %v3447 = vmax.f32 %v3446, %v3300
    %v3448 = vmax.f32 %v3447, %v3301
    %v3449 = vrot.slane %v3448, 4
    %v3450 = vmax.f32 %v3448, %v3449
    %v3451 = vrot.slane %v3450, 2
    %v3452 = vmax.f32 %v3450, %v3451
    %v3453 = vrot.slane %v3452, 1
    %v3454 = vmax.f32 %v3452, %v3453
    %v3455 = vmax.f32 %v3302, %v3303
    %v3456 = vmax.f32 %v3455, %v3304
    %v3457 = vmax.f32 %v3456, %v3305
    %v3458 = vmax.f32 %v3457, %v3306
    %v3459 = vmax.f32 %v3458, %v3307
    %v3460 = vmax.f32 %v3459, %v3308
    %v3461 = vmax.f32 %v3460, %v3309
    %v3462 = vrot.slane %v3461, 4
    %v3463 = vmax.f32 %v3461, %v3462
    %v3464 = vrot.slane %v3463, 2
    %v3465 = vmax.f32 %v3463, %v3464
    %v3466 = vrot.slane %v3465, 1
    %v3467 = vmax.f32 %v3465, %v3466
    %v3468 = vmax.f32 %v3310, %v3311
    %v3469 = vmax.f32 %v3468, %v3312
    %v3470 = vmax.f32 %v3469, %v3313
    %v3471 = vmax.f32 %v3470, %v3314
    %v3472 = vmax.f32 %v3471, %v3315
    %v3473 = vmax.f32 %v3472, %v3316
    %v3474 = vmax.f32 %v3473, %v3317
    %v3475 = vrot.slane %v3474, 4
    %v3476 = vmax.f32 %v3474, %v3475
    %v3477 = vrot.slane %v3476, 2
    %v3478 = vmax.f32 %v3476, %v3477
    %v3479 = vrot.slane %v3478, 1
    %v3480 = vmax.f32 %v3478, %v3479
    %v3481 = vmax.f32 %v3318, %v3319
    %v3482 = vmax.f32 %v3481, %v3320
    %v3483 = vmax.f32 %v3482, %v3321
    %v3484 = vmax.f32 %v3483, %v3322
    %v3485 = vmax.f32 %v3484, %v3323
    %v3486 = vmax.f32 %v3485, %v3324
    %v3487 = vmax.f32 %v3486, %v3325
    %v3488 = vrot.slane %v3487, 4
    %v3489 = vmax.f32 %v3487, %v3488
    %v3490 = vrot.slane %v3489, 2
    %v3491 = vmax.f32 %v3489, %v3490
    %v3492 = vrot.slane %v3491, 1
    %v3493 = vmax.f32 %v3491, %v3492
    %v3494 = vmax.f32 %v3326, %v3327
    %v3495 = vmax.f32 %v3494, %v3328
    %v3496 = vmax.f32 %v3495, %v3329
    %v3497 = vmax.f32 %v3496, %v3330
    %v3498 = vmax.f32 %v3497, %v3331
    %v3499 = vmax.f32 %v3498, %v3332
    %v3500 = vmax.f32 %v3499, %v3333
    %v3501 = vrot.slane %v3500, 4
    %v3502 = vmax.f32 %v3500, %v3501
    %v3503 = vrot.slane %v3502, 2
    %v3504 = vmax.f32 %v3502, %v3503
    %v3505 = vrot.slane %v3504, 1
    %v3506 = vmax.f32 %v3504, %v3505
    %v3507 = vmax.f32 %v3334, %v3335
    %v3508 = vmax.f32 %v3507, %v3336
    %v3509 = vmax.f32 %v3508, %v3337
    %v3510 = vmax.f32 %v3509, %v3338
    %v3511 = vmax.f32 %v3510, %v3339
    %v3512 = vmax.f32 %v3511, %v3340
    %v3513 = vmax.f32 %v3512, %v3341
    %v3514 = vrot.slane %v3513, 4
    %v3515 = vmax.f32 %v3513, %v3514
    %v3516 = vrot.slane %v3515, 2
    %v3517 = vmax.f32 %v3515, %v3516
    %v3518 = vrot.slane %v3517, 1
    %v3519 = vmax.f32 %v3517, %v3518
    %v3520 = vmax.f32 %v3342, %v3343
    %v3521 = vmax.f32 %v3520, %v3344
    %v3522 = vmax.f32 %v3521, %v3345
    %v3523 = vmax.f32 %v3522, %v3346
    %v3524 = vmax.f32 %v3523, %v3347
    %v3525 = vmax.f32 %v3524, %v3348
    %v3526 = vmax.f32 %v3525, %v3349
    %v3527 = vrot.slane %v3526, 4
    %v3528 = vmax.f32 %v3526, %v3527
    %v3529 = vrot.slane %v3528, 2
    %v3530 = vmax.f32 %v3528, %v3529
    %v3531 = vrot.slane %v3530, 1
    %v3532 = vmax.f32 %v3530, %v3531
    %v3533 = vmax.f32 %v3350, %v3351
    %v3534 = vmax.f32 %v3533, %v3352
    %v3535 = vmax.f32 %v3534, %v3353
    %v3536 = vmax.f32 %v3535, %v3354
    %v3537 = vmax.f32 %v3536, %v3355
    %v3538 = vmax.f32 %v3537, %v3356
    %v3539 = vmax.f32 %v3538, %v3357
    %v3540 = vrot.slane %v3539, 4
    %v3541 = vmax.f32 %v3539, %v3540
    %v3542 = vrot.slane %v3541, 2
    %v3543 = vmax.f32 %v3541, %v3542
    %v3544 = vrot.slane %v3543, 1
    %v3545 = vmax.f32 %v3543, %v3544
    %v3546 = vmax.f32 %v3358, %v3359
    %v3547 = vmax.f32 %v3546, %v3360
    %v3548 = vmax.f32 %v3547, %v3361
    %v3549 = vmax.f32 %v3548, %v3362
    %v3550 = vmax.f32 %v3549, %v3363
    %v3551 = vmax.f32 %v3550, %v3364
    %v3552 = vmax.f32 %v3551, %v3365
    %v3553 = vrot.slane %v3552, 4
    %v3554 = vmax.f32 %v3552, %v3553
    %v3555 = vrot.slane %v3554, 2
    %v3556 = vmax.f32 %v3554, %v3555
    %v3557 = vrot.slane %v3556, 1
    %v3558 = vmax.f32 %v3556, %v3557
    %v3559 = vmax.f32 %v3366, %v3367
    %v3560 = vmax.f32 %v3559, %v3368
    %v3561 = vmax.f32 %v3560, %v3369
    %v3562 = vmax.f32 %v3561, %v3370
    %v3563 = vmax.f32 %v3562, %v3371
    %v3564 = vmax.f32 %v3563, %v3372
    %v3565 = vmax.f32 %v3564, %v3373
    %v3566 = vrot.slane %v3565, 4
    %v3567 = vmax.f32 %v3565, %v3566
    %v3568 = vrot.slane %v3567, 2
    %v3569 = vmax.f32 %v3567, %v3568
    %v3570 = vrot.slane %v3569, 1
    %v3571 = vmax.f32 %v3569, %v3570
    %v3572 = vmax.f32 %v3374, %v3375
    %v3573 = vmax.f32 %v3572, %v3376
    %v3574 = vmax.f32 %v3573, %v3377
    %v3575 = vmax.f32 %v3574, %v3378
    %v3576 = vmax.f32 %v3575, %v3379
    %v3577 = vmax.f32 %v3576, %v3380
    %v3578 = vmax.f32 %v3577, %v3381
    %v3579 = vrot.slane %v3578, 4
    %v3580 = vmax.f32 %v3578, %v3579
    %v3581 = vrot.slane %v3580, 2
    %v3582 = vmax.f32 %v3580, %v3581
    %v3583 = vrot.slane %v3582, 1
    %v3584 = vmax.f32 %v3582, %v3583
    %v3585 = vmax.f32 %v3382, %v3383
    %v3586 = vmax.f32 %v3585, %v3384
    %v3587 = vmax.f32 %v3586, %v3385
    %v3588 = vmax.f32 %v3587, %v3386
    %v3589 = vmax.f32 %v3588, %v3387
    %v3590 = vmax.f32 %v3589, %v3388
    %v3591 = vmax.f32 %v3590, %v3389
    %v3592 = vrot.slane %v3591, 4
    %v3593 = vmax.f32 %v3591, %v3592
    %v3594 = vrot.slane %v3593, 2
    %v3595 = vmax.f32 %v3593, %v3594
    %v3596 = vrot.slane %v3595, 1
    %v3597 = vmax.f32 %v3595, %v3596
    %vm3598 = vcmp.gt.f32.partialorder %v3402, -1e+38
    %vm3599 = vcmp.gt.f32.partialorder %v3415, -1e+38
    %vm3600 = vcmp.gt.f32.partialorder %v3428, -1e+38
    %vm3601 = vcmp.gt.f32.partialorder %v3441, -1e+38
    %vm3602 = vcmp.gt.f32.partialorder %v3454, -1e+38
    %vm3603 = vcmp.gt.f32.partialorder %v3467, -1e+38
    %vm3604 = vcmp.gt.f32.partialorder %v3480, -1e+38
    %vm3605 = vcmp.gt.f32.partialorder %v3493, -1e+38
    %vm3606 = vcmp.gt.f32.partialorder %v3506, -1e+38
    %vm3607 = vcmp.gt.f32.partialorder %v3519, -1e+38
    %vm3608 = vcmp.gt.f32.partialorder %v3532, -1e+38
    %vm3609 = vcmp.gt.f32.partialorder %v3545, -1e+38
    %vm3610 = vcmp.gt.f32.partialorder %v3558, -1e+38
    %vm3611 = vcmp.gt.f32.partialorder %v3571, -1e+38
    %vm3612 = vcmp.gt.f32.partialorder %v3584, -1e+38
    %vm3613 = vcmp.gt.f32.partialorder %v3597, -1e+38
    %v3614 = vsel %vm3598, %v3402, 0.0
    %v3615 = vsel %vm3599, %v3415, 0.0
    %v3616 = vsel %vm3600, %v3428, 0.0
    %v3617 = vsel %vm3601, %v3441, 0.0
    %v3618 = vsel %vm3602, %v3454, 0.0
    %v3619 = vsel %vm3603, %v3467, 0.0
    %v3620 = vsel %vm3604, %v3480, 0.0
    %v3621 = vsel %vm3605, %v3493, 0.0
    %v3622 = vsel %vm3606, %v3506, 0.0
    %v3623 = vsel %vm3607, %v3519, 0.0
    %v3624 = vsel %vm3608, %v3532, 0.0
    %v3625 = vsel %vm3609, %v3545, 0.0
    %v3626 = vsel %vm3610, %v3558, 0.0
    %v3627 = vsel %vm3611, %v3571, 0.0
    %v3628 = vsel %vm3612, %v3584, 0.0
    %v3629 = vsel %vm3613, %v3597, 0.0
    %vm3646 = vcmask 1041409
    %v3647 = vsel %vm3646, %v3615, %v3614
    %vm3648 = vcmask 1042434
    %v3649 = vsel %vm3648, %v3616, %v3647
    %vm3650 = vcmask 1043459
    %v3651 = vsel %vm3650, %v3617, %v3649
    %vm3652 = vcmask 1044484
    %v3653 = vsel %vm3652, %v3618, %v3651
    %vm3654 = vcmask 1045509
    %v3655 = vsel %vm3654, %v3619, %v3653
    %vm3656 = vcmask 1046534
    %v3657 = vsel %vm3656, %v3620, %v3655
    %vm3658 = vcmask 1047559
    %v3659 = vsel %vm3658, %v3621, %v3657
    %v3660 = vsel %vm3646, %v3623, %v3622
    %v3661 = vsel %vm3648, %v3624, %v3660
    %v3662 = vsel %vm3650, %v3625, %v3661
    %v3663 = vsel %vm3652, %v3626, %v3662
    %v3664 = vsel %vm3654, %v3627, %v3663
    %v3665 = vsel %vm3656, %v3628, %v3664
    %v3666 = vsel %vm3658, %v3629, %v3665
    %s3669 = scalar_lea.vmem %s8, %s45
    %3670 = vst [vmem:[%s3669] sm:$0xff] %v3659
    %3671 = vst [vmem:[%s3669 + $0x8] sm:$0xff] %v3666
  $region38: #{net_forward.3} parent=0 // loop_footer
    %s43 = sadd.s32 1, %s39
  $region39: #{net_forward.3} parent=0 // loop_footer_branch
    %38 = sbr.rel target = $region35
  $region40: #{net_forward.3} parent=0 // loop_exit
    _
  // Predicated region
  $region41: #{net_forward.3} parent=0 // pred_check
    _
  $region42: #{net_forward.3} parent=0 // pred_check_branch
    %3673 = sbr.rel (0) target = $region44
  $region43: #{net_forward.3} parent=0 // pred_region
    _
  $region44: #{net_forward.3} parent=0 // pred_fallthru
    _
  // Predicated region
  $region45: #{net_forward.3} parent=0 // pred_check
    _
  $region46: #{net_forward.3} parent=0 // pred_check_branch
    %3675 = sbr.rel (0) target = $region48
  $region47: #{net_forward.3} parent=0 // pred_region
    _
  $region48: #{net_forward.3} parent=0 // pred_fallthru
    _

// kernel: net_forward.5
$region0: #{net_forward.5}
  #allocation0 [shape = 'u32[]', space=smem, size = 0x4, offset = 0x4, fixed_abs, tag = 'smem constant byte address 0x4 - core index']
  #allocation1 [shape = 'u32[72,128]{1,0:T(1,128)}', space=vmem, size = 0x9000, scoped, tag = 'internal scratch']
  %s0 = inlined_call_operand.vmem [shape: bf16[2,64,67], index: 0, kind: input, shape index: {}]
  %s1 = inlined_call_operand.vmem [shape: bf16[67,64], index: 1, kind: input, shape index: {}]
  %s2 = inlined_call_operand.vmem [shape: f32[1,64], index: 2, kind: input, shape index: {}]
  %s3 = inlined_call_operand.vmem [shape: bf16[64,128], index: 3, kind: input, shape index: {}]
  %s4 = inlined_call_operand.vmem [shape: f32[1,128], index: 4, kind: input, shape index: {}]
  %s5 = inlined_call_operand.vmem [shape: bf16[128,256], index: 5, kind: input, shape index: {}]
  %s6 = inlined_call_operand.vmem [shape: f32[1,256], index: 6, kind: input, shape index: {}]
  %s7 = inlined_call_operand.vmem [shape: bf16[256,128], index: 7, kind: input, shape index: {}]
  %s8 = inlined_call_operand.vmem [shape: f32[1,128], index: 8, kind: input, shape index: {}]
  %s9 = inlined_call_operand.vmem [shape: bf16[128,64], index: 9, kind: input, shape index: {}]
  %s10 = inlined_call_operand.vmem [shape: f32[1,64], index: 10, kind: input, shape index: {}]
  %s11 = inlined_call_operand.vmem [shape: bf16[64,128], index: 11, kind: input, shape index: {}]
  %s12 = inlined_call_operand.vmem [shape: f32[1,128], index: 12, kind: input, shape index: {}]
  %s13 = inlined_call_operand.hbm [shape: f32[2,128], index: 13, kind: output, shape index: {}]
  %s14 = sld [smem:[#allocation0]]
  $region62: #{net_forward.5} parent=0
    _
  %s16 = ssub.s32 1, %s14
  %s17 = scalar_select 0, %s16, %s14
  $region1: #{net_forward.5} parent=0
    #allocation2 [shape = 'u8[1024]{0}', space=vmem, size = 0x400, scoped, tag = 'output window, operand 0, single buffered']
    #allocation3 [shape = 's32[1]{0}', space=sflag, size = 0x4, scoped, tag = 'scoped memory for net_forward.5']
    %18 = vsyncpa [#allocation3], 0
    // Predicated region
    $region2: #{net_forward.5} parent=1 // pred_check
      _
    $region3: #{net_forward.5} parent=1 // pred_check_branch
      %20 = sbr.rel (0) target = $region5
    $region4: #{net_forward.5} parent=1 // pred_region
      _
    $region5: #{net_forward.5} parent=1 // pred_fallthru
      _
    // Predicated region
    $region6: #{net_forward.5} parent=1 // pred_check
      _
    $region7: #{net_forward.5} parent=1 // pred_check_branch
      %22 = sbr.rel (0) target = $region9
    $region8: #{net_forward.5} parent=1 // pred_region
      _
    $region9: #{net_forward.5} parent=1 // pred_fallthru
      _
    // Predicated region
    $region10: #{net_forward.5} parent=1 // pred_check
      _
    $region11: #{net_forward.5} parent=1 // pred_check_branch
      %24 = sbr.rel (0) target = $region13
    $region12: #{net_forward.5} parent=1 // pred_region
      _
    $region13: #{net_forward.5} parent=1 // pred_fallthru
      _
    // Predicated region
    $region14: #{net_forward.5} parent=1 // pred_check
      _
    $region15: #{net_forward.5} parent=1 // pred_check_branch
      %26 = sbr.rel (0) target = $region17
    $region16: #{net_forward.5} parent=1 // pred_region
      _
    $region17: #{net_forward.5} parent=1 // pred_fallthru
      _
    // Predicated region
    $region18: #{net_forward.5} parent=1 // pred_check
      _
    $region19: #{net_forward.5} parent=1 // pred_check_branch
      %28 = sbr.rel (0) target = $region21
    $region20: #{net_forward.5} parent=1 // pred_region
      _
    $region21: #{net_forward.5} parent=1 // pred_fallthru
      _
    // Predicated region
    $region22: #{net_forward.5} parent=1 // pred_check
      _
    $region23: #{net_forward.5} parent=1 // pred_check_branch
      %30 = sbr.rel (0) target = $region25
    $region24: #{net_forward.5} parent=1 // pred_region
      _
    $region25: #{net_forward.5} parent=1 // pred_fallthru
      _
    // Predicated region
    $region26: #{net_forward.5} parent=1 // pred_check
      _
    $region27: #{net_forward.5} parent=1 // pred_check_branch
      %32 = sbr.rel (0) target = $region29
    $region28: #{net_forward.5} parent=1 // pred_region
      _
    $region29: #{net_forward.5} parent=1 // pred_fallthru
      _
    // Predicated region
    $region30: #{net_forward.5} parent=1 // pred_check
      _
    $region31: #{net_forward.5} parent=1 // pred_check_branch
      %34 = sbr.rel (0) target = $region33
    $region32: #{net_forward.5} parent=1 // pred_region
      _
    $region33: #{net_forward.5} parent=1 // pred_fallthru
      _
    // Predicated region
    $region34: #{net_forward.5} parent=1 // pred_check
      _
    $region35: #{net_forward.5} parent=1 // pred_check_branch
      %36 = sbr.rel (0) target = $region37
    $region36: #{net_forward.5} parent=1 // pred_region
      _
    $region37: #{net_forward.5} parent=1 // pred_fallthru
      _
    // Predicated region
    $region38: #{net_forward.5} parent=1 // pred_check
      _
    $region39: #{net_forward.5} parent=1 // pred_check_branch
      %38 = sbr.rel (0) target = $region41
    $region40: #{net_forward.5} parent=1 // pred_region
      _
    $region41: #{net_forward.5} parent=1 // pred_fallthru
      _
    // Predicated region
    $region42: #{net_forward.5} parent=1 // pred_check
      _
    $region43: #{net_forward.5} parent=1 // pred_check_branch
      %40 = sbr.rel (0) target = $region45
    $region44: #{net_forward.5} parent=1 // pred_region
      _
    $region45: #{net_forward.5} parent=1 // pred_fallthru
      _
    // Predicated region
    $region46: #{net_forward.5} parent=1 // pred_check
      _
    $region47: #{net_forward.5} parent=1 // pred_check_branch
      %42 = sbr.rel (0) target = $region49
    $region48: #{net_forward.5} parent=1 // pred_region
      _
    $region49: #{net_forward.5} parent=1 // pred_fallthru
      _
    // Predicated region
    $region50: #{net_forward.5} parent=1 // pred_check
      _
    $region51: #{net_forward.5} parent=1 // pred_check_branch
      %44 = sbr.rel (0) target = $region53
    $region52: #{net_forward.5} parent=1 // pred_region
      _
    $region53: #{net_forward.5} parent=1 // pred_fallthru
      _
    %v46 = vld [vmem:[%s0] sm:$0xf]
    %v47 = vld [vmem:[%s0 + $0x4] sm:$0xf]
    %v48 = vld [vmem:[%s0 + $0x8] sm:$0xf]
    %v49 = vld [vmem:[%s0 + $0xc] sm:$0xf]
    %v50 = vld [vmem:[%s0 + $0x10] sm:$0xf]
    %v51 = vld [vmem:[%s0 + $0x14] sm:$0xf]
    %v52 = vld [vmem:[%s0 + $0x18] sm:$0xf]
    %v53 = vld [vmem:[%s0 + $0x1c] sm:$0xf]
    %v54 = vld [vmem:[%s0 + $0x20] sm:$0xf]
    %v55 = vld [vmem:[%s0 + $0x24] sm:$0xf]
    %v56 = vld [vmem:[%s0 + $0x28] sm:$0xf]
    %v57 = vld [vmem:[%s0 + $0x2c] sm:$0xf]
    %v58 = vld [vmem:[%s0 + $0x30] sm:$0xf]
    %v59 = vld [vmem:[%s0 + $0x34] sm:$0xf]
    %v60 = vld [vmem:[%s0 + $0x38] sm:$0xf]
    %v61 = vld [vmem:[%s0 + $0x3c] sm:$0xf]
    %v62 = vld [vmem:[%s1] sm:$0xf]
    %v63 = vld [vmem:[%s1 + $0x4] sm:$0xf]
    %v64 = vld [vmem:[%s1 + $0x8] sm:$0xf]
    %v65 = vld [vmem:[%s1 + $0xc] sm:$0xf]
    %v66 = vld [vmem:[%s1 + $0x10] sm:$0xf]
    %v67 = vld [vmem:[%s1 + $0x14] sm:$0xf]
    %v68 = vld [vmem:[%s1 + $0x18] sm:$0xf]
    %v69 = vld [vmem:[%s1 + $0x1c] sm:$0xf]
    %v70 = vld [vmem:[%s1 + $0x20] sm:$0x3]
    %v71 = vld [vmem:[%s2] sm:$0x1]
    %v73 = vperm.slane %v71, 0
    %v91 = vunpack.c.l.b16 %v46
    %v92 = vunpack.c.l.b16 %v47
    %v93 = vunpack.c.l.b16 %v48
    %v94 = vunpack.c.l.b16 %v49
    %v95 = vunpack.c.l.b16 %v50
    %v96 = vunpack.c.l.b16 %v51
    %v97 = vunpack.c.l.b16 %v52
    %v98 = vunpack.c.l.b16 %v53
    %v99 = vunpack.c.l.b16 %v54
    %v100 = vunpack.c.l.b16 %v55
    %v101 = vunpack.c.l.b16 %v56
    %v102 = vunpack.c.l.b16 %v57
    %v103 = vunpack.c.l.b16 %v58
    %v104 = vunpack.c.l.b16 %v59
    %v105 = vunpack.c.l.b16 %v60
    %v106 = vunpack.c.l.b16 %v61
    %v107 = vpack.c.b16 %v92, %v91
    %v108 = vpack.c.b16 %v94, %v93
    %v109 = vpack.c.b16 %v96, %v95
    %v110 = vpack.c.b16 %v98, %v97
    %v111 = vpack.c.b16 %v100, %v99
    %v112 = vpack.c.b16 %v102, %v101
    %v113 = vpack.c.b16 %v104, %v103
    %v114 = vpack.c.b16 %v106, %v105
    %v124 = vunpack.c.l.b16 %v62
    %v125 = vunpack.c.l.b16 %v63
    %v126 = vunpack.c.l.b16 %v64
    %v127 = vunpack.c.l.b16 %v65
    %v128 = vunpack.c.l.b16 %v66
    %v129 = vunpack.c.l.b16 %v67
    %v130 = vunpack.c.l.b16 %v68
    %v131 = vunpack.c.l.b16 %v69
    %v132 = vunpack.c.l.b16 %v70
    %v133 = vpack.c.b16 %v125, %v124
    %v134 = vpack.c.b16 %v127, %v126
    %v135 = vpack.c.b16 %v129, %v128
    %v136 = vpack.c.b16 %v131, %v130
    %v137 = vpack.c.b16 %v132, %v132
    %vm142 = vcmask 547840
    %v144 = vsel %vm142, %v107, 0
    %v147 = vsel %vm142, %v108, 0
    %v150 = vsel %vm142, %v109, 0
    %v153 = vsel %vm142, %v110, 0
    %v156 = vsel %vm142, %v111, 0
    %v159 = vsel %vm142, %v112, 0
    %v162 = vsel %vm142, %v113, 0
    %v165 = vsel %vm142, %v114, 0
    %vm167 = vcmask 1040384
    %vm168 = vcmask 1041408
    %v169 = vsel %vm167, 4294967295, 65535
    %v170 = vsel %vm168, %v169, 0
    %v172 = vand.u32 %v137, %v170
    %174 = vmatpush.bf16.msra.mxu0 0
    %175 = vmatpush.bf16.msra.mxu0 0
    %176 = vmatpush.bf16.msra.mxu0 0
    %177 = vmatpush.bf16.msra.mxu0 %v172
    %178 = vmatpush.bf16.msra.mxu0 %v136
    %179 = vmatpush.bf16.msra.mxu0 %v135
    %180 = vmatpush.bf16.msra.mxu0 %v134
    %181 = vmatpush.bf16.msra.mxu0 %v133
    %182 = vmatmul.bf16.gmra.mxu0 %v144
    %v183 = vpop.f32.mrf.mxu0
    %v184 = vadd.f32 %v73, %v183
    %v185 = vpop.f32.mrf.mxu0
    %v186 = vadd.f32 %v73, %v185
    %187 = vmatmul.bf16.gmra.mxu0 %v147
    %v188 = vpop.f32.mrf.mxu0
    %v189 = vadd.f32 %v73, %v188
    %v190 = vpop.f32.mrf.mxu0
    %v191 = vadd.f32 %v73, %v190
    %192 = vmatmul.bf16.gmra.mxu0 %v150
    %v193 = vpop.f32.mrf.mxu0
    %v194 = vadd.f32 %v73, %v193
    %v195 = vpop.f32.mrf.mxu0
    %v196 = vadd.f32 %v73, %v195
    %197 = vmatmul.bf16.gmra.mxu0 %v153
    %v198 = vpop.f32.mrf.mxu0
    %v199 = vadd.f32 %v73, %v198
    %v200 = vpop.f32.mrf.mxu0
    %v201 = vadd.f32 %v73, %v200
    %202 = vmatmul.bf16.gmra.mxu0 %v156
    %v203 = vpop.f32.mrf.mxu0
    %v204 = vadd.f32 %v73, %v203
    %v205 = vpop.f32.mrf.mxu0
    %v206 = vadd.f32 %v73, %v205
    %207 = vmatmul.bf16.gmra.mxu0 %v159
    %v208 = vpop.f32.mrf.mxu0
    %v209 = vadd.f32 %v73, %v208
    %v210 = vpop.f32.mrf.mxu0
    %v211 = vadd.f32 %v73, %v210
    %212 = vmatmul.bf16.gmra.mxu0 %v162
    %v213 = vpop.f32.mrf.mxu0
    %v214 = vadd.f32 %v73, %v213
    %v215 = vpop.f32.mrf.mxu0
    %v216 = vadd.f32 %v73, %v215
    %217 = vmatmul.bf16.gmra.mxu0 %v165
    %v218 = vpop.f32.mrf.mxu0
    %v219 = vadd.f32 %v73, %v218
    %v220 = vpop.f32.mrf.mxu0
    %v221 = vadd.f32 %v73, %v220
    %222 = vdwg.mxu0
    %v223 = vmax.f32 %v184, 0.0
    %v224 = vmax.f32 %v186, 0.0
    %v225 = vmax.f32 %v189, 0.0
    %v226 = vmax.f32 %v191, 0.0
    %v227 = vmax.f32 %v194, 0.0
    %v228 = vmax.f32 %v196, 0.0
    %v229 = vmax.f32 %v199, 0.0
    %v230 = vmax.f32 %v201, 0.0
    %v231 = vmax.f32 %v204, 0.0
    %v232 = vmax.f32 %v206, 0.0
    %v233 = vmax.f32 %v209, 0.0
    %v234 = vmax.f32 %v211, 0.0
    %v235 = vmax.f32 %v214, 0.0
    %v236 = vmax.f32 %v216, 0.0
    %v237 = vmax.f32 %v219, 0.0
    %v238 = vmax.f32 %v221, 0.0
    %v239 = vpack.c.bf16 %v224, %v223
    %v240 = vpack.c.bf16 %v226, %v225
    %v241 = vpack.c.bf16 %v228, %v227
    %v242 = vpack.c.bf16 %v230, %v229
    %v243 = vpack.c.bf16 %v232, %v231
    %v244 = vpack.c.bf16 %v234, %v233
    %v245 = vpack.c.bf16 %v236, %v235
    %v246 = vpack.c.bf16 %v238, %v237
    %v247 = vld [vmem:[%s3] sm:$0xf]
    %v248 = vld [vmem:[%s3 + $0x4] sm:$0xf]
    %v249 = vld [vmem:[%s3 + $0x8] sm:$0xf]
    %v250 = vld [vmem:[%s3 + $0xc] sm:$0xf]
    %v251 = vld [vmem:[%s3 + $0x10] sm:$0xf]
    %v252 = vld [vmem:[%s3 + $0x14] sm:$0xf]
    %v253 = vld [vmem:[%s3 + $0x18] sm:$0xf]
    %v254 = vld [vmem:[%s3 + $0x1c] sm:$0xf]
    %v255 = vld [vmem:[%s4] sm:$0x1]
    %v257 = vperm.slane %v255, 0
    %v267 = vunpack.c.l.b16 %v247
    %v268 = vunpack.c.l.b16 %v248
    %v269 = vunpack.c.l.b16 %v249
    %v270 = vunpack.c.l.b16 %v250
    %v271 = vunpack.c.l.b16 %v251
    %v272 = vunpack.c.l.b16 %v252
    %v273 = vunpack.c.l.b16 %v253
    %v274 = vunpack.c.l.b16 %v254
    %v275 = vpack.c.b16 %v268, %v267
    %v276 = vpack.c.b16 %v270, %v269
    %v277 = vpack.c.b16 %v272, %v271
    %v278 = vpack.c.b16 %v274, %v273
    %vm283 = vcmask 523264
    %v285 = vsel %vm283, %v239, 0
    %v288 = vsel %vm283, %v240, 0
    %v291 = vsel %vm283, %v241, 0
    %v294 = vsel %vm283, %v242, 0
    %v297 = vsel %vm283, %v243, 0
    %v300 = vsel %vm283, %v244, 0
    %v303 = vsel %vm283, %v245, 0
    %v306 = vsel %vm283, %v246, 0
    %308 = vmatpush.bf16.msra.mxu0 0
    %309 = vmatpush.bf16.msra.mxu0 0
    %310 = vmatpush.bf16.msra.mxu0 0
    %311 = vmatpush.bf16.msra.mxu0 0
    %312 = vmatpush.bf16.msra.mxu0 %v278
    %313 = vmatpush.bf16.msra.mxu0 %v277
    %314 = vmatpush.bf16.msra.mxu0 %v276
    %315 = vmatpush.bf16.msra.mxu0 %v275
    %316 = vmatmul.bf16.gmra.mxu0 %v285
    %v317 = vpop.f32.mrf.mxu0
    %v318 = vadd.f32 %v257, %v317
    %v319 = vpop.f32.mrf.mxu0
    %v320 = vadd.f32 %v257, %v319
    %321 = vmatmul.bf16.gmra.mxu0 %v288
    %v322 = vpop.f32.mrf.mxu0
    %v323 = vadd.f32 %v257, %v322
    %v324 = vpop.f32.mrf.mxu0
    %v325 = vadd.f32 %v257, %v324
    %326 = vmatmul.bf16.gmra.mxu0 %v291
    %v327 = vpop.f32.mrf.mxu0
    %v328 = vadd.f32 %v257, %v327
    %v329 = vpop.f32.mrf.mxu0
    %v330 = vadd.f32 %v257, %v329
    %331 = vmatmul.bf16.gmra.mxu0 %v294
    %v332 = vpop.f32.mrf.mxu0
    %v333 = vadd.f32 %v257, %v332
    %v334 = vpop.f32.mrf.mxu0
    %v335 = vadd.f32 %v257, %v334
    %336 = vmatmul.bf16.gmra.mxu0 %v297
    %v337 = vpop.f32.mrf.mxu0
    %v338 = vadd.f32 %v257, %v337
    %v339 = vpop.f32.mrf.mxu0
    %v340 = vadd.f32 %v257, %v339
    %341 = vmatmul.bf16.gmra.mxu0 %v300
    %v342 = vpop.f32.mrf.mxu0
    %v343 = vadd.f32 %v257, %v342
    %v344 = vpop.f32.mrf.mxu0
    %v345 = vadd.f32 %v257, %v344
    %346 = vmatmul.bf16.gmra.mxu0 %v303
    %v347 = vpop.f32.mrf.mxu0
    %v348 = vadd.f32 %v257, %v347
    %v349 = vpop.f32.mrf.mxu0
    %v350 = vadd.f32 %v257, %v349
    %351 = vmatmul.bf16.gmra.mxu0 %v306
    %v352 = vpop.f32.mrf.mxu0
    %v353 = vadd.f32 %v257, %v352
    %v354 = vpop.f32.mrf.mxu0
    %v355 = vadd.f32 %v257, %v354
    %356 = vdwg.mxu0
    %v357 = vmax.f32 %v318, 0.0
    %v358 = vmax.f32 %v320, 0.0
    %v359 = vmax.f32 %v323, 0.0
    %v360 = vmax.f32 %v325, 0.0
    %v361 = vmax.f32 %v328, 0.0
    %v362 = vmax.f32 %v330, 0.0
    %v363 = vmax.f32 %v333, 0.0
    %v364 = vmax.f32 %v335, 0.0
    %v365 = vmax.f32 %v338, 0.0
    %v366 = vmax.f32 %v340, 0.0
    %v367 = vmax.f32 %v343, 0.0
    %v368 = vmax.f32 %v345, 0.0
    %v369 = vmax.f32 %v348, 0.0
    %v370 = vmax.f32 %v350, 0.0
    %v371 = vmax.f32 %v353, 0.0
    %v372 = vmax.f32 %v355, 0.0
    %v373 = vpack.c.bf16 %v358, %v357
    %v374 = vpack.c.bf16 %v360, %v359
    %v375 = vpack.c.bf16 %v362, %v361
    %v376 = vpack.c.bf16 %v364, %v363
    %v377 = vpack.c.bf16 %v366, %v365
    %v378 = vpack.c.bf16 %v368, %v367
    %v379 = vpack.c.bf16 %v370, %v369
    %v380 = vpack.c.bf16 %v372, %v371
    %v381 = vld [vmem:[%s5] sm:$0xff]
    %v382 = vld [vmem:[%s5 + $0x8] sm:$0xff]
    %v383 = vld [vmem:[%s5 + $0x10] sm:$0xff]
    %v384 = vld [vmem:[%s5 + $0x18] sm:$0xff]
    %v385 = vld [vmem:[%s5 + $0x20] sm:$0xff]
    %v386 = vld [vmem:[%s5 + $0x28] sm:$0xff]
    %v387 = vld [vmem:[%s5 + $0x30] sm:$0xff]
    %v388 = vld [vmem:[%s5 + $0x38] sm:$0xff]
    %v389 = vld [vmem:[%s5 + $0x40] sm:$0xff]
    %v390 = vld [vmem:[%s5 + $0x48] sm:$0xff]
    %v391 = vld [vmem:[%s5 + $0x50] sm:$0xff]
    %v392 = vld [vmem:[%s5 + $0x58] sm:$0xff]
    %v393 = vld [vmem:[%s5 + $0x60] sm:$0xff]
    %v394 = vld [vmem:[%s5 + $0x68] sm:$0xff]
    %v395 = vld [vmem:[%s5 + $0x70] sm:$0xff]
    %v396 = vld [vmem:[%s5 + $0x78] sm:$0xff]
    %v397 = vld [vmem:[%s6] sm:$0x3]
    %v399 = vperm.slane %v397, 0
    %v400 = vperm.slane %v397, 1
    %v419 = vunpack.c.l.b16 %v381
    %v420 = vunpack.c.h.b16 %v381
    %v421 = vunpack.c.l.b16 %v382
    %v422 = vunpack.c.h.b16 %v382
    %v423 = vunpack.c.l.b16 %v383
    %v424 = vunpack.c.h.b16 %v383
    %v425 = vunpack.c.l.b16 %v384
    %v426 = vunpack.c.h.b16 %v384
    %v427 = vunpack.c.l.b16 %v385
    %v428 = vunpack.c.h.b16 %v385
    %v429 = vunpack.c.l.b16 %v386
    %v430 = vunpack.c.h.b16 %v386
    %v431 = vunpack.c.l.b16 %v387
    %v432 = vunpack.c.h.b16 %v387
    %v433 = vunpack.c.l.b16 %v388
    %v434 = vunpack.c.h.b16 %v388
    %v435 = vunpack.c.l.b16 %v389
    %v436 = vunpack.c.h.b16 %v389
    %v437 = vunpack.c.l.b16 %v390
    %v438 = vunpack.c.h.b16 %v390
    %v439 = vunpack.c.l.b16 %v391
    %v440 = vunpack.c.h.b16 %v391
    %v441 = vunpack.c.l.b16 %v392
    %v442 = vunpack.c.h.b16 %v392
    %v443 = vunpack.c.l.b16 %v393
    %v444 = vunpack.c.h.b16 %v393
    %v445 = vunpack.c.l.b16 %v394
    %v446 = vunpack.c.h.b16 %v394
    %v447 = vunpack.c.l.b16 %v395
    %v448 = vunpack.c.h.b16 %v395
    %v449 = vunpack.c.l.b16 %v396
    %v450 = vunpack.c.h.b16 %v396
    %v451 = vpack.c.b16 %v421, %v419
    %v452 = vpack.c.b16 %v422, %v420
    %v453 = vpack.c.b16 %v425, %v423
    %v454 = vpack.c.b16 %v426, %v424
    %v455 = vpack.c.b16 %v429, %v427
    %v456 = vpack.c.b16 %v430, %v428
    %v457 = vpack.c.b16 %v433, %v431
    %v458 = vpack.c.b16 %v434, %v432
    %v459 = vpack.c.b16 %v437, %v435
    %v460 = vpack.c.b16 %v438, %v436
    %v461 = vpack.c.b16 %v441, %v439
    %v462 = vpack.c.b16 %v442, %v440
    %v463 = vpack.c.b16 %v445, %v443
    %v464 = vpack.c.b16 %v446, %v444
    %v465 = vpack.c.b16 %v449, %v447
    %v466 = vpack.c.b16 %v450, %v448
    %483 = vmatpush.bf16.msra.mxu0 %v465
    %484 = vmatpush.bf16.msra.mxu0 %v463
    %485 = vmatpush.bf16.msra.mxu0 %v461
    %486 = vmatpush.bf16.msra.mxu0 %v459
    %487 = vmatpush.bf16.msra.mxu0 %v457
    %488 = vmatpush.bf16.msra.mxu0 %v455
    %489 = vmatpush.bf16.msra.mxu0 %v453
    %490 = vmatpush.bf16.msra.mxu0 %v451
    %491 = vmatmul.bf16.gmra.mxu0 %v373
    %v492 = vpop.f32.mrf.mxu0
    %v493 = vadd.f32 %v399, %v492
    %v494 = vpop.f32.mrf.mxu0
    %v495 = vadd.f32 %v399, %v494
    %496 = vmatmul.bf16.gmra.mxu0 %v374
    %v497 = vpop.f32.mrf.mxu0
    %v498 = vadd.f32 %v399, %v497
    %v499 = vpop.f32.mrf.mxu0
    %v500 = vadd.f32 %v399, %v499
    %501 = vmatmul.bf16.gmra.mxu0 %v375
    %v502 = vpop.f32.mrf.mxu0
    %v503 = vadd.f32 %v399, %v502
    %v504 = vpop.f32.mrf.mxu0
    %v505 = vadd.f32 %v399, %v504
    %506 = vmatmul.bf16.gmra.mxu0 %v376
    %v507 = vpop.f32.mrf.mxu0
    %v508 = vadd.f32 %v399, %v507
    %v509 = vpop.f32.mrf.mxu0
    %v510 = vadd.f32 %v399, %v509
    %511 = vmatmul.bf16.gmra.mxu0 %v377
    %v512 = vpop.f32.mrf.mxu0
    %v513 = vadd.f32 %v399, %v512
    %v514 = vpop.f32.mrf.mxu0
    %v515 = vadd.f32 %v399, %v514
    %516 = vmatmul.bf16.gmra.mxu0 %v378
    %v517 = vpop.f32.mrf.mxu0
    %v518 = vadd.f32 %v399, %v517
    %v519 = vpop.f32.mrf.mxu0
    %v520 = vadd.f32 %v399, %v519
    %521 = vmatmul.bf16.gmra.mxu0 %v379
    %v522 = vpop.f32.mrf.mxu0
    %v523 = vadd.f32 %v399, %v522
    %v524 = vpop.f32.mrf.mxu0
    %v525 = vadd.f32 %v399, %v524
    %526 = vmatmul.bf16.gmra.mxu0 %v380
    %v527 = vpop.f32.mrf.mxu0
    %v528 = vadd.f32 %v399, %v527
    %v529 = vpop.f32.mrf.mxu0
    %v530 = vadd.f32 %v399, %v529
    %531 = vdwg.mxu0
    %532 = vmatpush.bf16.msra.mxu0 %v466
    %533 = vmatpush.bf16.msra.mxu0 %v464
    %534 = vmatpush.bf16.msra.mxu0 %v462
    %535 = vmatpush.bf16.msra.mxu0 %v460
    %536 = vmatpush.bf16.msra.mxu0 %v458
    %537 = vmatpush.bf16.msra.mxu0 %v456
    %538 = vmatpush.bf16.msra.mxu0 %v454
    %539 = vmatpush.bf16.msra.mxu0 %v452
    %540 = vmatmul.bf16.gmra.mxu0 %v373
    %v541 = vpop.f32.mrf.mxu0
    %v542 = vadd.f32 %v400, %v541
    %v543 = vpop.f32.mrf.mxu0
    %v544 = vadd.f32 %v400, %v543
    %545 = vmatmul.bf16.gmra.mxu0 %v374
    %v546 = vpop.f32.mrf.mxu0
    %v547 = vadd.f32 %v400, %v546
    %v548 = vpop.f32.mrf.mxu0
    %v549 = vadd.f32 %v400, %v548
    %550 = vmatmul.bf16.gmra.mxu0 %v375
    %v551 = vpop.f32.mrf.mxu0
    %v552 = vadd.f32 %v400, %v551
    %v553 = vpop.f32.mrf.mxu0
    %v554 = vadd.f32 %v400, %v553
    %555 = vmatmul.bf16.gmra.mxu0 %v376
    %v556 = vpop.f32.mrf.mxu0
    %v557 = vadd.f32 %v400, %v556
    %v558 = vpop.f32.mrf.mxu0
    %v559 = vadd.f32 %v400, %v558
    %560 = vmatmul.bf16.gmra.mxu0 %v377
    %v561 = vpop.f32.mrf.mxu0
    %v562 = vadd.f32 %v400, %v561
    %v563 = vpop.f32.mrf.mxu0
    %v564 = vadd.f32 %v400, %v563
    %565 = vmatmul.bf16.gmra.mxu0 %v378
    %v566 = vpop.f32.mrf.mxu0
    %v567 = vadd.f32 %v400, %v566
    %v568 = vpop.f32.mrf.mxu0
    %v569 = vadd.f32 %v400, %v568
    %570 = vmatmul.bf16.gmra.mxu0 %v379
    %v571 = vpop.f32.mrf.mxu0
    %v572 = vadd.f32 %v400, %v571
    %v573 = vpop.f32.mrf.mxu0
    %v574 = vadd.f32 %v400, %v573
    %575 = vmatmul.bf16.gmra.mxu0 %v380
    %v576 = vpop.f32.mrf.mxu0
    %v577 = vadd.f32 %v400, %v576
    %v578 = vpop.f32.mrf.mxu0
    %v579 = vadd.f32 %v400, %v578
    %580 = vdwg.mxu0
    %v581 = vmax.f32 %v493, %v495
    %v582 = vmax.f32 %v581, %v498
    %v583 = vmax.f32 %v582, %v500
    %v584 = vmax.f32 %v583, %v503
    %v585 = vmax.f32 %v584, %v505
    %v586 = vmax.f32 %v585, %v508
    %v587 = vmax.f32 %v586, %v510
    %v588 = vrot.slane %v587, 4
    %v589 = vmax.f32 %v587, %v588
    %v590 = vrot.slane %v589, 2
    %v591 = vmax.f32 %v589, %v590
    %v592 = vrot.slane %v591, 1
    %v593 = vmax.f32 %v591, %v592
    %v594 = vmax.f32 %v542, %v544
    %v595 = vmax.f32 %v594, %v547
    %v596 = vmax.f32 %v595, %v549
    %v597 = vmax.f32 %v596, %v552
    %v598 = vmax.f32 %v597, %v554
    %v599 = vmax.f32 %v598, %v557
    %v600 = vmax.f32 %v599, %v559
    %v601 = vrot.slane %v600, 4
    %v602 = vmax.f32 %v600, %v601
    %v603 = vrot.slane %v602, 2
    %v604 = vmax.f32 %v602, %v603
    %v605 = vrot.slane %v604, 1
    %v606 = vmax.f32 %v604, %v605
    %v607 = vmax.f32 %v513, %v515
    %v608 = vmax.f32 %v607, %v518
    %v609 = vmax.f32 %v608, %v520
    %v610 = vmax.f32 %v609, %v523
    %v611 = vmax.f32 %v610, %v525
    %v612 = vmax.f32 %v611, %v528
    %v613 = vmax.f32 %v612, %v530
    %v614 = vrot.slane %v613, 4
    %v615 = vmax.f32 %v613, %v614
    %v616 = vrot.slane %v615, 2
    %v617 = vmax.f32 %v615, %v616
    %v618 = vrot.slane %v617, 1
    %v619 = vmax.f32 %v617, %v618
    %v620 = vmax.f32 %v562, %v564
    %v621 = vmax.f32 %v620, %v567
    %v622 = vmax.f32 %v621, %v569
    %v623 = vmax.f32 %v622, %v572
    %v624 = vmax.f32 %v623, %v574
    %v625 = vmax.f32 %v624, %v577
    %v626 = vmax.f32 %v625, %v579
    %v627 = vrot.slane %v626, 4
    %v628 = vmax.f32 %v626, %v627
    %v629 = vrot.slane %v628, 2
    %v630 = vmax.f32 %v628, %v629
    %v631 = vrot.slane %v630, 1
    %v632 = vmax.f32 %v630, %v631
    %v633 = vpack.c.bf16 %v593, %v593
    %v634 = vpack.c.bf16 %v606, %v606
    %v635 = vpack.c.bf16 %v619, %v619
    %v636 = vpack.c.bf16 %v632, %v632
    %v637 = vld [vmem:[%s7] sm:$0xf]
    %v638 = vld [vmem:[%s7 + $0x4] sm:$0xf]
    %v639 = vld [vmem:[%s7 + $0x8] sm:$0xf]
    %v640 = vld [vmem:[%s7 + $0xc] sm:$0xf]
    %v641 = vld [vmem:[%s7 + $0x10] sm:$0xf]
    %v642 = vld [vmem:[%s7 + $0x14] sm:$0xf]
    %v643 = vld [vmem:[%s7 + $0x18] sm:$0xf]
    %v644 = vld [vmem:[%s7 + $0x1c] sm:$0xf]
    %v645 = vld [vmem:[%s7 + $0x20] sm:$0xf]
    %v646 = vld [vmem:[%s7 + $0x24] sm:$0xf]
    %v647 = vld [vmem:[%s7 + $0x28] sm:$0xf]
    %v648 = vld [vmem:[%s7 + $0x2c] sm:$0xf]
    %v649 = vld [vmem:[%s7 + $0x30] sm:$0xf]
    %v650 = vld [vmem:[%s7 + $0x34] sm:$0xf]
    %v651 = vld [vmem:[%s7 + $0x38] sm:$0xf]
    %v652 = vld [vmem:[%s7 + $0x3c] sm:$0xf]
    %v653 = vld [vmem:[%s7 + $0x40] sm:$0xf]
    %v654 = vld [vmem:[%s7 + $0x44] sm:$0xf]
    %v655 = vld [vmem:[%s7 + $0x48] sm:$0xf]
    %v656 = vld [vmem:[%s7 + $0x4c] sm:$0xf]
    %v657 = vld [vmem:[%s7 + $0x50] sm:$0xf]
    %v658 = vld [vmem:[%s7 + $0x54] sm:$0xf]
    %v659 = vld [vmem:[%s7 + $0x58] sm:$0xf]
    %v660 = vld [vmem:[%s7 + $0x5c] sm:$0xf]
    %v661 = vld [vmem:[%s7 + $0x60] sm:$0xf]
    %v662 = vld [vmem:[%s7 + $0x64] sm:$0xf]
    %v663 = vld [vmem:[%s7 + $0x68] sm:$0xf]
    %v664 = vld [vmem:[%s7 + $0x6c] sm:$0xf]
    %v665 = vld [vmem:[%s7 + $0x70] sm:$0xf]
    %v666 = vld [vmem:[%s7 + $0x74] sm:$0xf]
    %v667 = vld [vmem:[%s7 + $0x78] sm:$0xf]
    %v668 = vld [vmem:[%s7 + $0x7c] sm:$0xf]
    %v669 = vld [vmem:[%s8] sm:$0x1]
    %v671 = vperm.slane %v669, 0
    %v677 = vunpack.c.l.b16 %v633
    %v678 = vunpack.c.l.b16 %v634
    %v679 = vunpack.c.l.b16 %v635
    %v680 = vunpack.c.l.b16 %v636
    %vm681 = vcmask 1041409
    %v682 = vsel %vm681, %v679, %v677
    %v683 = vsel %vm681, %v680, %v678
    %v684 = vpack.c.b16 %v682, %v682
    %v685 = vpack.c.b16 %v683, %v683
    %v720 = vunpack.c.l.b16 %v637
    %v721 = vunpack.c.l.b16 %v638
    %v722 = vunpack.c.l.b16 %v639
    %v723 = vunpack.c.l.b16 %v640
    %v724 = vunpack.c.l.b16 %v641
    %v725 = vunpack.c.l.b16 %v642
    %v726 = vunpack.c.l.b16 %v643
    %v727 = vunpack.c.l.b16 %v644
    %v728 = vunpack.c.l.b16 %v645
    %v729 = vunpack.c.l.b16 %v646
    %v730 = vunpack.c.l.b16 %v647
    %v731 = vunpack.c.l.b16 %v648
    %v732 = vunpack.c.l.b16 %v649
    %v733 = vunpack.c.l.b16 %v650
    %v734 = vunpack.c.l.b16 %v651
    %v735 = vunpack.c.l.b16 %v652
    %v736 = vunpack.c.l.b16 %v653
    %v737 = vunpack.c.l.b16 %v654
    %v738 = vunpack.c.l.b16 %v655
    %v739 = vunpack.c.l.b16 %v656
    %v740 = vunpack.c.l.b16 %v657
    %v741 = vunpack.c.l.b16 %v658
    %v742 = vunpack.c.l.b16 %v659
    %v743 = vunpack.c.l.b16 %v660
    %v744 = vunpack.c.l.b16 %v661
    %v745 = vunpack.c.l.b16 %v662
    %v746 = vunpack.c.l.b16 %v663
    %v747 = vunpack.c.l.b16 %v664
    %v748 = vunpack.c.l.b16 %v665
    %v749 = vunpack.c.l.b16 %v666
    %v750 = vunpack.c.l.b16 %v667
    %v751 = vunpack.c.l.b16 %v668
    %v752 = vpack.c.b16 %v721, %v720
    %v753 = vpack.c.b16 %v723, %v722
    %v754 = vpack.c.b16 %v725, %v724
    %v755 = vpack.c.b16 %v727, %v726
    %v756 = vpack.c.b16 %v729, %v728
    %v757 = vpack.c.b16 %v731, %v730
    %v758 = vpack.c.b16 %v733, %v732
    %v759 = vpack.c.b16 %v735, %v734
    %v760 = vpack.c.b16 %v737, %v736
    %v761 = vpack.c.b16 %v739, %v738
    %v762 = vpack.c.b16 %v741, %v740
    %v763 = vpack.c.b16 %v743, %v742
    %v764 = vpack.c.b16 %v745, %v744
    %v765 = vpack.c.b16 %v747, %v746
    %v766 = vpack.c.b16 %v749, %v748
    %v767 = vpack.c.b16 %v751, %v750
    %784 = vmatpush.bf16.msra.mxu0 %v759
    %785 = vmatpush.bf16.msra.mxu0 %v758
    %786 = vmatpush.bf16.msra.mxu0 %v757
    %787 = vmatpush.bf16.msra.mxu0 %v756
    %788 = vmatpush.bf16.msra.mxu0 %v755
    %789 = vmatpush.bf16.msra.mxu0 %v754
    %790 = vmatpush.bf16.msra.mxu0 %v753
    %791 = vmatpush.bf16.msra.mxu0 %v752
    %792 = vmatmul.bf16.gmra.mxu0 %v684
    %v793 = vpop.f32.mrf.mxu0
    %v794 = vadd.f32 %v671, %v793
    %v795 = vpop.f32.mrf.mxu0
    %796 = vdwg.mxu0
    %797 = vmatpush.bf16.msra.mxu0 %v767
    %798 = vmatpush.bf16.msra.mxu0 %v766
    %799 = vmatpush.bf16.msra.mxu0 %v765
    %800 = vmatpush.bf16.msra.mxu0 %v764
    %801 = vmatpush.bf16.msra.mxu0 %v763
    %802 = vmatpush.bf16.msra.mxu0 %v762
    %803 = vmatpush.bf16.msra.mxu0 %v761
    %804 = vmatpush.bf16.msra.mxu0 %v760
    %805 = vmatmul.bf16.gmra.mxu0 %v685
    %v806 = vpop.f32.mrf.mxu0
    %v807 = vadd.f32 %v794, %v806
    %v808 = vpop.f32.mrf.mxu0
    %809 = vdwg.mxu0
    %v810 = vmax.f32 %v807, 0.0
    %v811 = vpack.c.bf16 %v810, %v810
    %v812 = vld [vmem:[%s9] sm:$0xf]
    %v813 = vld [vmem:[%s9 + $0x4] sm:$0xf]
    %v814 = vld [vmem:[%s9 + $0x8] sm:$0xf]
    %v815 = vld [vmem:[%s9 + $0xc] sm:$0xf]
    %v816 = vld [vmem:[%s9 + $0x10] sm:$0xf]
    %v817 = vld [vmem:[%s9 + $0x14] sm:$0xf]
    %v818 = vld [vmem:[%s9 + $0x18] sm:$0xf]
    %v819 = vld [vmem:[%s9 + $0x1c] sm:$0xf]
    %v820 = vld [vmem:[%s9 + $0x20] sm:$0xf]
    %v821 = vld [vmem:[%s9 + $0x24] sm:$0xf]
    %v822 = vld [vmem:[%s9 + $0x28] sm:$0xf]
    %v823 = vld [vmem:[%s9 + $0x2c] sm:$0xf]
    %v824 = vld [vmem:[%s9 + $0x30] sm:$0xf]
    %v825 = vld [vmem:[%s9 + $0x34] sm:$0xf]
    %v826 = vld [vmem:[%s9 + $0x38] sm:$0xf]
    %v827 = vld [vmem:[%s9 + $0x3c] sm:$0xf]
    %v828 = vld [vmem:[%s10] sm:$0x1]
    %v830 = vperm.slane %v828, 0
    %v848 = vunpack.c.l.b16 %v812
    %v849 = vunpack.c.l.b16 %v813
    %v850 = vunpack.c.l.b16 %v814
    %v851 = vunpack.c.l.b16 %v815
    %v852 = vunpack.c.l.b16 %v816
    %v853 = vunpack.c.l.b16 %v817
    %v854 = vunpack.c.l.b16 %v818
    %v855 = vunpack.c.l.b16 %v819
    %v856 = vunpack.c.l.b16 %v820
    %v857 = vunpack.c.l.b16 %v821
    %v858 = vunpack.c.l.b16 %v822
    %v859 = vunpack.c.l.b16 %v823
    %v860 = vunpack.c.l.b16 %v824
    %v861 = vunpack.c.l.b16 %v825
    %v862 = vunpack.c.l.b16 %v826
    %v863 = vunpack.c.l.b16 %v827
    %v864 = vpack.c.b16 %v849, %v848
    %v865 = vpack.c.b16 %v851, %v850
    %v866 = vpack.c.b16 %v853, %v852
    %v867 = vpack.c.b16 %v855, %v854
    %v868 = vpack.c.b16 %v857, %v856
    %v869 = vpack.c.b16 %v859, %v858
    %v870 = vpack.c.b16 %v861, %v860
    %v871 = vpack.c.b16 %v863, %v862
    %880 = vmatpush.bf16.msra.mxu0 %v871
    %881 = vmatpush.bf16.msra.mxu0 %v870
    %882 = vmatpush.bf16.msra.mxu0 %v869
    %883 = vmatpush.bf16.msra.mxu0 %v868
    %884 = vmatpush.bf16.msra.mxu0 %v867
    %885 = vmatpush.bf16.msra.mxu0 %v866
    %886 = vmatpush.bf16.msra.mxu0 %v865
    %887 = vmatpush.bf16.msra.mxu0 %v864
    %888 = vmatmul.bf16.gmra.mxu0 %v811
    %v889 = vpop.f32.mrf.mxu0
    %v890 = vadd.f32 %v830, %v889
    %v891 = vpop.f32.mrf.mxu0
    %892 = vdwg.mxu0
    %v893 = vmax.f32 %v890, 0.0
    %v894 = vpack.c.bf16 %v893, %v893
    %v895 = vld [vmem:[%s11] sm:$0xf]
    %v896 = vld [vmem:[%s11 + $0x4] sm:$0xf]
    %v897 = vld [vmem:[%s11 + $0x8] sm:$0xf]
    %v898 = vld [vmem:[%s11 + $0xc] sm:$0xf]
    %v899 = vld [vmem:[%s11 + $0x10] sm:$0xf]
    %v900 = vld [vmem:[%s11 + $0x14] sm:$0xf]
    %v901 = vld [vmem:[%s11 + $0x18] sm:$0xf]
    %v902 = vld [vmem:[%s11 + $0x1c] sm:$0xf]
    %v903 = vld [vmem:[%s12] sm:$0x1]
    %v905 = vperm.slane %v903, 0
    %v915 = vunpack.c.l.b16 %v895
    %v916 = vunpack.c.l.b16 %v896
    %v917 = vunpack.c.l.b16 %v897
    %v918 = vunpack.c.l.b16 %v898
    %v919 = vunpack.c.l.b16 %v899
    %v920 = vunpack.c.l.b16 %v900
    %v921 = vunpack.c.l.b16 %v901
    %v922 = vunpack.c.l.b16 %v902
    %v923 = vpack.c.b16 %v916, %v915
    %v924 = vpack.c.b16 %v918, %v917
    %v925 = vpack.c.b16 %v920, %v919
    %v926 = vpack.c.b16 %v922, %v921
    %v932 = vsel %vm283, %v894, 0
    %934 = vmatpush.bf16.msra.mxu0 0
    %935 = vmatpush.bf16.msra.mxu0 0
    %936 = vmatpush.bf16.msra.mxu0 0
    %937 = vmatpush.bf16.msra.mxu0 0
    %938 = vmatpush.bf16.msra.mxu0 %v926
    %939 = vmatpush.bf16.msra.mxu0 %v925
    %940 = vmatpush.bf16.msra.mxu0 %v924
    %941 = vmatpush.bf16.msra.mxu0 %v923
    %942 = vmatmul.bf16.gmra.mxu0 %v932
    %v943 = vpop.f32.mrf.mxu0
    %v944 = vadd.f32 %v905, %v943
    %v945 = vpop.f32.mrf.mxu0
    %946 = vdwg.mxu0
    %v947 = vlaneseq
    %v948 = vand.u32 %v947, 127
    %vm949 = vcmp.lt.s32.totalorder %v948, 2
    %v950 = vsel %vm949, %v944, -3e+38
    %v951 = vsel %vm168, %v950, -inf
    %952 = vmax.xlane.f32.xlu0 %v951
    %v953 = vpop.xlane.xlu0 %952
    %v954 = vsub.f32 %v950, %v953
    %v955 = vmul.f32 %v954, 1.442695
    %v956 = vpow.pop %v955
    %v957 = vsel %vm949, %v956, 0.0
    %v958 = vsel %vm168, %v957, 0.0
    %959 = vadd.xlane.f32.xlu0 %v958
    %v960 = vpop.xlane.xlu0 %959
    %v961 = vlog2.pop %v960
    %v962 = vmul.f32 %v961, 0.6931472
    %v963 = vadd.f32 %v962, %v953
    %v964 = vsub.f32 %v944, %v963
    %v965 = vsel %vm949, %v964, 0.0
    %966 = vst [vmem:[#allocation2] sm:$0x3] %v965
    // Predicated region
    $region54: #{net_forward.5} parent=1 // pred_check
      _
    $region55: #{net_forward.5} parent=1 // pred_check_branch
      %968 = sbr.rel (0) target = $region57
    $region56: #{net_forward.5} parent=1 // pred_region
      %970 = vsyncadd [#allocation3], 0
      %s972 = sshll.u32 [#allocation2], 4
      %s973 = int_to_ptr.vmem [resolvable:$true] %s972
      %s974 = sshll.u32 %s13, 4
      %s975 = int_to_ptr.hbm [resolvable:$true] %s974
      %977 = dma.vmem_to_hbm [thread:$0]  %s973, 32, %s975, [#allocation3]
    $region57: #{net_forward.5} parent=1 // pred_fallthru
      _
    // Predicated region
    $region58: #{net_forward.5} parent=1 // pred_check
      _
    $region59: #{net_forward.5} parent=1 // pred_check_branch
      %979 = sbr.rel (0) target = $region61
    $region60: #{net_forward.5} parent=1 // pred_region
      %981 = dma.done [#allocation3], 32
    $region61: #{net_forward.5} parent=1 // pred_fallthru
      _
    %982 = vsyncpa [#allocation3], 1

// kernel: net_forward.4
$region0: #{net_forward.4}
  #allocation0 [shape = 'u32[]', space=smem, size = 0x4, offset = 0x4, fixed_abs, tag = 'smem constant byte address 0x4 - core index']
  #allocation1 [shape = 'u32[72,128]{1,0:T(1,128)}', space=vmem, size = 0x9000, scoped, tag = 'internal scratch']
  %s0 = inlined_call_operand.vmem [shape: bf16[2048,35], index: 0, kind: input, shape index: {}]
  %s1 = inlined_call_operand.vmem [shape: f32[32,64], index: 1, kind: input, shape index: {}]
  %s2 = inlined_call_operand.vmem [shape: bf16[35,32], index: 2, kind: input, shape index: {}]
  %s3 = inlined_call_operand.vmem [shape: f32[1,32], index: 3, kind: input, shape index: {}]
  %s4 = inlined_call_operand.vmem [shape: bf16[32,32], index: 4, kind: input, shape index: {}]
  %s5 = inlined_call_operand.vmem [shape: f32[1,32], index: 5, kind: input, shape index: {}]
  %s6 = inlined_call_operand.vmem [shape: bf16[32,128], index: 6, kind: input, shape index: {}]
  %s7 = inlined_call_operand.vmem [shape: f32[1,128], index: 7, kind: input, shape index: {}]
  %s8 = inlined_call_operand.vmem [shape: f32[32,128], index: 8, kind: output, shape index: {}]
  %s9 = sld [smem:[#allocation0]]
  $region49: #{net_forward.4} parent=0
    _
  %s11 = ssub.s32 1, %s9
  %s12 = scalar_select 0, %s11, %s9
  // Predicated region
  $region2: #{net_forward.4} parent=0 // pred_check
    _
  $region3: #{net_forward.4} parent=0 // pred_check_branch
    %14 = sbr.rel (0) target = $region5
  $region4: #{net_forward.4} parent=0 // pred_region
    _
  $region5: #{net_forward.4} parent=0 // pred_fallthru
    _
  // Predicated region
  $region6: #{net_forward.4} parent=0 // pred_check
    _
  $region7: #{net_forward.4} parent=0 // pred_check_branch
    %16 = sbr.rel (0) target = $region9
  $region8: #{net_forward.4} parent=0 // pred_region
    _
  $region9: #{net_forward.4} parent=0 // pred_fallthru
    _
  // Predicated region
  $region10: #{net_forward.4} parent=0 // pred_check
    _
  $region11: #{net_forward.4} parent=0 // pred_check_branch
    %18 = sbr.rel (0) target = $region13
  $region12: #{net_forward.4} parent=0 // pred_region
    _
  $region13: #{net_forward.4} parent=0 // pred_fallthru
    _
  // Predicated region
  $region14: #{net_forward.4} parent=0 // pred_check
    _
  $region15: #{net_forward.4} parent=0 // pred_check_branch
    %20 = sbr.rel (0) target = $region17
  $region16: #{net_forward.4} parent=0 // pred_region
    _
  $region17: #{net_forward.4} parent=0 // pred_fallthru
    _
  // Predicated region
  $region18: #{net_forward.4} parent=0 // pred_check
    _
  $region19: #{net_forward.4} parent=0 // pred_check_branch
    %22 = sbr.rel (0) target = $region21
  $region20: #{net_forward.4} parent=0 // pred_region
    _
  $region21: #{net_forward.4} parent=0 // pred_fallthru
    _
  // Predicated region
  $region22: #{net_forward.4} parent=0 // pred_check
    _
  $region23: #{net_forward.4} parent=0 // pred_check_branch
    %24 = sbr.rel (0) target = $region25
  $region24: #{net_forward.4} parent=0 // pred_region
    _
  $region25: #{net_forward.4} parent=0 // pred_fallthru
    _
  // Predicated region
  $region26: #{net_forward.4} parent=0 // pred_check
    _
  $region27: #{net_forward.4} parent=0 // pred_check_branch
    %26 = sbr.rel (0) target = $region29
  $region28: #{net_forward.4} parent=0 // pred_region
    _
  $region29: #{net_forward.4} parent=0 // pred_fallthru
    _
  // Predicated region
  $region30: #{net_forward.4} parent=0 // pred_check
    _
  $region31: #{net_forward.4} parent=0 // pred_check_branch
    %28 = sbr.rel (0) target = $region33
  $region32: #{net_forward.4} parent=0 // pred_region
    _
  $region33: #{net_forward.4} parent=0 // pred_fallthru
    _
  %v30 = vld [vmem:[%s2] sm:$0xf]
  %v31 = vld [vmem:[%s2 + $0x4] sm:$0xf]
  %v32 = vld [vmem:[%s2 + $0x8] sm:$0xf]
  %v33 = vld [vmem:[%s2 + $0xc] sm:$0xf]
  %v34 = vld [vmem:[%s2 + $0x10] sm:$0x3]
  %v35 = vld [vmem:[%s3] sm:$0x1]
  %v36 = vld [vmem:[%s4] sm:$0xf]
  %v37 = vld [vmem:[%s4 + $0x4] sm:$0xf]
  %v38 = vld [vmem:[%s4 + $0x8] sm:$0xf]
  %v39 = vld [vmem:[%s4 + $0xc] sm:$0xf]
  %v40 = vld [vmem:[%s5] sm:$0x1]
  %v41 = vld [vmem:[%s6] sm:$0xf]
  %v42 = vld [vmem:[%s6 + $0x4] sm:$0xf]
  %v43 = vld [vmem:[%s6 + $0x8] sm:$0xf]
  %v44 = vld [vmem:[%s6 + $0xc] sm:$0xf]
  %v45 = vld [vmem:[%s7] sm:$0x1]
  loop: start=0, step=1, limit=2
  $region34: #{net_forward.4} parent=0 // loop_pre_header
    _
  $region35: #{net_forward.4} parent=0 // loop_header
    %s47 = sphi 0, %s51
    %p48 = scmp.ge.s32.totalorder %s47, 2
  $region36: #{net_forward.4} parent=0 // loop_header_branch
    %50 = sbr.rel (%p48) target = $region40
  $region37: #{net_forward.4} parent=0 // loop_body
    %s52 = smul.u32 %s47, 1024
    %s53 = smul.u32 %s47, 16
    %s54 = sshra.s32 %s52, 3
    %s55 = sand.u32 %s52, 7
    %s56 = smul.addr %s54, 4
    %s57 = scalar_lea.vmem %s0, %s56
    %v58 = vld [vmem:[%s57] sm:$0xf]
    %v59 = vld [vmem:[%s57 + $0x4] sm:$0xf]
    %v60 = vld [vmem:[%s57 + $0x8] sm:$0xf]
    %v61 = vld [vmem:[%s57 + $0xc] sm:$0xf]
    %v62 = vld [vmem:[%s57 + $0x10] sm:$0xf]
    %v63 = vld [vmem:[%s57 + $0x14] sm:$0xf]
    %v64 = vld [vmem:[%s57 + $0x18] sm:$0xf]
    %v65 = vld [vmem:[%s57 + $0x1c] sm:$0xf]
    %v66 = vld [vmem:[%s57 + $0x20] sm:$0xf]
    %v67 = vld [vmem:[%s57 + $0x24] sm:$0xf]
    %v68 = vld [vmem:[%s57 + $0x28] sm:$0xf]
    %v69 = vld [vmem:[%s57 + $0x2c] sm:$0xf]
    %v70 = vld [vmem:[%s57 + $0x30] sm:$0xf]
    %v71 = vld [vmem:[%s57 + $0x34] sm:$0xf]
    %v72 = vld [vmem:[%s57 + $0x38] sm:$0xf]
    %v73 = vld [vmem:[%s57 + $0x3c] sm:$0xf]
    %v74 = vld [vmem:[%s57 + $0x40] sm:$0xf]
    %v75 = vld [vmem:[%s57 + $0x44] sm:$0xf]
    %v76 = vld [vmem:[%s57 + $0x48] sm:$0xf]
    %v77 = vld [vmem:[%s57 + $0x4c] sm:$0xf]
    %v78 = vld [vmem:[%s57 + $0x50] sm:$0xf]
    %v79 = vld [vmem:[%s57 + $0x54] sm:$0xf]
    %v80 = vld [vmem:[%s57 + $0x58] sm:$0xf]
    %v81 = vld [vmem:[%s57 + $0x5c] sm:$0xf]
    %v82 = vld [vmem:[%s57 + $0x60] sm:$0xf]
    %v83 = vld [vmem:[%s57 + $0x64] sm:$0xf]
    %v84 = vld [vmem:[%s57 + $0x68] sm:$0xf]
    %v85 = vld [vmem:[%s57 + $0x6c] sm:$0xf]
    %v86 = vld [vmem:[%s57 + $0x70] sm:$0xf]
    %v87 = vld [vmem:[%s57 + $0x74] sm:$0xf]
    %v88 = vld [vmem:[%s57 + $0x78] sm:$0xf]
    %v89 = vld [vmem:[%s57 + $0x7c] sm:$0xf]
    %v90 = vld [vmem:[%s57 + $0x80] sm:$0xf]
    %v91 = vld [vmem:[%s57 + $0x84] sm:$0xf]
    %v92 = vld [vmem:[%s57 + $0x88] sm:$0xf]
    %v93 = vld [vmem:[%s57 + $0x8c] sm:$0xf]
    %v94 = vld [vmem:[%s57 + $0x90] sm:$0xf]
    %v95 = vld [vmem:[%s57 + $0x94] sm:$0xf]
    %v96 = vld [vmem:[%s57 + $0x98] sm:$0xf]
    %v97 = vld [vmem:[%s57 + $0x9c] sm:$0xf]
    %v98 = vld [vmem:[%s57 + $0xa0] sm:$0xf]
    %v99 = vld [vmem:[%s57 + $0xa4] sm:$0xf]
    %v100 = vld [vmem:[%s57 + $0xa8] sm:$0xf]
    %v101 = vld [vmem:[%s57 + $0xac] sm:$0xf]
    %v102 = vld [vmem:[%s57 + $0xb0] sm:$0xf]
    %v103 = vld [vmem:[%s57 + $0xb4] sm:$0xf]
    %v104 = vld [vmem:[%s57 + $0xb8] sm:$0xf]
    %v105 = vld [vmem:[%s57 + $0xbc] sm:$0xf]
    %v106 = vld [vmem:[%s57 + $0xc0] sm:$0xf]
    %v107 = vld [vmem:[%s57 + $0xc4] sm:$0xf]
    %v108 = vld [vmem:[%s57 + $0xc8] sm:$0xf]
    %v109 = vld [vmem:[%s57 + $0xcc] sm:$0xf]
    %v110 = vld [vmem:[%s57 + $0xd0] sm:$0xf]
    %v111 = vld [vmem:[%s57 + $0xd4] sm:$0xf]
    %v112 = vld [vmem:[%s57 + $0xd8] sm:$0xf]
    %v113 = vld [vmem:[%s57 + $0xdc] sm:$0xf]
    %v114 = vld [vmem:[%s57 + $0xe0] sm:$0xf]
    %v115 = vld [vmem:[%s57 + $0xe4] sm:$0xf]
    %v116 = vld [vmem:[%s57 + $0xe8] sm:$0xf]
    %v117 = vld [vmem:[%s57 + $0xec] sm:$0xf]
    %v118 = vld [vmem:[%s57 + $0xf0] sm:$0xf]
    %v119 = vld [vmem:[%s57 + $0xf4] sm:$0xf]
    %v120 = vld [vmem:[%s57 + $0xf8] sm:$0xf]
    %v121 = vld [vmem:[%s57 + $0xfc] sm:$0xf]
    %v122 = vld [vmem:[%s57 + $0x100] sm:$0xf]
    %v123 = vld [vmem:[%s57 + $0x104] sm:$0xf]
    %v124 = vld [vmem:[%s57 + $0x108] sm:$0xf]
    %v125 = vld [vmem:[%s57 + $0x10c] sm:$0xf]
    %v126 = vld [vmem:[%s57 + $0x110] sm:$0xf]
    %v127 = vld [vmem:[%s57 + $0x114] sm:$0xf]
    %v128 = vld [vmem:[%s57 + $0x118] sm:$0xf]
    %v129 = vld [vmem:[%s57 + $0x11c] sm:$0xf]
    %v130 = vld [vmem:[%s57 + $0x120] sm:$0xf]
    %v131 = vld [vmem:[%s57 + $0x124] sm:$0xf]
    %v132 = vld [vmem:[%s57 + $0x128] sm:$0xf]
    %v133 = vld [vmem:[%s57 + $0x12c] sm:$0xf]
    %v134 = vld [vmem:[%s57 + $0x130] sm:$0xf]
    %v135 = vld [vmem:[%s57 + $0x134] sm:$0xf]
    %v136 = vld [vmem:[%s57 + $0x138] sm:$0xf]
    %v137 = vld [vmem:[%s57 + $0x13c] sm:$0xf]
    %v138 = vld [vmem:[%s57 + $0x140] sm:$0xf]
    %v139 = vld [vmem:[%s57 + $0x144] sm:$0xf]
    %v140 = vld [vmem:[%s57 + $0x148] sm:$0xf]
    %v141 = vld [vmem:[%s57 + $0x14c] sm:$0xf]
    %v142 = vld [vmem:[%s57 + $0x150] sm:$0xf]
    %v143 = vld [vmem:[%s57 + $0x154] sm:$0xf]
    %v144 = vld [vmem:[%s57 + $0x158] sm:$0xf]
    %v145 = vld [vmem:[%s57 + $0x15c] sm:$0xf]
    %v146 = vld [vmem:[%s57 + $0x160] sm:$0xf]
    %v147 = vld [vmem:[%s57 + $0x164] sm:$0xf]
    %v148 = vld [vmem:[%s57 + $0x168] sm:$0xf]
    %v149 = vld [vmem:[%s57 + $0x16c] sm:$0xf]
    %v150 = vld [vmem:[%s57 + $0x170] sm:$0xf]
    %v151 = vld [vmem:[%s57 + $0x174] sm:$0xf]
    %v152 = vld [vmem:[%s57 + $0x178] sm:$0xf]
    %v153 = vld [vmem:[%s57 + $0x17c] sm:$0xf]
    %v154 = vld [vmem:[%s57 + $0x180] sm:$0xf]
    %v155 = vld [vmem:[%s57 + $0x184] sm:$0xf]
    %v156 = vld [vmem:[%s57 + $0x188] sm:$0xf]
    %v157 = vld [vmem:[%s57 + $0x18c] sm:$0xf]
    %v158 = vld [vmem:[%s57 + $0x190] sm:$0xf]
    %v159 = vld [vmem:[%s57 + $0x194] sm:$0xf]
    %v160 = vld [vmem:[%s57 + $0x198] sm:$0xf]
    %v161 = vld [vmem:[%s57 + $0x19c] sm:$0xf]
    %v162 = vld [vmem:[%s57 + $0x1a0] sm:$0xf]
    %v163 = vld [vmem:[%s57 + $0x1a4] sm:$0xf]
    %v164 = vld [vmem:[%s57 + $0x1a8] sm:$0xf]
    %v165 = vld [vmem:[%s57 + $0x1ac] sm:$0xf]
    %v166 = vld [vmem:[%s57 + $0x1b0] sm:$0xf]
    %v167 = vld [vmem:[%s57 + $0x1b4] sm:$0xf]
    %v168 = vld [vmem:[%s57 + $0x1b8] sm:$0xf]
    %v169 = vld [vmem:[%s57 + $0x1bc] sm:$0xf]
    %v170 = vld [vmem:[%s57 + $0x1c0] sm:$0xf]
    %v171 = vld [vmem:[%s57 + $0x1c4] sm:$0xf]
    %v172 = vld [vmem:[%s57 + $0x1c8] sm:$0xf]
    %v173 = vld [vmem:[%s57 + $0x1cc] sm:$0xf]
    %v174 = vld [vmem:[%s57 + $0x1d0] sm:$0xf]
    %v175 = vld [vmem:[%s57 + $0x1d4] sm:$0xf]
    %v176 = vld [vmem:[%s57 + $0x1d8] sm:$0xf]
    %v177 = vld [vmem:[%s57 + $0x1dc] sm:$0xf]
    %v178 = vld [vmem:[%s57 + $0x1e0] sm:$0xf]
    %v179 = vld [vmem:[%s57 + $0x1e4] sm:$0xf]
    %v180 = vld [vmem:[%s57 + $0x1e8] sm:$0xf]
    %v181 = vld [vmem:[%s57 + $0x1ec] sm:$0xf]
    %v182 = vld [vmem:[%s57 + $0x1f0] sm:$0xf]
    %v183 = vld [vmem:[%s57 + $0x1f4] sm:$0xf]
    %v184 = vld [vmem:[%s57 + $0x1f8] sm:$0xf]
    %v185 = vld [vmem:[%s57 + $0x1fc] sm:$0xf]
    %v187 = vperm.slane %v35, 0
    %v317 = vunpack.c.l.b16 %v58
    %v318 = vunpack.c.l.b16 %v59
    %v319 = vunpack.c.l.b16 %v60
    %v320 = vunpack.c.l.b16 %v61
    %v321 = vunpack.c.l.b16 %v62
    %v322 = vunpack.c.l.b16 %v63
    %v323 = vunpack.c.l.b16 %v64
    %v324 = vunpack.c.l.b16 %v65
    %v325 = vunpack.c.l.b16 %v66
    %v326 = vunpack.c.l.b16 %v67
    %v327 = vunpack.c.l.b16 %v68
    %v328 = vunpack.c.l.b16 %v69
    %v329 = vunpack.c.l.b16 %v70
    %v330 = vunpack.c.l.b16 %v71
    %v331 = vunpack.c.l.b16 %v72
    %v332 = vunpack.c.l.b16 %v73
    %v333 = vunpack.c.l.b16 %v74
    %v334 = vunpack.c.l.b16 %v75
    %v335 = vunpack.c.l.b16 %v76
    %v336 = vunpack.c.l.b16 %v77
    %v337 = vunpack.c.l.b16 %v78
    %v338 = vunpack.c.l.b16 %v79
    %v339 = vunpack.c.l.b16 %v80
    %v340 = vunpack.c.l.b16 %v81
    %v341 = vunpack.c.l.b16 %v82
    %v342 = vunpack.c.l.b16 %v83
    %v343 = vunpack.c.l.b16 %v84
    %v344 = vunpack.c.l.b16 %v85
    %v345 = vunpack.c.l.b16 %v86
    %v346 = vunpack.c.l.b16 %v87
    %v347 = vunpack.c.l.b16 %v88
    %v348 = vunpack.c.l.b16 %v89
    %v349 = vunpack.c.l.b16 %v90
    %v350 = vunpack.c.l.b16 %v91
    %v351 = vunpack.c.l.b16 %v92
    %v352 = vunpack.c.l.b16 %v93
    %v353 = vunpack.c.l.b16 %v94
    %v354 = vunpack.c.l.b16 %v95
    %v355 = vunpack.c.l.b16 %v96
    %v356 = vunpack.c.l.b16 %v97
    %v357 = vunpack.c.l.b16 %v98
    %v358 = vunpack.c.l.b16 %v99
    %v359 = vunpack.c.l.b16 %v100
    %v360 = vunpack.c.l.b16 %v101
    %v361 = vunpack.c.l.b16 %v102
    %v362 = vunpack.c.l.b16 %v103
    %v363 = vunpack.c.l.b16 %v104
    %v364 = vunpack.c.l.b16 %v105
    %v365 = vunpack.c.l.b16 %v106
    %v366 = vunpack.c.l.b16 %v107
    %v367 = vunpack.c.l.b16 %v108
    %v368 = vunpack.c.l.b16 %v109
    %v369 = vunpack.c.l.b16 %v110
    %v370 = vunpack.c.l.b16 %v111
    %v371 = vunpack.c.l.b16 %v112
    %v372 = vunpack.c.l.b16 %v113
    %v373 = vunpack.c.l.b16 %v114
    %v374 = vunpack.c.l.b16 %v115
    %v375 = vunpack.c.l.b16 %v116
    %v376 = vunpack.c.l.b16 %v117
    %v377 = vunpack.c.l.b16 %v118
    %v378 = vunpack.c.l.b16 %v119
    %v379 = vunpack.c.l.b16 %v120
    %v380 = vunpack.c.l.b16 %v121
    %v381 = vunpack.c.l.b16 %v122
    %v382 = vunpack.c.l.b16 %v123
    %v383 = vunpack.c.l.b16 %v124
    %v384 = vunpack.c.l.b16 %v125
    %v385 = vunpack.c.l.b16 %v126
    %v386 = vunpack.c.l.b16 %v127
    %v387 = vunpack.c.l.b16 %v128
    %v388 = vunpack.c.l.b16 %v129
    %v389 = vunpack.c.l.b16 %v130
    %v390 = vunpack.c.l.b16 %v131
    %v391 = vunpack.c.l.b16 %v132
    %v392 = vunpack.c.l.b16 %v133
    %v393 = vunpack.c.l.b16 %v134
    %v394 = vunpack.c.l.b16 %v135
    %v395 = vunpack.c.l.b16 %v136
    %v396 = vunpack.c.l.b16 %v137
    %v397 = vunpack.c.l.b16 %v138
    %v398 = vunpack.c.l.b16 %v139
    %v399 = vunpack.c.l.b16 %v140
    %v400 = vunpack.c.l.b16 %v141
    %v401 = vunpack.c.l.b16 %v142
    %v402 = vunpack.c.l.b16 %v143
    %v403 = vunpack.c.l.b16 %v144
    %v404 = vunpack.c.l.b16 %v145
    %v405 = vunpack.c.l.b16 %v146
    %v406 = vunpack.c.l.b16 %v147
    %v407 = vunpack.c.l.b16 %v148
    %v408 = vunpack.c.l.b16 %v149
    %v409 = vunpack.c.l.b16 %v150
    %v410 = vunpack.c.l.b16 %v151
    %v411 = vunpack.c.l.b16 %v152
    %v412 = vunpack.c.l.b16 %v153
    %v413 = vunpack.c.l.b16 %v154
    %v414 = vunpack.c.l.b16 %v155
    %v415 = vunpack.c.l.b16 %v156
    %v416 = vunpack.c.l.b16 %v157
    %v417 = vunpack.c.l.b16 %v158
    %v418 = vunpack.c.l.b16 %v159
    %v419 = vunpack.c.l.b16 %v160
    %v420 = vunpack.c.l.b16 %v161
    %v421 = vunpack.c.l.b16 %v162
    %v422 = vunpack.c.l.b16 %v163
    %v423 = vunpack.c.l.b16 %v164
    %v424 = vunpack.c.l.b16 %v165
    %v425 = vunpack.c.l.b16 %v166
    %v426 = vunpack.c.l.b16 %v167
    %v427 = vunpack.c.l.b16 %v168
    %v428 = vunpack.c.l.b16 %v169
    %v429 = vunpack.c.l.b16 %v170
    %v430 = vunpack.c.l.b16 %v171
    %v431 = vunpack.c.l.b16 %v172
    %v432 = vunpack.c.l.b16 %v173
    %v433 = vunpack.c.l.b16 %v174
    %v434 = vunpack.c.l.b16 %v175
    %v435 = vunpack.c.l.b16 %v176
    %v436 = vunpack.c.l.b16 %v177
    %v437 = vunpack.c.l.b16 %v178
    %v438 = vunpack.c.l.b16 %v179
    %v439 = vunpack.c.l.b16 %v180
    %v440 = vunpack.c.l.b16 %v181
    %v441 = vunpack.c.l.b16 %v182
    %v442 = vunpack.c.l.b16 %v183
    %v443 = vunpack.c.l.b16 %v184
    %v444 = vunpack.c.l.b16 %v185
    %v445 = vpack.c.b16 %v318, %v317
    %v446 = vpack.c.b16 %v320, %v319
    %v447 = vpack.c.b16 %v322, %v321
    %v448 = vpack.c.b16 %v324, %v323
    %v449 = vpack.c.b16 %v326, %v325
    %v450 = vpack.c.b16 %v328, %v327
    %v451 = vpack.c.b16 %v330, %v329
    %v452 = vpack.c.b16 %v332, %v331
    %v453 = vpack.c.b16 %v334, %v333
    %v454 = vpack.c.b16 %v336, %v335
    %v455 = vpack.c.b16 %v338, %v337
    %v456 = vpack.c.b16 %v340, %v339
    %v457 = vpack.c.b16 %v342, %v341
    %v458 = vpack.c.b16 %v344, %v343
    %v459 = vpack.c.b16 %v346, %v345
    %v460 = vpack.c.b16 %v348, %v347
    %v461 = vpack.c.b16 %v350, %v349
    %v462 = vpack.c.b16 %v352, %v351
    %v463 = vpack.c.b16 %v354, %v353
    %v464 = vpack.c.b16 %v356, %v355
    %v465 = vpack.c.b16 %v358, %v357
    %v466 = vpack.c.b16 %v360, %v359
    %v467 = vpack.c.b16 %v362, %v361
    %v468 = vpack.c.b16 %v364, %v363
    %v469 = vpack.c.b16 %v366, %v365
    %v470 = vpack.c.b16 %v368, %v367
    %v471 = vpack.c.b16 %v370, %v369
    %v472 = vpack.c.b16 %v372, %v371
    %v473 = vpack.c.b16 %v374, %v373
    %v474 = vpack.c.b16 %v376, %v375
    %v475 = vpack.c.b16 %v378, %v377
    %v476 = vpack.c.b16 %v380, %v379
    %v477 = vpack.c.b16 %v382, %v381
    %v478 = vpack.c.b16 %v384, %v383
    %v479 = vpack.c.b16 %v386, %v385
    %v480 = vpack.c.b16 %v388, %v387
    %v481 = vpack.c.b16 %v390, %v389
    %v482 = vpack.c.b16 %v392, %v391
    %v483 = vpack.c.b16 %v394, %v393
    %v484 = vpack.c.b16 %v396, %v395
    %v485 = vpack.c.b16 %v398, %v397
    %v486 = vpack.c.b16 %v400, %v399
    %v487 = vpack.c.b16 %v402, %v401
    %v488 = vpack.c.b16 %v404, %v403
    %v489 = vpack.c.b16 %v406, %v405
    %v490 = vpack.c.b16 %v408, %v407
    %v491 = vpack.c.b16 %v410, %v409
    %v492 = vpack.c.b16 %v412, %v411
    %v493 = vpack.c.b16 %v414, %v413
    %v494 = vpack.c.b16 %v416, %v415
    %v495 = vpack.c.b16 %v418, %v417
    %v496 = vpack.c.b16 %v420, %v419
    %v497 = vpack.c.b16 %v422, %v421
    %v498 = vpack.c.b16 %v424, %v423
    %v499 = vpack.c.b16 %v426, %v425
    %v500 = vpack.c.b16 %v428, %v427
    %v501 = vpack.c.b16 %v430, %v429
    %v502 = vpack.c.b16 %v432, %v431
    %v503 = vpack.c.b16 %v434, %v433
    %v504 = vpack.c.b16 %v436, %v435
    %v505 = vpack.c.b16 %v438, %v437
    %v506 = vpack.c.b16 %v440, %v439
    %v507 = vpack.c.b16 %v442, %v441
    %v508 = vpack.c.b16 %v444, %v443
    %v514 = vunpack.c.l.b16 %v30
    %v515 = vunpack.c.l.b16 %v31
    %v516 = vunpack.c.l.b16 %v32
    %v517 = vunpack.c.l.b16 %v33
    %v518 = vunpack.c.l.b16 %v34
    %v519 = vpack.c.b16 %v515, %v514
    %v520 = vpack.c.b16 %v517, %v516
    %v521 = vpack.c.b16 %v518, %v518
    %vm524 = vcmask 285696
    %v526 = vsel %vm524, %v445, 0
    %v529 = vsel %vm524, %v446, 0
    %v532 = vsel %vm524, %v447, 0
    %v535 = vsel %vm524, %v448, 0
    %v538 = vsel %vm524, %v449, 0
    %v541 = vsel %vm524, %v450, 0
    %v544 = vsel %vm524, %v451, 0
    %v547 = vsel %vm524, %v452, 0
    %v550 = vsel %vm524, %v453, 0
    %v553 = vsel %vm524, %v454, 0
    %v556 = vsel %vm524, %v455, 0
    %v559 = vsel %vm524, %v456, 0
    %v562 = vsel %vm524, %v457, 0
    %v565 = vsel %vm524, %v458, 0
    %v568 = vsel %vm524, %v459, 0
    %v571 = vsel %vm524, %v460, 0
    %v574 = vsel %vm524, %v461, 0
    %v577 = vsel %vm524, %v462, 0
    %v580 = vsel %vm524, %v463, 0
    %v583 = vsel %vm524, %v464, 0
    %v586 = vsel %vm524, %v465, 0
    %v589 = vsel %vm524, %v466, 0
    %v592 = vsel %vm524, %v467, 0
    %v595 = vsel %vm524, %v468, 0
    %v598 = vsel %vm524, %v469, 0
    %v601 = vsel %vm524, %v470, 0
    %v604 = vsel %vm524, %v471, 0
    %v607 = vsel %vm524, %v472, 0
    %v610 = vsel %vm524, %v473, 0
    %v613 = vsel %vm524, %v474, 0
    %v616 = vsel %vm524, %v475, 0
    %v619 = vsel %vm524, %v476, 0
    %v622 = vsel %vm524, %v477, 0
    %v625 = vsel %vm524, %v478, 0
    %v628 = vsel %vm524, %v479, 0
    %v631 = vsel %vm524, %v480, 0
    %v634 = vsel %vm524, %v481, 0
    %v637 = vsel %vm524, %v482, 0
    %v640 = vsel %vm524, %v483, 0
    %v643 = vsel %vm524, %v484, 0
    %v646 = vsel %vm524, %v485, 0
    %v649 = vsel %vm524, %v486, 0
    %v652 = vsel %vm524, %v487, 0
    %v655 = vsel %vm524, %v488, 0
    %v658 = vsel %vm524, %v489, 0
    %v661 = vsel %vm524, %v490, 0
    %v664 = vsel %vm524, %v491, 0
    %v667 = vsel %vm524, %v492, 0
    %v670 = vsel %vm524, %v493, 0
    %v673 = vsel %vm524, %v494, 0
    %v676 = vsel %vm524, %v495, 0
    %v679 = vsel %vm524, %v496, 0
    %v682 = vsel %vm524, %v497, 0
    %v685 = vsel %vm524, %v498, 0
    %v688 = vsel %vm524, %v499, 0
    %v691 = vsel %vm524, %v500, 0
    %v694 = vsel %vm524, %v501, 0
    %v697 = vsel %vm524, %v502, 0
    %v700 = vsel %vm524, %v503, 0
    %v703 = vsel %vm524, %v504, 0
    %v706 = vsel %vm524, %v505, 0
    %v709 = vsel %vm524, %v506, 0
    %v712 = vsel %vm524, %v507, 0
    %v715 = vsel %vm524, %v508, 0
    %vm717 = vcmask 1040384
    %vm718 = vcmask 1041408
    %v719 = vsel %vm717, 4294967295, 65535
    %v720 = vsel %vm718, %v719, 0
    %v722 = vand.u32 %v521, %v720
    %724 = vmatpush.bf16.msra.mxu0 0
    %725 = vmatpush.bf16.msra.mxu0 0
    %726 = vmatpush.bf16.msra.mxu0 0
    %727 = vmatpush.bf16.msra.mxu0 0
    %728 = vmatpush.bf16.msra.mxu0 0
    %729 = vmatpush.bf16.msra.mxu0 %v722
    %730 = vmatpush.bf16.msra.mxu0 %v520
    %731 = vmatpush.bf16.msra.mxu0 %v519
    %732 = vmatmul.bf16.gmra.mxu0 %v526
    %v733 = vpop.f32.mrf.mxu0
    %v734 = vadd.f32 %v187, %v733
    %v735 = vpop.f32.mrf.mxu0
    %v736 = vadd.f32 %v187, %v735
    %737 = vmatmul.bf16.gmra.mxu0 %v529
    %v738 = vpop.f32.mrf.mxu0
    %v739 = vadd.f32 %v187, %v738
    %v740 = vpop.f32.mrf.mxu0
    %v741 = vadd.f32 %v187, %v740
    %742 = vmatmul.bf16.gmra.mxu0 %v532
    %v743 = vpop.f32.mrf.mxu0
    %v744 = vadd.f32 %v187, %v743
    %v745 = vpop.f32.mrf.mxu0
    %v746 = vadd.f32 %v187, %v745
    %747 = vmatmul.bf16.gmra.mxu0 %v535
    %v748 = vpop.f32.mrf.mxu0
    %v749 = vadd.f32 %v187, %v748
    %v750 = vpop.f32.mrf.mxu0
    %v751 = vadd.f32 %v187, %v750
    %752 = vmatmul.bf16.gmra.mxu0 %v538
    %v753 = vpop.f32.mrf.mxu0
    %v754 = vadd.f32 %v187, %v753
    %v755 = vpop.f32.mrf.mxu0
    %v756 = vadd.f32 %v187, %v755
    %757 = vmatmul.bf16.gmra.mxu0 %v541
    %v758 = vpop.f32.mrf.mxu0
    %v759 = vadd.f32 %v187, %v758
    %v760 = vpop.f32.mrf.mxu0
    %v761 = vadd.f32 %v187, %v760
    %762 = vmatmul.bf16.gmra.mxu0 %v544
    %v763 = vpop.f32.mrf.mxu0
    %v764 = vadd.f32 %v187, %v763
    %v765 = vpop.f32.mrf.mxu0
    %v766 = vadd.f32 %v187, %v765
    %767 = vmatmul.bf16.gmra.mxu0 %v547
    %v768 = vpop.f32.mrf.mxu0
    %v769 = vadd.f32 %v187, %v768
    %v770 = vpop.f32.mrf.mxu0
    %v771 = vadd.f32 %v187, %v770
    %772 = vmatmul.bf16.gmra.mxu0 %v550
    %v773 = vpop.f32.mrf.mxu0
    %v774 = vadd.f32 %v187, %v773
    %v775 = vpop.f32.mrf.mxu0
    %v776 = vadd.f32 %v187, %v775
    %777 = vmatmul.bf16.gmra.mxu0 %v553
    %v778 = vpop.f32.mrf.mxu0
    %v779 = vadd.f32 %v187, %v778
    %v780 = vpop.f32.mrf.mxu0
    %v781 = vadd.f32 %v187, %v780
    %782 = vmatmul.bf16.gmra.mxu0 %v556
    %v783 = vpop.f32.mrf.mxu0
    %v784 = vadd.f32 %v187, %v783
    %v785 = vpop.f32.mrf.mxu0
    %v786 = vadd.f32 %v187, %v785
    %787 = vmatmul.bf16.gmra.mxu0 %v559
    %v788 = vpop.f32.mrf.mxu0
    %v789 = vadd.f32 %v187, %v788
    %v790 = vpop.f32.mrf.mxu0
    %v791 = vadd.f32 %v187, %v790
    %792 = vmatmul.bf16.gmra.mxu0 %v562
    %v793 = vpop.f32.mrf.mxu0
    %v794 = vadd.f32 %v187, %v793
    %v795 = vpop.f32.mrf.mxu0
    %v796 = vadd.f32 %v187, %v795
    %797 = vmatmul.bf16.gmra.mxu0 %v565
    %v798 = vpop.f32.mrf.mxu0
    %v799 = vadd.f32 %v187, %v798
    %v800 = vpop.f32.mrf.mxu0
    %v801 = vadd.f32 %v187, %v800
    %802 = vmatmul.bf16.gmra.mxu0 %v568
    %v803 = vpop.f32.mrf.mxu0
    %v804 = vadd.f32 %v187, %v803
    %v805 = vpop.f32.mrf.mxu0
    %v806 = vadd.f32 %v187, %v805
    %807 = vmatmul.bf16.gmra.mxu0 %v571
    %v808 = vpop.f32.mrf.mxu0
    %v809 = vadd.f32 %v187, %v808
    %v810 = vpop.f32.mrf.mxu0
    %v811 = vadd.f32 %v187, %v810
    %812 = vmatmul.bf16.gmra.mxu0 %v574
    %v813 = vpop.f32.mrf.mxu0
    %v814 = vadd.f32 %v187, %v813
    %v815 = vpop.f32.mrf.mxu0
    %v816 = vadd.f32 %v187, %v815
    %817 = vmatmul.bf16.gmra.mxu0 %v577
    %v818 = vpop.f32.mrf.mxu0
    %v819 = vadd.f32 %v187, %v818
    %v820 = vpop.f32.mrf.mxu0
    %v821 = vadd.f32 %v187, %v820
    %822 = vmatmul.bf16.gmra.mxu0 %v580
    %v823 = vpop.f32.mrf.mxu0
    %v824 = vadd.f32 %v187, %v823
    %v825 = vpop.f32.mrf.mxu0
    %v826 = vadd.f32 %v187, %v825
    %827 = vmatmul.bf16.gmra.mxu0 %v583
    %v828 = vpop.f32.mrf.mxu0
    %v829 = vadd.f32 %v187, %v828
    %v830 = vpop.f32.mrf.mxu0
    %v831 = vadd.f32 %v187, %v830
    %832 = vmatmul.bf16.gmra.mxu0 %v586
    %v833 = vpop.f32.mrf.mxu0
    %v834 = vadd.f32 %v187, %v833
    %v835 = vpop.f32.mrf.mxu0
    %v836 = vadd.f32 %v187, %v835
    %837 = vmatmul.bf16.gmra.mxu0 %v589
    %v838 = vpop.f32.mrf.mxu0
    %v839 = vadd.f32 %v187, %v838
    %v840 = vpop.f32.mrf.mxu0
    %v841 = vadd.f32 %v187, %v840
    %842 = vmatmul.bf16.gmra.mxu0 %v592
    %v843 = vpop.f32.mrf.mxu0
    %v844 = vadd.f32 %v187, %v843
    %v845 = vpop.f32.mrf.mxu0
    %v846 = vadd.f32 %v187, %v845
    %847 = vmatmul.bf16.gmra.mxu0 %v595
    %v848 = vpop.f32.mrf.mxu0
    %v849 = vadd.f32 %v187, %v848
    %v850 = vpop.f32.mrf.mxu0
    %v851 = vadd.f32 %v187, %v850
    %852 = vmatmul.bf16.gmra.mxu0 %v598
    %v853 = vpop.f32.mrf.mxu0
    %v854 = vadd.f32 %v187, %v853
    %v855 = vpop.f32.mrf.mxu0
    %v856 = vadd.f32 %v187, %v855
    %857 = vmatmul.bf16.gmra.mxu0 %v601
    %v858 = vpop.f32.mrf.mxu0
    %v859 = vadd.f32 %v187, %v858
    %v860 = vpop.f32.mrf.mxu0
    %v861 = vadd.f32 %v187, %v860
    %862 = vmatmul.bf16.gmra.mxu0 %v604
    %v863 = vpop.f32.mrf.mxu0
    %v864 = vadd.f32 %v187, %v863
    %v865 = vpop.f32.mrf.mxu0
    %v866 = vadd.f32 %v187, %v865
    %867 = vmatmul.bf16.gmra.mxu0 %v607
    %v868 = vpop.f32.mrf.mxu0
    %v869 = vadd.f32 %v187, %v868
    %v870 = vpop.f32.mrf.mxu0
    %v871 = vadd.f32 %v187, %v870
    %872 = vmatmul.bf16.gmra.mxu0 %v610
    %v873 = vpop.f32.mrf.mxu0
    %v874 = vadd.f32 %v187, %v873
    %v875 = vpop.f32.mrf.mxu0
    %v876 = vadd.f32 %v187, %v875
    %877 = vmatmul.bf16.gmra.mxu0 %v613
    %v878 = vpop.f32.mrf.mxu0
    %v879 = vadd.f32 %v187, %v878
    %v880 = vpop.f32.mrf.mxu0
    %v881 = vadd.f32 %v187, %v880
    %882 = vmatmul.bf16.gmra.mxu0 %v616
    %v883 = vpop.f32.mrf.mxu0
    %v884 = vadd.f32 %v187, %v883
    %v885 = vpop.f32.mrf.mxu0
    %v886 = vadd.f32 %v187, %v885
    %887 = vmatmul.bf16.gmra.mxu0 %v619
    %v888 = vpop.f32.mrf.mxu0
    %v889 = vadd.f32 %v187, %v888
    %v890 = vpop.f32.mrf.mxu0
    %v891 = vadd.f32 %v187, %v890
    %892 = vmatmul.bf16.gmra.mxu0 %v622
    %v893 = vpop.f32.mrf.mxu0
    %v894 = vadd.f32 %v187, %v893
    %v895 = vpop.f32.mrf.mxu0
    %v896 = vadd.f32 %v187, %v895
    %897 = vmatmul.bf16.gmra.mxu0 %v625
    %v898 = vpop.f32.mrf.mxu0
    %v899 = vadd.f32 %v187, %v898
    %v900 = vpop.f32.mrf.mxu0
    %v901 = vadd.f32 %v187, %v900
    %902 = vmatmul.bf16.gmra.mxu0 %v628
    %v903 = vpop.f32.mrf.mxu0
    %v904 = vadd.f32 %v187, %v903
    %v905 = vpop.f32.mrf.mxu0
    %v906 = vadd.f32 %v187, %v905
    %907 = vmatmul.bf16.gmra.mxu0 %v631
    %v908 = vpop.f32.mrf.mxu0
    %v909 = vadd.f32 %v187, %v908
    %v910 = vpop.f32.mrf.mxu0
    %v911 = vadd.f32 %v187, %v910
    %912 = vmatmul.bf16.gmra.mxu0 %v634
    %v913 = vpop.f32.mrf.mxu0
    %v914 = vadd.f32 %v187, %v913
    %v915 = vpop.f32.mrf.mxu0
    %v916 = vadd.f32 %v187, %v915
    %917 = vmatmul.bf16.gmra.mxu0 %v637
    %v918 = vpop.f32.mrf.mxu0
    %v919 = vadd.f32 %v187, %v918
    %v920 = vpop.f32.mrf.mxu0
    %v921 = vadd.f32 %v187, %v920
    %922 = vmatmul.bf16.gmra.mxu0 %v640
    %v923 = vpop.f32.mrf.mxu0
    %v924 = vadd.f32 %v187, %v923
    %v925 = vpop.f32.mrf.mxu0
    %v926 = vadd.f32 %v187, %v925
    %927 = vmatmul.bf16.gmra.mxu0 %v643
    %v928 = vpop.f32.mrf.mxu0
    %v929 = vadd.f32 %v187, %v928
    %v930 = vpop.f32.mrf.mxu0
    %v931 = vadd.f32 %v187, %v930
    %932 = vmatmul.bf16.gmra.mxu0 %v646
    %v933 = vpop.f32.mrf.mxu0
    %v934 = vadd.f32 %v187, %v933
    %v935 = vpop.f32.mrf.mxu0
    %v936 = vadd.f32 %v187, %v935
    %937 = vmatmul.bf16.gmra.mxu0 %v649
    %v938 = vpop.f32.mrf.mxu0
    %v939 = vadd.f32 %v187, %v938
    %v940 = vpop.f32.mrf.mxu0
    %v941 = vadd.f32 %v187, %v940
    %942 = vmatmul.bf16.gmra.mxu0 %v652
    %v943 = vpop.f32.mrf.mxu0
    %v944 = vadd.f32 %v187, %v943
    %v945 = vpop.f32.mrf.mxu0
    %v946 = vadd.f32 %v187, %v945
    %947 = vmatmul.bf16.gmra.mxu0 %v655
    %v948 = vpop.f32.mrf.mxu0
    %v949 = vadd.f32 %v187, %v948
    %v950 = vpop.f32.mrf.mxu0
    %v951 = vadd.f32 %v187, %v950
    %952 = vmatmul.bf16.gmra.mxu0 %v658
    %v953 = vpop.f32.mrf.mxu0
    %v954 = vadd.f32 %v187, %v953
    %v955 = vpop.f32.mrf.mxu0
    %v956 = vadd.f32 %v187, %v955
    %957 = vmatmul.bf16.gmra.mxu0 %v661
    %v958 = vpop.f32.mrf.mxu0
    %v959 = vadd.f32 %v187, %v958
    %v960 = vpop.f32.mrf.mxu0
    %v961 = vadd.f32 %v187, %v960
    %962 = vmatmul.bf16.gmra.mxu0 %v664
    %v963 = vpop.f32.mrf.mxu0
    %v964 = vadd.f32 %v187, %v963
    %v965 = vpop.f32.mrf.mxu0
    %v966 = vadd.f32 %v187, %v965
    %967 = vmatmul.bf16.gmra.mxu0 %v667
    %v968 = vpop.f32.mrf.mxu0
    %v969 = vadd.f32 %v187, %v968
    %v970 = vpop.f32.mrf.mxu0
    %v971 = vadd.f32 %v187, %v970
    %972 = vmatmul.bf16.gmra.mxu0 %v670
    %v973 = vpop.f32.mrf.mxu0
    %v974 = vadd.f32 %v187, %v973
    %v975 = vpop.f32.mrf.mxu0
    %v976 = vadd.f32 %v187, %v975
    %977 = vmatmul.bf16.gmra.mxu0 %v673
    %v978 = vpop.f32.mrf.mxu0
    %v979 = vadd.f32 %v187, %v978
    %v980 = vpop.f32.mrf.mxu0
    %v981 = vadd.f32 %v187, %v980
    %982 = vmatmul.bf16.gmra.mxu0 %v676
    %v983 = vpop.f32.mrf.mxu0
    %v984 = vadd.f32 %v187, %v983
    %v985 = vpop.f32.mrf.mxu0
    %v986 = vadd.f32 %v187, %v985
    %987 = vmatmul.bf16.gmra.mxu0 %v679
    %v988 = vpop.f32.mrf.mxu0
    %v989 = vadd.f32 %v187, %v988
    %v990 = vpop.f32.mrf.mxu0
    %v991 = vadd.f32 %v187, %v990
    %992 = vmatmul.bf16.gmra.mxu0 %v682
    %v993 = vpop.f32.mrf.mxu0
    %v994 = vadd.f32 %v187, %v993
    %v995 = vpop.f32.mrf.mxu0
    %v996 = vadd.f32 %v187, %v995
    %997 = vmatmul.bf16.gmra.mxu0 %v685
    %v998 = vpop.f32.mrf.mxu0
    %v999 = vadd.f32 %v187, %v998
    %v1000 = vpop.f32.mrf.mxu0
    %v1001 = vadd.f32 %v187, %v1000
    %1002 = vmatmul.bf16.gmra.mxu0 %v688
    %v1003 = vpop.f32.mrf.mxu0
    %v1004 = vadd.f32 %v187, %v1003
    %v1005 = vpop.f32.mrf.mxu0
    %v1006 = vadd.f32 %v187, %v1005
    %1007 = vmatmul.bf16.gmra.mxu0 %v691
    %v1008 = vpop.f32.mrf.mxu0
    %v1009 = vadd.f32 %v187, %v1008
    %v1010 = vpop.f32.mrf.mxu0
    %v1011 = vadd.f32 %v187, %v1010
    %1012 = vmatmul.bf16.gmra.mxu0 %v694
    %v1013 = vpop.f32.mrf.mxu0
    %v1014 = vadd.f32 %v187, %v1013
    %v1015 = vpop.f32.mrf.mxu0
    %v1016 = vadd.f32 %v187, %v1015
    %1017 = vmatmul.bf16.gmra.mxu0 %v697
    %v1018 = vpop.f32.mrf.mxu0
    %v1019 = vadd.f32 %v187, %v1018
    %v1020 = vpop.f32.mrf.mxu0
    %v1021 = vadd.f32 %v187, %v1020
    %1022 = vmatmul.bf16.gmra.mxu0 %v700
    %v1023 = vpop.f32.mrf.mxu0
    %v1024 = vadd.f32 %v187, %v1023
    %v1025 = vpop.f32.mrf.mxu0
    %v1026 = vadd.f32 %v187, %v1025
    %1027 = vmatmul.bf16.gmra.mxu0 %v703
    %v1028 = vpop.f32.mrf.mxu0
    %v1029 = vadd.f32 %v187, %v1028
    %v1030 = vpop.f32.mrf.mxu0
    %v1031 = vadd.f32 %v187, %v1030
    %1032 = vmatmul.bf16.gmra.mxu0 %v706
    %v1033 = vpop.f32.mrf.mxu0
    %v1034 = vadd.f32 %v187, %v1033
    %v1035 = vpop.f32.mrf.mxu0
    %v1036 = vadd.f32 %v187, %v1035
    %1037 = vmatmul.bf16.gmra.mxu0 %v709
    %v1038 = vpop.f32.mrf.mxu0
    %v1039 = vadd.f32 %v187, %v1038
    %v1040 = vpop.f32.mrf.mxu0
    %v1041 = vadd.f32 %v187, %v1040
    %1042 = vmatmul.bf16.gmra.mxu0 %v712
    %v1043 = vpop.f32.mrf.mxu0
    %v1044 = vadd.f32 %v187, %v1043
    %v1045 = vpop.f32.mrf.mxu0
    %v1046 = vadd.f32 %v187, %v1045
    %1047 = vmatmul.bf16.gmra.mxu0 %v715
    %v1048 = vpop.f32.mrf.mxu0
    %v1049 = vadd.f32 %v187, %v1048
    %v1050 = vpop.f32.mrf.mxu0
    %v1051 = vadd.f32 %v187, %v1050
    %1052 = vdwg.mxu0
    %v1053 = vmax.f32 %v734, 0.0
    %v1054 = vmax.f32 %v736, 0.0
    %v1055 = vmax.f32 %v739, 0.0
    %v1056 = vmax.f32 %v741, 0.0
    %v1057 = vmax.f32 %v744, 0.0
    %v1058 = vmax.f32 %v746, 0.0
    %v1059 = vmax.f32 %v749, 0.0
    %v1060 = vmax.f32 %v751, 0.0
    %v1061 = vmax.f32 %v754, 0.0
    %v1062 = vmax.f32 %v756, 0.0
    %v1063 = vmax.f32 %v759, 0.0
    %v1064 = vmax.f32 %v761, 0.0
    %v1065 = vmax.f32 %v764, 0.0
    %v1066 = vmax.f32 %v766, 0.0
    %v1067 = vmax.f32 %v769, 0.0
    %v1068 = vmax.f32 %v771, 0.0
    %v1069 = vmax.f32 %v774, 0.0
    %v1070 = vmax.f32 %v776, 0.0
    %v1071 = vmax.f32 %v779, 0.0
    %v1072 = vmax.f32 %v781, 0.0
    %v1073 = vmax.f32 %v784, 0.0
    %v1074 = vmax.f32 %v786, 0.0
    %v1075 = vmax.f32 %v789, 0.0
    %v1076 = vmax.f32 %v791, 0.0
    %v1077 = vmax.f32 %v794, 0.0
    %v1078 = vmax.f32 %v796, 0.0
    %v1079 = vmax.f32 %v799, 0.0
    %v1080 = vmax.f32 %v801, 0.0
    %v1081 = vmax.f32 %v804, 0.0
    %v1082 = vmax.f32 %v806, 0.0
    %v1083 = vmax.f32 %v809, 0.0
    %v1084 = vmax.f32 %v811, 0.0
    %v1085 = vmax.f32 %v814, 0.0
    %v1086 = vmax.f32 %v816, 0.0
    %v1087 = vmax.f32 %v819, 0.0
    %v1088 = vmax.f32 %v821, 0.0
    %v1089 = vmax.f32 %v824, 0.0
    %v1090 = vmax.f32 %v826, 0.0
    %v1091 = vmax.f32 %v829, 0.0
    %v1092 = vmax.f32 %v831, 0.0
    %v1093 = vmax.f32 %v834, 0.0
    %v1094 = vmax.f32 %v836, 0.0
    %v1095 = vmax.f32 %v839, 0.0
    %v1096 = vmax.f32 %v841, 0.0
    %v1097 = vmax.f32 %v844, 0.0
    %v1098 = vmax.f32 %v846, 0.0
    %v1099 = vmax.f32 %v849, 0.0
    %v1100 = vmax.f32 %v851, 0.0
    %v1101 = vmax.f32 %v854, 0.0
    %v1102 = vmax.f32 %v856, 0.0
    %v1103 = vmax.f32 %v859, 0.0
    %v1104 = vmax.f32 %v861, 0.0
    %v1105 = vmax.f32 %v864, 0.0
    %v1106 = vmax.f32 %v866, 0.0
    %v1107 = vmax.f32 %v869, 0.0
    %v1108 = vmax.f32 %v871, 0.0
    %v1109 = vmax.f32 %v874, 0.0
    %v1110 = vmax.f32 %v876, 0.0
    %v1111 = vmax.f32 %v879, 0.0
    %v1112 = vmax.f32 %v881, 0.0
    %v1113 = vmax.f32 %v884, 0.0
    %v1114 = vmax.f32 %v886, 0.0
    %v1115 = vmax.f32 %v889, 0.0
    %v1116 = vmax.f32 %v891, 0.0
    %v1117 = vmax.f32 %v894, 0.0
    %v1118 = vmax.f32 %v896, 0.0
    %v1119 = vmax.f32 %v899, 0.0
    %v1120 = vmax.f32 %v901, 0.0
    %v1121 = vmax.f32 %v904, 0.0
    %v1122 = vmax.f32 %v906, 0.0
    %v1123 = vmax.f32 %v909, 0.0
    %v1124 = vmax.f32 %v911, 0.0
    %v1125 = vmax.f32 %v914, 0.0
    %v1126 = vmax.f32 %v916, 0.0
    %v1127 = vmax.f32 %v919, 0.0
    %v1128 = vmax.f32 %v921, 0.0
    %v1129 = vmax.f32 %v924, 0.0
    %v1130 = vmax.f32 %v926, 0.0
    %v1131 = vmax.f32 %v929, 0.0
    %v1132 = vmax.f32 %v931, 0.0
    %v1133 = vmax.f32 %v934, 0.0
    %v1134 = vmax.f32 %v936, 0.0
    %v1135 = vmax.f32 %v939, 0.0
    %v1136 = vmax.f32 %v941, 0.0
    %v1137 = vmax.f32 %v944, 0.0
    %v1138 = vmax.f32 %v946, 0.0
    %v1139 = vmax.f32 %v949, 0.0
    %v1140 = vmax.f32 %v951, 0.0
    %v1141 = vmax.f32 %v954, 0.0
    %v1142 = vmax.f32 %v956, 0.0
    %v1143 = vmax.f32 %v959, 0.0
    %v1144 = vmax.f32 %v961, 0.0
    %v1145 = vmax.f32 %v964, 0.0
    %v1146 = vmax.f32 %v966, 0.0
    %v1147 = vmax.f32 %v969, 0.0
    %v1148 = vmax.f32 %v971, 0.0
    %v1149 = vmax.f32 %v974, 0.0
    %v1150 = vmax.f32 %v976, 0.0
    %v1151 = vmax.f32 %v979, 0.0
    %v1152 = vmax.f32 %v981, 0.0
    %v1153 = vmax.f32 %v984, 0.0
    %v1154 = vmax.f32 %v986, 0.0
    %v1155 = vmax.f32 %v989, 0.0
    %v1156 = vmax.f32 %v991, 0.0
    %v1157 = vmax.f32 %v994, 0.0
    %v1158 = vmax.f32 %v996, 0.0
    %v1159 = vmax.f32 %v999, 0.0
    %v1160 = vmax.f32 %v1001, 0.0
    %v1161 = vmax.f32 %v1004, 0.0
    %v1162 = vmax.f32 %v1006, 0.0
    %v1163 = vmax.f32 %v1009, 0.0
    %v1164 = vmax.f32 %v1011, 0.0
    %v1165 = vmax.f32 %v1014, 0.0
    %v1166 = vmax.f32 %v1016, 0.0
    %v1167 = vmax.f32 %v1019, 0.0
    %v1168 = vmax.f32 %v1021, 0.0
    %v1169 = vmax.f32 %v1024, 0.0
    %v1170 = vmax.f32 %v1026, 0.0
    %v1171 = vmax.f32 %v1029, 0.0
    %v1172 = vmax.f32 %v1031, 0.0
    %v1173 = vmax.f32 %v1034, 0.0
    %v1174 = vmax.f32 %v1036, 0.0
    %v1175 = vmax.f32 %v1039, 0.0
    %v1176 = vmax.f32 %v1041, 0.0
    %v1177 = vmax.f32 %v1044, 0.0
    %v1178 = vmax.f32 %v1046, 0.0
    %v1179 = vmax.f32 %v1049, 0.0
    %v1180 = vmax.f32 %v1051, 0.0
    %v1181 = vpack.c.bf16 %v1054, %v1053
    %v1182 = vpack.c.bf16 %v1056, %v1055
    %v1183 = vpack.c.bf16 %v1058, %v1057
    %v1184 = vpack.c.bf16 %v1060, %v1059
    %v1185 = vpack.c.bf16 %v1062, %v1061
    %v1186 = vpack.c.bf16 %v1064, %v1063
    %v1187 = vpack.c.bf16 %v1066, %v1065
    %v1188 = vpack.c.bf16 %v1068, %v1067
    %v1189 = vpack.c.bf16 %v1070, %v1069
    %v1190 = vpack.c.bf16 %v1072, %v1071
    %v1191 = vpack.c.bf16 %v1074, %v1073
    %v1192 = vpack.c.bf16 %v1076, %v1075
    %v1193 = vpack.c.bf16 %v1078, %v1077
    %v1194 = vpack.c.bf16 %v1080, %v1079
    %v1195 = vpack.c.bf16 %v1082, %v1081
    %v1196 = vpack.c.bf16 %v1084, %v1083
    %v1197 = vpack.c.bf16 %v1086, %v1085
    %v1198 = vpack.c.bf16 %v1088, %v1087
    %v1199 = vpack.c.bf16 %v1090, %v1089
    %v1200 = vpack.c.bf16 %v1092, %v1091
    %v1201 = vpack.c.bf16 %v1094, %v1093
    %v1202 = vpack.c.bf16 %v1096, %v1095
    %v1203 = vpack.c.bf16 %v1098, %v1097
    %v1204 = vpack.c.bf16 %v1100, %v1099
    %v1205 = vpack.c.bf16 %v1102, %v1101
    %v1206 = vpack.c.bf16 %v1104, %v1103
    %v1207 = vpack.c.bf16 %v1106, %v1105
    %v1208 = vpack.c.bf16 %v1108, %v1107
    %v1209 = vpack.c.bf16 %v1110, %v1109
    %v1210 = vpack.c.bf16 %v1112, %v1111
    %v1211 = vpack.c.bf16 %v1114, %v1113
    %v1212 = vpack.c.bf16 %v1116, %v1115
    %v1213 = vpack.c.bf16 %v1118, %v1117
    %v1214 = vpack.c.bf16 %v1120, %v1119
    %v1215 = vpack.c.bf16 %v1122, %v1121
    %v1216 = vpack.c.bf16 %v1124, %v1123
    %v1217 = vpack.c.bf16 %v1126, %v1125
    %v1218 = vpack.c.bf16 %v1128, %v1127
    %v1219 = vpack.c.bf16 %v1130, %v1129
    %v1220 = vpack.c.bf16 %v1132, %v1131
    %v1221 = vpack.c.bf16 %v1134, %v1133
    %v1222 = vpack.c.bf16 %v1136, %v1135
    %v1223 = vpack.c.bf16 %v1138, %v1137
    %v1224 = vpack.c.bf16 %v1140, %v1139
    %v1225 = vpack.c.bf16 %v1142, %v1141
    %v1226 = vpack.c.bf16 %v1144, %v1143
    %v1227 = vpack.c.bf16 %v1146, %v1145
    %v1228 = vpack.c.bf16 %v1148, %v1147
    %v1229 = vpack.c.bf16 %v1150, %v1149
    %v1230 = vpack.c.bf16 %v1152, %v1151
    %v1231 = vpack.c.bf16 %v1154, %v1153
    %v1232 = vpack.c.bf16 %v1156, %v1155
    %v1233 = vpack.c.bf16 %v1158, %v1157
    %v1234 = vpack.c.bf16 %v1160, %v1159
    %v1235 = vpack.c.bf16 %v1162, %v1161
    %v1236 = vpack.c.bf16 %v1164, %v1163
    %v1237 = vpack.c.bf16 %v1166, %v1165
    %v1238 = vpack.c.bf16 %v1168, %v1167
    %v1239 = vpack.c.bf16 %v1170, %v1169
    %v1240 = vpack.c.bf16 %v1172, %v1171
    %v1241 = vpack.c.bf16 %v1174, %v1173
    %v1242 = vpack.c.bf16 %v1176, %v1175
    %v1243 = vpack.c.bf16 %v1178, %v1177
    %v1244 = vpack.c.bf16 %v1180, %v1179
    %v1246 = vperm.slane %v40, 0
    %v1252 = vunpack.c.l.b16 %v36
    %v1253 = vunpack.c.l.b16 %v37
    %v1254 = vunpack.c.l.b16 %v38
    %v1255 = vunpack.c.l.b16 %v39
    %v1256 = vpack.c.b16 %v1253, %v1252
    %v1257 = vpack.c.b16 %v1255, %v1254
    %vm1260 = vcmask 261120
    %v1262 = vsel %vm1260, %v1181, 0
    %v1265 = vsel %vm1260, %v1182, 0
    %v1268 = vsel %vm1260, %v1183, 0
    %v1271 = vsel %vm1260, %v1184, 0
    %v1274 = vsel %vm1260, %v1185, 0
    %v1277 = vsel %vm1260, %v1186, 0
    %v1280 = vsel %vm1260, %v1187, 0
    %v1283 = vsel %vm1260, %v1188, 0
    %v1286 = vsel %vm1260, %v1189, 0
    %v1289 = vsel %vm1260, %v1190, 0
    %v1292 = vsel %vm1260, %v1191, 0
    %v1295 = vsel %vm1260, %v1192, 0
    %v1298 = vsel %vm1260, %v1193, 0
    %v1301 = vsel %vm1260, %v1194, 0
    %v1304 = vsel %vm1260, %v1195, 0
    %v1307 = vsel %vm1260, %v1196, 0
    %v1310 = vsel %vm1260, %v1197, 0
    %v1313 = vsel %vm1260, %v1198, 0
    %v1316 = vsel %vm1260, %v1199, 0
    %v1319 = vsel %vm1260, %v1200, 0
    %v1322 = vsel %vm1260, %v1201, 0
    %v1325 = vsel %vm1260, %v1202, 0
    %v1328 = vsel %vm1260, %v1203, 0
    %v1331 = vsel %vm1260, %v1204, 0
    %v1334 = vsel %vm1260, %v1205, 0
    %v1337 = vsel %vm1260, %v1206, 0
    %v1340 = vsel %vm1260, %v1207, 0
    %v1343 = vsel %vm1260, %v1208, 0
    %v1346 = vsel %vm1260, %v1209, 0
    %v1349 = vsel %vm1260, %v1210, 0
    %v1352 = vsel %vm1260, %v1211, 0
    %v1355 = vsel %vm1260, %v1212, 0
    %v1358 = vsel %vm1260, %v1213, 0
    %v1361 = vsel %vm1260, %v1214, 0
    %v1364 = vsel %vm1260, %v1215, 0
    %v1367 = vsel %vm1260, %v1216, 0
    %v1370 = vsel %vm1260, %v1217, 0
    %v1373 = vsel %vm1260, %v1218, 0
    %v1376 = vsel %vm1260, %v1219, 0
    %v1379 = vsel %vm1260, %v1220, 0
    %v1382 = vsel %vm1260, %v1221, 0
    %v1385 = vsel %vm1260, %v1222, 0
    %v1388 = vsel %vm1260, %v1223, 0
    %v1391 = vsel %vm1260, %v1224, 0
    %v1394 = vsel %vm1260, %v1225, 0
    %v1397 = vsel %vm1260, %v1226, 0
    %v1400 = vsel %vm1260, %v1227, 0
    %v1403 = vsel %vm1260, %v1228, 0
    %v1406 = vsel %vm1260, %v1229, 0
    %v1409 = vsel %vm1260, %v1230, 0
    %v1412 = vsel %vm1260, %v1231, 0
    %v1415 = vsel %vm1260, %v1232, 0
    %v1418 = vsel %vm1260, %v1233, 0
    %v1421 = vsel %vm1260, %v1234, 0
    %v1424 = vsel %vm1260, %v1235, 0
    %v1427 = vsel %vm1260, %v1236, 0
    %v1430 = vsel %vm1260, %v1237, 0
    %v1433 = vsel %vm1260, %v1238, 0
    %v1436 = vsel %vm1260, %v1239, 0
    %v1439 = vsel %vm1260, %v1240, 0
    %v1442 = vsel %vm1260, %v1241, 0
    %v1445 = vsel %vm1260, %v1242, 0
    %v1448 = vsel %vm1260, %v1243, 0
    %v1451 = vsel %vm1260, %v1244, 0
    %1453 = vmatpush.bf16.msra.mxu0 0
    %1454 = vmatpush.bf16.msra.mxu0 0
    %1455 = vmatpush.bf16.msra.mxu0 0
    %1456 = vmatpush.bf16.msra.mxu0 0
    %1457 = vmatpush.bf16.msra.mxu0 0
    %1458 = vmatpush.bf16.msra.mxu0 0
    %1459 = vmatpush.bf16.msra.mxu0 %v1257
    %1460 = vmatpush.bf16.msra.mxu0 %v1256
    %1461 = vmatmul.bf16.gmra.mxu0 %v1262
    %v1462 = vpop.f32.mrf.mxu0
    %v1463 = vadd.f32 %v1246, %v1462
    %v1464 = vpop.f32.mrf.mxu0
    %v1465 = vadd.f32 %v1246, %v1464
    %1466 = vmatmul.bf16.gmra.mxu0 %v1265
    %v1467 = vpop.f32.mrf.mxu0
    %v1468 = vadd.f32 %v1246, %v1467
    %v1469 = vpop.f32.mrf.mxu0
    %v1470 = vadd.f32 %v1246, %v1469
    %1471 = vmatmul.bf16.gmra.mxu0 %v1268
    %v1472 = vpop.f32.mrf.mxu0
    %v1473 = vadd.f32 %v1246, %v1472
    %v1474 = vpop.f32.mrf.mxu0
    %v1475 = vadd.f32 %v1246, %v1474
    %1476 = vmatmul.bf16.gmra.mxu0 %v1271
    %v1477 = vpop.f32.mrf.mxu0
    %v1478 = vadd.f32 %v1246, %v1477
    %v1479 = vpop.f32.mrf.mxu0
    %v1480 = vadd.f32 %v1246, %v1479
    %1481 = vmatmul.bf16.gmra.mxu0 %v1274
    %v1482 = vpop.f32.mrf.mxu0
    %v1483 = vadd.f32 %v1246, %v1482
    %v1484 = vpop.f32.mrf.mxu0
    %v1485 = vadd.f32 %v1246, %v1484
    %1486 = vmatmul.bf16.gmra.mxu0 %v1277
    %v1487 = vpop.f32.mrf.mxu0
    %v1488 = vadd.f32 %v1246, %v1487
    %v1489 = vpop.f32.mrf.mxu0
    %v1490 = vadd.f32 %v1246, %v1489
    %1491 = vmatmul.bf16.gmra.mxu0 %v1280
    %v1492 = vpop.f32.mrf.mxu0
    %v1493 = vadd.f32 %v1246, %v1492
    %v1494 = vpop.f32.mrf.mxu0
    %v1495 = vadd.f32 %v1246, %v1494
    %1496 = vmatmul.bf16.gmra.mxu0 %v1283
    %v1497 = vpop.f32.mrf.mxu0
    %v1498 = vadd.f32 %v1246, %v1497
    %v1499 = vpop.f32.mrf.mxu0
    %v1500 = vadd.f32 %v1246, %v1499
    %1501 = vmatmul.bf16.gmra.mxu0 %v1286
    %v1502 = vpop.f32.mrf.mxu0
    %v1503 = vadd.f32 %v1246, %v1502
    %v1504 = vpop.f32.mrf.mxu0
    %v1505 = vadd.f32 %v1246, %v1504
    %1506 = vmatmul.bf16.gmra.mxu0 %v1289
    %v1507 = vpop.f32.mrf.mxu0
    %v1508 = vadd.f32 %v1246, %v1507
    %v1509 = vpop.f32.mrf.mxu0
    %v1510 = vadd.f32 %v1246, %v1509
    %1511 = vmatmul.bf16.gmra.mxu0 %v1292
    %v1512 = vpop.f32.mrf.mxu0
    %v1513 = vadd.f32 %v1246, %v1512
    %v1514 = vpop.f32.mrf.mxu0
    %v1515 = vadd.f32 %v1246, %v1514
    %1516 = vmatmul.bf16.gmra.mxu0 %v1295
    %v1517 = vpop.f32.mrf.mxu0
    %v1518 = vadd.f32 %v1246, %v1517
    %v1519 = vpop.f32.mrf.mxu0
    %v1520 = vadd.f32 %v1246, %v1519
    %1521 = vmatmul.bf16.gmra.mxu0 %v1298
    %v1522 = vpop.f32.mrf.mxu0
    %v1523 = vadd.f32 %v1246, %v1522
    %v1524 = vpop.f32.mrf.mxu0
    %v1525 = vadd.f32 %v1246, %v1524
    %1526 = vmatmul.bf16.gmra.mxu0 %v1301
    %v1527 = vpop.f32.mrf.mxu0
    %v1528 = vadd.f32 %v1246, %v1527
    %v1529 = vpop.f32.mrf.mxu0
    %v1530 = vadd.f32 %v1246, %v1529
    %1531 = vmatmul.bf16.gmra.mxu0 %v1304
    %v1532 = vpop.f32.mrf.mxu0
    %v1533 = vadd.f32 %v1246, %v1532
    %v1534 = vpop.f32.mrf.mxu0
    %v1535 = vadd.f32 %v1246, %v1534
    %1536 = vmatmul.bf16.gmra.mxu0 %v1307
    %v1537 = vpop.f32.mrf.mxu0
    %v1538 = vadd.f32 %v1246, %v1537
    %v1539 = vpop.f32.mrf.mxu0
    %v1540 = vadd.f32 %v1246, %v1539
    %1541 = vmatmul.bf16.gmra.mxu0 %v1310
    %v1542 = vpop.f32.mrf.mxu0
    %v1543 = vadd.f32 %v1246, %v1542
    %v1544 = vpop.f32.mrf.mxu0
    %v1545 = vadd.f32 %v1246, %v1544
    %1546 = vmatmul.bf16.gmra.mxu0 %v1313
    %v1547 = vpop.f32.mrf.mxu0
    %v1548 = vadd.f32 %v1246, %v1547
    %v1549 = vpop.f32.mrf.mxu0
    %v1550 = vadd.f32 %v1246, %v1549
    %1551 = vmatmul.bf16.gmra.mxu0 %v1316
    %v1552 = vpop.f32.mrf.mxu0
    %v1553 = vadd.f32 %v1246, %v1552
    %v1554 = vpop.f32.mrf.mxu0
    %v1555 = vadd.f32 %v1246, %v1554
    %1556 = vmatmul.bf16.gmra.mxu0 %v1319
    %v1557 = vpop.f32.mrf.mxu0
    %v1558 = vadd.f32 %v1246, %v1557
    %v1559 = vpop.f32.mrf.mxu0
    %v1560 = vadd.f32 %v1246, %v1559
    %1561 = vmatmul.bf16.gmra.mxu0 %v1322
    %v1562 = vpop.f32.mrf.mxu0
    %v1563 = vadd.f32 %v1246, %v1562
    %v1564 = vpop.f32.mrf.mxu0
    %v1565 = vadd.f32 %v1246, %v1564
    %1566 = vmatmul.bf16.gmra.mxu0 %v1325
    %v1567 = vpop.f32.mrf.mxu0
    %v1568 = vadd.f32 %v1246, %v1567
    %v1569 = vpop.f32.mrf.mxu0
    %v1570 = vadd.f32 %v1246, %v1569
    %1571 = vmatmul.bf16.gmra.mxu0 %v1328
    %v1572 = vpop.f32.mrf.mxu0
    %v1573 = vadd.f32 %v1246, %v1572
    %v1574 = vpop.f32.mrf.mxu0
    %v1575 = vadd.f32 %v1246, %v1574
    %1576 = vmatmul.bf16.gmra.mxu0 %v1331
    %v1577 = vpop.f32.mrf.mxu0
    %v1578 = vadd.f32 %v1246, %v1577
    %v1579 = vpop.f32.mrf.mxu0
    %v1580 = vadd.f32 %v1246, %v1579
    %1581 = vmatmul.bf16.gmra.mxu0 %v1334
    %v1582 = vpop.f32.mrf.mxu0
    %v1583 = vadd.f32 %v1246, %v1582
    %v1584 = vpop.f32.mrf.mxu0
    %v1585 = vadd.f32 %v1246, %v1584
    %1586 = vmatmul.bf16.gmra.mxu0 %v1337
    %v1587 = vpop.f32.mrf.mxu0
    %v1588 = vadd.f32 %v1246, %v1587
    %v1589 = vpop.f32.mrf.mxu0
    %v1590 = vadd.f32 %v1246, %v1589
    %1591 = vmatmul.bf16.gmra.mxu0 %v1340
    %v1592 = vpop.f32.mrf.mxu0
    %v1593 = vadd.f32 %v1246, %v1592
    %v1594 = vpop.f32.mrf.mxu0
    %v1595 = vadd.f32 %v1246, %v1594
    %1596 = vmatmul.bf16.gmra.mxu0 %v1343
    %v1597 = vpop.f32.mrf.mxu0
    %v1598 = vadd.f32 %v1246, %v1597
    %v1599 = vpop.f32.mrf.mxu0
    %v1600 = vadd.f32 %v1246, %v1599
    %1601 = vmatmul.bf16.gmra.mxu0 %v1346
    %v1602 = vpop.f32.mrf.mxu0
    %v1603 = vadd.f32 %v1246, %v1602
    %v1604 = vpop.f32.mrf.mxu0
    %v1605 = vadd.f32 %v1246, %v1604
    %1606 = vmatmul.bf16.gmra.mxu0 %v1349
    %v1607 = vpop.f32.mrf.mxu0
    %v1608 = vadd.f32 %v1246, %v1607
    %v1609 = vpop.f32.mrf.mxu0
    %v1610 = vadd.f32 %v1246, %v1609
    %1611 = vmatmul.bf16.gmra.mxu0 %v1352
    %v1612 = vpop.f32.mrf.mxu0
    %v1613 = vadd.f32 %v1246, %v1612
    %v1614 = vpop.f32.mrf.mxu0
    %v1615 = vadd.f32 %v1246, %v1614
    %1616 = vmatmul.bf16.gmra.mxu0 %v1355
    %v1617 = vpop.f32.mrf.mxu0
    %v1618 = vadd.f32 %v1246, %v1617
    %v1619 = vpop.f32.mrf.mxu0
    %v1620 = vadd.f32 %v1246, %v1619
    %1621 = vmatmul.bf16.gmra.mxu0 %v1358
    %v1622 = vpop.f32.mrf.mxu0
    %v1623 = vadd.f32 %v1246, %v1622
    %v1624 = vpop.f32.mrf.mxu0
    %v1625 = vadd.f32 %v1246, %v1624
    %1626 = vmatmul.bf16.gmra.mxu0 %v1361
    %v1627 = vpop.f32.mrf.mxu0
    %v1628 = vadd.f32 %v1246, %v1627
    %v1629 = vpop.f32.mrf.mxu0
    %v1630 = vadd.f32 %v1246, %v1629
    %1631 = vmatmul.bf16.gmra.mxu0 %v1364
    %v1632 = vpop.f32.mrf.mxu0
    %v1633 = vadd.f32 %v1246, %v1632
    %v1634 = vpop.f32.mrf.mxu0
    %v1635 = vadd.f32 %v1246, %v1634
    %1636 = vmatmul.bf16.gmra.mxu0 %v1367
    %v1637 = vpop.f32.mrf.mxu0
    %v1638 = vadd.f32 %v1246, %v1637
    %v1639 = vpop.f32.mrf.mxu0
    %v1640 = vadd.f32 %v1246, %v1639
    %1641 = vmatmul.bf16.gmra.mxu0 %v1370
    %v1642 = vpop.f32.mrf.mxu0
    %v1643 = vadd.f32 %v1246, %v1642
    %v1644 = vpop.f32.mrf.mxu0
    %v1645 = vadd.f32 %v1246, %v1644
    %1646 = vmatmul.bf16.gmra.mxu0 %v1373
    %v1647 = vpop.f32.mrf.mxu0
    %v1648 = vadd.f32 %v1246, %v1647
    %v1649 = vpop.f32.mrf.mxu0
    %v1650 = vadd.f32 %v1246, %v1649
    %1651 = vmatmul.bf16.gmra.mxu0 %v1376
    %v1652 = vpop.f32.mrf.mxu0
    %v1653 = vadd.f32 %v1246, %v1652
    %v1654 = vpop.f32.mrf.mxu0
    %v1655 = vadd.f32 %v1246, %v1654
    %1656 = vmatmul.bf16.gmra.mxu0 %v1379
    %v1657 = vpop.f32.mrf.mxu0
    %v1658 = vadd.f32 %v1246, %v1657
    %v1659 = vpop.f32.mrf.mxu0
    %v1660 = vadd.f32 %v1246, %v1659
    %1661 = vmatmul.bf16.gmra.mxu0 %v1382
    %v1662 = vpop.f32.mrf.mxu0
    %v1663 = vadd.f32 %v1246, %v1662
    %v1664 = vpop.f32.mrf.mxu0
    %v1665 = vadd.f32 %v1246, %v1664
    %1666 = vmatmul.bf16.gmra.mxu0 %v1385
    %v1667 = vpop.f32.mrf.mxu0
    %v1668 = vadd.f32 %v1246, %v1667
    %v1669 = vpop.f32.mrf.mxu0
    %v1670 = vadd.f32 %v1246, %v1669
    %1671 = vmatmul.bf16.gmra.mxu0 %v1388
    %v1672 = vpop.f32.mrf.mxu0
    %v1673 = vadd.f32 %v1246, %v1672
    %v1674 = vpop.f32.mrf.mxu0
    %v1675 = vadd.f32 %v1246, %v1674
    %1676 = vmatmul.bf16.gmra.mxu0 %v1391
    %v1677 = vpop.f32.mrf.mxu0
    %v1678 = vadd.f32 %v1246, %v1677
    %v1679 = vpop.f32.mrf.mxu0
    %v1680 = vadd.f32 %v1246, %v1679
    %1681 = vmatmul.bf16.gmra.mxu0 %v1394
    %v1682 = vpop.f32.mrf.mxu0
    %v1683 = vadd.f32 %v1246, %v1682
    %v1684 = vpop.f32.mrf.mxu0
    %v1685 = vadd.f32 %v1246, %v1684
    %1686 = vmatmul.bf16.gmra.mxu0 %v1397
    %v1687 = vpop.f32.mrf.mxu0
    %v1688 = vadd.f32 %v1246, %v1687
    %v1689 = vpop.f32.mrf.mxu0
    %v1690 = vadd.f32 %v1246, %v1689
    %1691 = vmatmul.bf16.gmra.mxu0 %v1400
    %v1692 = vpop.f32.mrf.mxu0
    %v1693 = vadd.f32 %v1246, %v1692
    %v1694 = vpop.f32.mrf.mxu0
    %v1695 = vadd.f32 %v1246, %v1694
    %1696 = vmatmul.bf16.gmra.mxu0 %v1403
    %v1697 = vpop.f32.mrf.mxu0
    %v1698 = vadd.f32 %v1246, %v1697
    %v1699 = vpop.f32.mrf.mxu0
    %v1700 = vadd.f32 %v1246, %v1699
    %1701 = vmatmul.bf16.gmra.mxu0 %v1406
    %v1702 = vpop.f32.mrf.mxu0
    %v1703 = vadd.f32 %v1246, %v1702
    %v1704 = vpop.f32.mrf.mxu0
    %v1705 = vadd.f32 %v1246, %v1704
    %1706 = vmatmul.bf16.gmra.mxu0 %v1409
    %v1707 = vpop.f32.mrf.mxu0
    %v1708 = vadd.f32 %v1246, %v1707
    %v1709 = vpop.f32.mrf.mxu0
    %v1710 = vadd.f32 %v1246, %v1709
    %1711 = vmatmul.bf16.gmra.mxu0 %v1412
    %v1712 = vpop.f32.mrf.mxu0
    %v1713 = vadd.f32 %v1246, %v1712
    %v1714 = vpop.f32.mrf.mxu0
    %v1715 = vadd.f32 %v1246, %v1714
    %1716 = vmatmul.bf16.gmra.mxu0 %v1415
    %v1717 = vpop.f32.mrf.mxu0
    %v1718 = vadd.f32 %v1246, %v1717
    %v1719 = vpop.f32.mrf.mxu0
    %v1720 = vadd.f32 %v1246, %v1719
    %1721 = vmatmul.bf16.gmra.mxu0 %v1418
    %v1722 = vpop.f32.mrf.mxu0
    %v1723 = vadd.f32 %v1246, %v1722
    %v1724 = vpop.f32.mrf.mxu0
    %v1725 = vadd.f32 %v1246, %v1724
    %1726 = vmatmul.bf16.gmra.mxu0 %v1421
    %v1727 = vpop.f32.mrf.mxu0
    %v1728 = vadd.f32 %v1246, %v1727
    %v1729 = vpop.f32.mrf.mxu0
    %v1730 = vadd.f32 %v1246, %v1729
    %1731 = vmatmul.bf16.gmra.mxu0 %v1424
    %v1732 = vpop.f32.mrf.mxu0
    %v1733 = vadd.f32 %v1246, %v1732
    %v1734 = vpop.f32.mrf.mxu0
    %v1735 = vadd.f32 %v1246, %v1734
    %1736 = vmatmul.bf16.gmra.mxu0 %v1427
    %v1737 = vpop.f32.mrf.mxu0
    %v1738 = vadd.f32 %v1246, %v1737
    %v1739 = vpop.f32.mrf.mxu0
    %v1740 = vadd.f32 %v1246, %v1739
    %1741 = vmatmul.bf16.gmra.mxu0 %v1430
    %v1742 = vpop.f32.mrf.mxu0
    %v1743 = vadd.f32 %v1246, %v1742
    %v1744 = vpop.f32.mrf.mxu0
    %v1745 = vadd.f32 %v1246, %v1744
    %1746 = vmatmul.bf16.gmra.mxu0 %v1433
    %v1747 = vpop.f32.mrf.mxu0
    %v1748 = vadd.f32 %v1246, %v1747
    %v1749 = vpop.f32.mrf.mxu0
    %v1750 = vadd.f32 %v1246, %v1749
    %1751 = vmatmul.bf16.gmra.mxu0 %v1436
    %v1752 = vpop.f32.mrf.mxu0
    %v1753 = vadd.f32 %v1246, %v1752
    %v1754 = vpop.f32.mrf.mxu0
    %v1755 = vadd.f32 %v1246, %v1754
    %1756 = vmatmul.bf16.gmra.mxu0 %v1439
    %v1757 = vpop.f32.mrf.mxu0
    %v1758 = vadd.f32 %v1246, %v1757
    %v1759 = vpop.f32.mrf.mxu0
    %v1760 = vadd.f32 %v1246, %v1759
    %1761 = vmatmul.bf16.gmra.mxu0 %v1442
    %v1762 = vpop.f32.mrf.mxu0
    %v1763 = vadd.f32 %v1246, %v1762
    %v1764 = vpop.f32.mrf.mxu0
    %v1765 = vadd.f32 %v1246, %v1764
    %1766 = vmatmul.bf16.gmra.mxu0 %v1445
    %v1767 = vpop.f32.mrf.mxu0
    %v1768 = vadd.f32 %v1246, %v1767
    %v1769 = vpop.f32.mrf.mxu0
    %v1770 = vadd.f32 %v1246, %v1769
    %1771 = vmatmul.bf16.gmra.mxu0 %v1448
    %v1772 = vpop.f32.mrf.mxu0
    %v1773 = vadd.f32 %v1246, %v1772
    %v1774 = vpop.f32.mrf.mxu0
    %v1775 = vadd.f32 %v1246, %v1774
    %1776 = vmatmul.bf16.gmra.mxu0 %v1451
    %v1777 = vpop.f32.mrf.mxu0
    %v1778 = vadd.f32 %v1246, %v1777
    %v1779 = vpop.f32.mrf.mxu0
    %v1780 = vadd.f32 %v1246, %v1779
    %1781 = vdwg.mxu0
    %v1782 = vmax.f32 %v1463, 0.0
    %v1783 = vmax.f32 %v1465, 0.0
    %v1784 = vmax.f32 %v1468, 0.0
    %v1785 = vmax.f32 %v1470, 0.0
    %v1786 = vmax.f32 %v1473, 0.0
    %v1787 = vmax.f32 %v1475, 0.0
    %v1788 = vmax.f32 %v1478, 0.0
    %v1789 = vmax.f32 %v1480, 0.0
    %v1790 = vmax.f32 %v1483, 0.0
    %v1791 = vmax.f32 %v1485, 0.0
    %v1792 = vmax.f32 %v1488, 0.0
    %v1793 = vmax.f32 %v1490, 0.0
    %v1794 = vmax.f32 %v1493, 0.0
    %v1795 = vmax.f32 %v1495, 0.0
    %v1796 = vmax.f32 %v1498, 0.0
    %v1797 = vmax.f32 %v1500, 0.0
    %v1798 = vmax.f32 %v1503, 0.0
    %v1799 = vmax.f32 %v1505, 0.0
    %v1800 = vmax.f32 %v1508, 0.0
    %v1801 = vmax.f32 %v1510, 0.0
    %v1802 = vmax.f32 %v1513, 0.0
    %v1803 = vmax.f32 %v1515, 0.0
    %v1804 = vmax.f32 %v1518, 0.0
    %v1805 = vmax.f32 %v1520, 0.0
    %v1806 = vmax.f32 %v1523, 0.0
    %v1807 = vmax.f32 %v1525, 0.0
    %v1808 = vmax.f32 %v1528, 0.0
    %v1809 = vmax.f32 %v1530, 0.0
    %v1810 = vmax.f32 %v1533, 0.0
    %v1811 = vmax.f32 %v1535, 0.0
    %v1812 = vmax.f32 %v1538, 0.0
    %v1813 = vmax.f32 %v1540, 0.0
    %v1814 = vmax.f32 %v1543, 0.0
    %v1815 = vmax.f32 %v1545, 0.0
    %v1816 = vmax.f32 %v1548, 0.0
    %v1817 = vmax.f32 %v1550, 0.0
    %v1818 = vmax.f32 %v1553, 0.0
    %v1819 = vmax.f32 %v1555, 0.0
    %v1820 = vmax.f32 %v1558, 0.0
    %v1821 = vmax.f32 %v1560, 0.0
    %v1822 = vmax.f32 %v1563, 0.0
    %v1823 = vmax.f32 %v1565, 0.0
    %v1824 = vmax.f32 %v1568, 0.0
    %v1825 = vmax.f32 %v1570, 0.0
    %v1826 = vmax.f32 %v1573, 0.0
    %v1827 = vmax.f32 %v1575, 0.0
    %v1828 = vmax.f32 %v1578, 0.0
    %v1829 = vmax.f32 %v1580, 0.0
    %v1830 = vmax.f32 %v1583, 0.0
    %v1831 = vmax.f32 %v1585, 0.0
    %v1832 = vmax.f32 %v1588, 0.0
    %v1833 = vmax.f32 %v1590, 0.0
    %v1834 = vmax.f32 %v1593, 0.0
    %v1835 = vmax.f32 %v1595, 0.0
    %v1836 = vmax.f32 %v1598, 0.0
    %v1837 = vmax.f32 %v1600, 0.0
    %v1838 = vmax.f32 %v1603, 0.0
    %v1839 = vmax.f32 %v1605, 0.0
    %v1840 = vmax.f32 %v1608, 0.0
    %v1841 = vmax.f32 %v1610, 0.0
    %v1842 = vmax.f32 %v1613, 0.0
    %v1843 = vmax.f32 %v1615, 0.0
    %v1844 = vmax.f32 %v1618, 0.0
    %v1845 = vmax.f32 %v1620, 0.0
    %v1846 = vmax.f32 %v1623, 0.0
    %v1847 = vmax.f32 %v1625, 0.0
    %v1848 = vmax.f32 %v1628, 0.0
    %v1849 = vmax.f32 %v1630, 0.0
    %v1850 = vmax.f32 %v1633, 0.0
    %v1851 = vmax.f32 %v1635, 0.0
    %v1852 = vmax.f32 %v1638, 0.0
    %v1853 = vmax.f32 %v1640, 0.0
    %v1854 = vmax.f32 %v1643, 0.0
    %v1855 = vmax.f32 %v1645, 0.0
    %v1856 = vmax.f32 %v1648, 0.0
    %v1857 = vmax.f32 %v1650, 0.0
    %v1858 = vmax.f32 %v1653, 0.0
    %v1859 = vmax.f32 %v1655, 0.0
    %v1860 = vmax.f32 %v1658, 0.0
    %v1861 = vmax.f32 %v1660, 0.0
    %v1862 = vmax.f32 %v1663, 0.0
    %v1863 = vmax.f32 %v1665, 0.0
    %v1864 = vmax.f32 %v1668, 0.0
    %v1865 = vmax.f32 %v1670, 0.0
    %v1866 = vmax.f32 %v1673, 0.0
    %v1867 = vmax.f32 %v1675, 0.0
    %v1868 = vmax.f32 %v1678, 0.0
    %v1869 = vmax.f32 %v1680, 0.0
    %v1870 = vmax.f32 %v1683, 0.0
    %v1871 = vmax.f32 %v1685, 0.0
    %v1872 = vmax.f32 %v1688, 0.0
    %v1873 = vmax.f32 %v1690, 0.0
    %v1874 = vmax.f32 %v1693, 0.0
    %v1875 = vmax.f32 %v1695, 0.0
    %v1876 = vmax.f32 %v1698, 0.0
    %v1877 = vmax.f32 %v1700, 0.0
    %v1878 = vmax.f32 %v1703, 0.0
    %v1879 = vmax.f32 %v1705, 0.0
    %v1880 = vmax.f32 %v1708, 0.0
    %v1881 = vmax.f32 %v1710, 0.0
    %v1882 = vmax.f32 %v1713, 0.0
    %v1883 = vmax.f32 %v1715, 0.0
    %v1884 = vmax.f32 %v1718, 0.0
    %v1885 = vmax.f32 %v1720, 0.0
    %v1886 = vmax.f32 %v1723, 0.0
    %v1887 = vmax.f32 %v1725, 0.0
    %v1888 = vmax.f32 %v1728, 0.0
    %v1889 = vmax.f32 %v1730, 0.0
    %v1890 = vmax.f32 %v1733, 0.0
    %v1891 = vmax.f32 %v1735, 0.0
    %v1892 = vmax.f32 %v1738, 0.0
    %v1893 = vmax.f32 %v1740, 0.0
    %v1894 = vmax.f32 %v1743, 0.0
    %v1895 = vmax.f32 %v1745, 0.0
    %v1896 = vmax.f32 %v1748, 0.0
    %v1897 = vmax.f32 %v1750, 0.0
    %v1898 = vmax.f32 %v1753, 0.0
    %v1899 = vmax.f32 %v1755, 0.0
    %v1900 = vmax.f32 %v1758, 0.0
    %v1901 = vmax.f32 %v1760, 0.0
    %v1902 = vmax.f32 %v1763, 0.0
    %v1903 = vmax.f32 %v1765, 0.0
    %v1904 = vmax.f32 %v1768, 0.0
    %v1905 = vmax.f32 %v1770, 0.0
    %v1906 = vmax.f32 %v1773, 0.0
    %v1907 = vmax.f32 %v1775, 0.0
    %v1908 = vmax.f32 %v1778, 0.0
    %v1909 = vmax.f32 %v1780, 0.0
    %v1910 = vpack.c.bf16 %v1783, %v1782
    %v1911 = vpack.c.bf16 %v1785, %v1784
    %v1912 = vpack.c.bf16 %v1787, %v1786
    %v1913 = vpack.c.bf16 %v1789, %v1788
    %v1914 = vpack.c.bf16 %v1791, %v1790
    %v1915 = vpack.c.bf16 %v1793, %v1792
    %v1916 = vpack.c.bf16 %v1795, %v1794
    %v1917 = vpack.c.bf16 %v1797, %v1796
    %v1918 = vpack.c.bf16 %v1799, %v1798
    %v1919 = vpack.c.bf16 %v1801, %v1800
    %v1920 = vpack.c.bf16 %v1803, %v1802
    %v1921 = vpack.c.bf16 %v1805, %v1804
    %v1922 = vpack.c.bf16 %v1807, %v1806
    %v1923 = vpack.c.bf16 %v1809, %v1808
    %v1924 = vpack.c.bf16 %v1811, %v1810
    %v1925 = vpack.c.bf16 %v1813, %v1812
    %v1926 = vpack.c.bf16 %v1815, %v1814
    %v1927 = vpack.c.bf16 %v1817, %v1816
    %v1928 = vpack.c.bf16 %v1819, %v1818
    %v1929 = vpack.c.bf16 %v1821, %v1820
    %v1930 = vpack.c.bf16 %v1823, %v1822
    %v1931 = vpack.c.bf16 %v1825, %v1824
    %v1932 = vpack.c.bf16 %v1827, %v1826
    %v1933 = vpack.c.bf16 %v1829, %v1828
    %v1934 = vpack.c.bf16 %v1831, %v1830
    %v1935 = vpack.c.bf16 %v1833, %v1832
    %v1936 = vpack.c.bf16 %v1835, %v1834
    %v1937 = vpack.c.bf16 %v1837, %v1836
    %v1938 = vpack.c.bf16 %v1839, %v1838
    %v1939 = vpack.c.bf16 %v1841, %v1840
    %v1940 = vpack.c.bf16 %v1843, %v1842
    %v1941 = vpack.c.bf16 %v1845, %v1844
    %v1942 = vpack.c.bf16 %v1847, %v1846
    %v1943 = vpack.c.bf16 %v1849, %v1848
    %v1944 = vpack.c.bf16 %v1851, %v1850
    %v1945 = vpack.c.bf16 %v1853, %v1852
    %v1946 = vpack.c.bf16 %v1855, %v1854
    %v1947 = vpack.c.bf16 %v1857, %v1856
    %v1948 = vpack.c.bf16 %v1859, %v1858
    %v1949 = vpack.c.bf16 %v1861, %v1860
    %v1950 = vpack.c.bf16 %v1863, %v1862
    %v1951 = vpack.c.bf16 %v1865, %v1864
    %v1952 = vpack.c.bf16 %v1867, %v1866
    %v1953 = vpack.c.bf16 %v1869, %v1868
    %v1954 = vpack.c.bf16 %v1871, %v1870
    %v1955 = vpack.c.bf16 %v1873, %v1872
    %v1956 = vpack.c.bf16 %v1875, %v1874
    %v1957 = vpack.c.bf16 %v1877, %v1876
    %v1958 = vpack.c.bf16 %v1879, %v1878
    %v1959 = vpack.c.bf16 %v1881, %v1880
    %v1960 = vpack.c.bf16 %v1883, %v1882
    %v1961 = vpack.c.bf16 %v1885, %v1884
    %v1962 = vpack.c.bf16 %v1887, %v1886
    %v1963 = vpack.c.bf16 %v1889, %v1888
    %v1964 = vpack.c.bf16 %v1891, %v1890
    %v1965 = vpack.c.bf16 %v1893, %v1892
    %v1966 = vpack.c.bf16 %v1895, %v1894
    %v1967 = vpack.c.bf16 %v1897, %v1896
    %v1968 = vpack.c.bf16 %v1899, %v1898
    %v1969 = vpack.c.bf16 %v1901, %v1900
    %v1970 = vpack.c.bf16 %v1903, %v1902
    %v1971 = vpack.c.bf16 %v1905, %v1904
    %v1972 = vpack.c.bf16 %v1907, %v1906
    %v1973 = vpack.c.bf16 %v1909, %v1908
    %v1975 = vperm.slane %v45, 0
    %v1981 = vunpack.c.l.b16 %v41
    %v1982 = vunpack.c.l.b16 %v42
    %v1983 = vunpack.c.l.b16 %v43
    %v1984 = vunpack.c.l.b16 %v44
    %v1985 = vpack.c.b16 %v1982, %v1981
    %v1986 = vpack.c.b16 %v1984, %v1983
    %v1990 = vsel %vm1260, %v1910, 0
    %v1993 = vsel %vm1260, %v1911, 0
    %v1996 = vsel %vm1260, %v1912, 0
    %v1999 = vsel %vm1260, %v1913, 0
    %v2002 = vsel %vm1260, %v1914, 0
    %v2005 = vsel %vm1260, %v1915, 0
    %v2008 = vsel %vm1260, %v1916, 0
    %v2011 = vsel %vm1260, %v1917, 0
    %v2014 = vsel %vm1260, %v1918, 0
    %v2017 = vsel %vm1260, %v1919, 0
    %v2020 = vsel %vm1260, %v1920, 0
    %v2023 = vsel %vm1260, %v1921, 0
    %v2026 = vsel %vm1260, %v1922, 0
    %v2029 = vsel %vm1260, %v1923, 0
    %v2032 = vsel %vm1260, %v1924, 0
    %v2035 = vsel %vm1260, %v1925, 0
    %v2038 = vsel %vm1260, %v1926, 0
    %v2041 = vsel %vm1260, %v1927, 0
    %v2044 = vsel %vm1260, %v1928, 0
    %v2047 = vsel %vm1260, %v1929, 0
    %v2050 = vsel %vm1260, %v1930, 0
    %v2053 = vsel %vm1260, %v1931, 0
    %v2056 = vsel %vm1260, %v1932, 0
    %v2059 = vsel %vm1260, %v1933, 0
    %v2062 = vsel %vm1260, %v1934, 0
    %v2065 = vsel %vm1260, %v1935, 0
    %v2068 = vsel %vm1260, %v1936, 0
    %v2071 = vsel %vm1260, %v1937, 0
    %v2074 = vsel %vm1260, %v1938, 0
    %v2077 = vsel %vm1260, %v1939, 0
    %v2080 = vsel %vm1260, %v1940, 0
    %v2083 = vsel %vm1260, %v1941, 0
    %v2086 = vsel %vm1260, %v1942, 0
    %v2089 = vsel %vm1260, %v1943, 0
    %v2092 = vsel %vm1260, %v1944, 0
    %v2095 = vsel %vm1260, %v1945, 0
    %v2098 = vsel %vm1260, %v1946, 0
    %v2101 = vsel %vm1260, %v1947, 0
    %v2104 = vsel %vm1260, %v1948, 0
    %v2107 = vsel %vm1260, %v1949, 0
    %v2110 = vsel %vm1260, %v1950, 0
    %v2113 = vsel %vm1260, %v1951, 0
    %v2116 = vsel %vm1260, %v1952, 0
    %v2119 = vsel %vm1260, %v1953, 0
    %v2122 = vsel %vm1260, %v1954, 0
    %v2125 = vsel %vm1260, %v1955, 0
    %v2128 = vsel %vm1260, %v1956, 0
    %v2131 = vsel %vm1260, %v1957, 0
    %v2134 = vsel %vm1260, %v1958, 0
    %v2137 = vsel %vm1260, %v1959, 0
    %v2140 = vsel %vm1260, %v1960, 0
    %v2143 = vsel %vm1260, %v1961, 0
    %v2146 = vsel %vm1260, %v1962, 0
    %v2149 = vsel %vm1260, %v1963, 0
    %v2152 = vsel %vm1260, %v1964, 0
    %v2155 = vsel %vm1260, %v1965, 0
    %v2158 = vsel %vm1260, %v1966, 0
    %v2161 = vsel %vm1260, %v1967, 0
    %v2164 = vsel %vm1260, %v1968, 0
    %v2167 = vsel %vm1260, %v1969, 0
    %v2170 = vsel %vm1260, %v1970, 0
    %v2173 = vsel %vm1260, %v1971, 0
    %v2176 = vsel %vm1260, %v1972, 0
    %v2179 = vsel %vm1260, %v1973, 0
    %2181 = vmatpush.bf16.msra.mxu0 0
    %2182 = vmatpush.bf16.msra.mxu0 0
    %2183 = vmatpush.bf16.msra.mxu0 0
    %2184 = vmatpush.bf16.msra.mxu0 0
    %2185 = vmatpush.bf16.msra.mxu0 0
    %2186 = vmatpush.bf16.msra.mxu0 0
    %2187 = vmatpush.bf16.msra.mxu0 %v1986
    %2188 = vmatpush.bf16.msra.mxu0 %v1985
    %2189 = vmatmul.bf16.gmra.mxu0 %v1990
    %v2190 = vpop.f32.mrf.mxu0
    %v2191 = vadd.f32 %v1975, %v2190
    %v2192 = vpop.f32.mrf.mxu0
    %v2193 = vadd.f32 %v1975, %v2192
    %2194 = vmatmul.bf16.gmra.mxu0 %v1993
    %v2195 = vpop.f32.mrf.mxu0
    %v2196 = vadd.f32 %v1975, %v2195
    %v2197 = vpop.f32.mrf.mxu0
    %v2198 = vadd.f32 %v1975, %v2197
    %2199 = vmatmul.bf16.gmra.mxu0 %v1996
    %v2200 = vpop.f32.mrf.mxu0
    %v2201 = vadd.f32 %v1975, %v2200
    %v2202 = vpop.f32.mrf.mxu0
    %v2203 = vadd.f32 %v1975, %v2202
    %2204 = vmatmul.bf16.gmra.mxu0 %v1999
    %v2205 = vpop.f32.mrf.mxu0
    %v2206 = vadd.f32 %v1975, %v2205
    %v2207 = vpop.f32.mrf.mxu0
    %v2208 = vadd.f32 %v1975, %v2207
    %2209 = vmatmul.bf16.gmra.mxu0 %v2002
    %v2210 = vpop.f32.mrf.mxu0
    %v2211 = vadd.f32 %v1975, %v2210
    %v2212 = vpop.f32.mrf.mxu0
    %v2213 = vadd.f32 %v1975, %v2212
    %2214 = vmatmul.bf16.gmra.mxu0 %v2005
    %v2215 = vpop.f32.mrf.mxu0
    %v2216 = vadd.f32 %v1975, %v2215
    %v2217 = vpop.f32.mrf.mxu0
    %v2218 = vadd.f32 %v1975, %v2217
    %2219 = vmatmul.bf16.gmra.mxu0 %v2008
    %v2220 = vpop.f32.mrf.mxu0
    %v2221 = vadd.f32 %v1975, %v2220
    %v2222 = vpop.f32.mrf.mxu0
    %v2223 = vadd.f32 %v1975, %v2222
    %2224 = vmatmul.bf16.gmra.mxu0 %v2011
    %v2225 = vpop.f32.mrf.mxu0
    %v2226 = vadd.f32 %v1975, %v2225
    %v2227 = vpop.f32.mrf.mxu0
    %v2228 = vadd.f32 %v1975, %v2227
    %2229 = vmatmul.bf16.gmra.mxu0 %v2014
    %v2230 = vpop.f32.mrf.mxu0
    %v2231 = vadd.f32 %v1975, %v2230
    %v2232 = vpop.f32.mrf.mxu0
    %v2233 = vadd.f32 %v1975, %v2232
    %2234 = vmatmul.bf16.gmra.mxu0 %v2017
    %v2235 = vpop.f32.mrf.mxu0
    %v2236 = vadd.f32 %v1975, %v2235
    %v2237 = vpop.f32.mrf.mxu0
    %v2238 = vadd.f32 %v1975, %v2237
    %2239 = vmatmul.bf16.gmra.mxu0 %v2020
    %v2240 = vpop.f32.mrf.mxu0
    %v2241 = vadd.f32 %v1975, %v2240
    %v2242 = vpop.f32.mrf.mxu0
    %v2243 = vadd.f32 %v1975, %v2242
    %2244 = vmatmul.bf16.gmra.mxu0 %v2023
    %v2245 = vpop.f32.mrf.mxu0
    %v2246 = vadd.f32 %v1975, %v2245
    %v2247 = vpop.f32.mrf.mxu0
    %v2248 = vadd.f32 %v1975, %v2247
    %2249 = vmatmul.bf16.gmra.mxu0 %v2026
    %v2250 = vpop.f32.mrf.mxu0
    %v2251 = vadd.f32 %v1975, %v2250
    %v2252 = vpop.f32.mrf.mxu0
    %v2253 = vadd.f32 %v1975, %v2252
    %2254 = vmatmul.bf16.gmra.mxu0 %v2029
    %v2255 = vpop.f32.mrf.mxu0
    %v2256 = vadd.f32 %v1975, %v2255
    %v2257 = vpop.f32.mrf.mxu0
    %v2258 = vadd.f32 %v1975, %v2257
    %2259 = vmatmul.bf16.gmra.mxu0 %v2032
    %v2260 = vpop.f32.mrf.mxu0
    %v2261 = vadd.f32 %v1975, %v2260
    %v2262 = vpop.f32.mrf.mxu0
    %v2263 = vadd.f32 %v1975, %v2262
    %2264 = vmatmul.bf16.gmra.mxu0 %v2035
    %v2265 = vpop.f32.mrf.mxu0
    %v2266 = vadd.f32 %v1975, %v2265
    %v2267 = vpop.f32.mrf.mxu0
    %v2268 = vadd.f32 %v1975, %v2267
    %2269 = vmatmul.bf16.gmra.mxu0 %v2038
    %v2270 = vpop.f32.mrf.mxu0
    %v2271 = vadd.f32 %v1975, %v2270
    %v2272 = vpop.f32.mrf.mxu0
    %v2273 = vadd.f32 %v1975, %v2272
    %2274 = vmatmul.bf16.gmra.mxu0 %v2041
    %v2275 = vpop.f32.mrf.mxu0
    %v2276 = vadd.f32 %v1975, %v2275
    %v2277 = vpop.f32.mrf.mxu0
    %v2278 = vadd.f32 %v1975, %v2277
    %2279 = vmatmul.bf16.gmra.mxu0 %v2044
    %v2280 = vpop.f32.mrf.mxu0
    %v2281 = vadd.f32 %v1975, %v2280
    %v2282 = vpop.f32.mrf.mxu0
    %v2283 = vadd.f32 %v1975, %v2282
    %2284 = vmatmul.bf16.gmra.mxu0 %v2047
    %v2285 = vpop.f32.mrf.mxu0
    %v2286 = vadd.f32 %v1975, %v2285
    %v2287 = vpop.f32.mrf.mxu0
    %v2288 = vadd.f32 %v1975, %v2287
    %2289 = vmatmul.bf16.gmra.mxu0 %v2050
    %v2290 = vpop.f32.mrf.mxu0
    %v2291 = vadd.f32 %v1975, %v2290
    %v2292 = vpop.f32.mrf.mxu0
    %v2293 = vadd.f32 %v1975, %v2292
    %2294 = vmatmul.bf16.gmra.mxu0 %v2053
    %v2295 = vpop.f32.mrf.mxu0
    %v2296 = vadd.f32 %v1975, %v2295
    %v2297 = vpop.f32.mrf.mxu0
    %v2298 = vadd.f32 %v1975, %v2297
    %2299 = vmatmul.bf16.gmra.mxu0 %v2056
    %v2300 = vpop.f32.mrf.mxu0
    %v2301 = vadd.f32 %v1975, %v2300
    %v2302 = vpop.f32.mrf.mxu0
    %v2303 = vadd.f32 %v1975, %v2302
    %2304 = vmatmul.bf16.gmra.mxu0 %v2059
    %v2305 = vpop.f32.mrf.mxu0
    %v2306 = vadd.f32 %v1975, %v2305
    %v2307 = vpop.f32.mrf.mxu0
    %v2308 = vadd.f32 %v1975, %v2307
    %2309 = vmatmul.bf16.gmra.mxu0 %v2062
    %v2310 = vpop.f32.mrf.mxu0
    %v2311 = vadd.f32 %v1975, %v2310
    %v2312 = vpop.f32.mrf.mxu0
    %v2313 = vadd.f32 %v1975, %v2312
    %2314 = vmatmul.bf16.gmra.mxu0 %v2065
    %v2315 = vpop.f32.mrf.mxu0
    %v2316 = vadd.f32 %v1975, %v2315
    %v2317 = vpop.f32.mrf.mxu0
    %v2318 = vadd.f32 %v1975, %v2317
    %2319 = vmatmul.bf16.gmra.mxu0 %v2068
    %v2320 = vpop.f32.mrf.mxu0
    %v2321 = vadd.f32 %v1975, %v2320
    %v2322 = vpop.f32.mrf.mxu0
    %v2323 = vadd.f32 %v1975, %v2322
    %2324 = vmatmul.bf16.gmra.mxu0 %v2071
    %v2325 = vpop.f32.mrf.mxu0
    %v2326 = vadd.f32 %v1975, %v2325
    %v2327 = vpop.f32.mrf.mxu0
    %v2328 = vadd.f32 %v1975, %v2327
    %2329 = vmatmul.bf16.gmra.mxu0 %v2074
    %v2330 = vpop.f32.mrf.mxu0
    %v2331 = vadd.f32 %v1975, %v2330
    %v2332 = vpop.f32.mrf.mxu0
    %v2333 = vadd.f32 %v1975, %v2332
    %2334 = vmatmul.bf16.gmra.mxu0 %v2077
    %v2335 = vpop.f32.mrf.mxu0
    %v2336 = vadd.f32 %v1975, %v2335
    %v2337 = vpop.f32.mrf.mxu0
    %v2338 = vadd.f32 %v1975, %v2337
    %2339 = vmatmul.bf16.gmra.mxu0 %v2080
    %v2340 = vpop.f32.mrf.mxu0
    %v2341 = vadd.f32 %v1975, %v2340
    %v2342 = vpop.f32.mrf.mxu0
    %v2343 = vadd.f32 %v1975, %v2342
    %2344 = vmatmul.bf16.gmra.mxu0 %v2083
    %v2345 = vpop.f32.mrf.mxu0
    %v2346 = vadd.f32 %v1975, %v2345
    %v2347 = vpop.f32.mrf.mxu0
    %v2348 = vadd.f32 %v1975, %v2347
    %2349 = vmatmul.bf16.gmra.mxu0 %v2086
    %v2350 = vpop.f32.mrf.mxu0
    %v2351 = vadd.f32 %v1975, %v2350
    %v2352 = vpop.f32.mrf.mxu0
    %v2353 = vadd.f32 %v1975, %v2352
    %2354 = vmatmul.bf16.gmra.mxu0 %v2089
    %v2355 = vpop.f32.mrf.mxu0
    %v2356 = vadd.f32 %v1975, %v2355
    %v2357 = vpop.f32.mrf.mxu0
    %v2358 = vadd.f32 %v1975, %v2357
    %2359 = vmatmul.bf16.gmra.mxu0 %v2092
    %v2360 = vpop.f32.mrf.mxu0
    %v2361 = vadd.f32 %v1975, %v2360
    %v2362 = vpop.f32.mrf.mxu0
    %v2363 = vadd.f32 %v1975, %v2362
    %2364 = vmatmul.bf16.gmra.mxu0 %v2095
    %v2365 = vpop.f32.mrf.mxu0
    %v2366 = vadd.f32 %v1975, %v2365
    %v2367 = vpop.f32.mrf.mxu0
    %v2368 = vadd.f32 %v1975, %v2367
    %2369 = vmatmul.bf16.gmra.mxu0 %v2098
    %v2370 = vpop.f32.mrf.mxu0
    %v2371 = vadd.f32 %v1975, %v2370
    %v2372 = vpop.f32.mrf.mxu0
    %v2373 = vadd.f32 %v1975, %v2372
    %2374 = vmatmul.bf16.gmra.mxu0 %v2101
    %v2375 = vpop.f32.mrf.mxu0
    %v2376 = vadd.f32 %v1975, %v2375
    %v2377 = vpop.f32.mrf.mxu0
    %v2378 = vadd.f32 %v1975, %v2377
    %2379 = vmatmul.bf16.gmra.mxu0 %v2104
    %v2380 = vpop.f32.mrf.mxu0
    %v2381 = vadd.f32 %v1975, %v2380
    %v2382 = vpop.f32.mrf.mxu0
    %v2383 = vadd.f32 %v1975, %v2382
    %2384 = vmatmul.bf16.gmra.mxu0 %v2107
    %v2385 = vpop.f32.mrf.mxu0
    %v2386 = vadd.f32 %v1975, %v2385
    %v2387 = vpop.f32.mrf.mxu0
    %v2388 = vadd.f32 %v1975, %v2387
    %2389 = vmatmul.bf16.gmra.mxu0 %v2110
    %v2390 = vpop.f32.mrf.mxu0
    %v2391 = vadd.f32 %v1975, %v2390
    %v2392 = vpop.f32.mrf.mxu0
    %v2393 = vadd.f32 %v1975, %v2392
    %2394 = vmatmul.bf16.gmra.mxu0 %v2113
    %v2395 = vpop.f32.mrf.mxu0
    %v2396 = vadd.f32 %v1975, %v2395
    %v2397 = vpop.f32.mrf.mxu0
    %v2398 = vadd.f32 %v1975, %v2397
    %2399 = vmatmul.bf16.gmra.mxu0 %v2116
    %v2400 = vpop.f32.mrf.mxu0
    %v2401 = vadd.f32 %v1975, %v2400
    %v2402 = vpop.f32.mrf.mxu0
    %v2403 = vadd.f32 %v1975, %v2402
    %2404 = vmatmul.bf16.gmra.mxu0 %v2119
    %v2405 = vpop.f32.mrf.mxu0
    %v2406 = vadd.f32 %v1975, %v2405
    %v2407 = vpop.f32.mrf.mxu0
    %v2408 = vadd.f32 %v1975, %v2407
    %2409 = vmatmul.bf16.gmra.mxu0 %v2122
    %v2410 = vpop.f32.mrf.mxu0
    %v2411 = vadd.f32 %v1975, %v2410
    %v2412 = vpop.f32.mrf.mxu0
    %v2413 = vadd.f32 %v1975, %v2412
    %2414 = vmatmul.bf16.gmra.mxu0 %v2125
    %v2415 = vpop.f32.mrf.mxu0
    %v2416 = vadd.f32 %v1975, %v2415
    %v2417 = vpop.f32.mrf.mxu0
    %v2418 = vadd.f32 %v1975, %v2417
    %2419 = vmatmul.bf16.gmra.mxu0 %v2128
    %v2420 = vpop.f32.mrf.mxu0
    %v2421 = vadd.f32 %v1975, %v2420
    %v2422 = vpop.f32.mrf.mxu0
    %v2423 = vadd.f32 %v1975, %v2422
    %2424 = vmatmul.bf16.gmra.mxu0 %v2131
    %v2425 = vpop.f32.mrf.mxu0
    %v2426 = vadd.f32 %v1975, %v2425
    %v2427 = vpop.f32.mrf.mxu0
    %v2428 = vadd.f32 %v1975, %v2427
    %2429 = vmatmul.bf16.gmra.mxu0 %v2134
    %v2430 = vpop.f32.mrf.mxu0
    %v2431 = vadd.f32 %v1975, %v2430
    %v2432 = vpop.f32.mrf.mxu0
    %v2433 = vadd.f32 %v1975, %v2432
    %2434 = vmatmul.bf16.gmra.mxu0 %v2137
    %v2435 = vpop.f32.mrf.mxu0
    %v2436 = vadd.f32 %v1975, %v2435
    %v2437 = vpop.f32.mrf.mxu0
    %v2438 = vadd.f32 %v1975, %v2437
    %2439 = vmatmul.bf16.gmra.mxu0 %v2140
    %v2440 = vpop.f32.mrf.mxu0
    %v2441 = vadd.f32 %v1975, %v2440
    %v2442 = vpop.f32.mrf.mxu0
    %v2443 = vadd.f32 %v1975, %v2442
    %2444 = vmatmul.bf16.gmra.mxu0 %v2143
    %v2445 = vpop.f32.mrf.mxu0
    %v2446 = vadd.f32 %v1975, %v2445
    %v2447 = vpop.f32.mrf.mxu0
    %v2448 = vadd.f32 %v1975, %v2447
    %2449 = vmatmul.bf16.gmra.mxu0 %v2146
    %v2450 = vpop.f32.mrf.mxu0
    %v2451 = vadd.f32 %v1975, %v2450
    %v2452 = vpop.f32.mrf.mxu0
    %v2453 = vadd.f32 %v1975, %v2452
    %2454 = vmatmul.bf16.gmra.mxu0 %v2149
    %v2455 = vpop.f32.mrf.mxu0
    %v2456 = vadd.f32 %v1975, %v2455
    %v2457 = vpop.f32.mrf.mxu0
    %v2458 = vadd.f32 %v1975, %v2457
    %2459 = vmatmul.bf16.gmra.mxu0 %v2152
    %v2460 = vpop.f32.mrf.mxu0
    %v2461 = vadd.f32 %v1975, %v2460
    %v2462 = vpop.f32.mrf.mxu0
    %v2463 = vadd.f32 %v1975, %v2462
    %2464 = vmatmul.bf16.gmra.mxu0 %v2155
    %v2465 = vpop.f32.mrf.mxu0
    %v2466 = vadd.f32 %v1975, %v2465
    %v2467 = vpop.f32.mrf.mxu0
    %v2468 = vadd.f32 %v1975, %v2467
    %2469 = vmatmul.bf16.gmra.mxu0 %v2158
    %v2470 = vpop.f32.mrf.mxu0
    %v2471 = vadd.f32 %v1975, %v2470
    %v2472 = vpop.f32.mrf.mxu0
    %v2473 = vadd.f32 %v1975, %v2472
    %2474 = vmatmul.bf16.gmra.mxu0 %v2161
    %v2475 = vpop.f32.mrf.mxu0
    %v2476 = vadd.f32 %v1975, %v2475
    %v2477 = vpop.f32.mrf.mxu0
    %v2478 = vadd.f32 %v1975, %v2477
    %2479 = vmatmul.bf16.gmra.mxu0 %v2164
    %v2480 = vpop.f32.mrf.mxu0
    %v2481 = vadd.f32 %v1975, %v2480
    %v2482 = vpop.f32.mrf.mxu0
    %v2483 = vadd.f32 %v1975, %v2482
    %2484 = vmatmul.bf16.gmra.mxu0 %v2167
    %v2485 = vpop.f32.mrf.mxu0
    %v2486 = vadd.f32 %v1975, %v2485
    %v2487 = vpop.f32.mrf.mxu0
    %v2488 = vadd.f32 %v1975, %v2487
    %2489 = vmatmul.bf16.gmra.mxu0 %v2170
    %v2490 = vpop.f32.mrf.mxu0
    %v2491 = vadd.f32 %v1975, %v2490
    %v2492 = vpop.f32.mrf.mxu0
    %v2493 = vadd.f32 %v1975, %v2492
    %2494 = vmatmul.bf16.gmra.mxu0 %v2173
    %v2495 = vpop.f32.mrf.mxu0
    %v2496 = vadd.f32 %v1975, %v2495
    %v2497 = vpop.f32.mrf.mxu0
    %v2498 = vadd.f32 %v1975, %v2497
    %2499 = vmatmul.bf16.gmra.mxu0 %v2176
    %v2500 = vpop.f32.mrf.mxu0
    %v2501 = vadd.f32 %v1975, %v2500
    %v2502 = vpop.f32.mrf.mxu0
    %v2503 = vadd.f32 %v1975, %v2502
    %2504 = vmatmul.bf16.gmra.mxu0 %v2179
    %v2505 = vpop.f32.mrf.mxu0
    %v2506 = vadd.f32 %v1975, %v2505
    %v2507 = vpop.f32.mrf.mxu0
    %v2508 = vadd.f32 %v1975, %v2507
    %2509 = vdwg.mxu0
    %s2510 = scalar_lea.vmem %s1, %s53
    %v2511 = vld [vmem:[%s2510] sm:$0xff]
    %v2512 = vld [vmem:[%s2510 + $0x8] sm:$0xff]
    %v2513 = vperm.slane %v2511, 0
    %v2514 = vlaneseq
    %v2515 = vshrl.u32 %v2514, 7
    %2517 = vset.pattern.permute.xlu0 %v2515
    %2518 = vperm.xlu0 %2517, %v2513
    %v2519 = vpop.permute.xlu0 %2518
    %v2520 = vlaneseq
    %v2521 = vshrl.u32 %v2520, 7
    %v2522 = vadd.s32 %v2521, 8
    %2523 = vset.pattern.permute.xlu0 %v2522
    %2524 = vperm.xlu0 %2523, %v2513
    %v2525 = vpop.permute.xlu0 %2524
    %v2526 = vlaneseq
    %v2527 = vshrl.u32 %v2526, 7
    %v2528 = vadd.s32 %v2527, 16
    %2529 = vset.pattern.permute.xlu0 %v2528
    %2530 = vperm.xlu0 %2529, %v2513
    %v2531 = vpop.permute.xlu0 %2530
    %v2532 = vlaneseq
    %v2533 = vshrl.u32 %v2532, 7
    %v2534 = vadd.s32 %v2533, 24
    %2535 = vset.pattern.permute.xlu0 %v2534
    %2536 = vperm.xlu0 %2535, %v2513
    %v2537 = vpop.permute.xlu0 %2536
    %v2538 = vlaneseq
    %v2539 = vshrl.u32 %v2538, 7
    %v2540 = vadd.s32 %v2539, 32
    %2541 = vset.pattern.permute.xlu0 %v2540
    %2542 = vperm.xlu0 %2541, %v2513
    %v2543 = vpop.permute.xlu0 %2542
    %v2544 = vlaneseq
    %v2545 = vshrl.u32 %v2544, 7
    %v2546 = vadd.s32 %v2545, 40
    %2547 = vset.pattern.permute.xlu0 %v2546
    %2548 = vperm.xlu0 %2547, %v2513
    %v2549 = vpop.permute.xlu0 %2548
    %v2550 = vlaneseq
    %v2551 = vshrl.u32 %v2550, 7
    %v2552 = vadd.s32 %v2551, 48
    %2553 = vset.pattern.permute.xlu0 %v2552
    %2554 = vperm.xlu0 %2553, %v2513
    %v2555 = vpop.permute.xlu0 %2554
    %v2556 = vlaneseq
    %v2557 = vshrl.u32 %v2556, 7
    %v2558 = vadd.s32 %v2557, 56
    %2559 = vset.pattern.permute.xlu0 %v2558
    %2560 = vperm.xlu0 %2559, %v2513
    %v2561 = vpop.permute.xlu0 %2560
    %v2562 = vperm.slane %v2511, 1
    %v2563 = vlaneseq
    %v2564 = vshrl.u32 %v2563, 7
    %2566 = vset.pattern.permute.xlu0 %v2564
    %2567 = vperm.xlu0 %2566, %v2562
    %v2568 = vpop.permute.xlu0 %2567
    %v2569 = vlaneseq
    %v2570 = vshrl.u32 %v2569, 7
    %v2571 = vadd.s32 %v2570, 8
    %2572 = vset.pattern.permute.xlu0 %v2571
    %2573 = vperm.xlu0 %2572, %v2562
    %v2574 = vpop.permute.xlu0 %2573
    %v2575 = vlaneseq
    %v2576 = vshrl.u32 %v2575, 7
    %v2577 = vadd.s32 %v2576, 16
    %2578 = vset.pattern.permute.xlu0 %v2577
    %2579 = vperm.xlu0 %2578, %v2562
    %v2580 = vpop.permute.xlu0 %2579
    %v2581 = vlaneseq
    %v2582 = vshrl.u32 %v2581, 7
    %v2583 = vadd.s32 %v2582, 24
    %2584 = vset.pattern.permute.xlu0 %v2583
    %2585 = vperm.xlu0 %2584, %v2562
    %v2586 = vpop.permute.xlu0 %2585
    %v2587 = vlaneseq
    %v2588 = vshrl.u32 %v2587, 7
    %v2589 = vadd.s32 %v2588, 32
    %2590 = vset.pattern.permute.xlu0 %v2589
    %2591 = vperm.xlu0 %2590, %v2562
    %v2592 = vpop.permute.xlu0 %2591
    %v2593 = vlaneseq
    %v2594 = vshrl.u32 %v2593, 7
    %v2595 = vadd.s32 %v2594, 40
    %2596 = vset.pattern.permute.xlu0 %v2595
    %2597 = vperm.xlu0 %2596, %v2562
    %v2598 = vpop.permute.xlu0 %2597
    %v2599 = vlaneseq
    %v2600 = vshrl.u32 %v2599, 7
    %v2601 = vadd.s32 %v2600, 48
    %2602 = vset.pattern.permute.xlu0 %v2601
    %2603 = vperm.xlu0 %2602, %v2562
    %v2604 = vpop.permute.xlu0 %2603
    %v2605 = vlaneseq
    %v2606 = vshrl.u32 %v2605, 7
    %v2607 = vadd.s32 %v2606, 56
    %2608 = vset.pattern.permute.xlu0 %v2607
    %2609 = vperm.xlu0 %2608, %v2562
    %v2610 = vpop.permute.xlu0 %2609
    %v2611 = vperm.slane %v2511, 2
    %v2612 = vlaneseq
    %v2613 = vshrl.u32 %v2612, 7
    %2615 = vset.pattern.permute.xlu0 %v2613
    %2616 = vperm.xlu0 %2615, %v2611
    %v2617 = vpop.permute.xlu0 %2616
    %v2618 = vlaneseq
    %v2619 = vshrl.u32 %v2618, 7
    %v2620 = vadd.s32 %v2619, 8
    %2621 = vset.pattern.permute.xlu0 %v2620
    %2622 = vperm.xlu0 %2621, %v2611
    %v2623 = vpop.permute.xlu0 %2622
    %v2624 = vlaneseq
    %v2625 = vshrl.u32 %v2624, 7
    %v2626 = vadd.s32 %v2625, 16
    %2627 = vset.pattern.permute.xlu0 %v2626
    %2628 = vperm.xlu0 %2627, %v2611
    %v2629 = vpop.permute.xlu0 %2628
    %v2630 = vlaneseq
    %v2631 = vshrl.u32 %v2630, 7
    %v2632 = vadd.s32 %v2631, 24
    %2633 = vset.pattern.permute.xlu0 %v2632
    %2634 = vperm.xlu0 %2633, %v2611
    %v2635 = vpop.permute.xlu0 %2634
    %v2636 = vlaneseq
    %v2637 = vshrl.u32 %v2636, 7
    %v2638 = vadd.s32 %v2637, 32
    %2639 = vset.pattern.permute.xlu0 %v2638
    %2640 = vperm.xlu0 %2639, %v2611
    %v2641 = vpop.permute.xlu0 %2640
    %v2642 = vlaneseq
    %v2643 = vshrl.u32 %v2642, 7
    %v2644 = vadd.s32 %v2643, 40
    %2645 = vset.pattern.permute.xlu0 %v2644
    %2646 = vperm.xlu0 %2645, %v2611
    %v2647 = vpop.permute.xlu0 %2646
    %v2648 = vlaneseq
    %v2649 = vshrl.u32 %v2648, 7
    %v2650 = vadd.s32 %v2649, 48
    %2651 = vset.pattern.permute.xlu0 %v2650
    %2652 = vperm.xlu0 %2651, %v2611
    %v2653 = vpop.permute.xlu0 %2652
    %v2654 = vlaneseq
    %v2655 = vshrl.u32 %v2654, 7
    %v2656 = vadd.s32 %v2655, 56
    %2657 = vset.pattern.permute.xlu0 %v2656
    %2658 = vperm.xlu0 %2657, %v2611
    %v2659 = vpop.permute.xlu0 %2658
    %v2660 = vperm.slane %v2511, 3
    %v2661 = vlaneseq
    %v2662 = vshrl.u32 %v2661, 7
    %2664 = vset.pattern.permute.xlu0 %v2662
    %2665 = vperm.xlu0 %2664, %v2660
    %v2666 = vpop.permute.xlu0 %2665
    %v2667 = vlaneseq
    %v2668 = vshrl.u32 %v2667, 7
    %v2669 = vadd.s32 %v2668, 8
    %2670 = vset.pattern.permute.xlu0 %v2669
    %2671 = vperm.xlu0 %2670, %v2660
    %v2672 = vpop.permute.xlu0 %2671
    %v2673 = vlaneseq
    %v2674 = vshrl.u32 %v2673, 7
    %v2675 = vadd.s32 %v2674, 16
    %2676 = vset.pattern.permute.xlu0 %v2675
    %2677 = vperm.xlu0 %2676, %v2660
    %v2678 = vpop.permute.xlu0 %2677
    %v2679 = vlaneseq
    %v2680 = vshrl.u32 %v2679, 7
    %v2681 = vadd.s32 %v2680, 24
    %2682 = vset.pattern.permute.xlu0 %v2681
    %2683 = vperm.xlu0 %2682, %v2660
    %v2684 = vpop.permute.xlu0 %2683
    %v2685 = vlaneseq
    %v2686 = vshrl.u32 %v2685, 7
    %v2687 = vadd.s32 %v2686, 32
    %2688 = vset.pattern.permute.xlu0 %v2687
    %2689 = vperm.xlu0 %2688, %v2660
    %v2690 = vpop.permute.xlu0 %2689
    %v2691 = vlaneseq
    %v2692 = vshrl.u32 %v2691, 7
    %v2693 = vadd.s32 %v2692, 40
    %2694 = vset.pattern.permute.xlu0 %v2693
    %2695 = vperm.xlu0 %2694, %v2660
    %v2696 = vpop.permute.xlu0 %2695
    %v2697 = vlaneseq
    %v2698 = vshrl.u32 %v2697, 7
    %v2699 = vadd.s32 %v2698, 48
    %2700 = vset.pattern.permute.xlu0 %v2699
    %2701 = vperm.xlu0 %2700, %v2660
    %v2702 = vpop.permute.xlu0 %2701
    %v2703 = vlaneseq
    %v2704 = vshrl.u32 %v2703, 7
    %v2705 = vadd.s32 %v2704, 56
    %2706 = vset.pattern.permute.xlu0 %v2705
    %2707 = vperm.xlu0 %2706, %v2660
    %v2708 = vpop.permute.xlu0 %2707
    %v2709 = vperm.slane %v2511, 4
    %v2710 = vlaneseq
    %v2711 = vshrl.u32 %v2710, 7
    %2713 = vset.pattern.permute.xlu0 %v2711
    %2714 = vperm.xlu0 %2713, %v2709
    %v2715 = vpop.permute.xlu0 %2714
    %v2716 = vlaneseq
    %v2717 = vshrl.u32 %v2716, 7
    %v2718 = vadd.s32 %v2717, 8
    %2719 = vset.pattern.permute.xlu0 %v2718
    %2720 = vperm.xlu0 %2719, %v2709
    %v2721 = vpop.permute.xlu0 %2720
    %v2722 = vlaneseq
    %v2723 = vshrl.u32 %v2722, 7
    %v2724 = vadd.s32 %v2723, 16
    %2725 = vset.pattern.permute.xlu0 %v2724
    %2726 = vperm.xlu0 %2725, %v2709
    %v2727 = vpop.permute.xlu0 %2726
    %v2728 = vlaneseq
    %v2729 = vshrl.u32 %v2728, 7
    %v2730 = vadd.s32 %v2729, 24
    %2731 = vset.pattern.permute.xlu0 %v2730
    %2732 = vperm.xlu0 %2731, %v2709
    %v2733 = vpop.permute.xlu0 %2732
    %v2734 = vlaneseq
    %v2735 = vshrl.u32 %v2734, 7
    %v2736 = vadd.s32 %v2735, 32
    %2737 = vset.pattern.permute.xlu0 %v2736
    %2738 = vperm.xlu0 %2737, %v2709
    %v2739 = vpop.permute.xlu0 %2738
    %v2740 = vlaneseq
    %v2741 = vshrl.u32 %v2740, 7
    %v2742 = vadd.s32 %v2741, 40
    %2743 = vset.pattern.permute.xlu0 %v2742
    %2744 = vperm.xlu0 %2743, %v2709
    %v2745 = vpop.permute.xlu0 %2744
    %v2746 = vlaneseq
    %v2747 = vshrl.u32 %v2746, 7
    %v2748 = vadd.s32 %v2747, 48
    %2749 = vset.pattern.permute.xlu0 %v2748
    %2750 = vperm.xlu0 %2749, %v2709
    %v2751 = vpop.permute.xlu0 %2750
    %v2752 = vlaneseq
    %v2753 = vshrl.u32 %v2752, 7
    %v2754 = vadd.s32 %v2753, 56
    %2755 = vset.pattern.permute.xlu0 %v2754
    %2756 = vperm.xlu0 %2755, %v2709
    %v2757 = vpop.permute.xlu0 %2756
    %v2758 = vperm.slane %v2511, 5
    %v2759 = vlaneseq
    %v2760 = vshrl.u32 %v2759, 7
    %2762 = vset.pattern.permute.xlu0 %v2760
    %2763 = vperm.xlu0 %2762, %v2758
    %v2764 = vpop.permute.xlu0 %2763
    %v2765 = vlaneseq
    %v2766 = vshrl.u32 %v2765, 7
    %v2767 = vadd.s32 %v2766, 8
    %2768 = vset.pattern.permute.xlu0 %v2767
    %2769 = vperm.xlu0 %2768, %v2758
    %v2770 = vpop.permute.xlu0 %2769
    %v2771 = vlaneseq
    %v2772 = vshrl.u32 %v2771, 7
    %v2773 = vadd.s32 %v2772, 16
    %2774 = vset.pattern.permute.xlu0 %v2773
    %2775 = vperm.xlu0 %2774, %v2758
    %v2776 = vpop.permute.xlu0 %2775
    %v2777 = vlaneseq
    %v2778 = vshrl.u32 %v2777, 7
    %v2779 = vadd.s32 %v2778, 24
    %2780 = vset.pattern.permute.xlu0 %v2779
    %2781 = vperm.xlu0 %2780, %v2758
    %v2782 = vpop.permute.xlu0 %2781
    %v2783 = vlaneseq
    %v2784 = vshrl.u32 %v2783, 7
    %v2785 = vadd.s32 %v2784, 32
    %2786 = vset.pattern.permute.xlu0 %v2785
    %2787 = vperm.xlu0 %2786, %v2758
    %v2788 = vpop.permute.xlu0 %2787
    %v2789 = vlaneseq
    %v2790 = vshrl.u32 %v2789, 7
    %v2791 = vadd.s32 %v2790, 40
    %2792 = vset.pattern.permute.xlu0 %v2791
    %2793 = vperm.xlu0 %2792, %v2758
    %v2794 = vpop.permute.xlu0 %2793
    %v2795 = vlaneseq
    %v2796 = vshrl.u32 %v2795, 7
    %v2797 = vadd.s32 %v2796, 48
    %2798 = vset.pattern.permute.xlu0 %v2797
    %2799 = vperm.xlu0 %2798, %v2758
    %v2800 = vpop.permute.xlu0 %2799
    %v2801 = vlaneseq
    %v2802 = vshrl.u32 %v2801, 7
    %v2803 = vadd.s32 %v2802, 56
    %2804 = vset.pattern.permute.xlu0 %v2803
    %2805 = vperm.xlu0 %2804, %v2758
    %v2806 = vpop.permute.xlu0 %2805
    %v2807 = vperm.slane %v2511, 6
    %v2808 = vlaneseq
    %v2809 = vshrl.u32 %v2808, 7
    %2811 = vset.pattern.permute.xlu0 %v2809
    %2812 = vperm.xlu0 %2811, %v2807
    %v2813 = vpop.permute.xlu0 %2812
    %v2814 = vlaneseq
    %v2815 = vshrl.u32 %v2814, 7
    %v2816 = vadd.s32 %v2815, 8
    %2817 = vset.pattern.permute.xlu0 %v2816
    %2818 = vperm.xlu0 %2817, %v2807
    %v2819 = vpop.permute.xlu0 %2818
    %v2820 = vlaneseq
    %v2821 = vshrl.u32 %v2820, 7
    %v2822 = vadd.s32 %v2821, 16
    %2823 = vset.pattern.permute.xlu0 %v2822
    %2824 = vperm.xlu0 %2823, %v2807
    %v2825 = vpop.permute.xlu0 %2824
    %v2826 = vlaneseq
    %v2827 = vshrl.u32 %v2826, 7
    %v2828 = vadd.s32 %v2827, 24
    %2829 = vset.pattern.permute.xlu0 %v2828
    %2830 = vperm.xlu0 %2829, %v2807
    %v2831 = vpop.permute.xlu0 %2830
    %v2832 = vlaneseq
    %v2833 = vshrl.u32 %v2832, 7
    %v2834 = vadd.s32 %v2833, 32
    %2835 = vset.pattern.permute.xlu0 %v2834
    %2836 = vperm.xlu0 %2835, %v2807
    %v2837 = vpop.permute.xlu0 %2836
    %v2838 = vlaneseq
    %v2839 = vshrl.u32 %v2838, 7
    %v2840 = vadd.s32 %v2839, 40
    %2841 = vset.pattern.permute.xlu0 %v2840
    %2842 = vperm.xlu0 %2841, %v2807
    %v2843 = vpop.permute.xlu0 %2842
    %v2844 = vlaneseq
    %v2845 = vshrl.u32 %v2844, 7
    %v2846 = vadd.s32 %v2845, 48
    %2847 = vset.pattern.permute.xlu0 %v2846
    %2848 = vperm.xlu0 %2847, %v2807
    %v2849 = vpop.permute.xlu0 %2848
    %v2850 = vlaneseq
    %v2851 = vshrl.u32 %v2850, 7
    %v2852 = vadd.s32 %v2851, 56
    %2853 = vset.pattern.permute.xlu0 %v2852
    %2854 = vperm.xlu0 %2853, %v2807
    %v2855 = vpop.permute.xlu0 %2854
    %v2856 = vperm.slane %v2511, 7
    %v2857 = vlaneseq
    %v2858 = vshrl.u32 %v2857, 7
    %2860 = vset.pattern.permute.xlu0 %v2858
    %2861 = vperm.xlu0 %2860, %v2856
    %v2862 = vpop.permute.xlu0 %2861
    %v2863 = vlaneseq
    %v2864 = vshrl.u32 %v2863, 7
    %v2865 = vadd.s32 %v2864, 8
    %2866 = vset.pattern.permute.xlu0 %v2865
    %2867 = vperm.xlu0 %2866, %v2856
    %v2868 = vpop.permute.xlu0 %2867
    %v2869 = vlaneseq
    %v2870 = vshrl.u32 %v2869, 7
    %v2871 = vadd.s32 %v2870, 16
    %2872 = vset.pattern.permute.xlu0 %v2871
    %2873 = vperm.xlu0 %2872, %v2856
    %v2874 = vpop.permute.xlu0 %2873
    %v2875 = vlaneseq
    %v2876 = vshrl.u32 %v2875, 7
    %v2877 = vadd.s32 %v2876, 24
    %2878 = vset.pattern.permute.xlu0 %v2877
    %2879 = vperm.xlu0 %2878, %v2856
    %v2880 = vpop.permute.xlu0 %2879
    %v2881 = vlaneseq
    %v2882 = vshrl.u32 %v2881, 7
    %v2883 = vadd.s32 %v2882, 32
    %2884 = vset.pattern.permute.xlu0 %v2883
    %2885 = vperm.xlu0 %2884, %v2856
    %v2886 = vpop.permute.xlu0 %2885
    %v2887 = vlaneseq
    %v2888 = vshrl.u32 %v2887, 7
    %v2889 = vadd.s32 %v2888, 40
    %2890 = vset.pattern.permute.xlu0 %v2889
    %2891 = vperm.xlu0 %2890, %v2856
    %v2892 = vpop.permute.xlu0 %2891
    %v2893 = vlaneseq
    %v2894 = vshrl.u32 %v2893, 7
    %v2895 = vadd.s32 %v2894, 48
    %2896 = vset.pattern.permute.xlu0 %v2895
    %2897 = vperm.xlu0 %2896, %v2856
    %v2898 = vpop.permute.xlu0 %2897
    %v2899 = vlaneseq
    %v2900 = vshrl.u32 %v2899, 7
    %v2901 = vadd.s32 %v2900, 56
    %2902 = vset.pattern.permute.xlu0 %v2901
    %2903 = vperm.xlu0 %2902, %v2856
    %v2904 = vpop.permute.xlu0 %2903
    %v2905 = vperm.slane %v2512, 0
    %v2906 = vlaneseq
    %v2907 = vshrl.u32 %v2906, 7
    %2909 = vset.pattern.permute.xlu0 %v2907
    %2910 = vperm.xlu0 %2909, %v2905
    %v2911 = vpop.permute.xlu0 %2910
    %v2912 = vlaneseq
    %v2913 = vshrl.u32 %v2912, 7
    %v2914 = vadd.s32 %v2913, 8
    %2915 = vset.pattern.permute.xlu0 %v2914
    %2916 = vperm.xlu0 %2915, %v2905
    %v2917 = vpop.permute.xlu0 %2916
    %v2918 = vlaneseq
    %v2919 = vshrl.u32 %v2918, 7
    %v2920 = vadd.s32 %v2919, 16
    %2921 = vset.pattern.permute.xlu0 %v2920
    %2922 = vperm.xlu0 %2921, %v2905
    %v2923 = vpop.permute.xlu0 %2922
    %v2924 = vlaneseq
    %v2925 = vshrl.u32 %v2924, 7
    %v2926 = vadd.s32 %v2925, 24
    %2927 = vset.pattern.permute.xlu0 %v2926
    %2928 = vperm.xlu0 %2927, %v2905
    %v2929 = vpop.permute.xlu0 %2928
    %v2930 = vlaneseq
    %v2931 = vshrl.u32 %v2930, 7
    %v2932 = vadd.s32 %v2931, 32
    %2933 = vset.pattern.permute.xlu0 %v2932
    %2934 = vperm.xlu0 %2933, %v2905
    %v2935 = vpop.permute.xlu0 %2934
    %v2936 = vlaneseq
    %v2937 = vshrl.u32 %v2936, 7
    %v2938 = vadd.s32 %v2937, 40
    %2939 = vset.pattern.permute.xlu0 %v2938
    %2940 = vperm.xlu0 %2939, %v2905
    %v2941 = vpop.permute.xlu0 %2940
    %v2942 = vlaneseq
    %v2943 = vshrl.u32 %v2942, 7
    %v2944 = vadd.s32 %v2943, 48
    %2945 = vset.pattern.permute.xlu0 %v2944
    %2946 = vperm.xlu0 %2945, %v2905
    %v2947 = vpop.permute.xlu0 %2946
    %v2948 = vlaneseq
    %v2949 = vshrl.u32 %v2948, 7
    %v2950 = vadd.s32 %v2949, 56
    %2951 = vset.pattern.permute.xlu0 %v2950
    %2952 = vperm.xlu0 %2951, %v2905
    %v2953 = vpop.permute.xlu0 %2952
    %v2954 = vperm.slane %v2512, 1
    %v2955 = vlaneseq
    %v2956 = vshrl.u32 %v2955, 7
    %2958 = vset.pattern.permute.xlu0 %v2956
    %2959 = vperm.xlu0 %2958, %v2954
    %v2960 = vpop.permute.xlu0 %2959
    %v2961 = vlaneseq
    %v2962 = vshrl.u32 %v2961, 7
    %v2963 = vadd.s32 %v2962, 8
    %2964 = vset.pattern.permute.xlu0 %v2963
    %2965 = vperm.xlu0 %2964, %v2954
    %v2966 = vpop.permute.xlu0 %2965
    %v2967 = vlaneseq
    %v2968 = vshrl.u32 %v2967, 7
    %v2969 = vadd.s32 %v2968, 16
    %2970 = vset.pattern.permute.xlu0 %v2969
    %2971 = vperm.xlu0 %2970, %v2954
    %v2972 = vpop.permute.xlu0 %2971
    %v2973 = vlaneseq
    %v2974 = vshrl.u32 %v2973, 7
    %v2975 = vadd.s32 %v2974, 24
    %2976 = vset.pattern.permute.xlu0 %v2975
    %2977 = vperm.xlu0 %2976, %v2954
    %v2978 = vpop.permute.xlu0 %2977
    %v2979 = vlaneseq
    %v2980 = vshrl.u32 %v2979, 7
    %v2981 = vadd.s32 %v2980, 32
    %2982 = vset.pattern.permute.xlu0 %v2981
    %2983 = vperm.xlu0 %2982, %v2954
    %v2984 = vpop.permute.xlu0 %2983
    %v2985 = vlaneseq
    %v2986 = vshrl.u32 %v2985, 7
    %v2987 = vadd.s32 %v2986, 40
    %2988 = vset.pattern.permute.xlu0 %v2987
    %2989 = vperm.xlu0 %2988, %v2954
    %v2990 = vpop.permute.xlu0 %2989
    %v2991 = vlaneseq
    %v2992 = vshrl.u32 %v2991, 7
    %v2993 = vadd.s32 %v2992, 48
    %2994 = vset.pattern.permute.xlu0 %v2993
    %2995 = vperm.xlu0 %2994, %v2954
    %v2996 = vpop.permute.xlu0 %2995
    %v2997 = vlaneseq
    %v2998 = vshrl.u32 %v2997, 7
    %v2999 = vadd.s32 %v2998, 56
    %3000 = vset.pattern.permute.xlu0 %v2999
    %3001 = vperm.xlu0 %3000, %v2954
    %v3002 = vpop.permute.xlu0 %3001
    %v3003 = vperm.slane %v2512, 2
    %v3004 = vlaneseq
    %v3005 = vshrl.u32 %v3004, 7
    %3007 = vset.pattern.permute.xlu0 %v3005
    %3008 = vperm.xlu0 %3007, %v3003
    %v3009 = vpop.permute.xlu0 %3008
    %v3010 = vlaneseq
    %v3011 = vshrl.u32 %v3010, 7
    %v3012 = vadd.s32 %v3011, 8
    %3013 = vset.pattern.permute.xlu0 %v3012
    %3014 = vperm.xlu0 %3013, %v3003
    %v3015 = vpop.permute.xlu0 %3014
    %v3016 = vlaneseq
    %v3017 = vshrl.u32 %v3016, 7
    %v3018 = vadd.s32 %v3017, 16
    %3019 = vset.pattern.permute.xlu0 %v3018
    %3020 = vperm.xlu0 %3019, %v3003
    %v3021 = vpop.permute.xlu0 %3020
    %v3022 = vlaneseq
    %v3023 = vshrl.u32 %v3022, 7
    %v3024 = vadd.s32 %v3023, 24
    %3025 = vset.pattern.permute.xlu0 %v3024
    %3026 = vperm.xlu0 %3025, %v3003
    %v3027 = vpop.permute.xlu0 %3026
    %v3028 = vlaneseq
    %v3029 = vshrl.u32 %v3028, 7
    %v3030 = vadd.s32 %v3029, 32
    %3031 = vset.pattern.permute.xlu0 %v3030
    %3032 = vperm.xlu0 %3031, %v3003
    %v3033 = vpop.permute.xlu0 %3032
    %v3034 = vlaneseq
    %v3035 = vshrl.u32 %v3034, 7
    %v3036 = vadd.s32 %v3035, 40
    %3037 = vset.pattern.permute.xlu0 %v3036
    %3038 = vperm.xlu0 %3037, %v3003
    %v3039 = vpop.permute.xlu0 %3038
    %v3040 = vlaneseq
    %v3041 = vshrl.u32 %v3040, 7
    %v3042 = vadd.s32 %v3041, 48
    %3043 = vset.pattern.permute.xlu0 %v3042
    %3044 = vperm.xlu0 %3043, %v3003
    %v3045 = vpop.permute.xlu0 %3044
    %v3046 = vlaneseq
    %v3047 = vshrl.u32 %v3046, 7
    %v3048 = vadd.s32 %v3047, 56
    %3049 = vset.pattern.permute.xlu0 %v3048
    %3050 = vperm.xlu0 %3049, %v3003
    %v3051 = vpop.permute.xlu0 %3050
    %v3052 = vperm.slane %v2512, 3
    %v3053 = vlaneseq
    %v3054 = vshrl.u32 %v3053, 7
    %3056 = vset.pattern.permute.xlu0 %v3054
    %3057 = vperm.xlu0 %3056, %v3052
    %v3058 = vpop.permute.xlu0 %3057
    %v3059 = vlaneseq
    %v3060 = vshrl.u32 %v3059, 7
    %v3061 = vadd.s32 %v3060, 8
    %3062 = vset.pattern.permute.xlu0 %v3061
    %3063 = vperm.xlu0 %3062, %v3052
    %v3064 = vpop.permute.xlu0 %3063
    %v3065 = vlaneseq
    %v3066 = vshrl.u32 %v3065, 7
    %v3067 = vadd.s32 %v3066, 16
    %3068 = vset.pattern.permute.xlu0 %v3067
    %3069 = vperm.xlu0 %3068, %v3052
    %v3070 = vpop.permute.xlu0 %3069
    %v3071 = vlaneseq
    %v3072 = vshrl.u32 %v3071, 7
    %v3073 = vadd.s32 %v3072, 24
    %3074 = vset.pattern.permute.xlu0 %v3073
    %3075 = vperm.xlu0 %3074, %v3052
    %v3076 = vpop.permute.xlu0 %3075
    %v3077 = vlaneseq
    %v3078 = vshrl.u32 %v3077, 7
    %v3079 = vadd.s32 %v3078, 32
    %3080 = vset.pattern.permute.xlu0 %v3079
    %3081 = vperm.xlu0 %3080, %v3052
    %v3082 = vpop.permute.xlu0 %3081
    %v3083 = vlaneseq
    %v3084 = vshrl.u32 %v3083, 7
    %v3085 = vadd.s32 %v3084, 40
    %3086 = vset.pattern.permute.xlu0 %v3085
    %3087 = vperm.xlu0 %3086, %v3052
    %v3088 = vpop.permute.xlu0 %3087
    %v3089 = vlaneseq
    %v3090 = vshrl.u32 %v3089, 7
    %v3091 = vadd.s32 %v3090, 48
    %3092 = vset.pattern.permute.xlu0 %v3091
    %3093 = vperm.xlu0 %3092, %v3052
    %v3094 = vpop.permute.xlu0 %3093
    %v3095 = vlaneseq
    %v3096 = vshrl.u32 %v3095, 7
    %v3097 = vadd.s32 %v3096, 56
    %3098 = vset.pattern.permute.xlu0 %v3097
    %3099 = vperm.xlu0 %3098, %v3052
    %v3100 = vpop.permute.xlu0 %3099
    %v3101 = vperm.slane %v2512, 4
    %v3102 = vlaneseq
    %v3103 = vshrl.u32 %v3102, 7
    %3105 = vset.pattern.permute.xlu0 %v3103
    %3106 = vperm.xlu0 %3105, %v3101
    %v3107 = vpop.permute.xlu0 %3106
    %v3108 = vlaneseq
    %v3109 = vshrl.u32 %v3108, 7
    %v3110 = vadd.s32 %v3109, 8
    %3111 = vset.pattern.permute.xlu0 %v3110
    %3112 = vperm.xlu0 %3111, %v3101
    %v3113 = vpop.permute.xlu0 %3112
    %v3114 = vlaneseq
    %v3115 = vshrl.u32 %v3114, 7
    %v3116 = vadd.s32 %v3115, 16
    %3117 = vset.pattern.permute.xlu0 %v3116
    %3118 = vperm.xlu0 %3117, %v3101
    %v3119 = vpop.permute.xlu0 %3118
    %v3120 = vlaneseq
    %v3121 = vshrl.u32 %v3120, 7
    %v3122 = vadd.s32 %v3121, 24
    %3123 = vset.pattern.permute.xlu0 %v3122
    %3124 = vperm.xlu0 %3123, %v3101
    %v3125 = vpop.permute.xlu0 %3124
    %v3126 = vlaneseq
    %v3127 = vshrl.u32 %v3126, 7
    %v3128 = vadd.s32 %v3127, 32
    %3129 = vset.pattern.permute.xlu0 %v3128
    %3130 = vperm.xlu0 %3129, %v3101
    %v3131 = vpop.permute.xlu0 %3130
    %v3132 = vlaneseq
    %v3133 = vshrl.u32 %v3132, 7
    %v3134 = vadd.s32 %v3133, 40
    %3135 = vset.pattern.permute.xlu0 %v3134
    %3136 = vperm.xlu0 %3135, %v3101
    %v3137 = vpop.permute.xlu0 %3136
    %v3138 = vlaneseq
    %v3139 = vshrl.u32 %v3138, 7
    %v3140 = vadd.s32 %v3139, 48
    %3141 = vset.pattern.permute.xlu0 %v3140
    %3142 = vperm.xlu0 %3141, %v3101
    %v3143 = vpop.permute.xlu0 %3142
    %v3144 = vlaneseq
    %v3145 = vshrl.u32 %v3144, 7
    %v3146 = vadd.s32 %v3145, 56
    %3147 = vset.pattern.permute.xlu0 %v3146
    %3148 = vperm.xlu0 %3147, %v3101
    %v3149 = vpop.permute.xlu0 %3148
    %v3150 = vperm.slane %v2512, 5
    %v3151 = vlaneseq
    %v3152 = vshrl.u32 %v3151, 7
    %3154 = vset.pattern.permute.xlu0 %v3152
    %3155 = vperm.xlu0 %3154, %v3150
    %v3156 = vpop.permute.xlu0 %3155
    %v3157 = vlaneseq
    %v3158 = vshrl.u32 %v3157, 7
    %v3159 = vadd.s32 %v3158, 8
    %3160 = vset.pattern.permute.xlu0 %v3159
    %3161 = vperm.xlu0 %3160, %v3150
    %v3162 = vpop.permute.xlu0 %3161
    %v3163 = vlaneseq
    %v3164 = vshrl.u32 %v3163, 7
    %v3165 = vadd.s32 %v3164, 16
    %3166 = vset.pattern.permute.xlu0 %v3165
    %3167 = vperm.xlu0 %3166, %v3150
    %v3168 = vpop.permute.xlu0 %3167
    %v3169 = vlaneseq
    %v3170 = vshrl.u32 %v3169, 7
    %v3171 = vadd.s32 %v3170, 24
    %3172 = vset.pattern.permute.xlu0 %v3171
    %3173 = vperm.xlu0 %3172, %v3150
    %v3174 = vpop.permute.xlu0 %3173
    %v3175 = vlaneseq
    %v3176 = vshrl.u32 %v3175, 7
    %v3177 = vadd.s32 %v3176, 32
    %3178 = vset.pattern.permute.xlu0 %v3177
    %3179 = vperm.xlu0 %3178, %v3150
    %v3180 = vpop.permute.xlu0 %3179
    %v3181 = vlaneseq
    %v3182 = vshrl.u32 %v3181, 7
    %v3183 = vadd.s32 %v3182, 40
    %3184 = vset.pattern.permute.xlu0 %v3183
    %3185 = vperm.xlu0 %3184, %v3150
    %v3186 = vpop.permute.xlu0 %3185
    %v3187 = vlaneseq
    %v3188 = vshrl.u32 %v3187, 7
    %v3189 = vadd.s32 %v3188, 48
    %3190 = vset.pattern.permute.xlu0 %v3189
    %3191 = vperm.xlu0 %3190, %v3150
    %v3192 = vpop.permute.xlu0 %3191
    %v3193 = vlaneseq
    %v3194 = vshrl.u32 %v3193, 7
    %v3195 = vadd.s32 %v3194, 56
    %3196 = vset.pattern.permute.xlu0 %v3195
    %3197 = vperm.xlu0 %3196, %v3150
    %v3198 = vpop.permute.xlu0 %3197
    %v3199 = vperm.slane %v2512, 6
    %v3200 = vlaneseq
    %v3201 = vshrl.u32 %v3200, 7
    %3203 = vset.pattern.permute.xlu0 %v3201
    %3204 = vperm.xlu0 %3203, %v3199
    %v3205 = vpop.permute.xlu0 %3204
    %v3206 = vlaneseq
    %v3207 = vshrl.u32 %v3206, 7
    %v3208 = vadd.s32 %v3207, 8
    %3209 = vset.pattern.permute.xlu0 %v3208
    %3210 = vperm.xlu0 %3209, %v3199
    %v3211 = vpop.permute.xlu0 %3210
    %v3212 = vlaneseq
    %v3213 = vshrl.u32 %v3212, 7
    %v3214 = vadd.s32 %v3213, 16
    %3215 = vset.pattern.permute.xlu0 %v3214
    %3216 = vperm.xlu0 %3215, %v3199
    %v3217 = vpop.permute.xlu0 %3216
    %v3218 = vlaneseq
    %v3219 = vshrl.u32 %v3218, 7
    %v3220 = vadd.s32 %v3219, 24
    %3221 = vset.pattern.permute.xlu0 %v3220
    %3222 = vperm.xlu0 %3221, %v3199
    %v3223 = vpop.permute.xlu0 %3222
    %v3224 = vlaneseq
    %v3225 = vshrl.u32 %v3224, 7
    %v3226 = vadd.s32 %v3225, 32
    %3227 = vset.pattern.permute.xlu0 %v3226
    %3228 = vperm.xlu0 %3227, %v3199
    %v3229 = vpop.permute.xlu0 %3228
    %v3230 = vlaneseq
    %v3231 = vshrl.u32 %v3230, 7
    %v3232 = vadd.s32 %v3231, 40
    %3233 = vset.pattern.permute.xlu0 %v3232
    %3234 = vperm.xlu0 %3233, %v3199
    %v3235 = vpop.permute.xlu0 %3234
    %v3236 = vlaneseq
    %v3237 = vshrl.u32 %v3236, 7
    %v3238 = vadd.s32 %v3237, 48
    %3239 = vset.pattern.permute.xlu0 %v3238
    %3240 = vperm.xlu0 %3239, %v3199
    %v3241 = vpop.permute.xlu0 %3240
    %v3242 = vlaneseq
    %v3243 = vshrl.u32 %v3242, 7
    %v3244 = vadd.s32 %v3243, 56
    %3245 = vset.pattern.permute.xlu0 %v3244
    %3246 = vperm.xlu0 %3245, %v3199
    %v3247 = vpop.permute.xlu0 %3246
    %v3248 = vperm.slane %v2512, 7
    %v3249 = vlaneseq
    %v3250 = vshrl.u32 %v3249, 7
    %3252 = vset.pattern.permute.xlu0 %v3250
    %3253 = vperm.xlu0 %3252, %v3248
    %v3254 = vpop.permute.xlu0 %3253
    %v3255 = vlaneseq
    %v3256 = vshrl.u32 %v3255, 7
    %v3257 = vadd.s32 %v3256, 8
    %3258 = vset.pattern.permute.xlu0 %v3257
    %3259 = vperm.xlu0 %3258, %v3248
    %v3260 = vpop.permute.xlu0 %3259
    %v3261 = vlaneseq
    %v3262 = vshrl.u32 %v3261, 7
    %v3263 = vadd.s32 %v3262, 16
    %3264 = vset.pattern.permute.xlu0 %v3263
    %3265 = vperm.xlu0 %3264, %v3248
    %v3266 = vpop.permute.xlu0 %3265
    %v3267 = vlaneseq
    %v3268 = vshrl.u32 %v3267, 7
    %v3269 = vadd.s32 %v3268, 24
    %3270 = vset.pattern.permute.xlu0 %v3269
    %3271 = vperm.xlu0 %3270, %v3248
    %v3272 = vpop.permute.xlu0 %3271
    %v3273 = vlaneseq
    %v3274 = vshrl.u32 %v3273, 7
    %v3275 = vadd.s32 %v3274, 32
    %3276 = vset.pattern.permute.xlu0 %v3275
    %3277 = vperm.xlu0 %3276, %v3248
    %v3278 = vpop.permute.xlu0 %3277
    %v3279 = vlaneseq
    %v3280 = vshrl.u32 %v3279, 7
    %v3281 = vadd.s32 %v3280, 40
    %3282 = vset.pattern.permute.xlu0 %v3281
    %3283 = vperm.xlu0 %3282, %v3248
    %v3284 = vpop.permute.xlu0 %3283
    %v3285 = vlaneseq
    %v3286 = vshrl.u32 %v3285, 7
    %v3287 = vadd.s32 %v3286, 48
    %3288 = vset.pattern.permute.xlu0 %v3287
    %3289 = vperm.xlu0 %3288, %v3248
    %v3290 = vpop.permute.xlu0 %3289
    %v3291 = vlaneseq
    %v3292 = vshrl.u32 %v3291, 7
    %v3293 = vadd.s32 %v3292, 56
    %3294 = vset.pattern.permute.xlu0 %v3293
    %3295 = vperm.xlu0 %3294, %v3248
    %v3296 = vpop.permute.xlu0 %3295
    %v3297 = vadd.f32 %v2191, %v2519
    %v3298 = vadd.f32 %v2193, %v2525
    %v3299 = vadd.f32 %v2196, %v2531
    %v3300 = vadd.f32 %v2198, %v2537
    %v3301 = vadd.f32 %v2201, %v2543
    %v3302 = vadd.f32 %v2203, %v2549
    %v3303 = vadd.f32 %v2206, %v2555
    %v3304 = vadd.f32 %v2208, %v2561
    %v3305 = vadd.f32 %v2211, %v2568
    %v3306 = vadd.f32 %v2213, %v2574
    %v3307 = vadd.f32 %v2216, %v2580
    %v3308 = vadd.f32 %v2218, %v2586
    %v3309 = vadd.f32 %v2221, %v2592
    %v3310 = vadd.f32 %v2223, %v2598
    %v3311 = vadd.f32 %v2226, %v2604
    %v3312 = vadd.f32 %v2228, %v2610
    %v3313 = vadd.f32 %v2231, %v2617
    %v3314 = vadd.f32 %v2233, %v2623
    %v3315 = vadd.f32 %v2236, %v2629
    %v3316 = vadd.f32 %v2238, %v2635
    %v3317 = vadd.f32 %v2241, %v2641
    %v3318 = vadd.f32 %v2243, %v2647
    %v3319 = vadd.f32 %v2246, %v2653
    %v3320 = vadd.f32 %v2248, %v2659
    %v3321 = vadd.f32 %v2251, %v2666
    %v3322 = vadd.f32 %v2253, %v2672
    %v3323 = vadd.f32 %v2256, %v2678
    %v3324 = vadd.f32 %v2258, %v2684
    %v3325 = vadd.f32 %v2261, %v2690
    %v3326 = vadd.f32 %v2263, %v2696
    %v3327 = vadd.f32 %v2266, %v2702
    %v3328 = vadd.f32 %v2268, %v2708
    %v3329 = vadd.f32 %v2271, %v2715
    %v3330 = vadd.f32 %v2273, %v2721
    %v3331 = vadd.f32 %v2276, %v2727
    %v3332 = vadd.f32 %v2278, %v2733
    %v3333 = vadd.f32 %v2281, %v2739
    %v3334 = vadd.f32 %v2283, %v2745
    %v3335 = vadd.f32 %v2286, %v2751
    %v3336 = vadd.f32 %v2288, %v2757
    %v3337 = vadd.f32 %v2291, %v2764
    %v3338 = vadd.f32 %v2293, %v2770
    %v3339 = vadd.f32 %v2296, %v2776
    %v3340 = vadd.f32 %v2298, %v2782
    %v3341 = vadd.f32 %v2301, %v2788
    %v3342 = vadd.f32 %v2303, %v2794
    %v3343 = vadd.f32 %v2306, %v2800
    %v3344 = vadd.f32 %v2308, %v2806
    %v3345 = vadd.f32 %v2311, %v2813
    %v3346 = vadd.f32 %v2313, %v2819
    %v3347 = vadd.f32 %v2316, %v2825
    %v3348 = vadd.f32 %v2318, %v2831
    %v3349 = vadd.f32 %v2321, %v2837
    %v3350 = vadd.f32 %v2323, %v2843
    %v3351 = vadd.f32 %v2326, %v2849
    %v3352 = vadd.f32 %v2328, %v2855
    %v3353 = vadd.f32 %v2331, %v2862
    %v3354 = vadd.f32 %v2333, %v2868
    %v3355 = vadd.f32 %v2336, %v2874
    %v3356 = vadd.f32 %v2338, %v2880
    %v3357 = vadd.f32 %v2341, %v2886
    %v3358 = vadd.f32 %v2343, %v2892
    %v3359 = vadd.f32 %v2346, %v2898
    %v3360 = vadd.f32 %v2348, %v2904
    %v3361 = vadd.f32 %v2351, %v2911
    %v3362 = vadd.f32 %v2353, %v2917
    %v3363 = vadd.f32 %v2356, %v2923
    %v3364 = vadd.f32 %v2358, %v2929
    %v3365 = vadd.f32 %v2361, %v2935
    %v3366 = vadd.f32 %v2363, %v2941
    %v3367 = vadd.f32 %v2366, %v2947
    %v3368 = vadd.f32 %v2368, %v2953
    %v3369 = vadd.f32 %v2371, %v2960
    %v3370 = vadd.f32 %v2373, %v2966
    %v3371 = vadd.f32 %v2376, %v2972
    %v3372 = vadd.f32 %v2378, %v2978
    %v3373 = vadd.f32 %v2381, %v2984
    %v3374 = vadd.f32 %v2383, %v2990
    %v3375 = vadd.f32 %v2386, %v2996
    %v3376 = vadd.f32 %v2388, %v3002
    %v3377 = vadd.f32 %v2391, %v3009
    %v3378 = vadd.f32 %v2393, %v3015
    %v3379 = vadd.f32 %v2396, %v3021
    %v3380 = vadd.f32 %v2398, %v3027
    %v3381 = vadd.f32 %v2401, %v3033
    %v3382 = vadd.f32 %v2403, %v3039
    %v3383 = vadd.f32 %v2406, %v3045
    %v3384 = vadd.f32 %v2408, %v3051
    %v3385 = vadd.f32 %v2411, %v3058
    %v3386 = vadd.f32 %v2413, %v3064
    %v3387 = vadd.f32 %v2416, %v3070
    %v3388 = vadd.f32 %v2418, %v3076
    %v3389 = vadd.f32 %v2421, %v3082
    %v3390 = vadd.f32 %v2423, %v3088
    %v3391 = vadd.f32 %v2426, %v3094
    %v3392 = vadd.f32 %v2428, %v3100
    %v3393 = vadd.f32 %v2431, %v3107
    %v3394 = vadd.f32 %v2433, %v3113
    %v3395 = vadd.f32 %v2436, %v3119
    %v3396 = vadd.f32 %v2438, %v3125
    %v3397 = vadd.f32 %v2441, %v3131
    %v3398 = vadd.f32 %v2443, %v3137
    %v3399 = vadd.f32 %v2446, %v3143
    %v3400 = vadd.f32 %v2448, %v3149
    %v3401 = vadd.f32 %v2451, %v3156
    %v3402 = vadd.f32 %v2453, %v3162
    %v3403 = vadd.f32 %v2456, %v3168
    %v3404 = vadd.f32 %v2458, %v3174
    %v3405 = vadd.f32 %v2461, %v3180
    %v3406 = vadd.f32 %v2463, %v3186
    %v3407 = vadd.f32 %v2466, %v3192
    %v3408 = vadd.f32 %v2468, %v3198
    %v3409 = vadd.f32 %v2471, %v3205
    %v3410 = vadd.f32 %v2473, %v3211
    %v3411 = vadd.f32 %v2476, %v3217
    %v3412 = vadd.f32 %v2478, %v3223
    %v3413 = vadd.f32 %v2481, %v3229
    %v3414 = vadd.f32 %v2483, %v3235
    %v3415 = vadd.f32 %v2486, %v3241
    %v3416 = vadd.f32 %v2488, %v3247
    %v3417 = vadd.f32 %v2491, %v3254
    %v3418 = vadd.f32 %v2493, %v3260
    %v3419 = vadd.f32 %v2496, %v3266
    %v3420 = vadd.f32 %v2498, %v3272
    %v3421 = vadd.f32 %v2501, %v3278
    %v3422 = vadd.f32 %v2503, %v3284
    %v3423 = vadd.f32 %v2506, %v3290
    %v3424 = vadd.f32 %v2508, %v3296
    %v3425 = vmax.f32 %v3297, %v3298
    %v3426 = vmax.f32 %v3425, %v3299
    %v3427 = vmax.f32 %v3426, %v3300
    %v3428 = vmax.f32 %v3427, %v3301
    %v3429 = vmax.f32 %v3428, %v3302
    %v3430 = vmax.f32 %v3429, %v3303
    %v3431 = vmax.f32 %v3430, %v3304
    %v3432 = vrot.slane %v3431, 4
    %v3433 = vmax.f32 %v3431, %v3432
    %v3434 = vrot.slane %v3433, 2
    %v3435 = vmax.f32 %v3433, %v3434
    %v3436 = vrot.slane %v3435, 1
    %v3437 = vmax.f32 %v3435, %v3436
    %v3438 = vmax.f32 %v3305, %v3306
    %v3439 = vmax.f32 %v3438, %v3307
    %v3440 = vmax.f32 %v3439, %v3308
    %v3441 = vmax.f32 %v3440, %v3309
    %v3442 = vmax.f32 %v3441, %v3310
    %v3443 = vmax.f32 %v3442, %v3311
    %v3444 = vmax.f32 %v3443, %v3312
    %v3445 = vrot.slane %v3444, 4
    %v3446 = vmax.f32 %v3444, %v3445
    %v3447 = vrot.slane %v3446, 2
    %v3448 = vmax.f32 %v3446, %v3447
    %v3449 = vrot.slane %v3448, 1
    %v3450 = vmax.f32 %v3448, %v3449
    %v3451 = vmax.f32 %v3313, %v3314
    %v3452 = vmax.f32 %v3451, %v3315
    %v3453 = vmax.f32 %v3452, %v3316
    %v3454 = vmax.f32 %v3453, %v3317
    %v3455 = vmax.f32 %v3454, %v3318
    %v3456 = vmax.f32 %v3455, %v3319
    %v3457 = vmax.f32 %v3456, %v3320
    %v3458 = vrot.slane %v3457, 4
    %v3459 = vmax.f32 %v3457, %v3458
    %v3460 = vrot.slane %v3459, 2
    %v3461 = vmax.f32 %v3459, %v3460
    %v3462 = vrot.slane %v3461, 1
    %v3463 = vmax.f32 %v3461, %v3462
    %v3464 = vmax.f32 %v3321, %v3322
    %v3465 = vmax.f32 %v3464, %v3323
    %v3466 = vmax.f32 %v3465, %v3324
    %v3467 = vmax.f32 %v3466, %v3325
    %v3468 = vmax.f32 %v3467, %v3326
    %v3469 = vmax.f32 %v3468, %v3327
    %v3470 = vmax.f32 %v3469, %v3328
    %v3471 = vrot.slane %v3470, 4
    %v3472 = vmax.f32 %v3470, %v3471
    %v3473 = vrot.slane %v3472, 2
    %v3474 = vmax.f32 %v3472, %v3473
    %v3475 = vrot.slane %v3474, 1
    %v3476 = vmax.f32 %v3474, %v3475
    %v3477 = vmax.f32 %v3329, %v3330
    %v3478 = vmax.f32 %v3477, %v3331
    %v3479 = vmax.f32 %v3478, %v3332
    %v3480 = vmax.f32 %v3479, %v3333
    %v3481 = vmax.f32 %v3480, %v3334
    %v3482 = vmax.f32 %v3481, %v3335
    %v3483 = vmax.f32 %v3482, %v3336
    %v3484 = vrot.slane %v3483, 4
    %v3485 = vmax.f32 %v3483, %v3484
    %v3486 = vrot.slane %v3485, 2
    %v3487 = vmax.f32 %v3485, %v3486
    %v3488 = vrot.slane %v3487, 1
    %v3489 = vmax.f32 %v3487, %v3488
    %v3490 = vmax.f32 %v3337, %v3338
    %v3491 = vmax.f32 %v3490, %v3339
    %v3492 = vmax.f32 %v3491, %v3340
    %v3493 = vmax.f32 %v3492, %v3341
    %v3494 = vmax.f32 %v3493, %v3342
    %v3495 = vmax.f32 %v3494, %v3343
    %v3496 = vmax.f32 %v3495, %v3344
    %v3497 = vrot.slane %v3496, 4
    %v3498 = vmax.f32 %v3496, %v3497
    %v3499 = vrot.slane %v3498, 2
    %v3500 = vmax.f32 %v3498, %v3499
    %v3501 = vrot.slane %v3500, 1
    %v3502 = vmax.f32 %v3500, %v3501
    %v3503 = vmax.f32 %v3345, %v3346
    %v3504 = vmax.f32 %v3503, %v3347
    %v3505 = vmax.f32 %v3504, %v3348
    %v3506 = vmax.f32 %v3505, %v3349
    %v3507 = vmax.f32 %v3506, %v3350
    %v3508 = vmax.f32 %v3507, %v3351
    %v3509 = vmax.f32 %v3508, %v3352
    %v3510 = vrot.slane %v3509, 4
    %v3511 = vmax.f32 %v3509, %v3510
    %v3512 = vrot.slane %v3511, 2
    %v3513 = vmax.f32 %v3511, %v3512
    %v3514 = vrot.slane %v3513, 1
    %v3515 = vmax.f32 %v3513, %v3514
    %v3516 = vmax.f32 %v3353, %v3354
    %v3517 = vmax.f32 %v3516, %v3355
    %v3518 = vmax.f32 %v3517, %v3356
    %v3519 = vmax.f32 %v3518, %v3357
    %v3520 = vmax.f32 %v3519, %v3358
    %v3521 = vmax.f32 %v3520, %v3359
    %v3522 = vmax.f32 %v3521, %v3360
    %v3523 = vrot.slane %v3522, 4
    %v3524 = vmax.f32 %v3522, %v3523
    %v3525 = vrot.slane %v3524, 2
    %v3526 = vmax.f32 %v3524, %v3525
    %v3527 = vrot.slane %v3526, 1
    %v3528 = vmax.f32 %v3526, %v3527
    %v3529 = vmax.f32 %v3361, %v3362
    %v3530 = vmax.f32 %v3529, %v3363
    %v3531 = vmax.f32 %v3530, %v3364
    %v3532 = vmax.f32 %v3531, %v3365
    %v3533 = vmax.f32 %v3532, %v3366
    %v3534 = vmax.f32 %v3533, %v3367
    %v3535 = vmax.f32 %v3534, %v3368
    %v3536 = vrot.slane %v3535, 4
    %v3537 = vmax.f32 %v3535, %v3536
    %v3538 = vrot.slane %v3537, 2
    %v3539 = vmax.f32 %v3537, %v3538
    %v3540 = vrot.slane %v3539, 1
    %v3541 = vmax.f32 %v3539, %v3540
    %v3542 = vmax.f32 %v3369, %v3370
    %v3543 = vmax.f32 %v3542, %v3371
    %v3544 = vmax.f32 %v3543, %v3372
    %v3545 = vmax.f32 %v3544, %v3373
    %v3546 = vmax.f32 %v3545, %v3374
    %v3547 = vmax.f32 %v3546, %v3375
    %v3548 = vmax.f32 %v3547, %v3376
    %v3549 = vrot.slane %v3548, 4
    %v3550 = vmax.f32 %v3548, %v3549
    %v3551 = vrot.slane %v3550, 2
    %v3552 = vmax.f32 %v3550, %v3551
    %v3553 = vrot.slane %v3552, 1
    %v3554 = vmax.f32 %v3552, %v3553
    %v3555 = vmax.f32 %v3377, %v3378
    %v3556 = vmax.f32 %v3555, %v3379
    %v3557 = vmax.f32 %v3556, %v3380
    %v3558 = vmax.f32 %v3557, %v3381
    %v3559 = vmax.f32 %v3558, %v3382
    %v3560 = vmax.f32 %v3559, %v3383
    %v3561 = vmax.f32 %v3560, %v3384
    %v3562 = vrot.slane %v3561, 4
    %v3563 = vmax.f32 %v3561, %v3562
    %v3564 = vrot.slane %v3563, 2
    %v3565 = vmax.f32 %v3563, %v3564
    %v3566 = vrot.slane %v3565, 1
    %v3567 = vmax.f32 %v3565, %v3566
    %v3568 = vmax.f32 %v3385, %v3386
    %v3569 = vmax.f32 %v3568, %v3387
    %v3570 = vmax.f32 %v3569, %v3388
    %v3571 = vmax.f32 %v3570, %v3389
    %v3572 = vmax.f32 %v3571, %v3390
    %v3573 = vmax.f32 %v3572, %v3391
    %v3574 = vmax.f32 %v3573, %v3392
    %v3575 = vrot.slane %v3574, 4
    %v3576 = vmax.f32 %v3574, %v3575
    %v3577 = vrot.slane %v3576, 2
    %v3578 = vmax.f32 %v3576, %v3577
    %v3579 = vrot.slane %v3578, 1
    %v3580 = vmax.f32 %v3578, %v3579
    %v3581 = vmax.f32 %v3393, %v3394
    %v3582 = vmax.f32 %v3581, %v3395
    %v3583 = vmax.f32 %v3582, %v3396
    %v3584 = vmax.f32 %v3583, %v3397
    %v3585 = vmax.f32 %v3584, %v3398
    %v3586 = vmax.f32 %v3585, %v3399
    %v3587 = vmax.f32 %v3586, %v3400
    %v3588 = vrot.slane %v3587, 4
    %v3589 = vmax.f32 %v3587, %v3588
    %v3590 = vrot.slane %v3589, 2
    %v3591 = vmax.f32 %v3589, %v3590
    %v3592 = vrot.slane %v3591, 1
    %v3593 = vmax.f32 %v3591, %v3592
    %v3594 = vmax.f32 %v3401, %v3402
    %v3595 = vmax.f32 %v3594, %v3403
    %v3596 = vmax.f32 %v3595, %v3404
    %v3597 = vmax.f32 %v3596, %v3405
    %v3598 = vmax.f32 %v3597, %v3406
    %v3599 = vmax.f32 %v3598, %v3407
    %v3600 = vmax.f32 %v3599, %v3408
    %v3601 = vrot.slane %v3600, 4
    %v3602 = vmax.f32 %v3600, %v3601
    %v3603 = vrot.slane %v3602, 2
    %v3604 = vmax.f32 %v3602, %v3603
    %v3605 = vrot.slane %v3604, 1
    %v3606 = vmax.f32 %v3604, %v3605
    %v3607 = vmax.f32 %v3409, %v3410
    %v3608 = vmax.f32 %v3607, %v3411
    %v3609 = vmax.f32 %v3608, %v3412
    %v3610 = vmax.f32 %v3609, %v3413
    %v3611 = vmax.f32 %v3610, %v3414
    %v3612 = vmax.f32 %v3611, %v3415
    %v3613 = vmax.f32 %v3612, %v3416
    %v3614 = vrot.slane %v3613, 4
    %v3615 = vmax.f32 %v3613, %v3614
    %v3616 = vrot.slane %v3615, 2
    %v3617 = vmax.f32 %v3615, %v3616
    %v3618 = vrot.slane %v3617, 1
    %v3619 = vmax.f32 %v3617, %v3618
    %v3620 = vmax.f32 %v3417, %v3418
    %v3621 = vmax.f32 %v3620, %v3419
    %v3622 = vmax.f32 %v3621, %v3420
    %v3623 = vmax.f32 %v3622, %v3421
    %v3624 = vmax.f32 %v3623, %v3422
    %v3625 = vmax.f32 %v3624, %v3423
    %v3626 = vmax.f32 %v3625, %v3424
    %v3627 = vrot.slane %v3626, 4
    %v3628 = vmax.f32 %v3626, %v3627
    %v3629 = vrot.slane %v3628, 2
    %v3630 = vmax.f32 %v3628, %v3629
    %v3631 = vrot.slane %v3630, 1
    %v3632 = vmax.f32 %v3630, %v3631
    %vm3633 = vcmp.gt.f32.partialorder %v3437, -1e+38
    %vm3634 = vcmp.gt.f32.partialorder %v3450, -1e+38
    %vm3635 = vcmp.gt.f32.partialorder %v3463, -1e+38
    %vm3636 = vcmp.gt.f32.partialorder %v3476, -1e+38
    %vm3637 = vcmp.gt.f32.partialorder %v3489, -1e+38
    %vm3638 = vcmp.gt.f32.partialorder %v3502, -1e+38
    %vm3639 = vcmp.gt.f32.partialorder %v3515, -1e+38
    %vm3640 = vcmp.gt.f32.partialorder %v3528, -1e+38
    %vm3641 = vcmp.gt.f32.partialorder %v3541, -1e+38
    %vm3642 = vcmp.gt.f32.partialorder %v3554, -1e+38
    %vm3643 = vcmp.gt.f32.partialorder %v3567, -1e+38
    %vm3644 = vcmp.gt.f32.partialorder %v3580, -1e+38
    %vm3645 = vcmp.gt.f32.partialorder %v3593, -1e+38
    %vm3646 = vcmp.gt.f32.partialorder %v3606, -1e+38
    %vm3647 = vcmp.gt.f32.partialorder %v3619, -1e+38
    %vm3648 = vcmp.gt.f32.partialorder %v3632, -1e+38
    %v3649 = vsel %vm3633, %v3437, 0.0
    %v3650 = vsel %vm3634, %v3450, 0.0
    %v3651 = vsel %vm3635, %v3463, 0.0
    %v3652 = vsel %vm3636, %v3476, 0.0
    %v3653 = vsel %vm3637, %v3489, 0.0
    %v3654 = vsel %vm3638, %v3502, 0.0
    %v3655 = vsel %vm3639, %v3515, 0.0
    %v3656 = vsel %vm3640, %v3528, 0.0
    %v3657 = vsel %vm3641, %v3541, 0.0
    %v3658 = vsel %vm3642, %v3554, 0.0
    %v3659 = vsel %vm3643, %v3567, 0.0
    %v3660 = vsel %vm3644, %v3580, 0.0
    %v3661 = vsel %vm3645, %v3593, 0.0
    %v3662 = vsel %vm3646, %v3606, 0.0
    %v3663 = vsel %vm3647, %v3619, 0.0
    %v3664 = vsel %vm3648, %v3632, 0.0
    %vm3681 = vcmask 1041409
    %v3682 = vsel %vm3681, %v3650, %v3649
    %vm3683 = vcmask 1042434
    %v3684 = vsel %vm3683, %v3651, %v3682
    %vm3685 = vcmask 1043459
    %v3686 = vsel %vm3685, %v3652, %v3684
    %vm3687 = vcmask 1044484
    %v3688 = vsel %vm3687, %v3653, %v3686
    %vm3689 = vcmask 1045509
    %v3690 = vsel %vm3689, %v3654, %v3688
    %vm3691 = vcmask 1046534
    %v3692 = vsel %vm3691, %v3655, %v3690
    %vm3693 = vcmask 1047559
    %v3694 = vsel %vm3693, %v3656, %v3692
    %v3695 = vsel %vm3681, %v3658, %v3657
    %v3696 = vsel %vm3683, %v3659, %v3695
    %v3697 = vsel %vm3685, %v3660, %v3696
    %v3698 = vsel %vm3687, %v3661, %v3697
    %v3699 = vsel %vm3689, %v3662, %v3698
    %v3700 = vsel %vm3691, %v3663, %v3699
    %v3701 = vsel %vm3693, %v3664, %v3700
    %s3704 = scalar_lea.vmem %s8, %s53
    %3705 = vst [vmem:[%s3704] sm:$0xff] %v3694
    %3706 = vst [vmem:[%s3704 + $0x8] sm:$0xff] %v3701
  $region38: #{net_forward.4} parent=0 // loop_footer
    %s51 = sadd.s32 1, %s47
  $region39: #{net_forward.4} parent=0 // loop_footer_branch
    %46 = sbr.rel target = $region35
  $region40: #{net_forward.4} parent=0 // loop_exit
    _
  // Predicated region
  $region41: #{net_forward.4} parent=0 // pred_check
    _
  $region42: #{net_forward.4} parent=0 // pred_check_branch
    %3708 = sbr.rel (0) target = $region44
  $region43: #{net_forward.4} parent=0 // pred_region
    _
  $region44: #{net_forward.4} parent=0 // pred_fallthru
    _
  // Predicated region
  $region45: #{net_forward.4} parent=0 // pred_check
    _
  $region46: #{net_forward.4} parent=0 // pred_check_branch
    %3710 = sbr.rel (0) target = $region48
  $region47: #{net_forward.4} parent=0 // pred_region
    _
  $region48: #{net_forward.4} parent=0 // pred_fallthru
    _

</llo_original>
